<compile_context>
chip_gen: v6e
topology: v6e:2x2x1
jax: 0.10.0
libtpu: 0.0.40
codegen_flags: <defaults>
</compile_context>

<pallas_src>
import numpy as np
import jax
import jax.numpy as jnp
from jax.experimental import pallas as pl
from jax.experimental.pallas import tpu as pltpu

BN_EPS = 1e-5
HIGHRES_OUT = 48


# ----------------------------------------------------------------------------
# Fused decoder kernel (one batch element per grid step)
# ----------------------------------------------------------------------------
def _make_decoder_kernel(H, W, Cout, Ho, Wo, atrous_rates):
    M = H * W
    M2 = Ho * Wo
    f32 = jnp.float32
    bf16 = jnp.bfloat16

    def mm(x, w):
        # MXU matmul: bf16 operands, f32 accumulation.
        return jnp.dot(x.astype(bf16), w, preferred_element_type=f32)

    def dw3x3(dst_ref, load_src, w9, d, HH, WW):
        """Depthwise 3x3, padding == dilation == d, accumulated into dst_ref.

        Zero padding is handled implicitly: each tap only touches its
        statically-valid region; taps entirely inside the padding are skipped
        at trace time (for d >= HH only the center tap survives).
        """
        dst_ref[...] = jnp.zeros_like(dst_ref)
        for ty in range(3):
            oy = (ty - 1) * d
            y0, y1 = max(0, -oy), min(HH, HH - oy)
            if y0 >= y1:
                continue
            for tx in range(3):
                ox = (tx - 1) * d
                x0, x1 = max(0, -ox), min(WW, WW - ox)
                if x0 >= x1:
                    continue
                k = ty * 3 + tx
                tap = load_src(y0 + oy, y1 + oy, x0 + ox, x1 + ox)  # (ny,nx,C)
                wk = w9[k:k + 1, :]                                  # (1, C)
                dst_ref[y0:y1, x0:x1, :] = dst_ref[y0:y1, x0:x1, :] + tap * wk

    def sp_to_fl(sp_ref, fl_ref, HH, WW):
        # (HH, WW, C) spatial scratch -> (HH*WW, C) flat scratch (row copies).
        for y in range(HH):
            fl_ref[y * WW:(y + 1) * WW, :] = sp_ref[y]

    def fl_to_sp(val, sp_ref, HH, WW):
        # (HH*WW, C) value -> (HH, WW, C) spatial scratch (row copies).
        for y in range(HH):
            sp_ref[y] = val[y * WW:(y + 1) * WW, :]

    def kernel(xlo_sp_ref, xlo_fl_ref, xhi_fl_ref, u_ref,
               w_b0_ref, dw_aspp_ref, pw_aspp_ref, sh_br_ref,
               w_pool_ref, sh_pool_ref, w_proj_ref, sh_proj_ref,
               dw_sep_ref, pw_sep_ref, sh_sep_ref,
               w_b1_ref, sh_b1_ref,
               dw_b2a_ref, dw_b2b_ref, pw_b2a_ref, pw_b2b_ref, sh_b2_ref,
               out_ref,
               s_dw_lo, s_fl_lo, s_sp_c, s_dw_c, s_fl_c,
               s_up, s_hr, s_dwa, s_dwb, s_fl_a, s_fl_b):
        x_fl = xlo_fl_ref[0]                                  # (M, Cin) f32

        # ---- ASPP branch 0: 1x1 conv + (folded) BN + ReLU -------------------
        b0 = jnp.maximum(mm(x_fl, w_b0_ref[...]) + sh_br_ref[0:1, :], 0.0)
        proj_pre = jnp.dot(b0.astype(bf16), w_proj_ref[0:Cout, :],
                           preferred_element_type=f32)        # (M, Cout)

        # ---- ASPP pooling branch, folded into the projection ---------------
        pooled_in = jnp.sum(x_fl, axis=0, keepdims=True) * (1.0 / M)   # (1,Cin)
        pooled = jnp.maximum(mm(pooled_in, w_pool_ref[...]) + sh_pool_ref[...],
                             0.0)                              # (1, Cout)
        proj_pre = proj_pre + jnp.dot(
            pooled.astype(bf16), w_proj_ref[4 * Cout:5 * Cout, :],
            preferred_element_type=f32)                        # broadcast add

        # ---- ASPP atrous separable branches (no padded HBM tensors) ---------
        for i, d in enumerate(atrous_rates):
            w9 = dw_aspp_ref[i]                                # (9, Cin)
            dw3x3(s_dw_lo,
                  lambda a, b, c, e: xlo_sp_ref[0, a:b, c:e, :],
                  w9, d, H, W)
            sp_to_fl(s_dw_lo, s_fl_lo, H, W)
            bi = jnp.maximum(mm(s_fl_lo[...], pw_aspp_ref[i])
                             + sh_br_ref[i + 1:i + 2, :], 0.0)  # (M, Cout)
            proj_pre = proj_pre + jnp.dot(
                bi.astype(bf16), w_proj_ref[(i + 1) * Cout:(i + 2) * Cout, :],
                preferred_element_type=f32)

        # ---- projection + BN + ReLU; nn.Dropout(0.5) is identity in eval ----
        proj = jnp.maximum(proj_pre + sh_proj_ref[...], 0.0)   # (M, Cout)

        # ---- aspp tail: SeparableConv2d(Cout->Cout, 3, pad=1) + BN + ReLU ---
        fl_to_sp(proj, s_sp_c, H, W)
        dw3x3(s_dw_c, lambda a, b, c, e: s_sp_c[a:b, c:e, :],
              dw_sep_ref[...], 1, H, W)
        sp_to_fl(s_dw_c, s_fl_c, H, W)
        aspp_out = jnp.maximum(mm(s_fl_c[...], pw_sep_ref[...])
                               + sh_sep_ref[...], 0.0)         # (M, Cout)

        # ---- bilinear upsample (align_corners=True): one Kronecker matmul ---
        aspp_up = jnp.dot(u_ref[...], aspp_out.astype(bf16),
                          preferred_element_type=f32)          # (M2, Cout)

        # ---- block1: 1x1 conv + BN + ReLU on high-res features --------------
        hr = jnp.maximum(mm(xhi_fl_ref[0], w_b1_ref[...]) + sh_b1_ref[...],
                         0.0)                                  # (M2, 48)

        # ---- block2: depthwise 3x3 (pad=1) on concat([aspp_up, hr]) done
        #      channel-split so the concat is never materialized, then
        #      pointwise (80 -> Cout) as a sum of two matmuls + BN + ReLU -----
        fl_to_sp(aspp_up, s_up, Ho, Wo)
        fl_to_sp(hr, s_hr, Ho, Wo)
        dw3x3(s_dwa, lambda a, b, c, e: s_up[a:b, c:e, :],
              dw_b2a_ref[...], 1, Ho, Wo)
        dw3x3(s_dwb, lambda a, b, c, e: s_hr[a:b, c:e, :],
              dw_b2b_ref[...], 1, Ho, Wo)
        sp_to_fl(s_dwa, s_fl_a, Ho, Wo)
        sp_to_fl(s_dwb, s_fl_b, Ho, Wo)
        fused = (mm(s_fl_a[...], pw_b2a_ref[...])
                 + mm(s_fl_b[...], pw_b2b_ref[...])
                 + sh_b2_ref[...])
        out_ref[0] = jnp.maximum(fused, 0.0)                   # (M2, Cout)

    return kernel


# ----------------------------------------------------------------------------
# Helpers (wrapper side)
# ----------------------------------------------------------------------------
def _bilinear_matrix_ac(out_size, in_size):
    # PyTorch UpsamplingBilinear2d (align_corners=True) interpolation matrix.
    m = np.zeros((out_size, in_size), np.float32)
    if out_size == 1 or in_size == 1:
        m[:, 0] = 1.0
        return m
    o = np.arange(out_size)
    s = o * (in_size - 1) / (out_size - 1)
    i0 = np.clip(np.floor(s).astype(np.int64), 0, in_size - 1)
    i1 = np.clip(i0 + 1, 0, in_size - 1)
    f = (s - i0).astype(np.float32)
    m[o, i0] += (1.0 - f)
    m[o, i1] += f
    return m


def _fold(w, bn):
    # Fold BN scale into the (Cin, Cout) weight; keep the shift separate.
    scale, shift = bn
    w_f = (w * scale[None, :]).astype(jnp.bfloat16)
    return w_f, shift.reshape(1, -1).astype(jnp.float32)


def _bcast_spec(shape):
    zeros = (0,) * len(shape)
    return pl.BlockSpec(shape, lambda n: zeros)


# ----------------------------------------------------------------------------
# Parameter init (deterministic, synthetic) — BN kept as (scale, shift)
# ----------------------------------------------------------------------------
def init_params(key, encoder_channels, out_channels):
    cin = encoder_channels[-1]
    c_hr = encoder_channels[-4]
    keys = iter(jax.random.split(key, 64))

    def w(shape, s=0.1):
        return (s * jax.random.normal(next(keys), shape)).astype(jnp.float32)

    def bn(c):
        gamma = 1.0 + 0.1 * jax.random.normal(next(keys), (c,))
        beta = 0.1 * jax.random.normal(next(keys), (c,))
        mean = 0.1 * jax.random.normal(next(keys), (c,))
        var = 1.0 + 0.1 * jax.random.uniform(next(keys), (c,))
        scale = gamma / jnp.sqrt(var + BN_EPS)
        shift = beta - mean * scale
        return scale.astype(jnp.float32), shift.astype(jnp.float32)

    p = {}
    p['aspp_b0_w'] = w((cin, out_channels)); p['aspp_b0_bn'] = bn(out_channels)
    for i in range(3):
        p[f'aspp_b{i+1}_dw'] = w((3, 3, cin))
        p[f'aspp_b{i+1}_pw'] = w((cin, out_channels))
        p[f'aspp_b{i+1}_bn'] = bn(out_channels)
    p['aspp_pool_w'] = w((cin, out_channels)); p['aspp_pool_bn'] = bn(out_channels)
    p['aspp_proj_w'] = w((5 * out_channels, out_channels)); p['aspp_proj_bn'] = bn(out_channels)
    p['aspp_sep_dw'] = w((3, 3, out_channels))
    p['aspp_sep_pw'] = w((out_channels, out_channels))
    p['aspp_sep_bn'] = bn(out_channels)
    p['block1_w'] = w((c_hr, HIGHRES_OUT)); p['block1_bn'] = bn(HIGHRES_OUT)
    p['block2_dw'] = w((3, 3, HIGHRES_OUT + out_channels))
    p['block2_pw'] = w((HIGHRES_OUT + out_channels, out_channels))
    p['block2_bn'] = bn(out_channels)
    return p


# ----------------------------------------------------------------------------
# Forward pass (DeepLabV3PlusDecoder.forward semantics, eval mode)
# ----------------------------------------------------------------------------
def deeplabv3plus_decoder(features, params, atrous_rates=(12, 24, 36),
                          output_stride=16):
    assert output_stride in (8, 16)
    scale_factor = 2 if output_stride == 8 else 4
    p = params

    x_low = jnp.transpose(features[-1], (0, 2, 3, 1)).astype(jnp.float32)
    x_high = jnp.transpose(features[-4], (0, 2, 3, 1)).astype(jnp.float32)
    N, H, W, Cin = x_low.shape
    _, Hh, Wh, Chr = x_high.shape
    Ho, Wo = H * scale_factor, W * scale_factor
    assert (Hh, Wh) == (Ho, Wo)
    Cout = p['aspp_b0_w'].shape[1]
    M, M2 = H * W, Ho * Wo

    # --- pack / fold params for the fused kernel -----------------------------
    w_b0, sh_b0 = _fold(p['aspp_b0_w'], p['aspp_b0_bn'])
    dw_aspp = jnp.stack([p[f'aspp_b{i+1}_dw'].reshape(9, Cin) for i in range(3)])
    pw_list, sh_list = [], [sh_b0]
    for i in range(3):
        wi, si = _fold(p[f'aspp_b{i+1}_pw'], p[f'aspp_b{i+1}_bn'])
        pw_list.append(wi)
        sh_list.append(si)
    pw_aspp = jnp.stack(pw_list)                              # (3, Cin, Cout) bf16
    sh_br = jnp.concatenate(sh_list, axis=0)                  # (4, Cout) f32
    w_pool, sh_pool = _fold(p['aspp_pool_w'], p['aspp_pool_bn'])
    w_proj, sh_proj = _fold(p['aspp_proj_w'], p['aspp_proj_bn'])
    dw_sep = p['aspp_sep_dw'].reshape(9, Cout)
    pw_sep, sh_sep = _fold(p['aspp_sep_pw'], p['aspp_sep_bn'])
    w_b1, sh_b1 = _fold(p['block1_w'], p['block1_bn'])
    dw_b2 = p['block2_dw'].reshape(9, Cout + HIGHRES_OUT)
    dw_b2a, dw_b2b = dw_b2[:, :Cout], dw_b2[:, Cout:]          # aspp / highres parts
    pw_b2, sh_b2 = _fold(p['block2_pw'], p['block2_bn'])
    pw_b2a, pw_b2b = pw_b2[:Cout, :], pw_b2[Cout:, :]

    # Bilinear upsample (align_corners=True) as one Kronecker interpolation
    # matrix: y_flat = U @ x_flat with U = kron(Mh, Mw), shape (Ho*Wo, H*W).
    u = jnp.asarray(
        np.kron(_bilinear_matrix_ac(Ho, H), _bilinear_matrix_ac(Wo, W)),
        dtype=jnp.bfloat16)

    x_low_fl = x_low.reshape(N, M, Cin)       # flat view for 1x1 / pooling
    x_high_fl = x_high.reshape(N, M2, Chr)    # flat view for block1

    kernel = _make_decoder_kernel(H, W, Cout, Ho, Wo, tuple(atrous_rates))

    in_specs = [
        pl.BlockSpec((1, H, W, Cin), lambda n: (n, 0, 0, 0)),   # x_low spatial
        pl.BlockSpec((1, M, Cin), lambda n: (n, 0, 0)),         # x_low flat
        pl.BlockSpec((1, M2, Chr), lambda n: (n, 0, 0)),        # x_high flat
        _bcast_spec((M2, M)),                                   # upsample matrix
        _bcast_spec((Cin, Cout)),                               # w_b0
        _bcast_spec((3, 9, Cin)),                               # dw_aspp
        _bcast_spec((3, Cin, Cout)),                            # pw_aspp
        _bcast_spec((4, Cout)),                                 # sh_br
        _bcast_spec((Cin, Cout)),                               # w_pool
        _bcast_spec((1, Cout)),                                 # sh_pool
        _bcast_spec((5 * Cout, Cout)),                          # w_proj
        _bcast_spec((1, Cout)),                                 # sh_proj
        _bcast_spec((9, Cout)),                                 # dw_sep
        _bcast_spec((Cout, Cout)),                              # pw_sep
        _bcast_spec((1, Cout)),                                 # sh_sep
        _bcast_spec((Chr, HIGHRES_OUT)),                        # w_b1
        _bcast_spec((1, HIGHRES_OUT)),                          # sh_b1
        _bcast_spec((9, Cout)),                                 # dw_b2a
        _bcast_spec((9, HIGHRES_OUT)),                          # dw_b2b
        _bcast_spec((Cout, Cout)),                              # pw_b2a
        _bcast_spec((HIGHRES_OUT, Cout)),                       # pw_b2b
        _bcast_spec((1, Cout)),                                 # sh_b2
    ]
    scratch_shapes = [
        pltpu.VMEM((H, W, Cin), jnp.float32),                   # branch dw acc
        pltpu.VMEM((M, Cin), jnp.float32),                      # branch dw flat
        pltpu.VMEM((H, W, Cout), jnp.float32),                  # proj spatial
        pltpu.VMEM((H, W, Cout), jnp.float32),                  # sep dw acc
        pltpu.VMEM((M, Cout), jnp.float32),                     # sep dw flat
        pltpu.VMEM((Ho, Wo, Cout), jnp.float32),                # aspp_up spatial
        pltpu.VMEM((Ho, Wo, HIGHRES_OUT), jnp.float32),         # hr spatial
        pltpu.VMEM((Ho, Wo, Cout), jnp.float32),                # block2 dw acc (aspp)
        pltpu.VMEM((Ho, Wo, HIGHRES_OUT), jnp.float32),         # block2 dw acc (hr)
        pltpu.VMEM((M2, Cout), jnp.float32),                    # block2 dw flat (aspp)
        pltpu.VMEM((M2, HIGHRES_OUT), jnp.float32),             # block2 dw flat (hr)
    ]

    out_flat = pl.pallas_call(
        kernel,
        out_shape=jax.ShapeDtypeStruct((N, M2, Cout), jnp.float32),
        grid=(N,),
        in_specs=in_specs,
        out_specs=pl.BlockSpec((1, M2, Cout), lambda n: (n, 0, 0)),
        scratch_shapes=scratch_shapes,
        compiler_params=pltpu.CompilerParams(
            dimension_semantics=("parallel",)),
    )(x_low, x_low_fl, x_high_fl, u,
      w_b0, dw_aspp, pw_aspp, sh_br, w_pool, sh_pool, w_proj, sh_proj,
      dw_sep, pw_sep, sh_sep, w_b1, sh_b1,
      dw_b2a, dw_b2b, pw_b2a, pw_b2b, sh_b2)

    out = out_flat.reshape(N, Ho, Wo, Cout)
    return jnp.transpose(out, (0, 3, 1, 2))                    # NHWC -> NCHW


# ----------------------------------------------------------------------------
if __name__ == "__main__":
    key = jax.random.PRNGKey(0)
    k_params, *k_feats = jax.random.split(key, 6)

    encoder_channels = (3, 8, 16, 24, 32)
    out_channels = 32
    params = init_params(k_params, encoder_channels, out_channels)

    # features[-4] is the high-res skip (stride 4), features[-1] the deepest
    # (stride 16) map: 4x spatial ratio matches output_stride=16.
    features = [
        jax.random.normal(k_feats[0], (2, 3, 32, 32), jnp.float32),   # unused
        jax.random.normal(k_feats[1], (2, 8, 16, 16), jnp.float32),   # features[-4]
        jax.random.normal(k_feats[2], (2, 16, 8, 8), jnp.float32),    # unused
        jax.random.normal(k_feats[3], (2, 24, 8, 8), jnp.float32),    # unused
        jax.random.normal(k_feats[4], (2, 32, 4, 4), jnp.float32),    # features[-1]
    ]

    out = deeplabv3plus_decoder(features, params, output_stride=16)
    out = jax.block_until_ready(out)
    assert out.shape == (2, out_channels, 16, 16), out.shape
    assert bool(jnp.all(jnp.isfinite(out)))
    print("KERNEL_OK")
</pallas_src>

<mosaic_0001>
module attributes {stable_mosaic.version = 11 : i64} {
  func.func @kernel(%arg0: i32, %arg1: memref<1x4x4x32xf32, #tpu.memory_space<vmem>>, %arg2: memref<1x16x32xf32, #tpu.memory_space<vmem>>, %arg3: memref<1x256x8xf32, #tpu.memory_space<vmem>>, %arg4: memref<256x16xbf16, #tpu.memory_space<vmem>>, %arg5: memref<32x32xbf16, #tpu.memory_space<vmem>>, %arg6: memref<3x9x32xf32, #tpu.memory_space<vmem>>, %arg7: memref<3x32x32xbf16, #tpu.memory_space<vmem>>, %arg8: memref<4x32xf32, #tpu.memory_space<vmem>>, %arg9: memref<32x32xbf16, #tpu.memory_space<vmem>>, %arg10: memref<1x32xf32, #tpu.memory_space<vmem>>, %arg11: memref<160x32xbf16, #tpu.memory_space<vmem>>, %arg12: memref<1x32xf32, #tpu.memory_space<vmem>>, %arg13: memref<9x32xf32, #tpu.memory_space<vmem>>, %arg14: memref<32x32xbf16, #tpu.memory_space<vmem>>, %arg15: memref<1x32xf32, #tpu.memory_space<vmem>>, %arg16: memref<8x48xbf16, #tpu.memory_space<vmem>>, %arg17: memref<1x48xf32, #tpu.memory_space<vmem>>, %arg18: memref<9x32xf32, #tpu.memory_space<vmem>>, %arg19: memref<9x48xf32, #tpu.memory_space<vmem>>, %arg20: memref<32x32xbf16, #tpu.memory_space<vmem>>, %arg21: memref<48x32xbf16, #tpu.memory_space<vmem>>, %arg22: memref<1x32xf32, #tpu.memory_space<vmem>>, %arg23: memref<1x256x32xf32, #tpu.memory_space<vmem>>, %arg24: memref<4x4x32xf32, #tpu.memory_space<vmem>>, %arg25: memref<16x32xf32, #tpu.memory_space<vmem>>, %arg26: memref<4x4x32xf32, #tpu.memory_space<vmem>>, %arg27: memref<4x4x32xf32, #tpu.memory_space<vmem>>, %arg28: memref<16x32xf32, #tpu.memory_space<vmem>>, %arg29: memref<16x16x32xf32, #tpu.memory_space<vmem>>, %arg30: memref<16x16x48xf32, #tpu.memory_space<vmem>>, %arg31: memref<16x16x32xf32, #tpu.memory_space<vmem>>, %arg32: memref<16x16x48xf32, #tpu.memory_space<vmem>>, %arg33: memref<256x32xf32, #tpu.memory_space<vmem>>, %arg34: memref<256x48xf32, #tpu.memory_space<vmem>>) attributes {dimension_semantics = [#tpu.dimension_semantics<parallel>], iteration_bounds = array<i64: 2>, scalar_prefetch = 0 : i64, scratch_operands = 11 : i64, tpu.core_type = #tpu.core_type<tc>, window_params = [{transform_indices = @transform_0, window_bounds = array<i64: 1, 4, 4, 32>}, {transform_indices = @transform_1, window_bounds = array<i64: 1, 16, 32>}, {transform_indices = @transform_2, window_bounds = array<i64: 1, 256, 8>}, {pipeline_mode = #tpu.pipeline_mode<synchronous>, transform_indices = @transform_3, window_bounds = array<i64: 256, 16>}, {pipeline_mode = #tpu.pipeline_mode<synchronous>, transform_indices = @transform_4, window_bounds = array<i64: 32, 32>}, {pipeline_mode = #tpu.pipeline_mode<synchronous>, transform_indices = @transform_5, window_bounds = array<i64: 3, 9, 32>}, {pipeline_mode = #tpu.pipeline_mode<synchronous>, transform_indices = @transform_6, window_bounds = array<i64: 3, 32, 32>}, {pipeline_mode = #tpu.pipeline_mode<synchronous>, transform_indices = @transform_7, window_bounds = array<i64: 4, 32>}, {pipeline_mode = #tpu.pipeline_mode<synchronous>, transform_indices = @transform_8, window_bounds = array<i64: 32, 32>}, {pipeline_mode = #tpu.pipeline_mode<synchronous>, transform_indices = @transform_9, window_bounds = array<i64: 1, 32>}, {pipeline_mode = #tpu.pipeline_mode<synchronous>, transform_indices = @transform_10, window_bounds = array<i64: 160, 32>}, {pipeline_mode = #tpu.pipeline_mode<synchronous>, transform_indices = @transform_11, window_bounds = array<i64: 1, 32>}, {pipeline_mode = #tpu.pipeline_mode<synchronous>, transform_indices = @transform_12, window_bounds = array<i64: 9, 32>}, {pipeline_mode = #tpu.pipeline_mode<synchronous>, transform_indices = @transform_13, window_bounds = array<i64: 32, 32>}, {pipeline_mode = #tpu.pipeline_mode<synchronous>, transform_indices = @transform_14, window_bounds = array<i64: 1, 32>}, {pipeline_mode = #tpu.pipeline_mode<synchronous>, transform_indices = @transform_15, window_bounds = array<i64: 8, 48>}, {pipeline_mode = #tpu.pipeline_mode<synchronous>, transform_indices = @transform_16, window_bounds = array<i64: 1, 48>}, {pipeline_mode = #tpu.pipeline_mode<synchronous>, transform_indices = @transform_17, window_bounds = array<i64: 9, 32>}, {pipeline_mode = #tpu.pipeline_mode<synchronous>, transform_indices = @transform_18, window_bounds = array<i64: 9, 48>}, {pipeline_mode = #tpu.pipeline_mode<synchronous>, transform_indices = @transform_19, window_bounds = array<i64: 32, 32>}, {pipeline_mode = #tpu.pipeline_mode<synchronous>, transform_indices = @transform_20, window_bounds = array<i64: 48, 32>}, {pipeline_mode = #tpu.pipeline_mode<synchronous>, transform_indices = @transform_21, window_bounds = array<i64: 1, 32>}, {transform_indices = @transform_22, window_bounds = array<i64: 1, 256, 32>}]} {
    %c0 = arith.constant 0 : index
    %c0_0 = arith.constant 0 : index
    %c0_1 = arith.constant 0 : index
    %0 = vector.load %arg2[%c0, %c0_0, %c0_1] : memref<1x16x32xf32, #tpu.memory_space<vmem>>, vector<1x16x32xf32>
    %1 = vector.shape_cast %0 : vector<1x16x32xf32> to vector<16x32xf32>
    %c0_2 = arith.constant 0 : index
    %c0_3 = arith.constant 0 : index
    %2 = vector.load %arg5[%c0_2, %c0_3] : memref<32x32xbf16, #tpu.memory_space<vmem>>, vector<32x32xbf16>
    %3 = arith.truncf %1 : vector<16x32xf32> to vector<16x32xbf16>
    %cst = arith.constant dense<0.000000e+00> : vector<16x32xf32>
    %4 = tpu.matmul %3, %2, %cst {dimension_numbers = #tpu.dot_dimension_numbers<[1], [0], [0], [1], [0, 0, 1, 1], [], []>} : vector<16x32xbf16>, vector<32x32xbf16>, vector<16x32xf32> -> vector<16x32xf32>
    %c0_4 = arith.constant 0 : index
    %c0_5 = arith.constant 0 : index
    %5 = vector.load %arg8[%c0_4, %c0_5] : memref<4x32xf32, #tpu.memory_space<vmem>>, vector<1x32xf32>
    %6 = vector.broadcast %5 : vector<1x32xf32> to vector<16x32xf32>
    %7 = arith.addf %4, %6 : vector<16x32xf32>
    %cst_6 = arith.constant 0.000000e+00 : f32
    %8 = vector.broadcast %cst_6 : f32 to vector<16x32xf32>
    %9 = arith.maximumf %7, %8 : vector<16x32xf32>
    %10 = arith.truncf %9 : vector<16x32xf32> to vector<16x32xbf16>
    %c0_7 = arith.constant 0 : index
    %c0_8 = arith.constant 0 : index
    %11 = vector.load %arg11[%c0_7, %c0_8] : memref<160x32xbf16, #tpu.memory_space<vmem>>, vector<32x32xbf16>
    %cst_9 = arith.constant dense<0.000000e+00> : vector<16x32xf32>
    %12 = tpu.matmul %10, %11, %cst_9 {dimension_numbers = #tpu.dot_dimension_numbers<[1], [0], [0], [1], [0, 0, 1, 1], [], []>} : vector<16x32xbf16>, vector<32x32xbf16>, vector<16x32xf32> -> vector<16x32xf32>
    %cst_10 = arith.constant dense<0.000000e+00> : vector<32xf32>
    %13 = vector.multi_reduction <add>, %1, %cst_10 [0] : vector<16x32xf32> to vector<32xf32>
    %14 = vector.shape_cast %13 : vector<32xf32> to vector<1x32xf32>
    %cst_11 = arith.constant 6.250000e-02 : f32
    %15 = vector.broadcast %cst_11 : f32 to vector<1x32xf32>
    %16 = arith.mulf %14, %15 : vector<1x32xf32>
    %c0_12 = arith.constant 0 : index
    %c0_13 = arith.constant 0 : index
    %17 = vector.load %arg9[%c0_12, %c0_13] : memref<32x32xbf16, #tpu.memory_space<vmem>>, vector<32x32xbf16>
    %18 = arith.truncf %16 : vector<1x32xf32> to vector<1x32xbf16>
    %cst_14 = arith.constant dense<0.000000e+00> : vector<1x32xf32>
    %19 = tpu.matmul %18, %17, %cst_14 {dimension_numbers = #tpu.dot_dimension_numbers<[1], [0], [0], [1], [0, 0, 1, 1], [], []>} : vector<1x32xbf16>, vector<32x32xbf16>, vector<1x32xf32> -> vector<1x32xf32>
    %c0_15 = arith.constant 0 : index
    %c0_16 = arith.constant 0 : index
    %20 = vector.load %arg10[%c0_15, %c0_16] : memref<1x32xf32, #tpu.memory_space<vmem>>, vector<1x32xf32>
    %21 = arith.addf %19, %20 : vector<1x32xf32>
    %cst_17 = arith.constant 0.000000e+00 : f32
    %22 = vector.broadcast %cst_17 : f32 to vector<1x32xf32>
    %23 = arith.maximumf %21, %22 : vector<1x32xf32>
    %24 = arith.truncf %23 : vector<1x32xf32> to vector<1x32xbf16>
    %c128 = arith.constant 128 : index
    %c0_18 = arith.constant 0 : index
    %25 = vector.load %arg11[%c128, %c0_18] : memref<160x32xbf16, #tpu.memory_space<vmem>>, vector<32x32xbf16>
    %cst_19 = arith.constant dense<0.000000e+00> : vector<1x32xf32>
    %26 = tpu.matmul %24, %25, %cst_19 {dimension_numbers = #tpu.dot_dimension_numbers<[1], [0], [0], [1], [0, 0, 1, 1], [], []>} : vector<1x32xbf16>, vector<32x32xbf16>, vector<1x32xf32> -> vector<1x32xf32>
    %27 = vector.broadcast %26 : vector<1x32xf32> to vector<16x32xf32>
    %28 = arith.addf %12, %27 : vector<16x32xf32>
    %c0_20 = arith.constant 0 : index
    %c0_21 = arith.constant 0 : index
    %c0_22 = arith.constant 0 : index
    %29 = vector.load %arg6[%c0_20, %c0_21, %c0_22] : memref<3x9x32xf32, #tpu.memory_space<vmem>>, vector<1x9x32xf32>
    %30 = vector.shape_cast %29 : vector<1x9x32xf32> to vector<9x32xf32>
    %cst_23 = arith.constant 0.000000e+00 : f32
    %31 = vector.broadcast %cst_23 : f32 to vector<4x4x32xf32>
    %c0_24 = arith.constant 0 : index
    %c0_25 = arith.constant 0 : index
    %c0_26 = arith.constant 0 : index
    %32 = vector.load %arg24[%c0_24, %c0_25, %c0_26] : memref<4x4x32xf32, #tpu.memory_space<vmem>>, vector<4x4x32xf32>
    tpu.vector_store %arg24[%c0_24, %c0_25, %c0_26], %31 {strides = array<i32>} : memref<4x4x32xf32, #tpu.memory_space<vmem>>, vector<4x4x32xf32>,
    %c0_27 = arith.constant 0 : index
    %c0_28 = arith.constant 0 : index
    %c0_29 = arith.constant 0 : index
    %c0_30 = arith.constant 0 : index
    %33 = vector.load %arg1[%c0_27, %c0_28, %c0_29, %c0_30] : memref<1x4x4x32xf32, #tpu.memory_space<vmem>>, vector<1x4x4x32xf32>
    %34 = vector.shape_cast %33 : vector<1x4x4x32xf32> to vector<4x4x32xf32>
    %35 = vector.extract_strided_slice %30 {offsets = [4, 0], sizes = [1, 32], strides = [1, 1]} : vector<9x32xf32> to vector<1x32xf32>
    %c0_31 = arith.constant 0 : index
    %c0_32 = arith.constant 0 : index
    %c0_33 = arith.constant 0 : index
    %36 = vector.load %arg24[%c0_31, %c0_32, %c0_33] : memref<4x4x32xf32, #tpu.memory_space<vmem>>, vector<4x4x32xf32>
    %37 = vector.shape_cast %35 : vector<1x32xf32> to vector<1x1x32xf32>
    %38 = vector.broadcast %37 : vector<1x1x32xf32> to vector<4x4x32xf32>
    %39 = arith.mulf %34, %38 : vector<4x4x32xf32>
    %40 = arith.addf %36, %39 : vector<4x4x32xf32>
    %c0_34 = arith.constant 0 : index
    %c0_35 = arith.constant 0 : index
    %c0_36 = arith.constant 0 : index
    %41 = vector.load %arg24[%c0_34, %c0_35, %c0_36] : memref<4x4x32xf32, #tpu.memory_space<vmem>>, vector<4x4x32xf32>
    tpu.vector_store %arg24[%c0_34, %c0_35, %c0_36], %40 {strides = array<i32>} : memref<4x4x32xf32, #tpu.memory_space<vmem>>, vector<4x4x32xf32>,
    %c0_37 = arith.constant 0 : index
    %c0_38 = arith.constant 0 : index
    %c0_39 = arith.constant 0 : index
    %42 = vector.load %arg24[%c0_37, %c0_38, %c0_39] : memref<4x4x32xf32, #tpu.memory_space<vmem>>, vector<1x4x32xf32>
    %43 = vector.shape_cast %42 : vector<1x4x32xf32> to vector<4x32xf32>
    %c0_40 = arith.constant 0 : index
    %c0_41 = arith.constant 0 : index
    %44 = vector.load %arg25[%c0_40, %c0_41] : memref<16x32xf32, #tpu.memory_space<vmem>>, vector<4x32xf32>
    tpu.vector_store %arg25[%c0_40, %c0_41], %43 {strides = array<i32>} : memref<16x32xf32, #tpu.memory_space<vmem>>, vector<4x32xf32>,
    %c1 = arith.constant 1 : index
    %c0_42 = arith.constant 0 : index
    %c0_43 = arith.constant 0 : index
    %45 = vector.load %arg24[%c1, %c0_42, %c0_43] : memref<4x4x32xf32, #tpu.memory_space<vmem>>, vector<1x4x32xf32>
    %46 = vector.shape_cast %45 : vector<1x4x32xf32> to vector<4x32xf32>
    %c4 = arith.constant 4 : index
    %c0_44 = arith.constant 0 : index
    %47 = vector.load %arg25[%c4, %c0_44] : memref<16x32xf32, #tpu.memory_space<vmem>>, vector<4x32xf32>
    tpu.vector_store %arg25[%c4, %c0_44], %46 {strides = array<i32>} : memref<16x32xf32, #tpu.memory_space<vmem>>, vector<4x32xf32>,
    %c2 = arith.constant 2 : index
    %c0_45 = arith.constant 0 : index
    %c0_46 = arith.constant 0 : index
    %48 = vector.load %arg24[%c2, %c0_45, %c0_46] : memref<4x4x32xf32, #tpu.memory_space<vmem>>, vector<1x4x32xf32>
    %49 = vector.shape_cast %48 : vector<1x4x32xf32> to vector<4x32xf32>
    %c8 = arith.constant 8 : index
    %c0_47 = arith.constant 0 : index
    %50 = vector.load %arg25[%c8, %c0_47] : memref<16x32xf32, #tpu.memory_space<vmem>>, vector<4x32xf32>
    tpu.vector_store %arg25[%c8, %c0_47], %49 {strides = array<i32>} : memref<16x32xf32, #tpu.memory_space<vmem>>, vector<4x32xf32>,
    %c3 = arith.constant 3 : index
    %c0_48 = arith.constant 0 : index
    %c0_49 = arith.constant 0 : index
    %51 = vector.load %arg24[%c3, %c0_48, %c0_49] : memref<4x4x32xf32, #tpu.memory_space<vmem>>, vector<1x4x32xf32>
    %52 = vector.shape_cast %51 : vector<1x4x32xf32> to vector<4x32xf32>
    %c12 = arith.constant 12 : index
    %c0_50 = arith.constant 0 : index
    %53 = vector.load %arg25[%c12, %c0_50] : memref<16x32xf32, #tpu.memory_space<vmem>>, vector<4x32xf32>
    tpu.vector_store %arg25[%c12, %c0_50], %52 {strides = array<i32>} : memref<16x32xf32, #tpu.memory_space<vmem>>, vector<4x32xf32>,
    %c0_51 = arith.constant 0 : index
    %c0_52 = arith.constant 0 : index
    %54 = vector.load %arg25[%c0_51, %c0_52] : memref<16x32xf32, #tpu.memory_space<vmem>>, vector<16x32xf32>
    %c0_53 = arith.constant 0 : index
    %c0_54 = arith.constant 0 : index
    %c0_55 = arith.constant 0 : index
    %55 = vector.load %arg7[%c0_53, %c0_54, %c0_55] : memref<3x32x32xbf16, #tpu.memory_space<vmem>>, vector<1x32x32xbf16>
    %56 = vector.shape_cast %55 : vector<1x32x32xbf16> to vector<32x32xbf16>
    %57 = arith.truncf %54 : vector<16x32xf32> to vector<16x32xbf16>
    %cst_56 = arith.constant dense<0.000000e+00> : vector<16x32xf32>
    %58 = tpu.matmul %57, %56, %cst_56 {dimension_numbers = #tpu.dot_dimension_numbers<[1], [0], [0], [1], [0, 0, 1, 1], [], []>} : vector<16x32xbf16>, vector<32x32xbf16>, vector<16x32xf32> -> vector<16x32xf32>
    %c1_57 = arith.constant 1 : index
    %c0_58 = arith.constant 0 : index
    %59 = vector.load %arg8[%c1_57, %c0_58] : memref<4x32xf32, #tpu.memory_space<vmem>>, vector<1x32xf32>
    %60 = vector.broadcast %59 : vector<1x32xf32> to vector<16x32xf32>
    %61 = arith.addf %58, %60 : vector<16x32xf32>
    %cst_59 = arith.constant 0.000000e+00 : f32
    %62 = vector.broadcast %cst_59 : f32 to vector<16x32xf32>
    %63 = arith.maximumf %61, %62 : vector<16x32xf32>
    %64 = arith.truncf %63 : vector<16x32xf32> to vector<16x32xbf16>
    %c32 = arith.constant 32 : index
    %c0_60 = arith.constant 0 : index
    %65 = vector.load %arg11[%c32, %c0_60] : memref<160x32xbf16, #tpu.memory_space<vmem>>, vector<32x32xbf16>
    %cst_61 = arith.constant dense<0.000000e+00> : vector<16x32xf32>
    %66 = tpu.matmul %64, %65, %cst_61 {dimension_numbers = #tpu.dot_dimension_numbers<[1], [0], [0], [1], [0, 0, 1, 1], [], []>} : vector<16x32xbf16>, vector<32x32xbf16>, vector<16x32xf32> -> vector<16x32xf32>
    %67 = arith.addf %28, %66 : vector<16x32xf32>
    %c1_62 = arith.constant 1 : index
    %c0_63 = arith.constant 0 : index
    %c0_64 = arith.constant 0 : index
    %68 = vector.load %arg6[%c1_62, %c0_63, %c0_64] : memref<3x9x32xf32, #tpu.memory_space<vmem>>, vector<1x9x32xf32>
    %69 = vector.shape_cast %68 : vector<1x9x32xf32> to vector<9x32xf32>
    %cst_65 = arith.constant 0.000000e+00 : f32
    %70 = vector.broadcast %cst_65 : f32 to vector<4x4x32xf32>
    %c0_66 = arith.constant 0 : index
    %c0_67 = arith.constant 0 : index
    %c0_68 = arith.constant 0 : index
    %71 = vector.load %arg24[%c0_66, %c0_67, %c0_68] : memref<4x4x32xf32, #tpu.memory_space<vmem>>, vector<4x4x32xf32>
    tpu.vector_store %arg24[%c0_66, %c0_67, %c0_68], %70 {strides = array<i32>} : memref<4x4x32xf32, #tpu.memory_space<vmem>>, vector<4x4x32xf32>,
    %c0_69 = arith.constant 0 : index
    %c0_70 = arith.constant 0 : index
    %c0_71 = arith.constant 0 : index
    %c0_72 = arith.constant 0 : index
    %72 = vector.load %arg1[%c0_69, %c0_70, %c0_71, %c0_72] : memref<1x4x4x32xf32, #tpu.memory_space<vmem>>, vector<1x4x4x32xf32>
    %73 = vector.shape_cast %72 : vector<1x4x4x32xf32> to vector<4x4x32xf32>
    %74 = vector.extract_strided_slice %69 {offsets = [4, 0], sizes = [1, 32], strides = [1, 1]} : vector<9x32xf32> to vector<1x32xf32>
    %c0_73 = arith.constant 0 : index
    %c0_74 = arith.constant 0 : index
    %c0_75 = arith.constant 0 : index
    %75 = vector.load %arg24[%c0_73, %c0_74, %c0_75] : memref<4x4x32xf32, #tpu.memory_space<vmem>>, vector<4x4x32xf32>
    %76 = vector.shape_cast %74 : vector<1x32xf32> to vector<1x1x32xf32>
    %77 = vector.broadcast %76 : vector<1x1x32xf32> to vector<4x4x32xf32>
    %78 = arith.mulf %73, %77 : vector<4x4x32xf32>
    %79 = arith.addf %75, %78 : vector<4x4x32xf32>
    %c0_76 = arith.constant 0 : index
    %c0_77 = arith.constant 0 : index
    %c0_78 = arith.constant 0 : index
    %80 = vector.load %arg24[%c0_76, %c0_77, %c0_78] : memref<4x4x32xf32, #tpu.memory_space<vmem>>, vector<4x4x32xf32>
    tpu.vector_store %arg24[%c0_76, %c0_77, %c0_78], %79 {strides = array<i32>} : memref<4x4x32xf32, #tpu.memory_space<vmem>>, vector<4x4x32xf32>,
    %c0_79 = arith.constant 0 : index
    %c0_80 = arith.constant 0 : index
    %c0_81 = arith.constant 0 : index
    %81 = vector.load %arg24[%c0_79, %c0_80, %c0_81] : memref<4x4x32xf32, #tpu.memory_space<vmem>>, vector<1x4x32xf32>
    %82 = vector.shape_cast %81 : vector<1x4x32xf32> to vector<4x32xf32>
    %c0_82 = arith.constant 0 : index
    %c0_83 = arith.constant 0 : index
    %83 = vector.load %arg25[%c0_82, %c0_83] : memref<16x32xf32, #tpu.memory_space<vmem>>, vector<4x32xf32>
    tpu.vector_store %arg25[%c0_82, %c0_83], %82 {strides = array<i32>} : memref<16x32xf32, #tpu.memory_space<vmem>>, vector<4x32xf32>,
    %c1_84 = arith.constant 1 : index
    %c0_85 = arith.constant 0 : index
    %c0_86 = arith.constant 0 : index
    %84 = vector.load %arg24[%c1_84, %c0_85, %c0_86] : memref<4x4x32xf32, #tpu.memory_space<vmem>>, vector<1x4x32xf32>
    %85 = vector.shape_cast %84 : vector<1x4x32xf32> to vector<4x32xf32>
    %c4_87 = arith.constant 4 : index
    %c0_88 = arith.constant 0 : index
    %86 = vector.load %arg25[%c4_87, %c0_88] : memref<16x32xf32, #tpu.memory_space<vmem>>, vector<4x32xf32>
    tpu.vector_store %arg25[%c4_87, %c0_88], %85 {strides = array<i32>} : memref<16x32xf32, #tpu.memory_space<vmem>>, vector<4x32xf32>,
    %c2_89 = arith.constant 2 : index
    %c0_90 = arith.constant 0 : index
    %c0_91 = arith.constant 0 : index
    %87 = vector.load %arg24[%c2_89, %c0_90, %c0_91] : memref<4x4x32xf32, #tpu.memory_space<vmem>>, vector<1x4x32xf32>
    %88 = vector.shape_cast %87 : vector<1x4x32xf32> to vector<4x32xf32>
    %c8_92 = arith.constant 8 : index
    %c0_93 = arith.constant 0 : index
    %89 = vector.load %arg25[%c8_92, %c0_93] : memref<16x32xf32, #tpu.memory_space<vmem>>, vector<4x32xf32>
    tpu.vector_store %arg25[%c8_92, %c0_93], %88 {strides = array<i32>} : memref<16x32xf32, #tpu.memory_space<vmem>>, vector<4x32xf32>,
    %c3_94 = arith.constant 3 : index
    %c0_95 = arith.constant 0 : index
    %c0_96 = arith.constant 0 : index
    %90 = vector.load %arg24[%c3_94, %c0_95, %c0_96] : memref<4x4x32xf32, #tpu.memory_space<vmem>>, vector<1x4x32xf32>
    %91 = vector.shape_cast %90 : vector<1x4x32xf32> to vector<4x32xf32>
    %c12_97 = arith.constant 12 : index
    %c0_98 = arith.constant 0 : index
    %92 = vector.load %arg25[%c12_97, %c0_98] : memref<16x32xf32, #tpu.memory_space<vmem>>, vector<4x32xf32>
    tpu.vector_store %arg25[%c12_97, %c0_98], %91 {strides = array<i32>} : memref<16x32xf32, #tpu.memory_space<vmem>>, vector<4x32xf32>,
    %c0_99 = arith.constant 0 : index
    %c0_100 = arith.constant 0 : index
    %93 = vector.load %arg25[%c0_99, %c0_100] : memref<16x32xf32, #tpu.memory_space<vmem>>, vector<16x32xf32>
    %c1_101 = arith.constant 1 : index
    %c0_102 = arith.constant 0 : index
    %c0_103 = arith.constant 0 : index
    %94 = vector.load %arg7[%c1_101, %c0_102, %c0_103] : memref<3x32x32xbf16, #tpu.memory_space<vmem>>, vector<1x32x32xbf16>
    %95 = vector.shape_cast %94 : vector<1x32x32xbf16> to vector<32x32xbf16>
    %96 = arith.truncf %93 : vector<16x32xf32> to vector<16x32xbf16>
    %cst_104 = arith.constant dense<0.000000e+00> : vector<16x32xf32>
    %97 = tpu.matmul %96, %95, %cst_104 {dimension_numbers = #tpu.dot_dimension_numbers<[1], [0], [0], [1], [0, 0, 1, 1], [], []>} : vector<16x32xbf16>, vector<32x32xbf16>, vector<16x32xf32> -> vector<16x32xf32>
    %c2_105 = arith.constant 2 : index
    %c0_106 = arith.constant 0 : index
    %98 = vector.load %arg8[%c2_105, %c0_106] : memref<4x32xf32, #tpu.memory_space<vmem>>, vector<1x32xf32>
    %99 = vector.broadcast %98 : vector<1x32xf32> to vector<16x32xf32>
    %100 = arith.addf %97, %99 : vector<16x32xf32>
    %cst_107 = arith.constant 0.000000e+00 : f32
    %101 = vector.broadcast %cst_107 : f32 to vector<16x32xf32>
    %102 = arith.maximumf %100, %101 : vector<16x32xf32>
    %103 = arith.truncf %102 : vector<16x32xf32> to vector<16x32xbf16>
    %c64 = arith.constant 64 : index
    %c0_108 = arith.constant 0 : index
    %104 = vector.load %arg11[%c64, %c0_108] : memref<160x32xbf16, #tpu.memory_space<vmem>>, vector<32x32xbf16>
    %cst_109 = arith.constant dense<0.000000e+00> : vector<16x32xf32>
    %105 = tpu.matmul %103, %104, %cst_109 {dimension_numbers = #tpu.dot_dimension_numbers<[1], [0], [0], [1], [0, 0, 1, 1], [], []>} : vector<16x32xbf16>, vector<32x32xbf16>, vector<16x32xf32> -> vector<16x32xf32>
    %106 = arith.addf %67, %105 : vector<16x32xf32>
    %c2_110 = arith.constant 2 : index
    %c0_111 = arith.constant 0 : index
    %c0_112 = arith.constant 0 : index
    %107 = vector.load %arg6[%c2_110, %c0_111, %c0_112] : memref<3x9x32xf32, #tpu.memory_space<vmem>>, vector<1x9x32xf32>
    %108 = vector.shape_cast %107 : vector<1x9x32xf32> to vector<9x32xf32>
    %cst_113 = arith.constant 0.000000e+00 : f32
    %109 = vector.broadcast %cst_113 : f32 to vector<4x4x32xf32>
    %c0_114 = arith.constant 0 : index
    %c0_115 = arith.constant 0 : index
    %c0_116 = arith.constant 0 : index
    %110 = vector.load %arg24[%c0_114, %c0_115, %c0_116] : memref<4x4x32xf32, #tpu.memory_space<vmem>>, vector<4x4x32xf32>
    tpu.vector_store %arg24[%c0_114, %c0_115, %c0_116], %109 {strides = array<i32>} : memref<4x4x32xf32, #tpu.memory_space<vmem>>, vector<4x4x32xf32>,
    %c0_117 = arith.constant 0 : index
    %c0_118 = arith.constant 0 : index
    %c0_119 = arith.constant 0 : index
    %c0_120 = arith.constant 0 : index
    %111 = vector.load %arg1[%c0_117, %c0_118, %c0_119, %c0_120] : memref<1x4x4x32xf32, #tpu.memory_space<vmem>>, vector<1x4x4x32xf32>
    %112 = vector.shape_cast %111 : vector<1x4x4x32xf32> to vector<4x4x32xf32>
    %113 = vector.extract_strided_slice %108 {offsets = [4, 0], sizes = [1, 32], strides = [1, 1]} : vector<9x32xf32> to vector<1x32xf32>
    %c0_121 = arith.constant 0 : index
    %c0_122 = arith.constant 0 : index
    %c0_123 = arith.constant 0 : index
    %114 = vector.load %arg24[%c0_121, %c0_122, %c0_123] : memref<4x4x32xf32, #tpu.memory_space<vmem>>, vector<4x4x32xf32>
    %115 = vector.shape_cast %113 : vector<1x32xf32> to vector<1x1x32xf32>
    %116 = vector.broadcast %115 : vector<1x1x32xf32> to vector<4x4x32xf32>
    %117 = arith.mulf %112, %116 : vector<4x4x32xf32>
    %118 = arith.addf %114, %117 : vector<4x4x32xf32>
    %c0_124 = arith.constant 0 : index
    %c0_125 = arith.constant 0 : index
    %c0_126 = arith.constant 0 : index
    %119 = vector.load %arg24[%c0_124, %c0_125, %c0_126] : memref<4x4x32xf32, #tpu.memory_space<vmem>>, vector<4x4x32xf32>
    tpu.vector_store %arg24[%c0_124, %c0_125, %c0_126], %118 {strides = array<i32>} : memref<4x4x32xf32, #tpu.memory_space<vmem>>, vector<4x4x32xf32>,
    %c0_127 = arith.constant 0 : index
    %c0_128 = arith.constant 0 : index
    %c0_129 = arith.constant 0 : index
    %120 = vector.load %arg24[%c0_127, %c0_128, %c0_129] : memref<4x4x32xf32, #tpu.memory_space<vmem>>, vector<1x4x32xf32>
    %121 = vector.shape_cast %120 : vector<1x4x32xf32> to vector<4x32xf32>
    %c0_130 = arith.constant 0 : index
    %c0_131 = arith.constant 0 : index
    %122 = vector.load %arg25[%c0_130, %c0_131] : memref<16x32xf32, #tpu.memory_space<vmem>>, vector<4x32xf32>
    tpu.vector_store %arg25[%c0_130, %c0_131], %121 {strides = array<i32>} : memref<16x32xf32, #tpu.memory_space<vmem>>, vector<4x32xf32>,
    %c1_132 = arith.constant 1 : index
    %c0_133 = arith.constant 0 : index
    %c0_134 = arith.constant 0 : index
    %123 = vector.load %arg24[%c1_132, %c0_133, %c0_134] : memref<4x4x32xf32, #tpu.memory_space<vmem>>, vector<1x4x32xf32>
    %124 = vector.shape_cast %123 : vector<1x4x32xf32> to vector<4x32xf32>
    %c4_135 = arith.constant 4 : index
    %c0_136 = arith.constant 0 : index
    %125 = vector.load %arg25[%c4_135, %c0_136] : memref<16x32xf32, #tpu.memory_space<vmem>>, vector<4x32xf32>
    tpu.vector_store %arg25[%c4_135, %c0_136], %124 {strides = array<i32>} : memref<16x32xf32, #tpu.memory_space<vmem>>, vector<4x32xf32>,
    %c2_137 = arith.constant 2 : index
    %c0_138 = arith.constant 0 : index
    %c0_139 = arith.constant 0 : index
    %126 = vector.load %arg24[%c2_137, %c0_138, %c0_139] : memref<4x4x32xf32, #tpu.memory_space<vmem>>, vector<1x4x32xf32>
    %127 = vector.shape_cast %126 : vector<1x4x32xf32> to vector<4x32xf32>
    %c8_140 = arith.constant 8 : index
    %c0_141 = arith.constant 0 : index
    %128 = vector.load %arg25[%c8_140, %c0_141] : memref<16x32xf32, #tpu.memory_space<vmem>>, vector<4x32xf32>
    tpu.vector_store %arg25[%c8_140, %c0_141], %127 {strides = array<i32>} : memref<16x32xf32, #tpu.memory_space<vmem>>, vector<4x32xf32>,
    %c3_142 = arith.constant 3 : index
    %c0_143 = arith.constant 0 : index
    %c0_144 = arith.constant 0 : index
    %129 = vector.load %arg24[%c3_142, %c0_143, %c0_144] : memref<4x4x32xf32, #tpu.memory_space<vmem>>, vector<1x4x32xf32>
    %130 = vector.shape_cast %129 : vector<1x4x32xf32> to vector<4x32xf32>
    %c12_145 = arith.constant 12 : index
    %c0_146 = arith.constant 0 : index
    %131 = vector.load %arg25[%c12_145, %c0_146] : memref<16x32xf32, #tpu.memory_space<vmem>>, vector<4x32xf32>
    tpu.vector_store %arg25[%c12_145, %c0_146], %130 {strides = array<i32>} : memref<16x32xf32, #tpu.memory_space<vmem>>, vector<4x32xf32>,
    %c0_147 = arith.constant 0 : index
    %c0_148 = arith.constant 0 : index
    %132 = vector.load %arg25[%c0_147, %c0_148] : memref<16x32xf32, #tpu.memory_space<vmem>>, vector<16x32xf32>
    %c2_149 = arith.constant 2 : index
    %c0_150 = arith.constant 0 : index
    %c0_151 = arith.constant 0 : index
    %133 = vector.load %arg7[%c2_149, %c0_150, %c0_151] : memref<3x32x32xbf16, #tpu.memory_space<vmem>>, vector<1x32x32xbf16>
    %134 = vector.shape_cast %133 : vector<1x32x32xbf16> to vector<32x32xbf16>
    %135 = arith.truncf %132 : vector<16x32xf32> to vector<16x32xbf16>
    %cst_152 = arith.constant dense<0.000000e+00> : vector<16x32xf32>
    %136 = tpu.matmul %135, %134, %cst_152 {dimension_numbers = #tpu.dot_dimension_numbers<[1], [0], [0], [1], [0, 0, 1, 1], [], []>} : vector<16x32xbf16>, vector<32x32xbf16>, vector<16x32xf32> -> vector<16x32xf32>
    %c3_153 = arith.constant 3 : index
    %c0_154 = arith.constant 0 : index
    %137 = vector.load %arg8[%c3_153, %c0_154] : memref<4x32xf32, #tpu.memory_space<vmem>>, vector<1x32xf32>
    %138 = vector.broadcast %137 : vector<1x32xf32> to vector<16x32xf32>
    %139 = arith.addf %136, %138 : vector<16x32xf32>
    %cst_155 = arith.constant 0.000000e+00 : f32
    %140 = vector.broadcast %cst_155 : f32 to vector<16x32xf32>
    %141 = arith.maximumf %139, %140 : vector<16x32xf32>
    %142 = arith.truncf %141 : vector<16x32xf32> to vector<16x32xbf16>
    %c96 = arith.constant 96 : index
    %c0_156 = arith.constant 0 : index
    %143 = vector.load %arg11[%c96, %c0_156] : memref<160x32xbf16, #tpu.memory_space<vmem>>, vector<32x32xbf16>
    %cst_157 = arith.constant dense<0.000000e+00> : vector<16x32xf32>
    %144 = tpu.matmul %142, %143, %cst_157 {dimension_numbers = #tpu.dot_dimension_numbers<[1], [0], [0], [1], [0, 0, 1, 1], [], []>} : vector<16x32xbf16>, vector<32x32xbf16>, vector<16x32xf32> -> vector<16x32xf32>
    %145 = arith.addf %106, %144 : vector<16x32xf32>
    %c0_158 = arith.constant 0 : index
    %c0_159 = arith.constant 0 : index
    %146 = vector.load %arg12[%c0_158, %c0_159] : memref<1x32xf32, #tpu.memory_space<vmem>>, vector<1x32xf32>
    %147 = vector.broadcast %146 : vector<1x32xf32> to vector<16x32xf32>
    %148 = arith.addf %145, %147 : vector<16x32xf32>
    %cst_160 = arith.constant 0.000000e+00 : f32
    %149 = vector.broadcast %cst_160 : f32 to vector<16x32xf32>
    %150 = arith.maximumf %148, %149 : vector<16x32xf32>
    %151 = vector.extract_strided_slice %150 {offsets = [0, 0], sizes = [4, 32], strides = [1, 1]} : vector<16x32xf32> to vector<4x32xf32>
    %c0_161 = arith.constant 0 : index
    %c0_162 = arith.constant 0 : index
    %c0_163 = arith.constant 0 : index
    %152 = vector.load %arg26[%c0_161, %c0_162, %c0_163] : memref<4x4x32xf32, #tpu.memory_space<vmem>>, vector<1x4x32xf32>
    %153 = vector.shape_cast %152 : vector<1x4x32xf32> to vector<4x32xf32>
    %154 = vector.shape_cast %151 : vector<4x32xf32> to vector<1x4x32xf32>
    tpu.vector_store %arg26[%c0_161, %c0_162, %c0_163], %154 {strides = array<i32>} : memref<4x4x32xf32, #tpu.memory_space<vmem>>, vector<1x4x32xf32>,
    %155 = vector.extract_strided_slice %150 {offsets = [4, 0], sizes = [4, 32], strides = [1, 1]} : vector<16x32xf32> to vector<4x32xf32>
    %c1_164 = arith.constant 1 : index
    %c0_165 = arith.constant 0 : index
    %c0_166 = arith.constant 0 : index
    %156 = vector.load %arg26[%c1_164, %c0_165, %c0_166] : memref<4x4x32xf32, #tpu.memory_space<vmem>>, vector<1x4x32xf32>
    %157 = vector.shape_cast %156 : vector<1x4x32xf32> to vector<4x32xf32>
    %158 = vector.shape_cast %155 : vector<4x32xf32> to vector<1x4x32xf32>
    tpu.vector_store %arg26[%c1_164, %c0_165, %c0_166], %158 {strides = array<i32>} : memref<4x4x32xf32, #tpu.memory_space<vmem>>, vector<1x4x32xf32>,
    %159 = vector.extract_strided_slice %150 {offsets = [8, 0], sizes = [4, 32], strides = [1, 1]} : vector<16x32xf32> to vector<4x32xf32>
    %c2_167 = arith.constant 2 : index
    %c0_168 = arith.constant 0 : index
    %c0_169 = arith.constant 0 : index
    %160 = vector.load %arg26[%c2_167, %c0_168, %c0_169] : memref<4x4x32xf32, #tpu.memory_space<vmem>>, vector<1x4x32xf32>
    %161 = vector.shape_cast %160 : vector<1x4x32xf32> to vector<4x32xf32>
    %162 = vector.shape_cast %159 : vector<4x32xf32> to vector<1x4x32xf32>
    tpu.vector_store %arg26[%c2_167, %c0_168, %c0_169], %162 {strides = array<i32>} : memref<4x4x32xf32, #tpu.memory_space<vmem>>, vector<1x4x32xf32>,
    %163 = vector.extract_strided_slice %150 {offsets = [12, 0], sizes = [4, 32], strides = [1, 1]} : vector<16x32xf32> to vector<4x32xf32>
    %c3_170 = arith.constant 3 : index
    %c0_171 = arith.constant 0 : index
    %c0_172 = arith.constant 0 : index
    %164 = vector.load %arg26[%c3_170, %c0_171, %c0_172] : memref<4x4x32xf32, #tpu.memory_space<vmem>>, vector<1x4x32xf32>
    %165 = vector.shape_cast %164 : vector<1x4x32xf32> to vector<4x32xf32>
    %166 = vector.shape_cast %163 : vector<4x32xf32> to vector<1x4x32xf32>
    tpu.vector_store %arg26[%c3_170, %c0_171, %c0_172], %166 {strides = array<i32>} : memref<4x4x32xf32, #tpu.memory_space<vmem>>, vector<1x4x32xf32>,
    %c0_173 = arith.constant 0 : index
    %c0_174 = arith.constant 0 : index
    %167 = vector.load %arg13[%c0_173, %c0_174] : memref<9x32xf32, #tpu.memory_space<vmem>>, vector<9x32xf32>
    %cst_175 = arith.constant 0.000000e+00 : f32
    %168 = vector.broadcast %cst_175 : f32 to vector<4x4x32xf32>
    %c0_176 = arith.constant 0 : index
    %c0_177 = arith.constant 0 : index
    %c0_178 = arith.constant 0 : index
    %169 = vector.load %arg27[%c0_176, %c0_177, %c0_178] : memref<4x4x32xf32, #tpu.memory_space<vmem>>, vector<4x4x32xf32>
    tpu.vector_store %arg27[%c0_176, %c0_177, %c0_178], %168 {strides = array<i32>} : memref<4x4x32xf32, #tpu.memory_space<vmem>>, vector<4x4x32xf32>,
    %c0_179 = arith.constant 0 : index
    %c0_180 = arith.constant 0 : index
    %c0_181 = arith.constant 0 : index
    %170 = vector.load %arg26[%c0_179, %c0_180, %c0_181] : memref<4x4x32xf32, #tpu.memory_space<vmem>>, vector<3x3x32xf32>
    %171 = vector.extract_strided_slice %167 {offsets = [0, 0], sizes = [1, 32], strides = [1, 1]} : vector<9x32xf32> to vector<1x32xf32>
    %c1_182 = arith.constant 1 : index
    %c1_183 = arith.constant 1 : index
    %c0_184 = arith.constant 0 : index
    %172 = vector.load %arg27[%c1_182, %c1_183, %c0_184] : memref<4x4x32xf32, #tpu.memory_space<vmem>>, vector<3x3x32xf32>
    %173 = vector.shape_cast %171 : vector<1x32xf32> to vector<1x1x32xf32>
    %174 = vector.broadcast %173 : vector<1x1x32xf32> to vector<3x3x32xf32>
    %175 = arith.mulf %170, %174 : vector<3x3x32xf32>
    %176 = arith.addf %172, %175 : vector<3x3x32xf32>
    %c1_185 = arith.constant 1 : index
    %c1_186 = arith.constant 1 : index
    %c0_187 = arith.constant 0 : index
    %177 = vector.load %arg27[%c1_185, %c1_186, %c0_187] : memref<4x4x32xf32, #tpu.memory_space<vmem>>, vector<3x3x32xf32>
    tpu.vector_store %arg27[%c1_185, %c1_186, %c0_187], %176 {strides = array<i32>} : memref<4x4x32xf32, #tpu.memory_space<vmem>>, vector<3x3x32xf32>,
    %c0_188 = arith.constant 0 : index
    %c0_189 = arith.constant 0 : index
    %c0_190 = arith.constant 0 : index
    %178 = vector.load %arg26[%c0_188, %c0_189, %c0_190] : memref<4x4x32xf32, #tpu.memory_space<vmem>>, vector<3x4x32xf32>
    %179 = vector.extract_strided_slice %167 {offsets = [1, 0], sizes = [1, 32], strides = [1, 1]} : vector<9x32xf32> to vector<1x32xf32>
    %c1_191 = arith.constant 1 : index
    %c0_192 = arith.constant 0 : index
    %c0_193 = arith.constant 0 : index
    %180 = vector.load %arg27[%c1_191, %c0_192, %c0_193] : memref<4x4x32xf32, #tpu.memory_space<vmem>>, vector<3x4x32xf32>
    %181 = vector.shape_cast %179 : vector<1x32xf32> to vector<1x1x32xf32>
    %182 = vector.broadcast %181 : vector<1x1x32xf32> to vector<3x4x32xf32>
    %183 = arith.mulf %178, %182 : vector<3x4x32xf32>
    %184 = arith.addf %180, %183 : vector<3x4x32xf32>
    %c1_194 = arith.constant 1 : index
    %c0_195 = arith.constant 0 : index
    %c0_196 = arith.constant 0 : index
    %185 = vector.load %arg27[%c1_194, %c0_195, %c0_196] : memref<4x4x32xf32, #tpu.memory_space<vmem>>, vector<3x4x32xf32>
    tpu.vector_store %arg27[%c1_194, %c0_195, %c0_196], %184 {strides = array<i32>} : memref<4x4x32xf32, #tpu.memory_space<vmem>>, vector<3x4x32xf32>,
    %c0_197 = arith.constant 0 : index
    %c1_198 = arith.constant 1 : index
    %c0_199 = arith.constant 0 : index
    %186 = vector.load %arg26[%c0_197, %c1_198, %c0_199] : memref<4x4x32xf32, #tpu.memory_space<vmem>>, vector<3x3x32xf32>
    %187 = vector.extract_strided_slice %167 {offsets = [2, 0], sizes = [1, 32], strides = [1, 1]} : vector<9x32xf32> to vector<1x32xf32>
    %c1_200 = arith.constant 1 : index
    %c0_201 = arith.constant 0 : index
    %c0_202 = arith.constant 0 : index
    %188 = vector.load %arg27[%c1_200, %c0_201, %c0_202] : memref<4x4x32xf32, #tpu.memory_space<vmem>>, vector<3x3x32xf32>
    %189 = vector.shape_cast %187 : vector<1x32xf32> to vector<1x1x32xf32>
    %190 = vector.broadcast %189 : vector<1x1x32xf32> to vector<3x3x32xf32>
    %191 = arith.mulf %186, %190 : vector<3x3x32xf32>
    %192 = arith.addf %188, %191 : vector<3x3x32xf32>
    %c1_203 = arith.constant 1 : index
    %c0_204 = arith.constant 0 : index
    %c0_205 = arith.constant 0 : index
    %193 = vector.load %arg27[%c1_203, %c0_204, %c0_205] : memref<4x4x32xf32, #tpu.memory_space<vmem>>, vector<3x3x32xf32>
    tpu.vector_store %arg27[%c1_203, %c0_204, %c0_205], %192 {strides = array<i32>} : memref<4x4x32xf32, #tpu.memory_space<vmem>>, vector<3x3x32xf32>,
    %c0_206 = arith.constant 0 : index
    %c0_207 = arith.constant 0 : index
    %c0_208 = arith.constant 0 : index
    %194 = vector.load %arg26[%c0_206, %c0_207, %c0_208] : memref<4x4x32xf32, #tpu.memory_space<vmem>>, vector<4x3x32xf32>
    %195 = vector.extract_strided_slice %167 {offsets = [3, 0], sizes = [1, 32], strides = [1, 1]} : vector<9x32xf32> to vector<1x32xf32>
    %c0_209 = arith.constant 0 : index
    %c1_210 = arith.constant 1 : index
    %c0_211 = arith.constant 0 : index
    %196 = vector.load %arg27[%c0_209, %c1_210, %c0_211] : memref<4x4x32xf32, #tpu.memory_space<vmem>>, vector<4x3x32xf32>
    %197 = vector.shape_cast %195 : vector<1x32xf32> to vector<1x1x32xf32>
    %198 = vector.broadcast %197 : vector<1x1x32xf32> to vector<4x3x32xf32>
    %199 = arith.mulf %194, %198 : vector<4x3x32xf32>
    %200 = arith.addf %196, %199 : vector<4x3x32xf32>
    %c0_212 = arith.constant 0 : index
    %c1_213 = arith.constant 1 : index
    %c0_214 = arith.constant 0 : index
    %201 = vector.load %arg27[%c0_212, %c1_213, %c0_214] : memref<4x4x32xf32, #tpu.memory_space<vmem>>, vector<4x3x32xf32>
    tpu.vector_store %arg27[%c0_212, %c1_213, %c0_214], %200 {strides = array<i32>} : memref<4x4x32xf32, #tpu.memory_space<vmem>>, vector<4x3x32xf32>,
    %c0_215 = arith.constant 0 : index
    %c0_216 = arith.constant 0 : index
    %c0_217 = arith.constant 0 : index
    %202 = vector.load %arg26[%c0_215, %c0_216, %c0_217] : memref<4x4x32xf32, #tpu.memory_space<vmem>>, vector<4x4x32xf32>
    %203 = vector.extract_strided_slice %167 {offsets = [4, 0], sizes = [1, 32], strides = [1, 1]} : vector<9x32xf32> to vector<1x32xf32>
    %c0_218 = arith.constant 0 : index
    %c0_219 = arith.constant 0 : index
    %c0_220 = arith.constant 0 : index
    %204 = vector.load %arg27[%c0_218, %c0_219, %c0_220] : memref<4x4x32xf32, #tpu.memory_space<vmem>>, vector<4x4x32xf32>
    %205 = vector.shape_cast %203 : vector<1x32xf32> to vector<1x1x32xf32>
    %206 = vector.broadcast %205 : vector<1x1x32xf32> to vector<4x4x32xf32>
    %207 = arith.mulf %202, %206 : vector<4x4x32xf32>
    %208 = arith.addf %204, %207 : vector<4x4x32xf32>
    %c0_221 = arith.constant 0 : index
    %c0_222 = arith.constant 0 : index
    %c0_223 = arith.constant 0 : index
    %209 = vector.load %arg27[%c0_221, %c0_222, %c0_223] : memref<4x4x32xf32, #tpu.memory_space<vmem>>, vector<4x4x32xf32>
    tpu.vector_store %arg27[%c0_221, %c0_222, %c0_223], %208 {strides = array<i32>} : memref<4x4x32xf32, #tpu.memory_space<vmem>>, vector<4x4x32xf32>,
    %c0_224 = arith.constant 0 : index
    %c1_225 = arith.constant 1 : index
    %c0_226 = arith.constant 0 : index
    %210 = vector.load %arg26[%c0_224, %c1_225, %c0_226] : memref<4x4x32xf32, #tpu.memory_space<vmem>>, vector<4x3x32xf32>
    %211 = vector.extract_strided_slice %167 {offsets = [5, 0], sizes = [1, 32], strides = [1, 1]} : vector<9x32xf32> to vector<1x32xf32>
    %c0_227 = arith.constant 0 : index
    %c0_228 = arith.constant 0 : index
    %c0_229 = arith.constant 0 : index
    %212 = vector.load %arg27[%c0_227, %c0_228, %c0_229] : memref<4x4x32xf32, #tpu.memory_space<vmem>>, vector<4x3x32xf32>
    %213 = vector.shape_cast %211 : vector<1x32xf32> to vector<1x1x32xf32>
    %214 = vector.broadcast %213 : vector<1x1x32xf32> to vector<4x3x32xf32>
    %215 = arith.mulf %210, %214 : vector<4x3x32xf32>
    %216 = arith.addf %212, %215 : vector<4x3x32xf32>
    %c0_230 = arith.constant 0 : index
    %c0_231 = arith.constant 0 : index
    %c0_232 = arith.constant 0 : index
    %217 = vector.load %arg27[%c0_230, %c0_231, %c0_232] : memref<4x4x32xf32, #tpu.memory_space<vmem>>, vector<4x3x32xf32>
    tpu.vector_store %arg27[%c0_230, %c0_231, %c0_232], %216 {strides = array<i32>} : memref<4x4x32xf32, #tpu.memory_space<vmem>>, vector<4x3x32xf32>,
    %c1_233 = arith.constant 1 : index
    %c0_234 = arith.constant 0 : index
    %c0_235 = arith.constant 0 : index
    %218 = vector.load %arg26[%c1_233, %c0_234, %c0_235] : memref<4x4x32xf32, #tpu.memory_space<vmem>>, vector<3x3x32xf32>
    %219 = vector.extract_strided_slice %167 {offsets = [6, 0], sizes = [1, 32], strides = [1, 1]} : vector<9x32xf32> to vector<1x32xf32>
    %c0_236 = arith.constant 0 : index
    %c1_237 = arith.constant 1 : index
    %c0_238 = arith.constant 0 : index
    %220 = vector.load %arg27[%c0_236, %c1_237, %c0_238] : memref<4x4x32xf32, #tpu.memory_space<vmem>>, vector<3x3x32xf32>
    %221 = vector.shape_cast %219 : vector<1x32xf32> to vector<1x1x32xf32>
    %222 = vector.broadcast %221 : vector<1x1x32xf32> to vector<3x3x32xf32>
    %223 = arith.mulf %218, %222 : vector<3x3x32xf32>
    %224 = arith.addf %220, %223 : vector<3x3x32xf32>
    %c0_239 = arith.constant 0 : index
    %c1_240 = arith.constant 1 : index
    %c0_241 = arith.constant 0 : index
    %225 = vector.load %arg27[%c0_239, %c1_240, %c0_241] : memref<4x4x32xf32, #tpu.memory_space<vmem>>, vector<3x3x32xf32>
    tpu.vector_store %arg27[%c0_239, %c1_240, %c0_241], %224 {strides = array<i32>} : memref<4x4x32xf32, #tpu.memory_space<vmem>>, vector<3x3x32xf32>,
    %c1_242 = arith.constant 1 : index
    %c0_243 = arith.constant 0 : index
    %c0_244 = arith.constant 0 : index
    %226 = vector.load %arg26[%c1_242, %c0_243, %c0_244] : memref<4x4x32xf32, #tpu.memory_space<vmem>>, vector<3x4x32xf32>
    %227 = vector.extract_strided_slice %167 {offsets = [7, 0], sizes = [1, 32], strides = [1, 1]} : vector<9x32xf32> to vector<1x32xf32>
    %c0_245 = arith.constant 0 : index
    %c0_246 = arith.constant 0 : index
    %c0_247 = arith.constant 0 : index
    %228 = vector.load %arg27[%c0_245, %c0_246, %c0_247] : memref<4x4x32xf32, #tpu.memory_space<vmem>>, vector<3x4x32xf32>
    %229 = vector.shape_cast %227 : vector<1x32xf32> to vector<1x1x32xf32>
    %230 = vector.broadcast %229 : vector<1x1x32xf32> to vector<3x4x32xf32>
    %231 = arith.mulf %226, %230 : vector<3x4x32xf32>
    %232 = arith.addf %228, %231 : vector<3x4x32xf32>
    %c0_248 = arith.constant 0 : index
    %c0_249 = arith.constant 0 : index
    %c0_250 = arith.constant 0 : index
    %233 = vector.load %arg27[%c0_248, %c0_249, %c0_250] : memref<4x4x32xf32, #tpu.memory_space<vmem>>, vector<3x4x32xf32>
    tpu.vector_store %arg27[%c0_248, %c0_249, %c0_250], %232 {strides = array<i32>} : memref<4x4x32xf32, #tpu.memory_space<vmem>>, vector<3x4x32xf32>,
    %c1_251 = arith.constant 1 : index
    %c1_252 = arith.constant 1 : index
    %c0_253 = arith.constant 0 : index
    %234 = vector.load %arg26[%c1_251, %c1_252, %c0_253] : memref<4x4x32xf32, #tpu.memory_space<vmem>>, vector<3x3x32xf32>
    %235 = vector.extract_strided_slice %167 {offsets = [8, 0], sizes = [1, 32], strides = [1, 1]} : vector<9x32xf32> to vector<1x32xf32>
    %c0_254 = arith.constant 0 : index
    %c0_255 = arith.constant 0 : index
    %c0_256 = arith.constant 0 : index
    %236 = vector.load %arg27[%c0_254, %c0_255, %c0_256] : memref<4x4x32xf32, #tpu.memory_space<vmem>>, vector<3x3x32xf32>
    %237 = vector.shape_cast %235 : vector<1x32xf32> to vector<1x1x32xf32>
    %238 = vector.broadcast %237 : vector<1x1x32xf32> to vector<3x3x32xf32>
    %239 = arith.mulf %234, %238 : vector<3x3x32xf32>
    %240 = arith.addf %236, %239 : vector<3x3x32xf32>
    %c0_257 = arith.constant 0 : index
    %c0_258 = arith.constant 0 : index
    %c0_259 = arith.constant 0 : index
    %241 = vector.load %arg27[%c0_257, %c0_258, %c0_259] : memref<4x4x32xf32, #tpu.memory_space<vmem>>, vector<3x3x32xf32>
    tpu.vector_store %arg27[%c0_257, %c0_258, %c0_259], %240 {strides = array<i32>} : memref<4x4x32xf32, #tpu.memory_space<vmem>>, vector<3x3x32xf32>,
    %c0_260 = arith.constant 0 : index
    %c0_261 = arith.constant 0 : index
    %c0_262 = arith.constant 0 : index
    %242 = vector.load %arg27[%c0_260, %c0_261, %c0_262] : memref<4x4x32xf32, #tpu.memory_space<vmem>>, vector<1x4x32xf32>
    %243 = vector.shape_cast %242 : vector<1x4x32xf32> to vector<4x32xf32>
    %c0_263 = arith.constant 0 : index
    %c0_264 = arith.constant 0 : index
    %244 = vector.load %arg28[%c0_263, %c0_264] : memref<16x32xf32, #tpu.memory_space<vmem>>, vector<4x32xf32>
    tpu.vector_store %arg28[%c0_263, %c0_264], %243 {strides = array<i32>} : memref<16x32xf32, #tpu.memory_space<vmem>>, vector<4x32xf32>,
    %c1_265 = arith.constant 1 : index
    %c0_266 = arith.constant 0 : index
    %c0_267 = arith.constant 0 : index
    %245 = vector.load %arg27[%c1_265, %c0_266, %c0_267] : memref<4x4x32xf32, #tpu.memory_space<vmem>>, vector<1x4x32xf32>
    %246 = vector.shape_cast %245 : vector<1x4x32xf32> to vector<4x32xf32>
    %c4_268 = arith.constant 4 : index
    %c0_269 = arith.constant 0 : index
    %247 = vector.load %arg28[%c4_268, %c0_269] : memref<16x32xf32, #tpu.memory_space<vmem>>, vector<4x32xf32>
    tpu.vector_store %arg28[%c4_268, %c0_269], %246 {strides = array<i32>} : memref<16x32xf32, #tpu.memory_space<vmem>>, vector<4x32xf32>,
    %c2_270 = arith.constant 2 : index
    %c0_271 = arith.constant 0 : index
    %c0_272 = arith.constant 0 : index
    %248 = vector.load %arg27[%c2_270, %c0_271, %c0_272] : memref<4x4x32xf32, #tpu.memory_space<vmem>>, vector<1x4x32xf32>
    %249 = vector.shape_cast %248 : vector<1x4x32xf32> to vector<4x32xf32>
    %c8_273 = arith.constant 8 : index
    %c0_274 = arith.constant 0 : index
    %250 = vector.load %arg28[%c8_273, %c0_274] : memref<16x32xf32, #tpu.memory_space<vmem>>, vector<4x32xf32>
    tpu.vector_store %arg28[%c8_273, %c0_274], %249 {strides = array<i32>} : memref<16x32xf32, #tpu.memory_space<vmem>>, vector<4x32xf32>,
    %c3_275 = arith.constant 3 : index
    %c0_276 = arith.constant 0 : index
    %c0_277 = arith.constant 0 : index
    %251 = vector.load %arg27[%c3_275, %c0_276, %c0_277] : memref<4x4x32xf32, #tpu.memory_space<vmem>>, vector<1x4x32xf32>
    %252 = vector.shape_cast %251 : vector<1x4x32xf32> to vector<4x32xf32>
    %c12_278 = arith.constant 12 : index
    %c0_279 = arith.constant 0 : index
    %253 = vector.load %arg28[%c12_278, %c0_279] : memref<16x32xf32, #tpu.memory_space<vmem>>, vector<4x32xf32>
    tpu.vector_store %arg28[%c12_278, %c0_279], %252 {strides = array<i32>} : memref<16x32xf32, #tpu.memory_space<vmem>>, vector<4x32xf32>,
    %c0_280 = arith.constant 0 : index
    %c0_281 = arith.constant 0 : index
    %254 = vector.load %arg28[%c0_280, %c0_281] : memref<16x32xf32, #tpu.memory_space<vmem>>, vector<16x32xf32>
    %c0_282 = arith.constant 0 : index
    %c0_283 = arith.constant 0 : index
    %255 = vector.load %arg14[%c0_282, %c0_283] : memref<32x32xbf16, #tpu.memory_space<vmem>>, vector<32x32xbf16>
    %256 = arith.truncf %254 : vector<16x32xf32> to vector<16x32xbf16>
    %cst_284 = arith.constant dense<0.000000e+00> : vector<16x32xf32>
    %257 = tpu.matmul %256, %255, %cst_284 {dimension_numbers = #tpu.dot_dimension_numbers<[1], [0], [0], [1], [0, 0, 1, 1], [], []>} : vector<16x32xbf16>, vector<32x32xbf16>, vector<16x32xf32> -> vector<16x32xf32>
    %c0_285 = arith.constant 0 : index
    %c0_286 = arith.constant 0 : index
    %258 = vector.load %arg15[%c0_285, %c0_286] : memref<1x32xf32, #tpu.memory_space<vmem>>, vector<1x32xf32>
    %259 = vector.broadcast %258 : vector<1x32xf32> to vector<16x32xf32>
    %260 = arith.addf %257, %259 : vector<16x32xf32>
    %cst_287 = arith.constant 0.000000e+00 : f32
    %261 = vector.broadcast %cst_287 : f32 to vector<16x32xf32>
    %262 = arith.maximumf %260, %261 : vector<16x32xf32>
    %c0_288 = arith.constant 0 : index
    %c0_289 = arith.constant 0 : index
    %263 = vector.load %arg4[%c0_288, %c0_289] : memref<256x16xbf16, #tpu.memory_space<vmem>>, vector<256x16xbf16>
    %264 = arith.truncf %262 : vector<16x32xf32> to vector<16x32xbf16>
    %cst_290 = arith.constant dense<0.000000e+00> : vector<256x32xf32>
    %265 = tpu.matmul %263, %264, %cst_290 {dimension_numbers = #tpu.dot_dimension_numbers<[1], [0], [0], [1], [0, 0, 1, 1], [], []>} : vector<256x16xbf16>, vector<16x32xbf16>, vector<256x32xf32> -> vector<256x32xf32>
    %c0_291 = arith.constant 0 : index
    %c0_292 = arith.constant 0 : index
    %c0_293 = arith.constant 0 : index
    %266 = vector.load %arg3[%c0_291, %c0_292, %c0_293] : memref<1x256x8xf32, #tpu.memory_space<vmem>>, vector<1x256x8xf32>
    %267 = vector.shape_cast %266 : vector<1x256x8xf32> to vector<256x8xf32>
    %c0_294 = arith.constant 0 : index
    %c0_295 = arith.constant 0 : index
    %268 = vector.load %arg16[%c0_294, %c0_295] : memref<8x48xbf16, #tpu.memory_space<vmem>>, vector<8x48xbf16>
    %269 = arith.truncf %267 : vector<256x8xf32> to vector<256x8xbf16>
    %cst_296 = arith.constant dense<0.000000e+00> : vector<256x48xf32>
    %270 = tpu.matmul %269, %268, %cst_296 {dimension_numbers = #tpu.dot_dimension_numbers<[1], [0], [0], [1], [0, 0, 1, 1], [], []>} : vector<256x8xbf16>, vector<8x48xbf16>, vector<256x48xf32> -> vector<256x48xf32>
    %c0_297 = arith.constant 0 : index
    %c0_298 = arith.constant 0 : index
    %271 = vector.load %arg17[%c0_297, %c0_298] : memref<1x48xf32, #tpu.memory_space<vmem>>, vector<1x48xf32>
    %272 = vector.broadcast %271 : vector<1x48xf32> to vector<256x48xf32>
    %273 = arith.addf %270, %272 : vector<256x48xf32>
    %cst_299 = arith.constant 0.000000e+00 : f32
    %274 = vector.broadcast %cst_299 : f32 to vector<256x48xf32>
    %275 = arith.maximumf %273, %274 : vector<256x48xf32>
    %276 = vector.extract_strided_slice %265 {offsets = [0, 0], sizes = [16, 32], strides = [1, 1]} : vector<256x32xf32> to vector<16x32xf32>
    %c0_300 = arith.constant 0 : index
    %c0_301 = arith.constant 0 : index
    %c0_302 = arith.constant 0 : index
    %277 = vector.load %arg29[%c0_300, %c0_301, %c0_302] : memref<16x16x32xf32, #tpu.memory_space<vmem>>, vector<1x16x32xf32>
    %278 = vector.shape_cast %277 : vector<1x16x32xf32> to vector<16x32xf32>
    %279 = vector.shape_cast %276 : vector<16x32xf32> to vector<1x16x32xf32>
    tpu.vector_store %arg29[%c0_300, %c0_301, %c0_302], %279 {strides = array<i32>} : memref<16x16x32xf32, #tpu.memory_space<vmem>>, vector<1x16x32xf32>,
    %280 = vector.extract_strided_slice %265 {offsets = [16, 0], sizes = [16, 32], strides = [1, 1]} : vector<256x32xf32> to vector<16x32xf32>
    %c1_303 = arith.constant 1 : index
    %c0_304 = arith.constant 0 : index
    %c0_305 = arith.constant 0 : index
    %281 = vector.load %arg29[%c1_303, %c0_304, %c0_305] : memref<16x16x32xf32, #tpu.memory_space<vmem>>, vector<1x16x32xf32>
    %282 = vector.shape_cast %281 : vector<1x16x32xf32> to vector<16x32xf32>
    %283 = vector.shape_cast %280 : vector<16x32xf32> to vector<1x16x32xf32>
    tpu.vector_store %arg29[%c1_303, %c0_304, %c0_305], %283 {strides = array<i32>} : memref<16x16x32xf32, #tpu.memory_space<vmem>>, vector<1x16x32xf32>,
    %284 = vector.extract_strided_slice %265 {offsets = [32, 0], sizes = [16, 32], strides = [1, 1]} : vector<256x32xf32> to vector<16x32xf32>
    %c2_306 = arith.constant 2 : index
    %c0_307 = arith.constant 0 : index
    %c0_308 = arith.constant 0 : index
    %285 = vector.load %arg29[%c2_306, %c0_307, %c0_308] : memref<16x16x32xf32, #tpu.memory_space<vmem>>, vector<1x16x32xf32>
    %286 = vector.shape_cast %285 : vector<1x16x32xf32> to vector<16x32xf32>
    %287 = vector.shape_cast %284 : vector<16x32xf32> to vector<1x16x32xf32>
    tpu.vector_store %arg29[%c2_306, %c0_307, %c0_308], %287 {strides = array<i32>} : memref<16x16x32xf32, #tpu.memory_space<vmem>>, vector<1x16x32xf32>,
    %288 = vector.extract_strided_slice %265 {offsets = [48, 0], sizes = [16, 32], strides = [1, 1]} : vector<256x32xf32> to vector<16x32xf32>
    %c3_309 = arith.constant 3 : index
    %c0_310 = arith.constant 0 : index
    %c0_311 = arith.constant 0 : index
    %289 = vector.load %arg29[%c3_309, %c0_310, %c0_311] : memref<16x16x32xf32, #tpu.memory_space<vmem>>, vector<1x16x32xf32>
    %290 = vector.shape_cast %289 : vector<1x16x32xf32> to vector<16x32xf32>
    %291 = vector.shape_cast %288 : vector<16x32xf32> to vector<1x16x32xf32>
    tpu.vector_store %arg29[%c3_309, %c0_310, %c0_311], %291 {strides = array<i32>} : memref<16x16x32xf32, #tpu.memory_space<vmem>>, vector<1x16x32xf32>,
    %292 = vector.extract_strided_slice %265 {offsets = [64, 0], sizes = [16, 32], strides = [1, 1]} : vector<256x32xf32> to vector<16x32xf32>
    %c4_312 = arith.constant 4 : index
    %c0_313 = arith.constant 0 : index
    %c0_314 = arith.constant 0 : index
    %293 = vector.load %arg29[%c4_312, %c0_313, %c0_314] : memref<16x16x32xf32, #tpu.memory_space<vmem>>, vector<1x16x32xf32>
    %294 = vector.shape_cast %293 : vector<1x16x32xf32> to vector<16x32xf32>
    %295 = vector.shape_cast %292 : vector<16x32xf32> to vector<1x16x32xf32>
    tpu.vector_store %arg29[%c4_312, %c0_313, %c0_314], %295 {strides = array<i32>} : memref<16x16x32xf32, #tpu.memory_space<vmem>>, vector<1x16x32xf32>,
    %296 = vector.extract_strided_slice %265 {offsets = [80, 0], sizes = [16, 32], strides = [1, 1]} : vector<256x32xf32> to vector<16x32xf32>
    %c5 = arith.constant 5 : index
    %c0_315 = arith.constant 0 : index
    %c0_316 = arith.constant 0 : index
    %297 = vector.load %arg29[%c5, %c0_315, %c0_316] : memref<16x16x32xf32, #tpu.memory_space<vmem>>, vector<1x16x32xf32>
    %298 = vector.shape_cast %297 : vector<1x16x32xf32> to vector<16x32xf32>
    %299 = vector.shape_cast %296 : vector<16x32xf32> to vector<1x16x32xf32>
    tpu.vector_store %arg29[%c5, %c0_315, %c0_316], %299 {strides = array<i32>} : memref<16x16x32xf32, #tpu.memory_space<vmem>>, vector<1x16x32xf32>,
    %300 = vector.extract_strided_slice %265 {offsets = [96, 0], sizes = [16, 32], strides = [1, 1]} : vector<256x32xf32> to vector<16x32xf32>
    %c6 = arith.constant 6 : index
    %c0_317 = arith.constant 0 : index
    %c0_318 = arith.constant 0 : index
    %301 = vector.load %arg29[%c6, %c0_317, %c0_318] : memref<16x16x32xf32, #tpu.memory_space<vmem>>, vector<1x16x32xf32>
    %302 = vector.shape_cast %301 : vector<1x16x32xf32> to vector<16x32xf32>
    %303 = vector.shape_cast %300 : vector<16x32xf32> to vector<1x16x32xf32>
    tpu.vector_store %arg29[%c6, %c0_317, %c0_318], %303 {strides = array<i32>} : memref<16x16x32xf32, #tpu.memory_space<vmem>>, vector<1x16x32xf32>,
    %304 = vector.extract_strided_slice %265 {offsets = [112, 0], sizes = [16, 32], strides = [1, 1]} : vector<256x32xf32> to vector<16x32xf32>
    %c7 = arith.constant 7 : index
    %c0_319 = arith.constant 0 : index
    %c0_320 = arith.constant 0 : index
    %305 = vector.load %arg29[%c7, %c0_319, %c0_320] : memref<16x16x32xf32, #tpu.memory_space<vmem>>, vector<1x16x32xf32>
    %306 = vector.shape_cast %305 : vector<1x16x32xf32> to vector<16x32xf32>
    %307 = vector.shape_cast %304 : vector<16x32xf32> to vector<1x16x32xf32>
    tpu.vector_store %arg29[%c7, %c0_319, %c0_320], %307 {strides = array<i32>} : memref<16x16x32xf32, #tpu.memory_space<vmem>>, vector<1x16x32xf32>,
    %308 = vector.extract_strided_slice %265 {offsets = [128, 0], sizes = [16, 32], strides = [1, 1]} : vector<256x32xf32> to vector<16x32xf32>
    %c8_321 = arith.constant 8 : index
    %c0_322 = arith.constant 0 : index
    %c0_323 = arith.constant 0 : index
    %309 = vector.load %arg29[%c8_321, %c0_322, %c0_323] : memref<16x16x32xf32, #tpu.memory_space<vmem>>, vector<1x16x32xf32>
    %310 = vector.shape_cast %309 : vector<1x16x32xf32> to vector<16x32xf32>
    %311 = vector.shape_cast %308 : vector<16x32xf32> to vector<1x16x32xf32>
    tpu.vector_store %arg29[%c8_321, %c0_322, %c0_323], %311 {strides = array<i32>} : memref<16x16x32xf32, #tpu.memory_space<vmem>>, vector<1x16x32xf32>,
    %312 = vector.extract_strided_slice %265 {offsets = [144, 0], sizes = [16, 32], strides = [1, 1]} : vector<256x32xf32> to vector<16x32xf32>
    %c9 = arith.constant 9 : index
    %c0_324 = arith.constant 0 : index
    %c0_325 = arith.constant 0 : index
    %313 = vector.load %arg29[%c9, %c0_324, %c0_325] : memref<16x16x32xf32, #tpu.memory_space<vmem>>, vector<1x16x32xf32>
    %314 = vector.shape_cast %313 : vector<1x16x32xf32> to vector<16x32xf32>
    %315 = vector.shape_cast %312 : vector<16x32xf32> to vector<1x16x32xf32>
    tpu.vector_store %arg29[%c9, %c0_324, %c0_325], %315 {strides = array<i32>} : memref<16x16x32xf32, #tpu.memory_space<vmem>>, vector<1x16x32xf32>,
    %316 = vector.extract_strided_slice %265 {offsets = [160, 0], sizes = [16, 32], strides = [1, 1]} : vector<256x32xf32> to vector<16x32xf32>
    %c10 = arith.constant 10 : index
    %c0_326 = arith.constant 0 : index
    %c0_327 = arith.constant 0 : index
    %317 = vector.load %arg29[%c10, %c0_326, %c0_327] : memref<16x16x32xf32, #tpu.memory_space<vmem>>, vector<1x16x32xf32>
    %318 = vector.shape_cast %317 : vector<1x16x32xf32> to vector<16x32xf32>
    %319 = vector.shape_cast %316 : vector<16x32xf32> to vector<1x16x32xf32>
    tpu.vector_store %arg29[%c10, %c0_326, %c0_327], %319 {strides = array<i32>} : memref<16x16x32xf32, #tpu.memory_space<vmem>>, vector<1x16x32xf32>,
    %320 = vector.extract_strided_slice %265 {offsets = [176, 0], sizes = [16, 32], strides = [1, 1]} : vector<256x32xf32> to vector<16x32xf32>
    %c11 = arith.constant 11 : index
    %c0_328 = arith.constant 0 : index
    %c0_329 = arith.constant 0 : index
    %321 = vector.load %arg29[%c11, %c0_328, %c0_329] : memref<16x16x32xf32, #tpu.memory_space<vmem>>, vector<1x16x32xf32>
    %322 = vector.shape_cast %321 : vector<1x16x32xf32> to vector<16x32xf32>
    %323 = vector.shape_cast %320 : vector<16x32xf32> to vector<1x16x32xf32>
    tpu.vector_store %arg29[%c11, %c0_328, %c0_329], %323 {strides = array<i32>} : memref<16x16x32xf32, #tpu.memory_space<vmem>>, vector<1x16x32xf32>,
    %324 = vector.extract_strided_slice %265 {offsets = [192, 0], sizes = [16, 32], strides = [1, 1]} : vector<256x32xf32> to vector<16x32xf32>
    %c12_330 = arith.constant 12 : index
    %c0_331 = arith.constant 0 : index
    %c0_332 = arith.constant 0 : index
    %325 = vector.load %arg29[%c12_330, %c0_331, %c0_332] : memref<16x16x32xf32, #tpu.memory_space<vmem>>, vector<1x16x32xf32>
    %326 = vector.shape_cast %325 : vector<1x16x32xf32> to vector<16x32xf32>
    %327 = vector.shape_cast %324 : vector<16x32xf32> to vector<1x16x32xf32>
    tpu.vector_store %arg29[%c12_330, %c0_331, %c0_332], %327 {strides = array<i32>} : memref<16x16x32xf32, #tpu.memory_space<vmem>>, vector<1x16x32xf32>,
    %328 = vector.extract_strided_slice %265 {offsets = [208, 0], sizes = [16, 32], strides = [1, 1]} : vector<256x32xf32> to vector<16x32xf32>
    %c13 = arith.constant 13 : index
    %c0_333 = arith.constant 0 : index
    %c0_334 = arith.constant 0 : index
    %329 = vector.load %arg29[%c13, %c0_333, %c0_334] : memref<16x16x32xf32, #tpu.memory_space<vmem>>, vector<1x16x32xf32>
    %330 = vector.shape_cast %329 : vector<1x16x32xf32> to vector<16x32xf32>
    %331 = vector.shape_cast %328 : vector<16x32xf32> to vector<1x16x32xf32>
    tpu.vector_store %arg29[%c13, %c0_333, %c0_334], %331 {strides = array<i32>} : memref<16x16x32xf32, #tpu.memory_space<vmem>>, vector<1x16x32xf32>,
    %332 = vector.extract_strided_slice %265 {offsets = [224, 0], sizes = [16, 32], strides = [1, 1]} : vector<256x32xf32> to vector<16x32xf32>
    %c14 = arith.constant 14 : index
    %c0_335 = arith.constant 0 : index
    %c0_336 = arith.constant 0 : index
    %333 = vector.load %arg29[%c14, %c0_335, %c0_336] : memref<16x16x32xf32, #tpu.memory_space<vmem>>, vector<1x16x32xf32>
    %334 = vector.shape_cast %333 : vector<1x16x32xf32> to vector<16x32xf32>
    %335 = vector.shape_cast %332 : vector<16x32xf32> to vector<1x16x32xf32>
    tpu.vector_store %arg29[%c14, %c0_335, %c0_336], %335 {strides = array<i32>} : memref<16x16x32xf32, #tpu.memory_space<vmem>>, vector<1x16x32xf32>,
    %336 = vector.extract_strided_slice %265 {offsets = [240, 0], sizes = [16, 32], strides = [1, 1]} : vector<256x32xf32> to vector<16x32xf32>
    %c15 = arith.constant 15 : index
    %c0_337 = arith.constant 0 : index
    %c0_338 = arith.constant 0 : index
    %337 = vector.load %arg29[%c15, %c0_337, %c0_338] : memref<16x16x32xf32, #tpu.memory_space<vmem>>, vector<1x16x32xf32>
    %338 = vector.shape_cast %337 : vector<1x16x32xf32> to vector<16x32xf32>
    %339 = vector.shape_cast %336 : vector<16x32xf32> to vector<1x16x32xf32>
    tpu.vector_store %arg29[%c15, %c0_337, %c0_338], %339 {strides = array<i32>} : memref<16x16x32xf32, #tpu.memory_space<vmem>>, vector<1x16x32xf32>,
    %340 = vector.extract_strided_slice %275 {offsets = [0, 0], sizes = [16, 48], strides = [1, 1]} : vector<256x48xf32> to vector<16x48xf32>
    %c0_339 = arith.constant 0 : index
    %c0_340 = arith.constant 0 : index
    %c0_341 = arith.constant 0 : index
    %341 = vector.load %arg30[%c0_339, %c0_340, %c0_341] : memref<16x16x48xf32, #tpu.memory_space<vmem>>, vector<1x16x48xf32>
    %342 = vector.shape_cast %341 : vector<1x16x48xf32> to vector<16x48xf32>
    %343 = vector.shape_cast %340 : vector<16x48xf32> to vector<1x16x48xf32>
    tpu.vector_store %arg30[%c0_339, %c0_340, %c0_341], %343 {strides = array<i32>} : memref<16x16x48xf32, #tpu.memory_space<vmem>>, vector<1x16x48xf32>,
    %344 = vector.extract_strided_slice %275 {offsets = [16, 0], sizes = [16, 48], strides = [1, 1]} : vector<256x48xf32> to vector<16x48xf32>
    %c1_342 = arith.constant 1 : index
    %c0_343 = arith.constant 0 : index
    %c0_344 = arith.constant 0 : index
    %345 = vector.load %arg30[%c1_342, %c0_343, %c0_344] : memref<16x16x48xf32, #tpu.memory_space<vmem>>, vector<1x16x48xf32>
    %346 = vector.shape_cast %345 : vector<1x16x48xf32> to vector<16x48xf32>
    %347 = vector.shape_cast %344 : vector<16x48xf32> to vector<1x16x48xf32>
    tpu.vector_store %arg30[%c1_342, %c0_343, %c0_344], %347 {strides = array<i32>} : memref<16x16x48xf32, #tpu.memory_space<vmem>>, vector<1x16x48xf32>,
    %348 = vector.extract_strided_slice %275 {offsets = [32, 0], sizes = [16, 48], strides = [1, 1]} : vector<256x48xf32> to vector<16x48xf32>
    %c2_345 = arith.constant 2 : index
    %c0_346 = arith.constant 0 : index
    %c0_347 = arith.constant 0 : index
    %349 = vector.load %arg30[%c2_345, %c0_346, %c0_347] : memref<16x16x48xf32, #tpu.memory_space<vmem>>, vector<1x16x48xf32>
    %350 = vector.shape_cast %349 : vector<1x16x48xf32> to vector<16x48xf32>
    %351 = vector.shape_cast %348 : vector<16x48xf32> to vector<1x16x48xf32>
    tpu.vector_store %arg30[%c2_345, %c0_346, %c0_347], %351 {strides = array<i32>} : memref<16x16x48xf32, #tpu.memory_space<vmem>>, vector<1x16x48xf32>,
    %352 = vector.extract_strided_slice %275 {offsets = [48, 0], sizes = [16, 48], strides = [1, 1]} : vector<256x48xf32> to vector<16x48xf32>
    %c3_348 = arith.constant 3 : index
    %c0_349 = arith.constant 0 : index
    %c0_350 = arith.constant 0 : index
    %353 = vector.load %arg30[%c3_348, %c0_349, %c0_350] : memref<16x16x48xf32, #tpu.memory_space<vmem>>, vector<1x16x48xf32>
    %354 = vector.shape_cast %353 : vector<1x16x48xf32> to vector<16x48xf32>
    %355 = vector.shape_cast %352 : vector<16x48xf32> to vector<1x16x48xf32>
    tpu.vector_store %arg30[%c3_348, %c0_349, %c0_350], %355 {strides = array<i32>} : memref<16x16x48xf32, #tpu.memory_space<vmem>>, vector<1x16x48xf32>,
    %356 = vector.extract_strided_slice %275 {offsets = [64, 0], sizes = [16, 48], strides = [1, 1]} : vector<256x48xf32> to vector<16x48xf32>
    %c4_351 = arith.constant 4 : index
    %c0_352 = arith.constant 0 : index
    %c0_353 = arith.constant 0 : index
    %357 = vector.load %arg30[%c4_351, %c0_352, %c0_353] : memref<16x16x48xf32, #tpu.memory_space<vmem>>, vector<1x16x48xf32>
    %358 = vector.shape_cast %357 : vector<1x16x48xf32> to vector<16x48xf32>
    %359 = vector.shape_cast %356 : vector<16x48xf32> to vector<1x16x48xf32>
    tpu.vector_store %arg30[%c4_351, %c0_352, %c0_353], %359 {strides = array<i32>} : memref<16x16x48xf32, #tpu.memory_space<vmem>>, vector<1x16x48xf32>,
    %360 = vector.extract_strided_slice %275 {offsets = [80, 0], sizes = [16, 48], strides = [1, 1]} : vector<256x48xf32> to vector<16x48xf32>
    %c5_354 = arith.constant 5 : index
    %c0_355 = arith.constant 0 : index
    %c0_356 = arith.constant 0 : index
    %361 = vector.load %arg30[%c5_354, %c0_355, %c0_356] : memref<16x16x48xf32, #tpu.memory_space<vmem>>, vector<1x16x48xf32>
    %362 = vector.shape_cast %361 : vector<1x16x48xf32> to vector<16x48xf32>
    %363 = vector.shape_cast %360 : vector<16x48xf32> to vector<1x16x48xf32>
    tpu.vector_store %arg30[%c5_354, %c0_355, %c0_356], %363 {strides = array<i32>} : memref<16x16x48xf32, #tpu.memory_space<vmem>>, vector<1x16x48xf32>,
    %364 = vector.extract_strided_slice %275 {offsets = [96, 0], sizes = [16, 48], strides = [1, 1]} : vector<256x48xf32> to vector<16x48xf32>
    %c6_357 = arith.constant 6 : index
    %c0_358 = arith.constant 0 : index
    %c0_359 = arith.constant 0 : index
    %365 = vector.load %arg30[%c6_357, %c0_358, %c0_359] : memref<16x16x48xf32, #tpu.memory_space<vmem>>, vector<1x16x48xf32>
    %366 = vector.shape_cast %365 : vector<1x16x48xf32> to vector<16x48xf32>
    %367 = vector.shape_cast %364 : vector<16x48xf32> to vector<1x16x48xf32>
    tpu.vector_store %arg30[%c6_357, %c0_358, %c0_359], %367 {strides = array<i32>} : memref<16x16x48xf32, #tpu.memory_space<vmem>>, vector<1x16x48xf32>,
    %368 = vector.extract_strided_slice %275 {offsets = [112, 0], sizes = [16, 48], strides = [1, 1]} : vector<256x48xf32> to vector<16x48xf32>
    %c7_360 = arith.constant 7 : index
    %c0_361 = arith.constant 0 : index
    %c0_362 = arith.constant 0 : index
    %369 = vector.load %arg30[%c7_360, %c0_361, %c0_362] : memref<16x16x48xf32, #tpu.memory_space<vmem>>, vector<1x16x48xf32>
    %370 = vector.shape_cast %369 : vector<1x16x48xf32> to vector<16x48xf32>
    %371 = vector.shape_cast %368 : vector<16x48xf32> to vector<1x16x48xf32>
    tpu.vector_store %arg30[%c7_360, %c0_361, %c0_362], %371 {strides = array<i32>} : memref<16x16x48xf32, #tpu.memory_space<vmem>>, vector<1x16x48xf32>,
    %372 = vector.extract_strided_slice %275 {offsets = [128, 0], sizes = [16, 48], strides = [1, 1]} : vector<256x48xf32> to vector<16x48xf32>
    %c8_363 = arith.constant 8 : index
    %c0_364 = arith.constant 0 : index
    %c0_365 = arith.constant 0 : index
    %373 = vector.load %arg30[%c8_363, %c0_364, %c0_365] : memref<16x16x48xf32, #tpu.memory_space<vmem>>, vector<1x16x48xf32>
    %374 = vector.shape_cast %373 : vector<1x16x48xf32> to vector<16x48xf32>
    %375 = vector.shape_cast %372 : vector<16x48xf32> to vector<1x16x48xf32>
    tpu.vector_store %arg30[%c8_363, %c0_364, %c0_365], %375 {strides = array<i32>} : memref<16x16x48xf32, #tpu.memory_space<vmem>>, vector<1x16x48xf32>,
    %376 = vector.extract_strided_slice %275 {offsets = [144, 0], sizes = [16, 48], strides = [1, 1]} : vector<256x48xf32> to vector<16x48xf32>
    %c9_366 = arith.constant 9 : index
    %c0_367 = arith.constant 0 : index
    %c0_368 = arith.constant 0 : index
    %377 = vector.load %arg30[%c9_366, %c0_367, %c0_368] : memref<16x16x48xf32, #tpu.memory_space<vmem>>, vector<1x16x48xf32>
    %378 = vector.shape_cast %377 : vector<1x16x48xf32> to vector<16x48xf32>
    %379 = vector.shape_cast %376 : vector<16x48xf32> to vector<1x16x48xf32>
    tpu.vector_store %arg30[%c9_366, %c0_367, %c0_368], %379 {strides = array<i32>} : memref<16x16x48xf32, #tpu.memory_space<vmem>>, vector<1x16x48xf32>,
    %380 = vector.extract_strided_slice %275 {offsets = [160, 0], sizes = [16, 48], strides = [1, 1]} : vector<256x48xf32> to vector<16x48xf32>
    %c10_369 = arith.constant 10 : index
    %c0_370 = arith.constant 0 : index
    %c0_371 = arith.constant 0 : index
    %381 = vector.load %arg30[%c10_369, %c0_370, %c0_371] : memref<16x16x48xf32, #tpu.memory_space<vmem>>, vector<1x16x48xf32>
    %382 = vector.shape_cast %381 : vector<1x16x48xf32> to vector<16x48xf32>
    %383 = vector.shape_cast %380 : vector<16x48xf32> to vector<1x16x48xf32>
    tpu.vector_store %arg30[%c10_369, %c0_370, %c0_371], %383 {strides = array<i32>} : memref<16x16x48xf32, #tpu.memory_space<vmem>>, vector<1x16x48xf32>,
    %384 = vector.extract_strided_slice %275 {offsets = [176, 0], sizes = [16, 48], strides = [1, 1]} : vector<256x48xf32> to vector<16x48xf32>
    %c11_372 = arith.constant 11 : index
    %c0_373 = arith.constant 0 : index
    %c0_374 = arith.constant 0 : index
    %385 = vector.load %arg30[%c11_372, %c0_373, %c0_374] : memref<16x16x48xf32, #tpu.memory_space<vmem>>, vector<1x16x48xf32>
    %386 = vector.shape_cast %385 : vector<1x16x48xf32> to vector<16x48xf32>
    %387 = vector.shape_cast %384 : vector<16x48xf32> to vector<1x16x48xf32>
    tpu.vector_store %arg30[%c11_372, %c0_373, %c0_374], %387 {strides = array<i32>} : memref<16x16x48xf32, #tpu.memory_space<vmem>>, vector<1x16x48xf32>,
    %388 = vector.extract_strided_slice %275 {offsets = [192, 0], sizes = [16, 48], strides = [1, 1]} : vector<256x48xf32> to vector<16x48xf32>
    %c12_375 = arith.constant 12 : index
    %c0_376 = arith.constant 0 : index
    %c0_377 = arith.constant 0 : index
    %389 = vector.load %arg30[%c12_375, %c0_376, %c0_377] : memref<16x16x48xf32, #tpu.memory_space<vmem>>, vector<1x16x48xf32>
    %390 = vector.shape_cast %389 : vector<1x16x48xf32> to vector<16x48xf32>
    %391 = vector.shape_cast %388 : vector<16x48xf32> to vector<1x16x48xf32>
    tpu.vector_store %arg30[%c12_375, %c0_376, %c0_377], %391 {strides = array<i32>} : memref<16x16x48xf32, #tpu.memory_space<vmem>>, vector<1x16x48xf32>,
    %392 = vector.extract_strided_slice %275 {offsets = [208, 0], sizes = [16, 48], strides = [1, 1]} : vector<256x48xf32> to vector<16x48xf32>
    %c13_378 = arith.constant 13 : index
    %c0_379 = arith.constant 0 : index
    %c0_380 = arith.constant 0 : index
    %393 = vector.load %arg30[%c13_378, %c0_379, %c0_380] : memref<16x16x48xf32, #tpu.memory_space<vmem>>, vector<1x16x48xf32>
    %394 = vector.shape_cast %393 : vector<1x16x48xf32> to vector<16x48xf32>
    %395 = vector.shape_cast %392 : vector<16x48xf32> to vector<1x16x48xf32>
    tpu.vector_store %arg30[%c13_378, %c0_379, %c0_380], %395 {strides = array<i32>} : memref<16x16x48xf32, #tpu.memory_space<vmem>>, vector<1x16x48xf32>,
    %396 = vector.extract_strided_slice %275 {offsets = [224, 0], sizes = [16, 48], strides = [1, 1]} : vector<256x48xf32> to vector<16x48xf32>
    %c14_381 = arith.constant 14 : index
    %c0_382 = arith.constant 0 : index
    %c0_383 = arith.constant 0 : index
    %397 = vector.load %arg30[%c14_381, %c0_382, %c0_383] : memref<16x16x48xf32, #tpu.memory_space<vmem>>, vector<1x16x48xf32>
    %398 = vector.shape_cast %397 : vector<1x16x48xf32> to vector<16x48xf32>
    %399 = vector.shape_cast %396 : vector<16x48xf32> to vector<1x16x48xf32>
    tpu.vector_store %arg30[%c14_381, %c0_382, %c0_383], %399 {strides = array<i32>} : memref<16x16x48xf32, #tpu.memory_space<vmem>>, vector<1x16x48xf32>,
    %400 = vector.extract_strided_slice %275 {offsets = [240, 0], sizes = [16, 48], strides = [1, 1]} : vector<256x48xf32> to vector<16x48xf32>
    %c15_384 = arith.constant 15 : index
    %c0_385 = arith.constant 0 : index
    %c0_386 = arith.constant 0 : index
    %401 = vector.load %arg30[%c15_384, %c0_385, %c0_386] : memref<16x16x48xf32, #tpu.memory_space<vmem>>, vector<1x16x48xf32>
    %402 = vector.shape_cast %401 : vector<1x16x48xf32> to vector<16x48xf32>
    %403 = vector.shape_cast %400 : vector<16x48xf32> to vector<1x16x48xf32>
    tpu.vector_store %arg30[%c15_384, %c0_385, %c0_386], %403 {strides = array<i32>} : memref<16x16x48xf32, #tpu.memory_space<vmem>>, vector<1x16x48xf32>,
    %c0_387 = arith.constant 0 : index
    %c0_388 = arith.constant 0 : index
    %404 = vector.load %arg18[%c0_387, %c0_388] : memref<9x32xf32, #tpu.memory_space<vmem>>, vector<9x32xf32>
    %cst_389 = arith.constant 0.000000e+00 : f32
    %405 = vector.broadcast %cst_389 : f32 to vector<16x16x32xf32>
    %c0_390 = arith.constant 0 : index
    %c0_391 = arith.constant 0 : index
    %c0_392 = arith.constant 0 : index
    %406 = vector.load %arg31[%c0_390, %c0_391, %c0_392] : memref<16x16x32xf32, #tpu.memory_space<vmem>>, vector<16x16x32xf32>
    tpu.vector_store %arg31[%c0_390, %c0_391, %c0_392], %405 {strides = array<i32>} : memref<16x16x32xf32, #tpu.memory_space<vmem>>, vector<16x16x32xf32>,
    %c0_393 = arith.constant 0 : index
    %c0_394 = arith.constant 0 : index
    %c0_395 = arith.constant 0 : index
    %407 = vector.load %arg29[%c0_393, %c0_394, %c0_395] : memref<16x16x32xf32, #tpu.memory_space<vmem>>, vector<15x15x32xf32>
    %408 = vector.extract_strided_slice %404 {offsets = [0, 0], sizes = [1, 32], strides = [1, 1]} : vector<9x32xf32> to vector<1x32xf32>
    %c1_396 = arith.constant 1 : index
    %c1_397 = arith.constant 1 : index
    %c0_398 = arith.constant 0 : index
    %409 = vector.load %arg31[%c1_396, %c1_397, %c0_398] : memref<16x16x32xf32, #tpu.memory_space<vmem>>, vector<15x15x32xf32>
    %410 = vector.shape_cast %408 : vector<1x32xf32> to vector<1x1x32xf32>
    %411 = vector.broadcast %410 : vector<1x1x32xf32> to vector<15x15x32xf32>
    %412 = arith.mulf %407, %411 : vector<15x15x32xf32>
    %413 = arith.addf %409, %412 : vector<15x15x32xf32>
    %c1_399 = arith.constant 1 : index
    %c1_400 = arith.constant 1 : index
    %c0_401 = arith.constant 0 : index
    %414 = vector.load %arg31[%c1_399, %c1_400, %c0_401] : memref<16x16x32xf32, #tpu.memory_space<vmem>>, vector<15x15x32xf32>
    tpu.vector_store %arg31[%c1_399, %c1_400, %c0_401], %413 {strides = array<i32>} : memref<16x16x32xf32, #tpu.memory_space<vmem>>, vector<15x15x32xf32>,
    %c0_402 = arith.constant 0 : index
    %c0_403 = arith.constant 0 : index
    %c0_404 = arith.constant 0 : index
    %415 = vector.load %arg29[%c0_402, %c0_403, %c0_404] : memref<16x16x32xf32, #tpu.memory_space<vmem>>, vector<15x16x32xf32>
    %416 = vector.extract_strided_slice %404 {offsets = [1, 0], sizes = [1, 32], strides = [1, 1]} : vector<9x32xf32> to vector<1x32xf32>
    %c1_405 = arith.constant 1 : index
    %c0_406 = arith.constant 0 : index
    %c0_407 = arith.constant 0 : index
    %417 = vector.load %arg31[%c1_405, %c0_406, %c0_407] : memref<16x16x32xf32, #tpu.memory_space<vmem>>, vector<15x16x32xf32>
    %418 = vector.shape_cast %416 : vector<1x32xf32> to vector<1x1x32xf32>
    %419 = vector.broadcast %418 : vector<1x1x32xf32> to vector<15x16x32xf32>
    %420 = arith.mulf %415, %419 : vector<15x16x32xf32>
    %421 = arith.addf %417, %420 : vector<15x16x32xf32>
    %c1_408 = arith.constant 1 : index
    %c0_409 = arith.constant 0 : index
    %c0_410 = arith.constant 0 : index
    %422 = vector.load %arg31[%c1_408, %c0_409, %c0_410] : memref<16x16x32xf32, #tpu.memory_space<vmem>>, vector<15x16x32xf32>
    tpu.vector_store %arg31[%c1_408, %c0_409, %c0_410], %421 {strides = array<i32>} : memref<16x16x32xf32, #tpu.memory_space<vmem>>, vector<15x16x32xf32>,
    %c0_411 = arith.constant 0 : index
    %c1_412 = arith.constant 1 : index
    %c0_413 = arith.constant 0 : index
    %423 = vector.load %arg29[%c0_411, %c1_412, %c0_413] : memref<16x16x32xf32, #tpu.memory_space<vmem>>, vector<15x15x32xf32>
    %424 = vector.extract_strided_slice %404 {offsets = [2, 0], sizes = [1, 32], strides = [1, 1]} : vector<9x32xf32> to vector<1x32xf32>
    %c1_414 = arith.constant 1 : index
    %c0_415 = arith.constant 0 : index
    %c0_416 = arith.constant 0 : index
    %425 = vector.load %arg31[%c1_414, %c0_415, %c0_416] : memref<16x16x32xf32, #tpu.memory_space<vmem>>, vector<15x15x32xf32>
    %426 = vector.shape_cast %424 : vector<1x32xf32> to vector<1x1x32xf32>
    %427 = vector.broadcast %426 : vector<1x1x32xf32> to vector<15x15x32xf32>
    %428 = arith.mulf %423, %427 : vector<15x15x32xf32>
    %429 = arith.addf %425, %428 : vector<15x15x32xf32>
    %c1_417 = arith.constant 1 : index
    %c0_418 = arith.constant 0 : index
    %c0_419 = arith.constant 0 : index
    %430 = vector.load %arg31[%c1_417, %c0_418, %c0_419] : memref<16x16x32xf32, #tpu.memory_space<vmem>>, vector<15x15x32xf32>
    tpu.vector_store %arg31[%c1_417, %c0_418, %c0_419], %429 {strides = array<i32>} : memref<16x16x32xf32, #tpu.memory_space<vmem>>, vector<15x15x32xf32>,
    %c0_420 = arith.constant 0 : index
    %c0_421 = arith.constant 0 : index
    %c0_422 = arith.constant 0 : index
    %431 = vector.load %arg29[%c0_420, %c0_421, %c0_422] : memref<16x16x32xf32, #tpu.memory_space<vmem>>, vector<16x15x32xf32>
    %432 = vector.extract_strided_slice %404 {offsets = [3, 0], sizes = [1, 32], strides = [1, 1]} : vector<9x32xf32> to vector<1x32xf32>
    %c0_423 = arith.constant 0 : index
    %c1_424 = arith.constant 1 : index
    %c0_425 = arith.constant 0 : index
    %433 = vector.load %arg31[%c0_423, %c1_424, %c0_425] : memref<16x16x32xf32, #tpu.memory_space<vmem>>, vector<16x15x32xf32>
    %434 = vector.shape_cast %432 : vector<1x32xf32> to vector<1x1x32xf32>
    %435 = vector.broadcast %434 : vector<1x1x32xf32> to vector<16x15x32xf32>
    %436 = arith.mulf %431, %435 : vector<16x15x32xf32>
    %437 = arith.addf %433, %436 : vector<16x15x32xf32>
    %c0_426 = arith.constant 0 : index
    %c1_427 = arith.constant 1 : index
    %c0_428 = arith.constant 0 : index
    %438 = vector.load %arg31[%c0_426, %c1_427, %c0_428] : memref<16x16x32xf32, #tpu.memory_space<vmem>>, vector<16x15x32xf32>
    tpu.vector_store %arg31[%c0_426, %c1_427, %c0_428], %437 {strides = array<i32>} : memref<16x16x32xf32, #tpu.memory_space<vmem>>, vector<16x15x32xf32>,
    %c0_429 = arith.constant 0 : index
    %c0_430 = arith.constant 0 : index
    %c0_431 = arith.constant 0 : index
    %439 = vector.load %arg29[%c0_429, %c0_430, %c0_431] : memref<16x16x32xf32, #tpu.memory_space<vmem>>, vector<16x16x32xf32>
    %440 = vector.extract_strided_slice %404 {offsets = [4, 0], sizes = [1, 32], strides = [1, 1]} : vector<9x32xf32> to vector<1x32xf32>
    %c0_432 = arith.constant 0 : index
    %c0_433 = arith.constant 0 : index
    %c0_434 = arith.constant 0 : index
    %441 = vector.load %arg31[%c0_432, %c0_433, %c0_434] : memref<16x16x32xf32, #tpu.memory_space<vmem>>, vector<16x16x32xf32>
    %442 = vector.shape_cast %440 : vector<1x32xf32> to vector<1x1x32xf32>
    %443 = vector.broadcast %442 : vector<1x1x32xf32> to vector<16x16x32xf32>
    %444 = arith.mulf %439, %443 : vector<16x16x32xf32>
    %445 = arith.addf %441, %444 : vector<16x16x32xf32>
    %c0_435 = arith.constant 0 : index
    %c0_436 = arith.constant 0 : index
    %c0_437 = arith.constant 0 : index
    %446 = vector.load %arg31[%c0_435, %c0_436, %c0_437] : memref<16x16x32xf32, #tpu.memory_space<vmem>>, vector<16x16x32xf32>
    tpu.vector_store %arg31[%c0_435, %c0_436, %c0_437], %445 {strides = array<i32>} : memref<16x16x32xf32, #tpu.memory_space<vmem>>, vector<16x16x32xf32>,
    %c0_438 = arith.constant 0 : index
    %c1_439 = arith.constant 1 : index
    %c0_440 = arith.constant 0 : index
    %447 = vector.load %arg29[%c0_438, %c1_439, %c0_440] : memref<16x16x32xf32, #tpu.memory_space<vmem>>, vector<16x15x32xf32>
    %448 = vector.extract_strided_slice %404 {offsets = [5, 0], sizes = [1, 32], strides = [1, 1]} : vector<9x32xf32> to vector<1x32xf32>
    %c0_441 = arith.constant 0 : index
    %c0_442 = arith.constant 0 : index
    %c0_443 = arith.constant 0 : index
    %449 = vector.load %arg31[%c0_441, %c0_442, %c0_443] : memref<16x16x32xf32, #tpu.memory_space<vmem>>, vector<16x15x32xf32>
    %450 = vector.shape_cast %448 : vector<1x32xf32> to vector<1x1x32xf32>
    %451 = vector.broadcast %450 : vector<1x1x32xf32> to vector<16x15x32xf32>
    %452 = arith.mulf %447, %451 : vector<16x15x32xf32>
    %453 = arith.addf %449, %452 : vector<16x15x32xf32>
    %c0_444 = arith.constant 0 : index
    %c0_445 = arith.constant 0 : index
    %c0_446 = arith.constant 0 : index
    %454 = vector.load %arg31[%c0_444, %c0_445, %c0_446] : memref<16x16x32xf32, #tpu.memory_space<vmem>>, vector<16x15x32xf32>
    tpu.vector_store %arg31[%c0_444, %c0_445, %c0_446], %453 {strides = array<i32>} : memref<16x16x32xf32, #tpu.memory_space<vmem>>, vector<16x15x32xf32>,
    %c1_447 = arith.constant 1 : index
    %c0_448 = arith.constant 0 : index
    %c0_449 = arith.constant 0 : index
    %455 = vector.load %arg29[%c1_447, %c0_448, %c0_449] : memref<16x16x32xf32, #tpu.memory_space<vmem>>, vector<15x15x32xf32>
    %456 = vector.extract_strided_slice %404 {offsets = [6, 0], sizes = [1, 32], strides = [1, 1]} : vector<9x32xf32> to vector<1x32xf32>
    %c0_450 = arith.constant 0 : index
    %c1_451 = arith.constant 1 : index
    %c0_452 = arith.constant 0 : index
    %457 = vector.load %arg31[%c0_450, %c1_451, %c0_452] : memref<16x16x32xf32, #tpu.memory_space<vmem>>, vector<15x15x32xf32>
    %458 = vector.shape_cast %456 : vector<1x32xf32> to vector<1x1x32xf32>
    %459 = vector.broadcast %458 : vector<1x1x32xf32> to vector<15x15x32xf32>
    %460 = arith.mulf %455, %459 : vector<15x15x32xf32>
    %461 = arith.addf %457, %460 : vector<15x15x32xf32>
    %c0_453 = arith.constant 0 : index
    %c1_454 = arith.constant 1 : index
    %c0_455 = arith.constant 0 : index
    %462 = vector.load %arg31[%c0_453, %c1_454, %c0_455] : memref<16x16x32xf32, #tpu.memory_space<vmem>>, vector<15x15x32xf32>
    tpu.vector_store %arg31[%c0_453, %c1_454, %c0_455], %461 {strides = array<i32>} : memref<16x16x32xf32, #tpu.memory_space<vmem>>, vector<15x15x32xf32>,
    %c1_456 = arith.constant 1 : index
    %c0_457 = arith.constant 0 : index
    %c0_458 = arith.constant 0 : index
    %463 = vector.load %arg29[%c1_456, %c0_457, %c0_458] : memref<16x16x32xf32, #tpu.memory_space<vmem>>, vector<15x16x32xf32>
    %464 = vector.extract_strided_slice %404 {offsets = [7, 0], sizes = [1, 32], strides = [1, 1]} : vector<9x32xf32> to vector<1x32xf32>
    %c0_459 = arith.constant 0 : index
    %c0_460 = arith.constant 0 : index
    %c0_461 = arith.constant 0 : index
    %465 = vector.load %arg31[%c0_459, %c0_460, %c0_461] : memref<16x16x32xf32, #tpu.memory_space<vmem>>, vector<15x16x32xf32>
    %466 = vector.shape_cast %464 : vector<1x32xf32> to vector<1x1x32xf32>
    %467 = vector.broadcast %466 : vector<1x1x32xf32> to vector<15x16x32xf32>
    %468 = arith.mulf %463, %467 : vector<15x16x32xf32>
    %469 = arith.addf %465, %468 : vector<15x16x32xf32>
    %c0_462 = arith.constant 0 : index
    %c0_463 = arith.constant 0 : index
    %c0_464 = arith.constant 0 : index
    %470 = vector.load %arg31[%c0_462, %c0_463, %c0_464] : memref<16x16x32xf32, #tpu.memory_space<vmem>>, vector<15x16x32xf32>
    tpu.vector_store %arg31[%c0_462, %c0_463, %c0_464], %469 {strides = array<i32>} : memref<16x16x32xf32, #tpu.memory_space<vmem>>, vector<15x16x32xf32>,
    %c1_465 = arith.constant 1 : index
    %c1_466 = arith.constant 1 : index
    %c0_467 = arith.constant 0 : index
    %471 = vector.load %arg29[%c1_465, %c1_466, %c0_467] : memref<16x16x32xf32, #tpu.memory_space<vmem>>, vector<15x15x32xf32>
    %472 = vector.extract_strided_slice %404 {offsets = [8, 0], sizes = [1, 32], strides = [1, 1]} : vector<9x32xf32> to vector<1x32xf32>
    %c0_468 = arith.constant 0 : index
    %c0_469 = arith.constant 0 : index
    %c0_470 = arith.constant 0 : index
    %473 = vector.load %arg31[%c0_468, %c0_469, %c0_470] : memref<16x16x32xf32, #tpu.memory_space<vmem>>, vector<15x15x32xf32>
    %474 = vector.shape_cast %472 : vector<1x32xf32> to vector<1x1x32xf32>
    %475 = vector.broadcast %474 : vector<1x1x32xf32> to vector<15x15x32xf32>
    %476 = arith.mulf %471, %475 : vector<15x15x32xf32>
    %477 = arith.addf %473, %476 : vector<15x15x32xf32>
    %c0_471 = arith.constant 0 : index
    %c0_472 = arith.constant 0 : index
    %c0_473 = arith.constant 0 : index
    %478 = vector.load %arg31[%c0_471, %c0_472, %c0_473] : memref<16x16x32xf32, #tpu.memory_space<vmem>>, vector<15x15x32xf32>
    tpu.vector_store %arg31[%c0_471, %c0_472, %c0_473], %477 {strides = array<i32>} : memref<16x16x32xf32, #tpu.memory_space<vmem>>, vector<15x15x32xf32>,
    %c0_474 = arith.constant 0 : index
    %c0_475 = arith.constant 0 : index
    %479 = vector.load %arg19[%c0_474, %c0_475] : memref<9x48xf32, #tpu.memory_space<vmem>>, vector<9x48xf32>
    %cst_476 = arith.constant 0.000000e+00 : f32
    %480 = vector.broadcast %cst_476 : f32 to vector<16x16x48xf32>
    %c0_477 = arith.constant 0 : index
    %c0_478 = arith.constant 0 : index
    %c0_479 = arith.constant 0 : index
    %481 = vector.load %arg32[%c0_477, %c0_478, %c0_479] : memref<16x16x48xf32, #tpu.memory_space<vmem>>, vector<16x16x48xf32>
    tpu.vector_store %arg32[%c0_477, %c0_478, %c0_479], %480 {strides = array<i32>} : memref<16x16x48xf32, #tpu.memory_space<vmem>>, vector<16x16x48xf32>,
    %c0_480 = arith.constant 0 : index
    %c0_481 = arith.constant 0 : index
    %c0_482 = arith.constant 0 : index
    %482 = vector.load %arg30[%c0_480, %c0_481, %c0_482] : memref<16x16x48xf32, #tpu.memory_space<vmem>>, vector<15x15x48xf32>
    %483 = vector.extract_strided_slice %479 {offsets = [0, 0], sizes = [1, 48], strides = [1, 1]} : vector<9x48xf32> to vector<1x48xf32>
    %c1_483 = arith.constant 1 : index
    %c1_484 = arith.constant 1 : index
    %c0_485 = arith.constant 0 : index
    %484 = vector.load %arg32[%c1_483, %c1_484, %c0_485] : memref<16x16x48xf32, #tpu.memory_space<vmem>>, vector<15x15x48xf32>
    %485 = vector.shape_cast %483 : vector<1x48xf32> to vector<1x1x48xf32>
    %486 = vector.broadcast %485 : vector<1x1x48xf32> to vector<15x15x48xf32>
    %487 = arith.mulf %482, %486 : vector<15x15x48xf32>
    %488 = arith.addf %484, %487 : vector<15x15x48xf32>
    %c1_486 = arith.constant 1 : index
    %c1_487 = arith.constant 1 : index
    %c0_488 = arith.constant 0 : index
    %489 = vector.load %arg32[%c1_486, %c1_487, %c0_488] : memref<16x16x48xf32, #tpu.memory_space<vmem>>, vector<15x15x48xf32>
    tpu.vector_store %arg32[%c1_486, %c1_487, %c0_488], %488 {strides = array<i32>} : memref<16x16x48xf32, #tpu.memory_space<vmem>>, vector<15x15x48xf32>,
    %c0_489 = arith.constant 0 : index
    %c0_490 = arith.constant 0 : index
    %c0_491 = arith.constant 0 : index
    %490 = vector.load %arg30[%c0_489, %c0_490, %c0_491] : memref<16x16x48xf32, #tpu.memory_space<vmem>>, vector<15x16x48xf32>
    %491 = vector.extract_strided_slice %479 {offsets = [1, 0], sizes = [1, 48], strides = [1, 1]} : vector<9x48xf32> to vector<1x48xf32>
    %c1_492 = arith.constant 1 : index
    %c0_493 = arith.constant 0 : index
    %c0_494 = arith.constant 0 : index
    %492 = vector.load %arg32[%c1_492, %c0_493, %c0_494] : memref<16x16x48xf32, #tpu.memory_space<vmem>>, vector<15x16x48xf32>
    %493 = vector.shape_cast %491 : vector<1x48xf32> to vector<1x1x48xf32>
    %494 = vector.broadcast %493 : vector<1x1x48xf32> to vector<15x16x48xf32>
    %495 = arith.mulf %490, %494 : vector<15x16x48xf32>
    %496 = arith.addf %492, %495 : vector<15x16x48xf32>
    %c1_495 = arith.constant 1 : index
    %c0_496 = arith.constant 0 : index
    %c0_497 = arith.constant 0 : index
    %497 = vector.load %arg32[%c1_495, %c0_496, %c0_497] : memref<16x16x48xf32, #tpu.memory_space<vmem>>, vector<15x16x48xf32>
    tpu.vector_store %arg32[%c1_495, %c0_496, %c0_497], %496 {strides = array<i32>} : memref<16x16x48xf32, #tpu.memory_space<vmem>>, vector<15x16x48xf32>,
    %c0_498 = arith.constant 0 : index
    %c1_499 = arith.constant 1 : index
    %c0_500 = arith.constant 0 : index
    %498 = vector.load %arg30[%c0_498, %c1_499, %c0_500] : memref<16x16x48xf32, #tpu.memory_space<vmem>>, vector<15x15x48xf32>
    %499 = vector.extract_strided_slice %479 {offsets = [2, 0], sizes = [1, 48], strides = [1, 1]} : vector<9x48xf32> to vector<1x48xf32>
    %c1_501 = arith.constant 1 : index
    %c0_502 = arith.constant 0 : index
    %c0_503 = arith.constant 0 : index
    %500 = vector.load %arg32[%c1_501, %c0_502, %c0_503] : memref<16x16x48xf32, #tpu.memory_space<vmem>>, vector<15x15x48xf32>
    %501 = vector.shape_cast %499 : vector<1x48xf32> to vector<1x1x48xf32>
    %502 = vector.broadcast %501 : vector<1x1x48xf32> to vector<15x15x48xf32>
    %503 = arith.mulf %498, %502 : vector<15x15x48xf32>
    %504 = arith.addf %500, %503 : vector<15x15x48xf32>
    %c1_504 = arith.constant 1 : index
    %c0_505 = arith.constant 0 : index
    %c0_506 = arith.constant 0 : index
    %505 = vector.load %arg32[%c1_504, %c0_505, %c0_506] : memref<16x16x48xf32, #tpu.memory_space<vmem>>, vector<15x15x48xf32>
    tpu.vector_store %arg32[%c1_504, %c0_505, %c0_506], %504 {strides = array<i32>} : memref<16x16x48xf32, #tpu.memory_space<vmem>>, vector<15x15x48xf32>,
    %c0_507 = arith.constant 0 : index
    %c0_508 = arith.constant 0 : index
    %c0_509 = arith.constant 0 : index
    %506 = vector.load %arg30[%c0_507, %c0_508, %c0_509] : memref<16x16x48xf32, #tpu.memory_space<vmem>>, vector<16x15x48xf32>
    %507 = vector.extract_strided_slice %479 {offsets = [3, 0], sizes = [1, 48], strides = [1, 1]} : vector<9x48xf32> to vector<1x48xf32>
    %c0_510 = arith.constant 0 : index
    %c1_511 = arith.constant 1 : index
    %c0_512 = arith.constant 0 : index
    %508 = vector.load %arg32[%c0_510, %c1_511, %c0_512] : memref<16x16x48xf32, #tpu.memory_space<vmem>>, vector<16x15x48xf32>
    %509 = vector.shape_cast %507 : vector<1x48xf32> to vector<1x1x48xf32>
    %510 = vector.broadcast %509 : vector<1x1x48xf32> to vector<16x15x48xf32>
    %511 = arith.mulf %506, %510 : vector<16x15x48xf32>
    %512 = arith.addf %508, %511 : vector<16x15x48xf32>
    %c0_513 = arith.constant 0 : index
    %c1_514 = arith.constant 1 : index
    %c0_515 = arith.constant 0 : index
    %513 = vector.load %arg32[%c0_513, %c1_514, %c0_515] : memref<16x16x48xf32, #tpu.memory_space<vmem>>, vector<16x15x48xf32>
    tpu.vector_store %arg32[%c0_513, %c1_514, %c0_515], %512 {strides = array<i32>} : memref<16x16x48xf32, #tpu.memory_space<vmem>>, vector<16x15x48xf32>,
    %c0_516 = arith.constant 0 : index
    %c0_517 = arith.constant 0 : index
    %c0_518 = arith.constant 0 : index
    %514 = vector.load %arg30[%c0_516, %c0_517, %c0_518] : memref<16x16x48xf32, #tpu.memory_space<vmem>>, vector<16x16x48xf32>
    %515 = vector.extract_strided_slice %479 {offsets = [4, 0], sizes = [1, 48], strides = [1, 1]} : vector<9x48xf32> to vector<1x48xf32>
    %c0_519 = arith.constant 0 : index
    %c0_520 = arith.constant 0 : index
    %c0_521 = arith.constant 0 : index
    %516 = vector.load %arg32[%c0_519, %c0_520, %c0_521] : memref<16x16x48xf32, #tpu.memory_space<vmem>>, vector<16x16x48xf32>
    %517 = vector.shape_cast %515 : vector<1x48xf32> to vector<1x1x48xf32>
    %518 = vector.broadcast %517 : vector<1x1x48xf32> to vector<16x16x48xf32>
    %519 = arith.mulf %514, %518 : vector<16x16x48xf32>
    %520 = arith.addf %516, %519 : vector<16x16x48xf32>
    %c0_522 = arith.constant 0 : index
    %c0_523 = arith.constant 0 : index
    %c0_524 = arith.constant 0 : index
    %521 = vector.load %arg32[%c0_522, %c0_523, %c0_524] : memref<16x16x48xf32, #tpu.memory_space<vmem>>, vector<16x16x48xf32>
    tpu.vector_store %arg32[%c0_522, %c0_523, %c0_524], %520 {strides = array<i32>} : memref<16x16x48xf32, #tpu.memory_space<vmem>>, vector<16x16x48xf32>,
    %c0_525 = arith.constant 0 : index
    %c1_526 = arith.constant 1 : index
    %c0_527 = arith.constant 0 : index
    %522 = vector.load %arg30[%c0_525, %c1_526, %c0_527] : memref<16x16x48xf32, #tpu.memory_space<vmem>>, vector<16x15x48xf32>
    %523 = vector.extract_strided_slice %479 {offsets = [5, 0], sizes = [1, 48], strides = [1, 1]} : vector<9x48xf32> to vector<1x48xf32>
    %c0_528 = arith.constant 0 : index
    %c0_529 = arith.constant 0 : index
    %c0_530 = arith.constant 0 : index
    %524 = vector.load %arg32[%c0_528, %c0_529, %c0_530] : memref<16x16x48xf32, #tpu.memory_space<vmem>>, vector<16x15x48xf32>
    %525 = vector.shape_cast %523 : vector<1x48xf32> to vector<1x1x48xf32>
    %526 = vector.broadcast %525 : vector<1x1x48xf32> to vector<16x15x48xf32>
    %527 = arith.mulf %522, %526 : vector<16x15x48xf32>
    %528 = arith.addf %524, %527 : vector<16x15x48xf32>
    %c0_531 = arith.constant 0 : index
    %c0_532 = arith.constant 0 : index
    %c0_533 = arith.constant 0 : index
    %529 = vector.load %arg32[%c0_531, %c0_532, %c0_533] : memref<16x16x48xf32, #tpu.memory_space<vmem>>, vector<16x15x48xf32>
    tpu.vector_store %arg32[%c0_531, %c0_532, %c0_533], %528 {strides = array<i32>} : memref<16x16x48xf32, #tpu.memory_space<vmem>>, vector<16x15x48xf32>,
    %c1_534 = arith.constant 1 : index
    %c0_535 = arith.constant 0 : index
    %c0_536 = arith.constant 0 : index
    %530 = vector.load %arg30[%c1_534, %c0_535, %c0_536] : memref<16x16x48xf32, #tpu.memory_space<vmem>>, vector<15x15x48xf32>
    %531 = vector.extract_strided_slice %479 {offsets = [6, 0], sizes = [1, 48], strides = [1, 1]} : vector<9x48xf32> to vector<1x48xf32>
    %c0_537 = arith.constant 0 : index
    %c1_538 = arith.constant 1 : index
    %c0_539 = arith.constant 0 : index
    %532 = vector.load %arg32[%c0_537, %c1_538, %c0_539] : memref<16x16x48xf32, #tpu.memory_space<vmem>>, vector<15x15x48xf32>
    %533 = vector.shape_cast %531 : vector<1x48xf32> to vector<1x1x48xf32>
    %534 = vector.broadcast %533 : vector<1x1x48xf32> to vector<15x15x48xf32>
    %535 = arith.mulf %530, %534 : vector<15x15x48xf32>
    %536 = arith.addf %532, %535 : vector<15x15x48xf32>
    %c0_540 = arith.constant 0 : index
    %c1_541 = arith.constant 1 : index
    %c0_542 = arith.constant 0 : index
    %537 = vector.load %arg32[%c0_540, %c1_541, %c0_542] : memref<16x16x48xf32, #tpu.memory_space<vmem>>, vector<15x15x48xf32>
    tpu.vector_store %arg32[%c0_540, %c1_541, %c0_542], %536 {strides = array<i32>} : memref<16x16x48xf32, #tpu.memory_space<vmem>>, vector<15x15x48xf32>,
    %c1_543 = arith.constant 1 : index
    %c0_544 = arith.constant 0 : index
    %c0_545 = arith.constant 0 : index
    %538 = vector.load %arg30[%c1_543, %c0_544, %c0_545] : memref<16x16x48xf32, #tpu.memory_space<vmem>>, vector<15x16x48xf32>
    %539 = vector.extract_strided_slice %479 {offsets = [7, 0], sizes = [1, 48], strides = [1, 1]} : vector<9x48xf32> to vector<1x48xf32>
    %c0_546 = arith.constant 0 : index
    %c0_547 = arith.constant 0 : index
    %c0_548 = arith.constant 0 : index
    %540 = vector.load %arg32[%c0_546, %c0_547, %c0_548] : memref<16x16x48xf32, #tpu.memory_space<vmem>>, vector<15x16x48xf32>
    %541 = vector.shape_cast %539 : vector<1x48xf32> to vector<1x1x48xf32>
    %542 = vector.broadcast %541 : vector<1x1x48xf32> to vector<15x16x48xf32>
    %543 = arith.mulf %538, %542 : vector<15x16x48xf32>
    %544 = arith.addf %540, %543 : vector<15x16x48xf32>
    %c0_549 = arith.constant 0 : index
    %c0_550 = arith.constant 0 : index
    %c0_551 = arith.constant 0 : index
    %545 = vector.load %arg32[%c0_549, %c0_550, %c0_551] : memref<16x16x48xf32, #tpu.memory_space<vmem>>, vector<15x16x48xf32>
    tpu.vector_store %arg32[%c0_549, %c0_550, %c0_551], %544 {strides = array<i32>} : memref<16x16x48xf32, #tpu.memory_space<vmem>>, vector<15x16x48xf32>,
    %c1_552 = arith.constant 1 : index
    %c1_553 = arith.constant 1 : index
    %c0_554 = arith.constant 0 : index
    %546 = vector.load %arg30[%c1_552, %c1_553, %c0_554] : memref<16x16x48xf32, #tpu.memory_space<vmem>>, vector<15x15x48xf32>
    %547 = vector.extract_strided_slice %479 {offsets = [8, 0], sizes = [1, 48], strides = [1, 1]} : vector<9x48xf32> to vector<1x48xf32>
    %c0_555 = arith.constant 0 : index
    %c0_556 = arith.constant 0 : index
    %c0_557 = arith.constant 0 : index
    %548 = vector.load %arg32[%c0_555, %c0_556, %c0_557] : memref<16x16x48xf32, #tpu.memory_space<vmem>>, vector<15x15x48xf32>
    %549 = vector.shape_cast %547 : vector<1x48xf32> to vector<1x1x48xf32>
    %550 = vector.broadcast %549 : vector<1x1x48xf32> to vector<15x15x48xf32>
    %551 = arith.mulf %546, %550 : vector<15x15x48xf32>
    %552 = arith.addf %548, %551 : vector<15x15x48xf32>
    %c0_558 = arith.constant 0 : index
    %c0_559 = arith.constant 0 : index
    %c0_560 = arith.constant 0 : index
    %553 = vector.load %arg32[%c0_558, %c0_559, %c0_560] : memref<16x16x48xf32, #tpu.memory_space<vmem>>, vector<15x15x48xf32>
    tpu.vector_store %arg32[%c0_558, %c0_559, %c0_560], %552 {strides = array<i32>} : memref<16x16x48xf32, #tpu.memory_space<vmem>>, vector<15x15x48xf32>,
    %c0_561 = arith.constant 0 : index
    %c0_562 = arith.constant 0 : index
    %c0_563 = arith.constant 0 : index
    %554 = vector.load %arg31[%c0_561, %c0_562, %c0_563] : memref<16x16x32xf32, #tpu.memory_space<vmem>>, vector<1x16x32xf32>
    %555 = vector.shape_cast %554 : vector<1x16x32xf32> to vector<16x32xf32>
    %c0_564 = arith.constant 0 : index
    %c0_565 = arith.constant 0 : index
    %556 = vector.load %arg33[%c0_564, %c0_565] : memref<256x32xf32, #tpu.memory_space<vmem>>, vector<16x32xf32>
    tpu.vector_store %arg33[%c0_564, %c0_565], %555 {strides = array<i32>} : memref<256x32xf32, #tpu.memory_space<vmem>>, vector<16x32xf32>,
    %c1_566 = arith.constant 1 : index
    %c0_567 = arith.constant 0 : index
    %c0_568 = arith.constant 0 : index
    %557 = vector.load %arg31[%c1_566, %c0_567, %c0_568] : memref<16x16x32xf32, #tpu.memory_space<vmem>>, vector<1x16x32xf32>
    %558 = vector.shape_cast %557 : vector<1x16x32xf32> to vector<16x32xf32>
    %c16 = arith.constant 16 : index
    %c0_569 = arith.constant 0 : index
    %559 = vector.load %arg33[%c16, %c0_569] : memref<256x32xf32, #tpu.memory_space<vmem>>, vector<16x32xf32>
    tpu.vector_store %arg33[%c16, %c0_569], %558 {strides = array<i32>} : memref<256x32xf32, #tpu.memory_space<vmem>>, vector<16x32xf32>,
    %c2_570 = arith.constant 2 : index
    %c0_571 = arith.constant 0 : index
    %c0_572 = arith.constant 0 : index
    %560 = vector.load %arg31[%c2_570, %c0_571, %c0_572] : memref<16x16x32xf32, #tpu.memory_space<vmem>>, vector<1x16x32xf32>
    %561 = vector.shape_cast %560 : vector<1x16x32xf32> to vector<16x32xf32>
    %c32_573 = arith.constant 32 : index
    %c0_574 = arith.constant 0 : index
    %562 = vector.load %arg33[%c32_573, %c0_574] : memref<256x32xf32, #tpu.memory_space<vmem>>, vector<16x32xf32>
    tpu.vector_store %arg33[%c32_573, %c0_574], %561 {strides = array<i32>} : memref<256x32xf32, #tpu.memory_space<vmem>>, vector<16x32xf32>,
    %c3_575 = arith.constant 3 : index
    %c0_576 = arith.constant 0 : index
    %c0_577 = arith.constant 0 : index
    %563 = vector.load %arg31[%c3_575, %c0_576, %c0_577] : memref<16x16x32xf32, #tpu.memory_space<vmem>>, vector<1x16x32xf32>
    %564 = vector.shape_cast %563 : vector<1x16x32xf32> to vector<16x32xf32>
    %c48 = arith.constant 48 : index
    %c0_578 = arith.constant 0 : index
    %565 = vector.load %arg33[%c48, %c0_578] : memref<256x32xf32, #tpu.memory_space<vmem>>, vector<16x32xf32>
    tpu.vector_store %arg33[%c48, %c0_578], %564 {strides = array<i32>} : memref<256x32xf32, #tpu.memory_space<vmem>>, vector<16x32xf32>,
    %c4_579 = arith.constant 4 : index
    %c0_580 = arith.constant 0 : index
    %c0_581 = arith.constant 0 : index
    %566 = vector.load %arg31[%c4_579, %c0_580, %c0_581] : memref<16x16x32xf32, #tpu.memory_space<vmem>>, vector<1x16x32xf32>
    %567 = vector.shape_cast %566 : vector<1x16x32xf32> to vector<16x32xf32>
    %c64_582 = arith.constant 64 : index
    %c0_583 = arith.constant 0 : index
    %568 = vector.load %arg33[%c64_582, %c0_583] : memref<256x32xf32, #tpu.memory_space<vmem>>, vector<16x32xf32>
    tpu.vector_store %arg33[%c64_582, %c0_583], %567 {strides = array<i32>} : memref<256x32xf32, #tpu.memory_space<vmem>>, vector<16x32xf32>,
    %c5_584 = arith.constant 5 : index
    %c0_585 = arith.constant 0 : index
    %c0_586 = arith.constant 0 : index
    %569 = vector.load %arg31[%c5_584, %c0_585, %c0_586] : memref<16x16x32xf32, #tpu.memory_space<vmem>>, vector<1x16x32xf32>
    %570 = vector.shape_cast %569 : vector<1x16x32xf32> to vector<16x32xf32>
    %c80 = arith.constant 80 : index
    %c0_587 = arith.constant 0 : index
    %571 = vector.load %arg33[%c80, %c0_587] : memref<256x32xf32, #tpu.memory_space<vmem>>, vector<16x32xf32>
    tpu.vector_store %arg33[%c80, %c0_587], %570 {strides = array<i32>} : memref<256x32xf32, #tpu.memory_space<vmem>>, vector<16x32xf32>,
    %c6_588 = arith.constant 6 : index
    %c0_589 = arith.constant 0 : index
    %c0_590 = arith.constant 0 : index
    %572 = vector.load %arg31[%c6_588, %c0_589, %c0_590] : memref<16x16x32xf32, #tpu.memory_space<vmem>>, vector<1x16x32xf32>
    %573 = vector.shape_cast %572 : vector<1x16x32xf32> to vector<16x32xf32>
    %c96_591 = arith.constant 96 : index
    %c0_592 = arith.constant 0 : index
    %574 = vector.load %arg33[%c96_591, %c0_592] : memref<256x32xf32, #tpu.memory_space<vmem>>, vector<16x32xf32>
    tpu.vector_store %arg33[%c96_591, %c0_592], %573 {strides = array<i32>} : memref<256x32xf32, #tpu.memory_space<vmem>>, vector<16x32xf32>,
    %c7_593 = arith.constant 7 : index
    %c0_594 = arith.constant 0 : index
    %c0_595 = arith.constant 0 : index
    %575 = vector.load %arg31[%c7_593, %c0_594, %c0_595] : memref<16x16x32xf32, #tpu.memory_space<vmem>>, vector<1x16x32xf32>
    %576 = vector.shape_cast %575 : vector<1x16x32xf32> to vector<16x32xf32>
    %c112 = arith.constant 112 : index
    %c0_596 = arith.constant 0 : index
    %577 = vector.load %arg33[%c112, %c0_596] : memref<256x32xf32, #tpu.memory_space<vmem>>, vector<16x32xf32>
    tpu.vector_store %arg33[%c112, %c0_596], %576 {strides = array<i32>} : memref<256x32xf32, #tpu.memory_space<vmem>>, vector<16x32xf32>,
    %c8_597 = arith.constant 8 : index
    %c0_598 = arith.constant 0 : index
    %c0_599 = arith.constant 0 : index
    %578 = vector.load %arg31[%c8_597, %c0_598, %c0_599] : memref<16x16x32xf32, #tpu.memory_space<vmem>>, vector<1x16x32xf32>
    %579 = vector.shape_cast %578 : vector<1x16x32xf32> to vector<16x32xf32>
    %c128_600 = arith.constant 128 : index
    %c0_601 = arith.constant 0 : index
    %580 = vector.load %arg33[%c128_600, %c0_601] : memref<256x32xf32, #tpu.memory_space<vmem>>, vector<16x32xf32>
    tpu.vector_store %arg33[%c128_600, %c0_601], %579 {strides = array<i32>} : memref<256x32xf32, #tpu.memory_space<vmem>>, vector<16x32xf32>,
    %c9_602 = arith.constant 9 : index
    %c0_603 = arith.constant 0 : index
    %c0_604 = arith.constant 0 : index
    %581 = vector.load %arg31[%c9_602, %c0_603, %c0_604] : memref<16x16x32xf32, #tpu.memory_space<vmem>>, vector<1x16x32xf32>
    %582 = vector.shape_cast %581 : vector<1x16x32xf32> to vector<16x32xf32>
    %c144 = arith.constant 144 : index
    %c0_605 = arith.constant 0 : index
    %583 = vector.load %arg33[%c144, %c0_605] : memref<256x32xf32, #tpu.memory_space<vmem>>, vector<16x32xf32>
    tpu.vector_store %arg33[%c144, %c0_605], %582 {strides = array<i32>} : memref<256x32xf32, #tpu.memory_space<vmem>>, vector<16x32xf32>,
    %c10_606 = arith.constant 10 : index
    %c0_607 = arith.constant 0 : index
    %c0_608 = arith.constant 0 : index
    %584 = vector.load %arg31[%c10_606, %c0_607, %c0_608] : memref<16x16x32xf32, #tpu.memory_space<vmem>>, vector<1x16x32xf32>
    %585 = vector.shape_cast %584 : vector<1x16x32xf32> to vector<16x32xf32>
    %c160 = arith.constant 160 : index
    %c0_609 = arith.constant 0 : index
    %586 = vector.load %arg33[%c160, %c0_609] : memref<256x32xf32, #tpu.memory_space<vmem>>, vector<16x32xf32>
    tpu.vector_store %arg33[%c160, %c0_609], %585 {strides = array<i32>} : memref<256x32xf32, #tpu.memory_space<vmem>>, vector<16x32xf32>,
    %c11_610 = arith.constant 11 : index
    %c0_611 = arith.constant 0 : index
    %c0_612 = arith.constant 0 : index
    %587 = vector.load %arg31[%c11_610, %c0_611, %c0_612] : memref<16x16x32xf32, #tpu.memory_space<vmem>>, vector<1x16x32xf32>
    %588 = vector.shape_cast %587 : vector<1x16x32xf32> to vector<16x32xf32>
    %c176 = arith.constant 176 : index
    %c0_613 = arith.constant 0 : index
    %589 = vector.load %arg33[%c176, %c0_613] : memref<256x32xf32, #tpu.memory_space<vmem>>, vector<16x32xf32>
    tpu.vector_store %arg33[%c176, %c0_613], %588 {strides = array<i32>} : memref<256x32xf32, #tpu.memory_space<vmem>>, vector<16x32xf32>,
    %c12_614 = arith.constant 12 : index
    %c0_615 = arith.constant 0 : index
    %c0_616 = arith.constant 0 : index
    %590 = vector.load %arg31[%c12_614, %c0_615, %c0_616] : memref<16x16x32xf32, #tpu.memory_space<vmem>>, vector<1x16x32xf32>
    %591 = vector.shape_cast %590 : vector<1x16x32xf32> to vector<16x32xf32>
    %c192 = arith.constant 192 : index
    %c0_617 = arith.constant 0 : index
    %592 = vector.load %arg33[%c192, %c0_617] : memref<256x32xf32, #tpu.memory_space<vmem>>, vector<16x32xf32>
    tpu.vector_store %arg33[%c192, %c0_617], %591 {strides = array<i32>} : memref<256x32xf32, #tpu.memory_space<vmem>>, vector<16x32xf32>,
    %c13_618 = arith.constant 13 : index
    %c0_619 = arith.constant 0 : index
    %c0_620 = arith.constant 0 : index
    %593 = vector.load %arg31[%c13_618, %c0_619, %c0_620] : memref<16x16x32xf32, #tpu.memory_space<vmem>>, vector<1x16x32xf32>
    %594 = vector.shape_cast %593 : vector<1x16x32xf32> to vector<16x32xf32>
    %c208 = arith.constant 208 : index
    %c0_621 = arith.constant 0 : index
    %595 = vector.load %arg33[%c208, %c0_621] : memref<256x32xf32, #tpu.memory_space<vmem>>, vector<16x32xf32>
    tpu.vector_store %arg33[%c208, %c0_621], %594 {strides = array<i32>} : memref<256x32xf32, #tpu.memory_space<vmem>>, vector<16x32xf32>,
    %c14_622 = arith.constant 14 : index
    %c0_623 = arith.constant 0 : index
    %c0_624 = arith.constant 0 : index
    %596 = vector.load %arg31[%c14_622, %c0_623, %c0_624] : memref<16x16x32xf32, #tpu.memory_space<vmem>>, vector<1x16x32xf32>
    %597 = vector.shape_cast %596 : vector<1x16x32xf32> to vector<16x32xf32>
    %c224 = arith.constant 224 : index
    %c0_625 = arith.constant 0 : index
    %598 = vector.load %arg33[%c224, %c0_625] : memref<256x32xf32, #tpu.memory_space<vmem>>, vector<16x32xf32>
    tpu.vector_store %arg33[%c224, %c0_625], %597 {strides = array<i32>} : memref<256x32xf32, #tpu.memory_space<vmem>>, vector<16x32xf32>,
    %c15_626 = arith.constant 15 : index
    %c0_627 = arith.constant 0 : index
    %c0_628 = arith.constant 0 : index
    %599 = vector.load %arg31[%c15_626, %c0_627, %c0_628] : memref<16x16x32xf32, #tpu.memory_space<vmem>>, vector<1x16x32xf32>
    %600 = vector.shape_cast %599 : vector<1x16x32xf32> to vector<16x32xf32>
    %c240 = arith.constant 240 : index
    %c0_629 = arith.constant 0 : index
    %601 = vector.load %arg33[%c240, %c0_629] : memref<256x32xf32, #tpu.memory_space<vmem>>, vector<16x32xf32>
    tpu.vector_store %arg33[%c240, %c0_629], %600 {strides = array<i32>} : memref<256x32xf32, #tpu.memory_space<vmem>>, vector<16x32xf32>,
    %c0_630 = arith.constant 0 : index
    %c0_631 = arith.constant 0 : index
    %c0_632 = arith.constant 0 : index
    %602 = vector.load %arg32[%c0_630, %c0_631, %c0_632] : memref<16x16x48xf32, #tpu.memory_space<vmem>>, vector<1x16x48xf32>
    %603 = vector.shape_cast %602 : vector<1x16x48xf32> to vector<16x48xf32>
    %c0_633 = arith.constant 0 : index
    %c0_634 = arith.constant 0 : index
    %604 = vector.load %arg34[%c0_633, %c0_634] : memref<256x48xf32, #tpu.memory_space<vmem>>, vector<16x48xf32>
    tpu.vector_store %arg34[%c0_633, %c0_634], %603 {strides = array<i32>} : memref<256x48xf32, #tpu.memory_space<vmem>>, vector<16x48xf32>,
    %c1_635 = arith.constant 1 : index
    %c0_636 = arith.constant 0 : index
    %c0_637 = arith.constant 0 : index
    %605 = vector.load %arg32[%c1_635, %c0_636, %c0_637] : memref<16x16x48xf32, #tpu.memory_space<vmem>>, vector<1x16x48xf32>
    %606 = vector.shape_cast %605 : vector<1x16x48xf32> to vector<16x48xf32>
    %c16_638 = arith.constant 16 : index
    %c0_639 = arith.constant 0 : index
    %607 = vector.load %arg34[%c16_638, %c0_639] : memref<256x48xf32, #tpu.memory_space<vmem>>, vector<16x48xf32>
    tpu.vector_store %arg34[%c16_638, %c0_639], %606 {strides = array<i32>} : memref<256x48xf32, #tpu.memory_space<vmem>>, vector<16x48xf32>,
    %c2_640 = arith.constant 2 : index
    %c0_641 = arith.constant 0 : index
    %c0_642 = arith.constant 0 : index
    %608 = vector.load %arg32[%c2_640, %c0_641, %c0_642] : memref<16x16x48xf32, #tpu.memory_space<vmem>>, vector<1x16x48xf32>
    %609 = vector.shape_cast %608 : vector<1x16x48xf32> to vector<16x48xf32>
    %c32_643 = arith.constant 32 : index
    %c0_644 = arith.constant 0 : index
    %610 = vector.load %arg34[%c32_643, %c0_644] : memref<256x48xf32, #tpu.memory_space<vmem>>, vector<16x48xf32>
    tpu.vector_store %arg34[%c32_643, %c0_644], %609 {strides = array<i32>} : memref<256x48xf32, #tpu.memory_space<vmem>>, vector<16x48xf32>,
    %c3_645 = arith.constant 3 : index
    %c0_646 = arith.constant 0 : index
    %c0_647 = arith.constant 0 : index
    %611 = vector.load %arg32[%c3_645, %c0_646, %c0_647] : memref<16x16x48xf32, #tpu.memory_space<vmem>>, vector<1x16x48xf32>
    %612 = vector.shape_cast %611 : vector<1x16x48xf32> to vector<16x48xf32>
    %c48_648 = arith.constant 48 : index
    %c0_649 = arith.constant 0 : index
    %613 = vector.load %arg34[%c48_648, %c0_649] : memref<256x48xf32, #tpu.memory_space<vmem>>, vector<16x48xf32>
    tpu.vector_store %arg34[%c48_648, %c0_649], %612 {strides = array<i32>} : memref<256x48xf32, #tpu.memory_space<vmem>>, vector<16x48xf32>,
    %c4_650 = arith.constant 4 : index
    %c0_651 = arith.constant 0 : index
    %c0_652 = arith.constant 0 : index
    %614 = vector.load %arg32[%c4_650, %c0_651, %c0_652] : memref<16x16x48xf32, #tpu.memory_space<vmem>>, vector<1x16x48xf32>
    %615 = vector.shape_cast %614 : vector<1x16x48xf32> to vector<16x48xf32>
    %c64_653 = arith.constant 64 : index
    %c0_654 = arith.constant 0 : index
    %616 = vector.load %arg34[%c64_653, %c0_654] : memref<256x48xf32, #tpu.memory_space<vmem>>, vector<16x48xf32>
    tpu.vector_store %arg34[%c64_653, %c0_654], %615 {strides = array<i32>} : memref<256x48xf32, #tpu.memory_space<vmem>>, vector<16x48xf32>,
    %c5_655 = arith.constant 5 : index
    %c0_656 = arith.constant 0 : index
    %c0_657 = arith.constant 0 : index
    %617 = vector.load %arg32[%c5_655, %c0_656, %c0_657] : memref<16x16x48xf32, #tpu.memory_space<vmem>>, vector<1x16x48xf32>
    %618 = vector.shape_cast %617 : vector<1x16x48xf32> to vector<16x48xf32>
    %c80_658 = arith.constant 80 : index
    %c0_659 = arith.constant 0 : index
    %619 = vector.load %arg34[%c80_658, %c0_659] : memref<256x48xf32, #tpu.memory_space<vmem>>, vector<16x48xf32>
    tpu.vector_store %arg34[%c80_658, %c0_659], %618 {strides = array<i32>} : memref<256x48xf32, #tpu.memory_space<vmem>>, vector<16x48xf32>,
    %c6_660 = arith.constant 6 : index
    %c0_661 = arith.constant 0 : index
    %c0_662 = arith.constant 0 : index
    %620 = vector.load %arg32[%c6_660, %c0_661, %c0_662] : memref<16x16x48xf32, #tpu.memory_space<vmem>>, vector<1x16x48xf32>
    %621 = vector.shape_cast %620 : vector<1x16x48xf32> to vector<16x48xf32>
    %c96_663 = arith.constant 96 : index
    %c0_664 = arith.constant 0 : index
    %622 = vector.load %arg34[%c96_663, %c0_664] : memref<256x48xf32, #tpu.memory_space<vmem>>, vector<16x48xf32>
    tpu.vector_store %arg34[%c96_663, %c0_664], %621 {strides = array<i32>} : memref<256x48xf32, #tpu.memory_space<vmem>>, vector<16x48xf32>,
    %c7_665 = arith.constant 7 : index
    %c0_666 = arith.constant 0 : index
    %c0_667 = arith.constant 0 : index
    %623 = vector.load %arg32[%c7_665, %c0_666, %c0_667] : memref<16x16x48xf32, #tpu.memory_space<vmem>>, vector<1x16x48xf32>
    %624 = vector.shape_cast %623 : vector<1x16x48xf32> to vector<16x48xf32>
    %c112_668 = arith.constant 112 : index
    %c0_669 = arith.constant 0 : index
    %625 = vector.load %arg34[%c112_668, %c0_669] : memref<256x48xf32, #tpu.memory_space<vmem>>, vector<16x48xf32>
    tpu.vector_store %arg34[%c112_668, %c0_669], %624 {strides = array<i32>} : memref<256x48xf32, #tpu.memory_space<vmem>>, vector<16x48xf32>,
    %c8_670 = arith.constant 8 : index
    %c0_671 = arith.constant 0 : index
    %c0_672 = arith.constant 0 : index
    %626 = vector.load %arg32[%c8_670, %c0_671, %c0_672] : memref<16x16x48xf32, #tpu.memory_space<vmem>>, vector<1x16x48xf32>
    %627 = vector.shape_cast %626 : vector<1x16x48xf32> to vector<16x48xf32>
    %c128_673 = arith.constant 128 : index
    %c0_674 = arith.constant 0 : index
    %628 = vector.load %arg34[%c128_673, %c0_674] : memref<256x48xf32, #tpu.memory_space<vmem>>, vector<16x48xf32>
    tpu.vector_store %arg34[%c128_673, %c0_674], %627 {strides = array<i32>} : memref<256x48xf32, #tpu.memory_space<vmem>>, vector<16x48xf32>,
    %c9_675 = arith.constant 9 : index
    %c0_676 = arith.constant 0 : index
    %c0_677 = arith.constant 0 : index
    %629 = vector.load %arg32[%c9_675, %c0_676, %c0_677] : memref<16x16x48xf32, #tpu.memory_space<vmem>>, vector<1x16x48xf32>
    %630 = vector.shape_cast %629 : vector<1x16x48xf32> to vector<16x48xf32>
    %c144_678 = arith.constant 144 : index
    %c0_679 = arith.constant 0 : index
    %631 = vector.load %arg34[%c144_678, %c0_679] : memref<256x48xf32, #tpu.memory_space<vmem>>, vector<16x48xf32>
    tpu.vector_store %arg34[%c144_678, %c0_679], %630 {strides = array<i32>} : memref<256x48xf32, #tpu.memory_space<vmem>>, vector<16x48xf32>,
    %c10_680 = arith.constant 10 : index
    %c0_681 = arith.constant 0 : index
    %c0_682 = arith.constant 0 : index
    %632 = vector.load %arg32[%c10_680, %c0_681, %c0_682] : memref<16x16x48xf32, #tpu.memory_space<vmem>>, vector<1x16x48xf32>
    %633 = vector.shape_cast %632 : vector<1x16x48xf32> to vector<16x48xf32>
    %c160_683 = arith.constant 160 : index
    %c0_684 = arith.constant 0 : index
    %634 = vector.load %arg34[%c160_683, %c0_684] : memref<256x48xf32, #tpu.memory_space<vmem>>, vector<16x48xf32>
    tpu.vector_store %arg34[%c160_683, %c0_684], %633 {strides = array<i32>} : memref<256x48xf32, #tpu.memory_space<vmem>>, vector<16x48xf32>,
    %c11_685 = arith.constant 11 : index
    %c0_686 = arith.constant 0 : index
    %c0_687 = arith.constant 0 : index
    %635 = vector.load %arg32[%c11_685, %c0_686, %c0_687] : memref<16x16x48xf32, #tpu.memory_space<vmem>>, vector<1x16x48xf32>
    %636 = vector.shape_cast %635 : vector<1x16x48xf32> to vector<16x48xf32>
    %c176_688 = arith.constant 176 : index
    %c0_689 = arith.constant 0 : index
    %637 = vector.load %arg34[%c176_688, %c0_689] : memref<256x48xf32, #tpu.memory_space<vmem>>, vector<16x48xf32>
    tpu.vector_store %arg34[%c176_688, %c0_689], %636 {strides = array<i32>} : memref<256x48xf32, #tpu.memory_space<vmem>>, vector<16x48xf32>,
    %c12_690 = arith.constant 12 : index
    %c0_691 = arith.constant 0 : index
    %c0_692 = arith.constant 0 : index
    %638 = vector.load %arg32[%c12_690, %c0_691, %c0_692] : memref<16x16x48xf32, #tpu.memory_space<vmem>>, vector<1x16x48xf32>
    %639 = vector.shape_cast %638 : vector<1x16x48xf32> to vector<16x48xf32>
    %c192_693 = arith.constant 192 : index
    %c0_694 = arith.constant 0 : index
    %640 = vector.load %arg34[%c192_693, %c0_694] : memref<256x48xf32, #tpu.memory_space<vmem>>, vector<16x48xf32>
    tpu.vector_store %arg34[%c192_693, %c0_694], %639 {strides = array<i32>} : memref<256x48xf32, #tpu.memory_space<vmem>>, vector<16x48xf32>,
    %c13_695 = arith.constant 13 : index
    %c0_696 = arith.constant 0 : index
    %c0_697 = arith.constant 0 : index
    %641 = vector.load %arg32[%c13_695, %c0_696, %c0_697] : memref<16x16x48xf32, #tpu.memory_space<vmem>>, vector<1x16x48xf32>
    %642 = vector.shape_cast %641 : vector<1x16x48xf32> to vector<16x48xf32>
    %c208_698 = arith.constant 208 : index
    %c0_699 = arith.constant 0 : index
    %643 = vector.load %arg34[%c208_698, %c0_699] : memref<256x48xf32, #tpu.memory_space<vmem>>, vector<16x48xf32>
    tpu.vector_store %arg34[%c208_698, %c0_699], %642 {strides = array<i32>} : memref<256x48xf32, #tpu.memory_space<vmem>>, vector<16x48xf32>,
    %c14_700 = arith.constant 14 : index
    %c0_701 = arith.constant 0 : index
    %c0_702 = arith.constant 0 : index
    %644 = vector.load %arg32[%c14_700, %c0_701, %c0_702] : memref<16x16x48xf32, #tpu.memory_space<vmem>>, vector<1x16x48xf32>
    %645 = vector.shape_cast %644 : vector<1x16x48xf32> to vector<16x48xf32>
    %c224_703 = arith.constant 224 : index
    %c0_704 = arith.constant 0 : index
    %646 = vector.load %arg34[%c224_703, %c0_704] : memref<256x48xf32, #tpu.memory_space<vmem>>, vector<16x48xf32>
    tpu.vector_store %arg34[%c224_703, %c0_704], %645 {strides = array<i32>} : memref<256x48xf32, #tpu.memory_space<vmem>>, vector<16x48xf32>,
    %c15_705 = arith.constant 15 : index
    %c0_706 = arith.constant 0 : index
    %c0_707 = arith.constant 0 : index
    %647 = vector.load %arg32[%c15_705, %c0_706, %c0_707] : memref<16x16x48xf32, #tpu.memory_space<vmem>>, vector<1x16x48xf32>
    %648 = vector.shape_cast %647 : vector<1x16x48xf32> to vector<16x48xf32>
    %c240_708 = arith.constant 240 : index
    %c0_709 = arith.constant 0 : index
    %649 = vector.load %arg34[%c240_708, %c0_709] : memref<256x48xf32, #tpu.memory_space<vmem>>, vector<16x48xf32>
    tpu.vector_store %arg34[%c240_708, %c0_709], %648 {strides = array<i32>} : memref<256x48xf32, #tpu.memory_space<vmem>>, vector<16x48xf32>,
    %c0_710 = arith.constant 0 : index
    %c0_711 = arith.constant 0 : index
    %650 = vector.load %arg33[%c0_710, %c0_711] : memref<256x32xf32, #tpu.memory_space<vmem>>, vector<256x32xf32>
    %c0_712 = arith.constant 0 : index
    %c0_713 = arith.constant 0 : index
    %651 = vector.load %arg20[%c0_712, %c0_713] : memref<32x32xbf16, #tpu.memory_space<vmem>>, vector<32x32xbf16>
    %652 = arith.truncf %650 : vector<256x32xf32> to vector<256x32xbf16>
    %cst_714 = arith.constant dense<0.000000e+00> : vector<256x32xf32>
    %653 = tpu.matmul %652, %651, %cst_714 {dimension_numbers = #tpu.dot_dimension_numbers<[1], [0], [0], [1], [0, 0, 1, 1], [], []>} : vector<256x32xbf16>, vector<32x32xbf16>, vector<256x32xf32> -> vector<256x32xf32>
    %c0_715 = arith.constant 0 : index
    %c0_716 = arith.constant 0 : index
    %654 = vector.load %arg34[%c0_715, %c0_716] : memref<256x48xf32, #tpu.memory_space<vmem>>, vector<256x48xf32>
    %c0_717 = arith.constant 0 : index
    %c0_718 = arith.constant 0 : index
    %655 = vector.load %arg21[%c0_717, %c0_718] : memref<48x32xbf16, #tpu.memory_space<vmem>>, vector<48x32xbf16>
    %656 = arith.truncf %654 : vector<256x48xf32> to vector<256x48xbf16>
    %cst_719 = arith.constant dense<0.000000e+00> : vector<256x32xf32>
    %657 = tpu.matmul %656, %655, %cst_719 {dimension_numbers = #tpu.dot_dimension_numbers<[1], [0], [0], [1], [0, 0, 1, 1], [], []>} : vector<256x48xbf16>, vector<48x32xbf16>, vector<256x32xf32> -> vector<256x32xf32>
    %658 = arith.addf %653, %657 : vector<256x32xf32>
    %c0_720 = arith.constant 0 : index
    %c0_721 = arith.constant 0 : index
    %659 = vector.load %arg22[%c0_720, %c0_721] : memref<1x32xf32, #tpu.memory_space<vmem>>, vector<1x32xf32>
    %660 = vector.broadcast %659 : vector<1x32xf32> to vector<256x32xf32>
    %661 = arith.addf %658, %660 : vector<256x32xf32>
    %cst_722 = arith.constant 0.000000e+00 : f32
    %662 = vector.broadcast %cst_722 : f32 to vector<256x32xf32>
    %663 = arith.maximumf %661, %662 : vector<256x32xf32>
    %c0_723 = arith.constant 0 : index
    %c0_724 = arith.constant 0 : index
    %c0_725 = arith.constant 0 : index
    %664 = vector.load %arg23[%c0_723, %c0_724, %c0_725] : memref<1x256x32xf32, #tpu.memory_space<vmem>>, vector<1x256x32xf32>
    %665 = vector.shape_cast %664 : vector<1x256x32xf32> to vector<256x32xf32>
    %666 = vector.shape_cast %663 : vector<256x32xf32> to vector<1x256x32xf32>
    tpu.vector_store %arg23[%c0_723, %c0_724, %c0_725], %666 {strides = array<i32>} : memref<1x256x32xf32, #tpu.memory_space<vmem>>, vector<1x256x32xf32>,
    return
  }
  func.func @transform_0(%arg0: i32) -> (i32, i32, i32, i32) {
    %c0_i32 = arith.constant 0 : i32
    %c0_i32_0 = arith.constant 0 : i32
    %c0_i32_1 = arith.constant 0 : i32
    %c0_i32_2 = arith.constant 0 : i32
    return %arg0, %c0_i32, %c0_i32_0, %c0_i32_1 : i32, i32, i32, i32
  }
  func.func @transform_1(%arg0: i32) -> (i32, i32, i32) {
    %c0_i32 = arith.constant 0 : i32
    %c0_i32_0 = arith.constant 0 : i32
    %c0_i32_1 = arith.constant 0 : i32
    return %arg0, %c0_i32, %c0_i32_0 : i32, i32, i32
  }
  func.func @transform_2(%arg0: i32) -> (i32, i32, i32) {
    %c0_i32 = arith.constant 0 : i32
    %c0_i32_0 = arith.constant 0 : i32
    %c0_i32_1 = arith.constant 0 : i32
    return %arg0, %c0_i32, %c0_i32_0 : i32, i32, i32
  }
  func.func @transform_3(%arg0: i32) -> (i32, i32) {
    %c0_i32 = arith.constant 0 : i32
    %c0_i32_0 = arith.constant 0 : i32
    %c0_i32_1 = arith.constant 0 : i32
    return %c0_i32, %c0_i32_0 : i32, i32
  }
  func.func @transform_4(%arg0: i32) -> (i32, i32) {
    %c0_i32 = arith.constant 0 : i32
    %c0_i32_0 = arith.constant 0 : i32
    %c0_i32_1 = arith.constant 0 : i32
    return %c0_i32, %c0_i32_0 : i32, i32
  }
  func.func @transform_5(%arg0: i32) -> (i32, i32, i32) {
    %c0_i32 = arith.constant 0 : i32
    %c0_i32_0 = arith.constant 0 : i32
    %c0_i32_1 = arith.constant 0 : i32
    %c0_i32_2 = arith.constant 0 : i32
    return %c0_i32, %c0_i32_0, %c0_i32_1 : i32, i32, i32
  }
  func.func @transform_6(%arg0: i32) -> (i32, i32, i32) {
    %c0_i32 = arith.constant 0 : i32
    %c0_i32_0 = arith.constant 0 : i32
    %c0_i32_1 = arith.constant 0 : i32
    %c0_i32_2 = arith.constant 0 : i32
    return %c0_i32, %c0_i32_0, %c0_i32_1 : i32, i32, i32
  }
  func.func @transform_7(%arg0: i32) -> (i32, i32) {
    %c0_i32 = arith.constant 0 : i32
    %c0_i32_0 = arith.constant 0 : i32
    %c0_i32_1 = arith.constant 0 : i32
    return %c0_i32, %c0_i32_0 : i32, i32
  }
  func.func @transform_8(%arg0: i32) -> (i32, i32) {
    %c0_i32 = arith.constant 0 : i32
    %c0_i32_0 = arith.constant 0 : i32
    %c0_i32_1 = arith.constant 0 : i32
    return %c0_i32, %c0_i32_0 : i32, i32
  }
  func.func @transform_9(%arg0: i32) -> (i32, i32) {
    %c0_i32 = arith.constant 0 : i32
    %c0_i32_0 = arith.constant 0 : i32
    %c0_i32_1 = arith.constant 0 : i32
    return %c0_i32, %c0_i32_0 : i32, i32
  }
  func.func @transform_10(%arg0: i32) -> (i32, i32) {
    %c0_i32 = arith.constant 0 : i32
    %c0_i32_0 = arith.constant 0 : i32
    %c0_i32_1 = arith.constant 0 : i32
    return %c0_i32, %c0_i32_0 : i32, i32
  }
  func.func @transform_11(%arg0: i32) -> (i32, i32) {
    %c0_i32 = arith.constant 0 : i32
    %c0_i32_0 = arith.constant 0 : i32
    %c0_i32_1 = arith.constant 0 : i32
    return %c0_i32, %c0_i32_0 : i32, i32
  }
  func.func @transform_12(%arg0: i32) -> (i32, i32) {
    %c0_i32 = arith.constant 0 : i32
    %c0_i32_0 = arith.constant 0 : i32
    %c0_i32_1 = arith.constant 0 : i32
    return %c0_i32, %c0_i32_0 : i32, i32
  }
  func.func @transform_13(%arg0: i32) -> (i32, i32) {
    %c0_i32 = arith.constant 0 : i32
    %c0_i32_0 = arith.constant 0 : i32
    %c0_i32_1 = arith.constant 0 : i32
    return %c0_i32, %c0_i32_0 : i32, i32
  }
  func.func @transform_14(%arg0: i32) -> (i32, i32) {
    %c0_i32 = arith.constant 0 : i32
    %c0_i32_0 = arith.constant 0 : i32
    %c0_i32_1 = arith.constant 0 : i32
    return %c0_i32, %c0_i32_0 : i32, i32
  }
  func.func @transform_15(%arg0: i32) -> (i32, i32) {
    %c0_i32 = arith.constant 0 : i32
    %c0_i32_0 = arith.constant 0 : i32
    %c0_i32_1 = arith.constant 0 : i32
    return %c0_i32, %c0_i32_0 : i32, i32
  }
  func.func @transform_16(%arg0: i32) -> (i32, i32) {
    %c0_i32 = arith.constant 0 : i32
    %c0_i32_0 = arith.constant 0 : i32
    %c0_i32_1 = arith.constant 0 : i32
    return %c0_i32, %c0_i32_0 : i32, i32
  }
  func.func @transform_17(%arg0: i32) -> (i32, i32) {
    %c0_i32 = arith.constant 0 : i32
    %c0_i32_0 = arith.constant 0 : i32
    %c0_i32_1 = arith.constant 0 : i32
    return %c0_i32, %c0_i32_0 : i32, i32
  }
  func.func @transform_18(%arg0: i32) -> (i32, i32) {
    %c0_i32 = arith.constant 0 : i32
    %c0_i32_0 = arith.constant 0 : i32
    %c0_i32_1 = arith.constant 0 : i32
    return %c0_i32, %c0_i32_0 : i32, i32
  }
  func.func @transform_19(%arg0: i32) -> (i32, i32) {
    %c0_i32 = arith.constant 0 : i32
    %c0_i32_0 = arith.constant 0 : i32
    %c0_i32_1 = arith.constant 0 : i32
    return %c0_i32, %c0_i32_0 : i32, i32
  }
  func.func @transform_20(%arg0: i32) -> (i32, i32) {
    %c0_i32 = arith.constant 0 : i32
    %c0_i32_0 = arith.constant 0 : i32
    %c0_i32_1 = arith.constant 0 : i32
    return %c0_i32, %c0_i32_0 : i32, i32
  }
  func.func @transform_21(%arg0: i32) -> (i32, i32) {
    %c0_i32 = arith.constant 0 : i32
    %c0_i32_0 = arith.constant 0 : i32
    %c0_i32_1 = arith.constant 0 : i32
    return %c0_i32, %c0_i32_0 : i32, i32
  }
  func.func @transform_22(%arg0: i32) -> (i32, i32, i32) {
    %c0_i32 = arith.constant 0 : i32
    %c0_i32_0 = arith.constant 0 : i32
    %c0_i32_1 = arith.constant 0 : i32
    return %arg0, %c0_i32, %c0_i32_0 : i32, i32, i32
  }
}

</mosaic_0001>

<llo_original>
// kernel: tpu_custom_call.1
$region0: #{tpu_custom_call.1}
  #allocation0 [shape = 'u32[]', space=smem, size = 0x4, offset = 0x4, fixed_abs, tag = 'smem constant byte address 0x4 - core index']
  #allocation1 [shape = 'u32[144,128]{1,0:T(1,128)}', space=vmem, size = 0x12000, scoped, tag = 'internal scratch']
  #allocation2 [shape = 'f32[4,4,32]{2,1,0:T(4,128)}', space=vmem, size = 0x2000, scoped, tag = 'scratch operand']
  #allocation3 [shape = 'f32[16,32]{1,0:T(8,128)}', space=vmem, size = 0x2000, scoped, tag = 'scratch operand']
  #allocation4 [shape = 'f32[4,4,32]{2,1,0:T(4,128)}', space=vmem, size = 0x2000, scoped, tag = 'scratch operand']
  #allocation5 [shape = 'f32[4,4,32]{2,1,0:T(4,128)}', space=vmem, size = 0x2000, scoped, tag = 'scratch operand']
  #allocation6 [shape = 'f32[16,32]{1,0:T(8,128)}', space=vmem, size = 0x2000, scoped, tag = 'scratch operand']
  #allocation7 [shape = 'f32[16,16,32]{2,1,0:T(8,128)}', space=vmem, size = 0x20000, scoped, tag = 'scratch operand']
  #allocation8 [shape = 'f32[16,16,48]{2,1,0:T(8,128)}', space=vmem, size = 0x20000, scoped, tag = 'scratch operand']
  #allocation9 [shape = 'f32[16,16,32]{2,1,0:T(8,128)}', space=vmem, size = 0x20000, scoped, tag = 'scratch operand']
  #allocation10 [shape = 'f32[16,16,48]{2,1,0:T(8,128)}', space=vmem, size = 0x20000, scoped, tag = 'scratch operand']
  #allocation11 [shape = 'f32[256,32]{1,0:T(8,128)}', space=vmem, size = 0x20000, scoped, tag = 'scratch operand']
  #allocation12 [shape = 'f32[256,48]{1,0:T(8,128)}', space=vmem, size = 0x20000, scoped, tag = 'scratch operand']
  %s0 = inlined_call_operand.vmem [shape: f32[2,4,4,32], index: 0, kind: input, shape index: {}]
  %s1 = inlined_call_operand.vmem [shape: f32[2,16,32], index: 1, kind: input, shape index: {}]
  %s2 = inlined_call_operand.vmem [shape: f32[2,256,8], index: 2, kind: input, shape index: {}]
  %s3 = inlined_call_operand.vmem [shape: bf16[256,16], index: 3, kind: input, shape index: {}]
  %s4 = inlined_call_operand.vmem [shape: bf16[32,32], index: 4, kind: input, shape index: {}]
  %s5 = inlined_call_operand.vmem [shape: f32[3,9,32], index: 5, kind: input, shape index: {}]
  %s6 = inlined_call_operand.vmem [shape: bf16[3,32,32], index: 6, kind: input, shape index: {}]
  %s7 = inlined_call_operand.vmem [shape: f32[4,32], index: 7, kind: input, shape index: {}]
  %s8 = inlined_call_operand.vmem [shape: bf16[32,32], index: 8, kind: input, shape index: {}]
  %s9 = inlined_call_operand.vmem [shape: f32[1,32], index: 9, kind: input, shape index: {}]
  %s10 = inlined_call_operand.vmem [shape: bf16[160,32], index: 10, kind: input, shape index: {}]
  %s11 = inlined_call_operand.vmem [shape: f32[1,32], index: 11, kind: input, shape index: {}]
  %s12 = inlined_call_operand.vmem [shape: f32[9,32], index: 12, kind: input, shape index: {}]
  %s13 = inlined_call_operand.vmem [shape: bf16[32,32], index: 13, kind: input, shape index: {}]
  %s14 = inlined_call_operand.vmem [shape: f32[1,32], index: 14, kind: input, shape index: {}]
  %s15 = inlined_call_operand.vmem [shape: bf16[8,48], index: 15, kind: input, shape index: {}]
  %s16 = inlined_call_operand.vmem [shape: f32[1,48], index: 16, kind: input, shape index: {}]
  %s17 = inlined_call_operand.vmem [shape: f32[9,32], index: 17, kind: input, shape index: {}]
  %s18 = inlined_call_operand.vmem [shape: f32[9,48], index: 18, kind: input, shape index: {}]
  %s19 = inlined_call_operand.vmem [shape: bf16[32,32], index: 19, kind: input, shape index: {}]
  %s20 = inlined_call_operand.vmem [shape: bf16[48,32], index: 20, kind: input, shape index: {}]
  %s21 = inlined_call_operand.vmem [shape: f32[1,32], index: 21, kind: input, shape index: {}]
  %s22 = inlined_call_operand.vmem [shape: f32[2,256,32], index: 22, kind: output, shape index: {}]
  %s23 = sld [smem:[#allocation0]]
  $region121: #{tpu_custom_call.1} parent=0
    _
  %s25 = ssub.s32 1, %s23
  %s26 = scalar_select 0, %s25, %s23
  loop: start=0, step=1, limit=4
  $region2: #{tpu_custom_call.1} parent=0 // loop_pre_header
    _
  $region3: #{tpu_custom_call.1} parent=0 // loop_header
    %s28 = sphi 0, %s32
    %p29 = scmp.ge.s32.totalorder %s28, 4
    %s38 = sphi 0, %s40
    %s41 = sphi 0, %s38
    %s42 = sphi 0, %s41
    %s58 = sphi 0, %s42
    %s64 = sphi 0, %s66
    %s67 = sphi 0, %s64
    %s68 = sphi 0, %s67
    %s84 = sphi 0, %s68
    %s90 = sphi 0, %s92
    %s93 = sphi 0, %s90
    %s94 = sphi 0, %s93
    %s110 = sphi 0, %s94
    %s114 = sphi 0, %s114
    %s116 = sphi 0, %s114
    %s117 = sphi 0, %s116
    %s131 = sphi 0, %s117
    %s135 = sphi 0, %s135
    %s137 = sphi 0, %s135
    %s138 = sphi 0, %s137
    %s152 = sphi 0, %s138
    %s156 = sphi 0, %s156
    %s158 = sphi 0, %s156
    %s159 = sphi 0, %s158
    %s173 = sphi 0, %s159
    %s177 = sphi 0, %s177
    %s179 = sphi 0, %s177
    %s180 = sphi 0, %s179
    %s194 = sphi 0, %s180
    %s198 = sphi 0, %s198
    %s200 = sphi 0, %s198
    %s201 = sphi 0, %s200
    %s215 = sphi 0, %s201
    %s219 = sphi 0, %s219
    %s221 = sphi 0, %s219
    %s222 = sphi 0, %s221
    %s236 = sphi 0, %s222
    %s240 = sphi 0, %s240
    %s242 = sphi 0, %s240
    %s243 = sphi 0, %s242
    %s257 = sphi 0, %s243
    %s261 = sphi 0, %s261
    %s263 = sphi 0, %s261
    %s264 = sphi 0, %s263
    %s278 = sphi 0, %s264
    %s282 = sphi 0, %s282
    %s284 = sphi 0, %s282
    %s285 = sphi 0, %s284
    %s299 = sphi 0, %s285
    %s303 = sphi 0, %s303
    %s305 = sphi 0, %s303
    %s306 = sphi 0, %s305
    %s320 = sphi 0, %s306
    %s324 = sphi 0, %s324
    %s326 = sphi 0, %s324
    %s327 = sphi 0, %s326
    %s341 = sphi 0, %s327
    %s345 = sphi 0, %s345
    %s347 = sphi 0, %s345
    %s348 = sphi 0, %s347
    %s362 = sphi 0, %s348
    %s366 = sphi 0, %s366
    %s368 = sphi 0, %s366
    %s369 = sphi 0, %s368
    %s383 = sphi 0, %s369
    %s387 = sphi 0, %s387
    %s389 = sphi 0, %s387
    %s390 = sphi 0, %s389
    %s404 = sphi 0, %s390
    %s408 = sphi 0, %s408
    %s410 = sphi 0, %s408
    %s411 = sphi 0, %s410
    %s425 = sphi 0, %s411
    %s429 = sphi 0, %s429
    %s431 = sphi 0, %s429
    %s432 = sphi 0, %s431
    %s446 = sphi 0, %s432
    %s450 = sphi 0, %s450
    %s452 = sphi 0, %s450
    %s453 = sphi 0, %s452
    %s467 = sphi 0, %s453
    %s471 = sphi 0, %s471
    %s473 = sphi 0, %s471
    %s474 = sphi 0, %s473
    %s488 = sphi 0, %s474
    %s492 = sphi 0, %s492
    %s494 = sphi 0, %s492
    %s495 = sphi 0, %s494
    %s509 = sphi 0, %s495
    %s515 = sphi 0, %s517
    %s518 = sphi 0, %s515
    %s519 = sphi 0, %s518
    %s535 = sphi 0, %s519
  $region4: #{tpu_custom_call.1} parent=0 // loop_header_branch
    %31 = sbr.rel (%p29) target = $region8
  $region5: #{tpu_custom_call.1} parent=0 // loop_body
    %s33 = ssub.s32 %s28, 1
    %s34 = ssub.s32 %s28, 2
    %s35 = sadd.s32 %s28, 1
    %s36 = ssub.s32 %s28, %s35
    %p37 = scmp.eq.s32.totalorder %s36, 0
    %s39 = sadd.s32 %s38, 1
    %s40 = scalar_select %p37, %s38, %s39
    %p43 = pneg %p37
    %p44 = scmp.eq.s32.totalorder %s28, 1
    %p45 = por %p43, %p44
    %p46 = scmp.ne.s32.totalorder %s38, %s41
    %p47 = scmp.eq.s32.totalorder %s28, 0
    %p48 = por %p46, %p47
    %p49 = scmp.ne.s32.totalorder %s38, %s41
    %p50 = scmp.eq.s32.totalorder %s33, 1
    %p51 = por %p49, %p50
    %p52 = scmp.ne.s32.totalorder %s41, %s42
    %p53 = scmp.eq.s32.totalorder %s33, 0
    %p54 = por %p52, %p53
    %p55 = scmp.ne.s32.totalorder %s41, %s42
    %p56 = scmp.eq.s32.totalorder %s34, 1
    %p57 = por %p55, %p56
    %p59 = scmp.ne.s32.totalorder %s42, %s58
    %p60 = scmp.eq.s32.totalorder %s34, 0
    %p61 = por %p59, %p60
    %s62 = ssub.s32 %s28, %s35
    %p63 = scmp.eq.s32.totalorder %s62, 0
    %s65 = sadd.s32 %s64, 1
    %s66 = scalar_select %p63, %s64, %s65
    %p69 = pneg %p63
    %p70 = scmp.eq.s32.totalorder %s28, 1
    %p71 = por %p69, %p70
    %p72 = scmp.ne.s32.totalorder %s64, %s67
    %p73 = scmp.eq.s32.totalorder %s28, 0
    %p74 = por %p72, %p73
    %p75 = scmp.ne.s32.totalorder %s64, %s67
    %p76 = scmp.eq.s32.totalorder %s33, 1
    %p77 = por %p75, %p76
    %p78 = scmp.ne.s32.totalorder %s67, %s68
    %p79 = scmp.eq.s32.totalorder %s33, 0
    %p80 = por %p78, %p79
    %p81 = scmp.ne.s32.totalorder %s67, %s68
    %p82 = scmp.eq.s32.totalorder %s34, 1
    %p83 = por %p81, %p82
    %p85 = scmp.ne.s32.totalorder %s68, %s84
    %p86 = scmp.eq.s32.totalorder %s34, 0
    %p87 = por %p85, %p86
    %s88 = ssub.s32 %s28, %s35
    %p89 = scmp.eq.s32.totalorder %s88, 0
    %s91 = sadd.s32 %s90, 1
    %s92 = scalar_select %p89, %s90, %s91
    %p95 = pneg %p89
    %p96 = scmp.eq.s32.totalorder %s28, 1
    %p97 = por %p95, %p96
    %p98 = scmp.ne.s32.totalorder %s90, %s93
    %p99 = scmp.eq.s32.totalorder %s28, 0
    %p100 = por %p98, %p99
    %p101 = scmp.ne.s32.totalorder %s90, %s93
    %p102 = scmp.eq.s32.totalorder %s33, 1
    %p103 = por %p101, %p102
    %p104 = scmp.ne.s32.totalorder %s93, %s94
    %p105 = scmp.eq.s32.totalorder %s33, 0
    %p106 = por %p104, %p105
    %p107 = scmp.ne.s32.totalorder %s93, %s94
    %p108 = scmp.eq.s32.totalorder %s34, 1
    %p109 = por %p107, %p108
    %p111 = scmp.ne.s32.totalorder %s94, %s110
    %p112 = scmp.eq.s32.totalorder %s34, 0
    %p113 = por %p111, %p112
    %s115 = sadd.s32 %s114, 1
    %p118 = scmp.eq.s32.totalorder %s28, 1
    %p119 = scmp.ne.s32.totalorder %s114, %s116
    %p120 = scmp.eq.s32.totalorder %s28, 0
    %p121 = por %p119, %p120
    %p122 = scmp.ne.s32.totalorder %s114, %s116
    %p123 = scmp.eq.s32.totalorder %s33, 1
    %p124 = por %p122, %p123
    %p125 = scmp.ne.s32.totalorder %s116, %s117
    %p126 = scmp.eq.s32.totalorder %s33, 0
    %p127 = por %p125, %p126
    %p128 = scmp.ne.s32.totalorder %s116, %s117
    %p129 = scmp.eq.s32.totalorder %s34, 1
    %p130 = por %p128, %p129
    %p132 = scmp.ne.s32.totalorder %s117, %s131
    %p133 = scmp.eq.s32.totalorder %s34, 0
    %p134 = por %p132, %p133
    %s136 = sadd.s32 %s135, 1
    %p139 = scmp.eq.s32.totalorder %s28, 1
    %p140 = scmp.ne.s32.totalorder %s135, %s137
    %p141 = scmp.eq.s32.totalorder %s28, 0
    %p142 = por %p140, %p141
    %p143 = scmp.ne.s32.totalorder %s135, %s137
    %p144 = scmp.eq.s32.totalorder %s33, 1
    %p145 = por %p143, %p144
    %p146 = scmp.ne.s32.totalorder %s137, %s138
    %p147 = scmp.eq.s32.totalorder %s33, 0
    %p148 = por %p146, %p147
    %p149 = scmp.ne.s32.totalorder %s137, %s138
    %p150 = scmp.eq.s32.totalorder %s34, 1
    %p151 = por %p149, %p150
    %p153 = scmp.ne.s32.totalorder %s138, %s152
    %p154 = scmp.eq.s32.totalorder %s34, 0
    %p155 = por %p153, %p154
    %s157 = sadd.s32 %s156, 1
    %p160 = scmp.eq.s32.totalorder %s28, 1
    %p161 = scmp.ne.s32.totalorder %s156, %s158
    %p162 = scmp.eq.s32.totalorder %s28, 0
    %p163 = por %p161, %p162
    %p164 = scmp.ne.s32.totalorder %s156, %s158
    %p165 = scmp.eq.s32.totalorder %s33, 1
    %p166 = por %p164, %p165
    %p167 = scmp.ne.s32.totalorder %s158, %s159
    %p168 = scmp.eq.s32.totalorder %s33, 0
    %p169 = por %p167, %p168
    %p170 = scmp.ne.s32.totalorder %s158, %s159
    %p171 = scmp.eq.s32.totalorder %s34, 1
    %p172 = por %p170, %p171
    %p174 = scmp.ne.s32.totalorder %s159, %s173
    %p175 = scmp.eq.s32.totalorder %s34, 0
    %p176 = por %p174, %p175
    %s178 = sadd.s32 %s177, 1
    %p181 = scmp.eq.s32.totalorder %s28, 1
    %p182 = scmp.ne.s32.totalorder %s177, %s179
    %p183 = scmp.eq.s32.totalorder %s28, 0
    %p184 = por %p182, %p183
    %p185 = scmp.ne.s32.totalorder %s177, %s179
    %p186 = scmp.eq.s32.totalorder %s33, 1
    %p187 = por %p185, %p186
    %p188 = scmp.ne.s32.totalorder %s179, %s180
    %p189 = scmp.eq.s32.totalorder %s33, 0
    %p190 = por %p188, %p189
    %p191 = scmp.ne.s32.totalorder %s179, %s180
    %p192 = scmp.eq.s32.totalorder %s34, 1
    %p193 = por %p191, %p192
    %p195 = scmp.ne.s32.totalorder %s180, %s194
    %p196 = scmp.eq.s32.totalorder %s34, 0
    %p197 = por %p195, %p196
    %s199 = sadd.s32 %s198, 1
    %p202 = scmp.eq.s32.totalorder %s28, 1
    %p203 = scmp.ne.s32.totalorder %s198, %s200
    %p204 = scmp.eq.s32.totalorder %s28, 0
    %p205 = por %p203, %p204
    %p206 = scmp.ne.s32.totalorder %s198, %s200
    %p207 = scmp.eq.s32.totalorder %s33, 1
    %p208 = por %p206, %p207
    %p209 = scmp.ne.s32.totalorder %s200, %s201
    %p210 = scmp.eq.s32.totalorder %s33, 0
    %p211 = por %p209, %p210
    %p212 = scmp.ne.s32.totalorder %s200, %s201
    %p213 = scmp.eq.s32.totalorder %s34, 1
    %p214 = por %p212, %p213
    %p216 = scmp.ne.s32.totalorder %s201, %s215
    %p217 = scmp.eq.s32.totalorder %s34, 0
    %p218 = por %p216, %p217
    %s220 = sadd.s32 %s219, 1
    %p223 = scmp.eq.s32.totalorder %s28, 1
    %p224 = scmp.ne.s32.totalorder %s219, %s221
    %p225 = scmp.eq.s32.totalorder %s28, 0
    %p226 = por %p224, %p225
    %p227 = scmp.ne.s32.totalorder %s219, %s221
    %p228 = scmp.eq.s32.totalorder %s33, 1
    %p229 = por %p227, %p228
    %p230 = scmp.ne.s32.totalorder %s221, %s222
    %p231 = scmp.eq.s32.totalorder %s33, 0
    %p232 = por %p230, %p231
    %p233 = scmp.ne.s32.totalorder %s221, %s222
    %p234 = scmp.eq.s32.totalorder %s34, 1
    %p235 = por %p233, %p234
    %p237 = scmp.ne.s32.totalorder %s222, %s236
    %p238 = scmp.eq.s32.totalorder %s34, 0
    %p239 = por %p237, %p238
    %s241 = sadd.s32 %s240, 1
    %p244 = scmp.eq.s32.totalorder %s28, 1
    %p245 = scmp.ne.s32.totalorder %s240, %s242
    %p246 = scmp.eq.s32.totalorder %s28, 0
    %p247 = por %p245, %p246
    %p248 = scmp.ne.s32.totalorder %s240, %s242
    %p249 = scmp.eq.s32.totalorder %s33, 1
    %p250 = por %p248, %p249
    %p251 = scmp.ne.s32.totalorder %s242, %s243
    %p252 = scmp.eq.s32.totalorder %s33, 0
    %p253 = por %p251, %p252
    %p254 = scmp.ne.s32.totalorder %s242, %s243
    %p255 = scmp.eq.s32.totalorder %s34, 1
    %p256 = por %p254, %p255
    %p258 = scmp.ne.s32.totalorder %s243, %s257
    %p259 = scmp.eq.s32.totalorder %s34, 0
    %p260 = por %p258, %p259
    %s262 = sadd.s32 %s261, 1
    %p265 = scmp.eq.s32.totalorder %s28, 1
    %p266 = scmp.ne.s32.totalorder %s261, %s263
    %p267 = scmp.eq.s32.totalorder %s28, 0
    %p268 = por %p266, %p267
    %p269 = scmp.ne.s32.totalorder %s261, %s263
    %p270 = scmp.eq.s32.totalorder %s33, 1
    %p271 = por %p269, %p270
    %p272 = scmp.ne.s32.totalorder %s263, %s264
    %p273 = scmp.eq.s32.totalorder %s33, 0
    %p274 = por %p272, %p273
    %p275 = scmp.ne.s32.totalorder %s263, %s264
    %p276 = scmp.eq.s32.totalorder %s34, 1
    %p277 = por %p275, %p276
    %p279 = scmp.ne.s32.totalorder %s264, %s278
    %p280 = scmp.eq.s32.totalorder %s34, 0
    %p281 = por %p279, %p280
    %s283 = sadd.s32 %s282, 1
    %p286 = scmp.eq.s32.totalorder %s28, 1
    %p287 = scmp.ne.s32.totalorder %s282, %s284
    %p288 = scmp.eq.s32.totalorder %s28, 0
    %p289 = por %p287, %p288
    %p290 = scmp.ne.s32.totalorder %s282, %s284
    %p291 = scmp.eq.s32.totalorder %s33, 1
    %p292 = por %p290, %p291
    %p293 = scmp.ne.s32.totalorder %s284, %s285
    %p294 = scmp.eq.s32.totalorder %s33, 0
    %p295 = por %p293, %p294
    %p296 = scmp.ne.s32.totalorder %s284, %s285
    %p297 = scmp.eq.s32.totalorder %s34, 1
    %p298 = por %p296, %p297
    %p300 = scmp.ne.s32.totalorder %s285, %s299
    %p301 = scmp.eq.s32.totalorder %s34, 0
    %p302 = por %p300, %p301
    %s304 = sadd.s32 %s303, 1
    %p307 = scmp.eq.s32.totalorder %s28, 1
    %p308 = scmp.ne.s32.totalorder %s303, %s305
    %p309 = scmp.eq.s32.totalorder %s28, 0
    %p310 = por %p308, %p309
    %p311 = scmp.ne.s32.totalorder %s303, %s305
    %p312 = scmp.eq.s32.totalorder %s33, 1
    %p313 = por %p311, %p312
    %p314 = scmp.ne.s32.totalorder %s305, %s306
    %p315 = scmp.eq.s32.totalorder %s33, 0
    %p316 = por %p314, %p315
    %p317 = scmp.ne.s32.totalorder %s305, %s306
    %p318 = scmp.eq.s32.totalorder %s34, 1
    %p319 = por %p317, %p318
    %p321 = scmp.ne.s32.totalorder %s306, %s320
    %p322 = scmp.eq.s32.totalorder %s34, 0
    %p323 = por %p321, %p322
    %s325 = sadd.s32 %s324, 1
    %p328 = scmp.eq.s32.totalorder %s28, 1
    %p329 = scmp.ne.s32.totalorder %s324, %s326
    %p330 = scmp.eq.s32.totalorder %s28, 0
    %p331 = por %p329, %p330
    %p332 = scmp.ne.s32.totalorder %s324, %s326
    %p333 = scmp.eq.s32.totalorder %s33, 1
    %p334 = por %p332, %p333
    %p335 = scmp.ne.s32.totalorder %s326, %s327
    %p336 = scmp.eq.s32.totalorder %s33, 0
    %p337 = por %p335, %p336
    %p338 = scmp.ne.s32.totalorder %s326, %s327
    %p339 = scmp.eq.s32.totalorder %s34, 1
    %p340 = por %p338, %p339
    %p342 = scmp.ne.s32.totalorder %s327, %s341
    %p343 = scmp.eq.s32.totalorder %s34, 0
    %p344 = por %p342, %p343
    %s346 = sadd.s32 %s345, 1
    %p349 = scmp.eq.s32.totalorder %s28, 1
    %p350 = scmp.ne.s32.totalorder %s345, %s347
    %p351 = scmp.eq.s32.totalorder %s28, 0
    %p352 = por %p350, %p351
    %p353 = scmp.ne.s32.totalorder %s345, %s347
    %p354 = scmp.eq.s32.totalorder %s33, 1
    %p355 = por %p353, %p354
    %p356 = scmp.ne.s32.totalorder %s347, %s348
    %p357 = scmp.eq.s32.totalorder %s33, 0
    %p358 = por %p356, %p357
    %p359 = scmp.ne.s32.totalorder %s347, %s348
    %p360 = scmp.eq.s32.totalorder %s34, 1
    %p361 = por %p359, %p360
    %p363 = scmp.ne.s32.totalorder %s348, %s362
    %p364 = scmp.eq.s32.totalorder %s34, 0
    %p365 = por %p363, %p364
    %s367 = sadd.s32 %s366, 1
    %p370 = scmp.eq.s32.totalorder %s28, 1
    %p371 = scmp.ne.s32.totalorder %s366, %s368
    %p372 = scmp.eq.s32.totalorder %s28, 0
    %p373 = por %p371, %p372
    %p374 = scmp.ne.s32.totalorder %s366, %s368
    %p375 = scmp.eq.s32.totalorder %s33, 1
    %p376 = por %p374, %p375
    %p377 = scmp.ne.s32.totalorder %s368, %s369
    %p378 = scmp.eq.s32.totalorder %s33, 0
    %p379 = por %p377, %p378
    %p380 = scmp.ne.s32.totalorder %s368, %s369
    %p381 = scmp.eq.s32.totalorder %s34, 1
    %p382 = por %p380, %p381
    %p384 = scmp.ne.s32.totalorder %s369, %s383
    %p385 = scmp.eq.s32.totalorder %s34, 0
    %p386 = por %p384, %p385
    %s388 = sadd.s32 %s387, 1
    %p391 = scmp.eq.s32.totalorder %s28, 1
    %p392 = scmp.ne.s32.totalorder %s387, %s389
    %p393 = scmp.eq.s32.totalorder %s28, 0
    %p394 = por %p392, %p393
    %p395 = scmp.ne.s32.totalorder %s387, %s389
    %p396 = scmp.eq.s32.totalorder %s33, 1
    %p397 = por %p395, %p396
    %p398 = scmp.ne.s32.totalorder %s389, %s390
    %p399 = scmp.eq.s32.totalorder %s33, 0
    %p400 = por %p398, %p399
    %p401 = scmp.ne.s32.totalorder %s389, %s390
    %p402 = scmp.eq.s32.totalorder %s34, 1
    %p403 = por %p401, %p402
    %p405 = scmp.ne.s32.totalorder %s390, %s404
    %p406 = scmp.eq.s32.totalorder %s34, 0
    %p407 = por %p405, %p406
    %s409 = sadd.s32 %s408, 1
    %p412 = scmp.eq.s32.totalorder %s28, 1
    %p413 = scmp.ne.s32.totalorder %s408, %s410
    %p414 = scmp.eq.s32.totalorder %s28, 0
    %p415 = por %p413, %p414
    %p416 = scmp.ne.s32.totalorder %s408, %s410
    %p417 = scmp.eq.s32.totalorder %s33, 1
    %p418 = por %p416, %p417
    %p419 = scmp.ne.s32.totalorder %s410, %s411
    %p420 = scmp.eq.s32.totalorder %s33, 0
    %p421 = por %p419, %p420
    %p422 = scmp.ne.s32.totalorder %s410, %s411
    %p423 = scmp.eq.s32.totalorder %s34, 1
    %p424 = por %p422, %p423
    %p426 = scmp.ne.s32.totalorder %s411, %s425
    %p427 = scmp.eq.s32.totalorder %s34, 0
    %p428 = por %p426, %p427
    %s430 = sadd.s32 %s429, 1
    %p433 = scmp.eq.s32.totalorder %s28, 1
    %p434 = scmp.ne.s32.totalorder %s429, %s431
    %p435 = scmp.eq.s32.totalorder %s28, 0
    %p436 = por %p434, %p435
    %p437 = scmp.ne.s32.totalorder %s429, %s431
    %p438 = scmp.eq.s32.totalorder %s33, 1
    %p439 = por %p437, %p438
    %p440 = scmp.ne.s32.totalorder %s431, %s432
    %p441 = scmp.eq.s32.totalorder %s33, 0
    %p442 = por %p440, %p441
    %p443 = scmp.ne.s32.totalorder %s431, %s432
    %p444 = scmp.eq.s32.totalorder %s34, 1
    %p445 = por %p443, %p444
    %p447 = scmp.ne.s32.totalorder %s432, %s446
    %p448 = scmp.eq.s32.totalorder %s34, 0
    %p449 = por %p447, %p448
    %s451 = sadd.s32 %s450, 1
    %p454 = scmp.eq.s32.totalorder %s28, 1
    %p455 = scmp.ne.s32.totalorder %s450, %s452
    %p456 = scmp.eq.s32.totalorder %s28, 0
    %p457 = por %p455, %p456
    %p458 = scmp.ne.s32.totalorder %s450, %s452
    %p459 = scmp.eq.s32.totalorder %s33, 1
    %p460 = por %p458, %p459
    %p461 = scmp.ne.s32.totalorder %s452, %s453
    %p462 = scmp.eq.s32.totalorder %s33, 0
    %p463 = por %p461, %p462
    %p464 = scmp.ne.s32.totalorder %s452, %s453
    %p465 = scmp.eq.s32.totalorder %s34, 1
    %p466 = por %p464, %p465
    %p468 = scmp.ne.s32.totalorder %s453, %s467
    %p469 = scmp.eq.s32.totalorder %s34, 0
    %p470 = por %p468, %p469
    %s472 = sadd.s32 %s471, 1
    %p475 = scmp.eq.s32.totalorder %s28, 1
    %p476 = scmp.ne.s32.totalorder %s471, %s473
    %p477 = scmp.eq.s32.totalorder %s28, 0
    %p478 = por %p476, %p477
    %p479 = scmp.ne.s32.totalorder %s471, %s473
    %p480 = scmp.eq.s32.totalorder %s33, 1
    %p481 = por %p479, %p480
    %p482 = scmp.ne.s32.totalorder %s473, %s474
    %p483 = scmp.eq.s32.totalorder %s33, 0
    %p484 = por %p482, %p483
    %p485 = scmp.ne.s32.totalorder %s473, %s474
    %p486 = scmp.eq.s32.totalorder %s34, 1
    %p487 = por %p485, %p486
    %p489 = scmp.ne.s32.totalorder %s474, %s488
    %p490 = scmp.eq.s32.totalorder %s34, 0
    %p491 = por %p489, %p490
    %s493 = sadd.s32 %s492, 1
    %p496 = scmp.eq.s32.totalorder %s28, 1
    %p497 = scmp.ne.s32.totalorder %s492, %s494
    %p498 = scmp.eq.s32.totalorder %s28, 0
    %p499 = por %p497, %p498
    %p500 = scmp.ne.s32.totalorder %s492, %s494
    %p501 = scmp.eq.s32.totalorder %s33, 1
    %p502 = por %p500, %p501
    %p503 = scmp.ne.s32.totalorder %s494, %s495
    %p504 = scmp.eq.s32.totalorder %s33, 0
    %p505 = por %p503, %p504
    %p506 = scmp.ne.s32.totalorder %s494, %s495
    %p507 = scmp.eq.s32.totalorder %s34, 1
    %p508 = por %p506, %p507
    %p510 = scmp.ne.s32.totalorder %s495, %s509
    %p511 = scmp.eq.s32.totalorder %s34, 0
    %p512 = por %p510, %p511
    %s513 = ssub.s32 %s28, %s35
    %p514 = scmp.eq.s32.totalorder %s513, 0
    %s516 = sadd.s32 %s515, 1
    %s517 = scalar_select %p514, %s515, %s516
    %p520 = pneg %p514
    %p521 = scmp.eq.s32.totalorder %s28, 1
    %p522 = por %p520, %p521
    %p523 = scmp.ne.s32.totalorder %s515, %s518
    %p524 = scmp.eq.s32.totalorder %s28, 0
    %p525 = por %p523, %p524
    %p526 = scmp.ne.s32.totalorder %s515, %s518
    %p527 = scmp.eq.s32.totalorder %s33, 1
    %p528 = por %p526, %p527
    %p529 = scmp.ne.s32.totalorder %s518, %s519
    %p530 = scmp.eq.s32.totalorder %s33, 0
    %p531 = por %p529, %p530
    %p532 = scmp.ne.s32.totalorder %s518, %s519
    %p533 = scmp.eq.s32.totalorder %s34, 1
    %p534 = por %p532, %p533
    %p536 = scmp.ne.s32.totalorder %s519, %s535
    %p537 = scmp.eq.s32.totalorder %s34, 0
    %p538 = por %p536, %p537
    %p539 = scmp.le.s32.totalorder 1, %s28
    %p540 = scmp.lt.s32.totalorder %s28, 3
    %p541 = pnand %p539, %p540
    %p542 = pneg %p541
    // Predicated region
    $region9: #{tpu_custom_call.1} parent=5 // pred_check
      _
    $region10: #{tpu_custom_call.1} parent=5 // pred_check_branch
      %544 = sbr.rel (%p541) target = $region12
    $region11: #{tpu_custom_call.1} parent=5 // pred_region
      %s545 = ssub.s32 %s28, 1
      // Predicated region
      $region13: #{tpu_custom_call.1} parent=11 // pred_check
        %p546 = pneg %p127
      $region14: #{tpu_custom_call.1} parent=11 // pred_check_branch
        %548 = sbr.rel (%p546) target = $region16
      $region15: #{tpu_custom_call.1} parent=11 // pred_region
        _
      $region16: #{tpu_custom_call.1} parent=11 // pred_fallthru
        _
      // Predicated region
      $region17: #{tpu_custom_call.1} parent=11 // pred_check
        %p549 = pneg %p148
      $region18: #{tpu_custom_call.1} parent=11 // pred_check_branch
        %551 = sbr.rel (%p549) target = $region20
      $region19: #{tpu_custom_call.1} parent=11 // pred_region
        _
      $region20: #{tpu_custom_call.1} parent=11 // pred_fallthru
        _
      // Predicated region
      $region21: #{tpu_custom_call.1} parent=11 // pred_check
        %p552 = pneg %p169
      $region22: #{tpu_custom_call.1} parent=11 // pred_check_branch
        %554 = sbr.rel (%p552) target = $region24
      $region23: #{tpu_custom_call.1} parent=11 // pred_region
        _
      $region24: #{tpu_custom_call.1} parent=11 // pred_fallthru
        _
      // Predicated region
      $region25: #{tpu_custom_call.1} parent=11 // pred_check
        %p555 = pneg %p190
      $region26: #{tpu_custom_call.1} parent=11 // pred_check_branch
        %557 = sbr.rel (%p555) target = $region28
      $region27: #{tpu_custom_call.1} parent=11 // pred_region
        _
      $region28: #{tpu_custom_call.1} parent=11 // pred_fallthru
        _
      // Predicated region
      $region29: #{tpu_custom_call.1} parent=11 // pred_check
        %p558 = pneg %p211
      $region30: #{tpu_custom_call.1} parent=11 // pred_check_branch
        %560 = sbr.rel (%p558) target = $region32
      $region31: #{tpu_custom_call.1} parent=11 // pred_region
        _
      $region32: #{tpu_custom_call.1} parent=11 // pred_fallthru
        _
      // Predicated region
      $region33: #{tpu_custom_call.1} parent=11 // pred_check
        %p561 = pneg %p232
      $region34: #{tpu_custom_call.1} parent=11 // pred_check_branch
        %563 = sbr.rel (%p561) target = $region36
      $region35: #{tpu_custom_call.1} parent=11 // pred_region
        _
      $region36: #{tpu_custom_call.1} parent=11 // pred_fallthru
        _
      // Predicated region
      $region37: #{tpu_custom_call.1} parent=11 // pred_check
        %p564 = pneg %p253
      $region38: #{tpu_custom_call.1} parent=11 // pred_check_branch
        %566 = sbr.rel (%p564) target = $region40
      $region39: #{tpu_custom_call.1} parent=11 // pred_region
        _
      $region40: #{tpu_custom_call.1} parent=11 // pred_fallthru
        _
      // Predicated region
      $region41: #{tpu_custom_call.1} parent=11 // pred_check
        %p567 = pneg %p274
      $region42: #{tpu_custom_call.1} parent=11 // pred_check_branch
        %569 = sbr.rel (%p567) target = $region44
      $region43: #{tpu_custom_call.1} parent=11 // pred_region
        _
      $region44: #{tpu_custom_call.1} parent=11 // pred_fallthru
        _
      // Predicated region
      $region45: #{tpu_custom_call.1} parent=11 // pred_check
        %p570 = pneg %p295
      $region46: #{tpu_custom_call.1} parent=11 // pred_check_branch
        %572 = sbr.rel (%p570) target = $region48
      $region47: #{tpu_custom_call.1} parent=11 // pred_region
        _
      $region48: #{tpu_custom_call.1} parent=11 // pred_fallthru
        _
      // Predicated region
      $region49: #{tpu_custom_call.1} parent=11 // pred_check
        %p573 = pneg %p316
      $region50: #{tpu_custom_call.1} parent=11 // pred_check_branch
        %575 = sbr.rel (%p573) target = $region52
      $region51: #{tpu_custom_call.1} parent=11 // pred_region
        _
      $region52: #{tpu_custom_call.1} parent=11 // pred_fallthru
        _
      // Predicated region
      $region53: #{tpu_custom_call.1} parent=11 // pred_check
        %p576 = pneg %p337
      $region54: #{tpu_custom_call.1} parent=11 // pred_check_branch
        %578 = sbr.rel (%p576) target = $region56
      $region55: #{tpu_custom_call.1} parent=11 // pred_region
        _
      $region56: #{tpu_custom_call.1} parent=11 // pred_fallthru
        _
      // Predicated region
      $region57: #{tpu_custom_call.1} parent=11 // pred_check
        %p579 = pneg %p358
      $region58: #{tpu_custom_call.1} parent=11 // pred_check_branch
        %581 = sbr.rel (%p579) target = $region60
      $region59: #{tpu_custom_call.1} parent=11 // pred_region
        _
      $region60: #{tpu_custom_call.1} parent=11 // pred_fallthru
        _
      // Predicated region
      $region61: #{tpu_custom_call.1} parent=11 // pred_check
        %p582 = pneg %p379
      $region62: #{tpu_custom_call.1} parent=11 // pred_check_branch
        %584 = sbr.rel (%p582) target = $region64
      $region63: #{tpu_custom_call.1} parent=11 // pred_region
        _
      $region64: #{tpu_custom_call.1} parent=11 // pred_fallthru
        _
      // Predicated region
      $region65: #{tpu_custom_call.1} parent=11 // pred_check
        %p585 = pneg %p400
      $region66: #{tpu_custom_call.1} parent=11 // pred_check_branch
        %587 = sbr.rel (%p585) target = $region68
      $region67: #{tpu_custom_call.1} parent=11 // pred_region
        _
      $region68: #{tpu_custom_call.1} parent=11 // pred_fallthru
        _
      // Predicated region
      $region69: #{tpu_custom_call.1} parent=11 // pred_check
        %p588 = pneg %p421
      $region70: #{tpu_custom_call.1} parent=11 // pred_check_branch
        %590 = sbr.rel (%p588) target = $region72
      $region71: #{tpu_custom_call.1} parent=11 // pred_region
        _
      $region72: #{tpu_custom_call.1} parent=11 // pred_fallthru
        _
      // Predicated region
      $region73: #{tpu_custom_call.1} parent=11 // pred_check
        %p591 = pneg %p442
      $region74: #{tpu_custom_call.1} parent=11 // pred_check_branch
        %593 = sbr.rel (%p591) target = $region76
      $region75: #{tpu_custom_call.1} parent=11 // pred_region
        _
      $region76: #{tpu_custom_call.1} parent=11 // pred_fallthru
        _
      // Predicated region
      $region77: #{tpu_custom_call.1} parent=11 // pred_check
        %p594 = pneg %p463
      $region78: #{tpu_custom_call.1} parent=11 // pred_check_branch
        %596 = sbr.rel (%p594) target = $region80
      $region79: #{tpu_custom_call.1} parent=11 // pred_region
        _
      $region80: #{tpu_custom_call.1} parent=11 // pred_fallthru
        _
      // Predicated region
      $region81: #{tpu_custom_call.1} parent=11 // pred_check
        %p597 = pneg %p484
      $region82: #{tpu_custom_call.1} parent=11 // pred_check_branch
        %599 = sbr.rel (%p597) target = $region84
      $region83: #{tpu_custom_call.1} parent=11 // pred_region
        _
      $region84: #{tpu_custom_call.1} parent=11 // pred_fallthru
        _
      // Predicated region
      $region85: #{tpu_custom_call.1} parent=11 // pred_check
        %p600 = pneg %p505
      $region86: #{tpu_custom_call.1} parent=11 // pred_check_branch
        %602 = sbr.rel (%p600) target = $region88
      $region87: #{tpu_custom_call.1} parent=11 // pred_region
        _
      $region88: #{tpu_custom_call.1} parent=11 // pred_fallthru
        _
    $region12: #{tpu_custom_call.1} parent=5 // pred_fallthru
      _
    %p603 = scmp.lt.s32.totalorder %s28, 2
    // Predicated region
    $region89: #{tpu_custom_call.1} parent=5 // pred_check
      %p604 = pneg %p603
    $region90: #{tpu_custom_call.1} parent=5 // pred_check_branch
      %606 = sbr.rel (%p604) target = $region92
    $region91: #{tpu_custom_call.1} parent=5 // pred_region
      // Predicated region
      $region93: #{tpu_custom_call.1} parent=91 // pred_check
        %p607 = pneg %p48
      $region94: #{tpu_custom_call.1} parent=91 // pred_check_branch
        %609 = sbr.rel (%p607) target = $region96
      $region95: #{tpu_custom_call.1} parent=91 // pred_region
        %p610 = scmp.lt.s32.totalorder %s28, 1
        %s611 = scalar_select %p610, %s28, 1
        %s612 = smul.addr %s611, 4
        %s613 = smul.addr %s612, 4
        %s614 = scalar_lea.vmem %s0, %s613
      $region96: #{tpu_custom_call.1} parent=91 // pred_fallthru
        _
      // Predicated region
      $region97: #{tpu_custom_call.1} parent=91 // pred_check
        %p615 = pneg %p74
      $region98: #{tpu_custom_call.1} parent=91 // pred_check_branch
        %617 = sbr.rel (%p615) target = $region100
      $region99: #{tpu_custom_call.1} parent=91 // pred_region
        %p618 = scmp.lt.s32.totalorder %s28, 1
        %s619 = scalar_select %p618, %s28, 1
        %s620 = smul.addr %s619, 2
        %s621 = smul.addr %s620, 8
        %s622 = scalar_lea.vmem %s1, %s621
      $region100: #{tpu_custom_call.1} parent=91 // pred_fallthru
        _
      // Predicated region
      $region101: #{tpu_custom_call.1} parent=91 // pred_check
        %p623 = pneg %p100
      $region102: #{tpu_custom_call.1} parent=91 // pred_check_branch
        %625 = sbr.rel (%p623) target = $region104
      $region103: #{tpu_custom_call.1} parent=91 // pred_region
        %p626 = scmp.lt.s32.totalorder %s28, 1
        %s627 = scalar_select %p626, %s28, 1
        %s628 = smul.addr %s627, 32
        %s629 = smul.addr %s628, 8
        %s630 = scalar_lea.vmem %s2, %s629
      $region104: #{tpu_custom_call.1} parent=91 // pred_fallthru
        _
    $region92: #{tpu_custom_call.1} parent=5 // pred_fallthru
      _
    %p631 = scmp.le.s32.totalorder 1, %s28
    %p632 = scmp.lt.s32.totalorder %s28, 3
    %p633 = pnand %p631, %p632
    %p634 = pneg %p633
    // Predicated region
    $region105: #{tpu_custom_call.1} parent=5 // pred_check
      _
    $region106: #{tpu_custom_call.1} parent=5 // pred_check_branch
      %636 = sbr.rel (%p633) target = $region108
    $region107: #{tpu_custom_call.1} parent=5 // pred_region
      %s637 = ssub.s32 %s28, 1
      %p638 = scmp.lt.s32.totalorder %s33, 1
      %s639 = scalar_select %p638, %s33, 1
      %s640 = smul.addr %s639, 4
      %s641 = smul.addr %s640, 4
      %s642 = scalar_lea.vmem %s0, %s641
      %p643 = pneg %p54
      %p644 = pneg %p51
      %p645 = scmp.lt.s32.totalorder %s33, 1
      %s646 = scalar_select %p645, %s33, 1
      %s647 = smul.addr %s646, 2
      %s648 = smul.addr %s647, 8
      %s649 = scalar_lea.vmem %s1, %s648
      %p650 = pneg %p80
      %p651 = pneg %p77
      %p652 = scmp.lt.s32.totalorder %s33, 1
      %s653 = scalar_select %p652, %s33, 1
      %s654 = smul.addr %s653, 32
      %s655 = smul.addr %s654, 8
      %s656 = scalar_lea.vmem %s2, %s655
      %p657 = pneg %p106
      %p658 = pneg %p103
      %p659 = pneg %p127
      %p660 = pneg %p124
      %p661 = pneg %p148
      %p662 = pneg %p145
      %p663 = pneg %p169
      %p664 = pneg %p166
      %p665 = pneg %p190
      %p666 = pneg %p187
      %p667 = pneg %p211
      %p668 = pneg %p208
      %p669 = pneg %p232
      %p670 = pneg %p229
      %p671 = pneg %p253
      %p672 = pneg %p250
      %p673 = pneg %p274
      %p674 = pneg %p271
      %p675 = pneg %p295
      %p676 = pneg %p292
      %p677 = pneg %p316
      %p678 = pneg %p313
      %p679 = pneg %p337
      %p680 = pneg %p334
      %p681 = pneg %p358
      %p682 = pneg %p355
      %p683 = pneg %p379
      %p684 = pneg %p376
      %p685 = pneg %p400
      %p686 = pneg %p397
      %p687 = pneg %p421
      %p688 = pneg %p418
      %p689 = pneg %p442
      %p690 = pneg %p439
      %p691 = pneg %p463
      %p692 = pneg %p460
      %p693 = pneg %p484
      %p694 = pneg %p481
      %p695 = pneg %p505
      %p696 = pneg %p502
      %p697 = pneg %p531
      %p698 = pneg %p528
      %p699 = scmp.lt.s32.totalorder %s33, 1
      %s700 = scalar_select %p699, %s33, 1
      %s701 = smul.addr %s700, 32
      %s702 = smul.addr %s701, 8
      %s703 = scalar_lea.vmem %s22, %s702
      %p704 = scmp.lt.s32.totalorder %s33, 1
      %s705 = scalar_select %p704, %s33, 1
      %s706 = smul.addr %s705, 4
      %s707 = smul.addr %s706, 4
      %s708 = scalar_lea.vmem %s0, %s707
      %p709 = scmp.lt.s32.totalorder %s33, 1
      %s710 = scalar_select %p709, %s33, 1
      %s711 = smul.addr %s710, 2
      %s712 = smul.addr %s711, 8
      %s713 = scalar_lea.vmem %s1, %s712
      %p714 = scmp.lt.s32.totalorder %s33, 1
      %s715 = scalar_select %p714, %s33, 1
      %s716 = smul.addr %s715, 32
      %s717 = smul.addr %s716, 8
      %s718 = scalar_lea.vmem %s2, %s717
      %p719 = scmp.lt.s32.totalorder %s33, 1
      %s720 = scalar_select %p719, %s33, 1
      %s721 = smul.addr %s720, 32
      %s722 = smul.addr %s721, 8
      %s723 = scalar_lea.vmem %s22, %s722
      %v725 = vld [vmem:[%s713] sm:$0xff]
      %v726 = vld [vmem:[%s713 + $0x8] sm:$0xff]
      %v727 = vld [vmem:[%s4] sm:$0xf]
      %v728 = vld [vmem:[%s4 + $0x4] sm:$0xf]
      %v729 = vld [vmem:[%s4 + $0x8] sm:$0xf]
      %v730 = vld [vmem:[%s4 + $0xc] sm:$0xf]
      %v731 = vpack.c.bf16 %v726, %v725
      %v732 = vld [vmem:[%s7] sm:$0x1]
      %v733 = vlaneseq
      %v734 = vshrl.u32 %v733, 7
      %v735 = vsub.s32 0, %v734
      %v736 = vrot.slane %v732, %v735
      %v741 = vunpack.c.l.b16 %v727
      %v742 = vunpack.c.l.b16 %v728
      %v743 = vunpack.c.l.b16 %v729
      %v744 = vunpack.c.l.b16 %v730
      %v745 = vpack.c.b16 %v742, %v741
      %v746 = vpack.c.b16 %v744, %v743
      %vm749 = vcmask 261120
      %v751 = vsel %vm749, %v731, 0
      %753 = vmatprep.subr.bf16.mxu0 0
      %754 = vmatpush1.bf16.msra.mxu0 0
      %755 = vmatprep.subr.bf16.mxu0 0
      %756 = vmatpush1.bf16.msra.mxu0 0
      %757 = vmatprep.subr.bf16.mxu0 0
      %758 = vmatpush1.bf16.msra.mxu0 0
      %759 = vmatprep.subr.bf16.mxu0 0
      %760 = vmatpush1.bf16.msra.mxu0 0
      %761 = vmatprep.subr.bf16.mxu0 0
      %762 = vmatpush1.bf16.msra.mxu0 0
      %763 = vmatprep.subr.bf16.mxu0 0
      %764 = vmatpush1.bf16.msra.mxu0 0
      %765 = vmatprep.subr.bf16.mxu0 0
      %766 = vmatpush1.bf16.msra.mxu0 %v746
      %767 = vmatprep.subr.bf16.mxu0 0
      %768 = vmatpush1.bf16.msra.mxu0 %v745
      %769 = vmatprep.subr.bf16.mxu0 0
      %770 = vmatpush2.bf16.msra.mxu0 0
      %771 = vmatprep.subr.bf16.mxu0 0
      %772 = vmatpush2.bf16.msra.mxu0 0
      %773 = vmatprep.subr.bf16.mxu0 0
      %774 = vmatpush2.bf16.msra.mxu0 0
      %775 = vmatprep.subr.bf16.mxu0 0
      %776 = vmatpush2.bf16.msra.mxu0 0
      %777 = vmatprep.subr.bf16.mxu0 0
      %778 = vmatpush2.bf16.msra.mxu0 0
      %779 = vmatprep.subr.bf16.mxu0 0
      %780 = vmatpush2.bf16.msra.mxu0 0
      %781 = vmatprep.subr.bf16.mxu0 0
      %782 = vmatpush2.bf16.msra.mxu0 0
      %783 = vmatprep.subr.bf16.mxu0 0
      %784 = vmatpush2.bf16.msra.mxu0 0
      %785 = vmatprep.mubr.bf16.mxu0 0
      %786 = vmatmul.mubr.bf16.gmra.mxu0 %v751
      %v787 = vpop.f32.mrf.mxu0
      %v788 = vadd.f32 %v736, %v787
      %v789 = vpop.f32.mrf.mxu0
      %v790 = vpop.f32.mrf.mxu0
      %v791 = vadd.f32 %v736, %v790
      %v792 = vpop.f32.mrf.mxu0
      %793 = vdwg.mxu0
      %v794 = vmax.f32 %v788, 0.0
      %v795 = vmax.f32 %v791, 0.0
      %v796 = vpack.c.bf16 %v795, %v794
      %v797 = vld [vmem:[%s10] sm:$0xf]
      %v798 = vld [vmem:[%s10 + $0x4] sm:$0xf]
      %v799 = vld [vmem:[%s10 + $0x8] sm:$0xf]
      %v800 = vld [vmem:[%s10 + $0xc] sm:$0xf]
      %v801 = vsel %vm749, %v725, 0.0
      %v802 = vsel %vm749, %v726, 0.0
      %v803 = vadd.f32 %v801, %v802
      %v804 = vrot.slane %v803, 4
      %v805 = vadd.f32 %v803, %v804
      %v806 = vrot.slane %v805, 2
      %v807 = vadd.f32 %v805, %v806
      %v808 = vrot.slane %v807, 1
      %v809 = vadd.f32 %v807, %v808
      %v810 = vmul.f32 %v809, 0.0625
      %v811 = vld [vmem:[%s8] sm:$0xf]
      %v812 = vld [vmem:[%s8 + $0x4] sm:$0xf]
      %v813 = vld [vmem:[%s8 + $0x8] sm:$0xf]
      %v814 = vld [vmem:[%s8 + $0xc] sm:$0xf]
      %v815 = vpack.c.bf16 %v810, %v810
      %v816 = vld [vmem:[%s9] sm:$0x1]
      %v821 = vunpack.c.l.b16 %v811
      %v822 = vunpack.c.l.b16 %v812
      %v823 = vunpack.c.l.b16 %v813
      %v824 = vunpack.c.l.b16 %v814
      %v825 = vpack.c.b16 %v822, %v821
      %v826 = vpack.c.b16 %v824, %v823
      %v830 = vsel %vm749, %v815, 0
      %832 = vmatprep.subr.bf16.mxu0 0
      %833 = vmatpush1.bf16.msra.mxu0 0
      %834 = vmatprep.subr.bf16.mxu0 0
      %835 = vmatpush1.bf16.msra.mxu0 0
      %836 = vmatprep.subr.bf16.mxu0 0
      %837 = vmatpush1.bf16.msra.mxu0 0
      %838 = vmatprep.subr.bf16.mxu0 0
      %839 = vmatpush1.bf16.msra.mxu0 0
      %840 = vmatprep.subr.bf16.mxu0 0
      %841 = vmatpush1.bf16.msra.mxu0 0
      %842 = vmatprep.subr.bf16.mxu0 0
      %843 = vmatpush1.bf16.msra.mxu0 0
      %844 = vmatprep.subr.bf16.mxu0 0
      %845 = vmatpush1.bf16.msra.mxu0 %v826
      %846 = vmatprep.subr.bf16.mxu0 0
      %847 = vmatpush1.bf16.msra.mxu0 %v825
      %848 = vmatprep.subr.bf16.mxu0 0
      %849 = vmatpush2.bf16.msra.mxu0 0
      %850 = vmatprep.subr.bf16.mxu0 0
      %851 = vmatpush2.bf16.msra.mxu0 0
      %852 = vmatprep.subr.bf16.mxu0 0
      %853 = vmatpush2.bf16.msra.mxu0 0
      %854 = vmatprep.subr.bf16.mxu0 0
      %855 = vmatpush2.bf16.msra.mxu0 0
      %856 = vmatprep.subr.bf16.mxu0 0
      %857 = vmatpush2.bf16.msra.mxu0 0
      %858 = vmatprep.subr.bf16.mxu0 0
      %859 = vmatpush2.bf16.msra.mxu0 0
      %860 = vmatprep.subr.bf16.mxu0 0
      %861 = vmatpush2.bf16.msra.mxu0 0
      %862 = vmatprep.subr.bf16.mxu0 0
      %863 = vmatpush2.bf16.msra.mxu0 0
      %864 = vmatprep.mubr.bf16.mxu0 0
      %865 = vmatmul.mubr.bf16.gmra.mxu0 %v830
      %v866 = vpop.f32.mrf.mxu0
      %v867 = vadd.f32 %v816, %v866
      %v868 = vpop.f32.mrf.mxu0
      %v869 = vpop.f32.mrf.mxu0
      %v870 = vpop.f32.mrf.mxu0
      %871 = vdwg.mxu0
      %v872 = vmax.f32 %v867, 0.0
      %v873 = vpack.c.bf16 %v872, %v872
      %v874 = vld [vmem:[%s10 + $0x40] sm:$0xf]
      %v875 = vld [vmem:[%s10 + $0x44] sm:$0xf]
      %v876 = vld [vmem:[%s10 + $0x48] sm:$0xf]
      %v877 = vld [vmem:[%s10 + $0x4c] sm:$0xf]
      %v882 = vunpack.c.l.b16 %v874
      %v883 = vunpack.c.l.b16 %v875
      %v884 = vunpack.c.l.b16 %v876
      %v885 = vunpack.c.l.b16 %v877
      %v886 = vpack.c.b16 %v883, %v882
      %v887 = vpack.c.b16 %v885, %v884
      %v891 = vsel %vm749, %v873, 0
      %893 = vmatprep.subr.bf16.mxu0 0
      %894 = vmatpush1.bf16.msra.mxu0 0
      %895 = vmatprep.subr.bf16.mxu0 0
      %896 = vmatpush1.bf16.msra.mxu0 0
      %897 = vmatprep.subr.bf16.mxu0 0
      %898 = vmatpush1.bf16.msra.mxu0 0
      %899 = vmatprep.subr.bf16.mxu0 0
      %900 = vmatpush1.bf16.msra.mxu0 0
      %901 = vmatprep.subr.bf16.mxu0 0
      %902 = vmatpush1.bf16.msra.mxu0 0
      %903 = vmatprep.subr.bf16.mxu0 0
      %904 = vmatpush1.bf16.msra.mxu0 0
      %905 = vmatprep.subr.bf16.mxu0 0
      %906 = vmatpush1.bf16.msra.mxu0 %v887
      %907 = vmatprep.subr.bf16.mxu0 0
      %908 = vmatpush1.bf16.msra.mxu0 %v886
      %909 = vmatprep.subr.bf16.mxu0 0
      %910 = vmatpush2.bf16.msra.mxu0 0
      %911 = vmatprep.subr.bf16.mxu0 0
      %912 = vmatpush2.bf16.msra.mxu0 0
      %913 = vmatprep.subr.bf16.mxu0 0
      %914 = vmatpush2.bf16.msra.mxu0 0
      %915 = vmatprep.subr.bf16.mxu0 0
      %916 = vmatpush2.bf16.msra.mxu0 0
      %917 = vmatprep.subr.bf16.mxu0 0
      %918 = vmatpush2.bf16.msra.mxu0 0
      %919 = vmatprep.subr.bf16.mxu0 0
      %920 = vmatpush2.bf16.msra.mxu0 0
      %921 = vmatprep.subr.bf16.mxu0 0
      %922 = vmatpush2.bf16.msra.mxu0 0
      %923 = vmatprep.subr.bf16.mxu0 0
      %924 = vmatpush2.bf16.msra.mxu0 0
      %925 = vmatprep.mubr.bf16.mxu0 0
      %926 = vmatmul.mubr.bf16.gmra.mxu0 %v891
      %v927 = vpop.f32.mrf.mxu0
      %v928 = vadd.f32 0.0, %v927
      %v929 = vpop.f32.mrf.mxu0
      %v930 = vpop.f32.mrf.mxu0
      %v931 = vpop.f32.mrf.mxu0
      %932 = vdwg.mxu0
      %v933 = vlaneseq
      %v934 = vshrl.u32 %v933, 7
      %v935 = vsub.s32 0, %v934
      %v936 = vrot.slane %v928, %v935
      %v941 = vunpack.c.l.b16 %v797
      %v942 = vunpack.c.l.b16 %v798
      %v943 = vunpack.c.l.b16 %v799
      %v944 = vunpack.c.l.b16 %v800
      %v945 = vpack.c.b16 %v942, %v941
      %v946 = vpack.c.b16 %v944, %v943
      %v950 = vsel %vm749, %v796, 0
      %952 = vmatprep.subr.bf16.mxu0 0
      %953 = vmatpush1.bf16.msra.mxu0 0
      %954 = vmatprep.subr.bf16.mxu0 0
      %955 = vmatpush1.bf16.msra.mxu0 0
      %956 = vmatprep.subr.bf16.mxu0 0
      %957 = vmatpush1.bf16.msra.mxu0 0
      %958 = vmatprep.subr.bf16.mxu0 0
      %959 = vmatpush1.bf16.msra.mxu0 0
      %960 = vmatprep.subr.bf16.mxu0 0
      %961 = vmatpush1.bf16.msra.mxu0 0
      %962 = vmatprep.subr.bf16.mxu0 0
      %963 = vmatpush1.bf16.msra.mxu0 0
      %964 = vmatprep.subr.bf16.mxu0 0
      %965 = vmatpush1.bf16.msra.mxu0 %v946
      %966 = vmatprep.subr.bf16.mxu0 0
      %967 = vmatpush1.bf16.msra.mxu0 %v945
      %968 = vmatprep.subr.bf16.mxu0 0
      %969 = vmatpush2.bf16.msra.mxu0 0
      %970 = vmatprep.subr.bf16.mxu0 0
      %971 = vmatpush2.bf16.msra.mxu0 0
      %972 = vmatprep.subr.bf16.mxu0 0
      %973 = vmatpush2.bf16.msra.mxu0 0
      %974 = vmatprep.subr.bf16.mxu0 0
      %975 = vmatpush2.bf16.msra.mxu0 0
      %976 = vmatprep.subr.bf16.mxu0 0
      %977 = vmatpush2.bf16.msra.mxu0 0
      %978 = vmatprep.subr.bf16.mxu0 0
      %979 = vmatpush2.bf16.msra.mxu0 0
      %980 = vmatprep.subr.bf16.mxu0 0
      %981 = vmatpush2.bf16.msra.mxu0 0
      %982 = vmatprep.subr.bf16.mxu0 0
      %983 = vmatpush2.bf16.msra.mxu0 0
      %984 = vmatprep.mubr.bf16.mxu0 0
      %985 = vmatmul.mubr.bf16.gmra.mxu0 %v950
      %v986 = vpop.f32.mrf.mxu0
      %v987 = vadd.f32 %v936, %v986
      %v988 = vpop.f32.mrf.mxu0
      %v989 = vpop.f32.mrf.mxu0
      %v990 = vadd.f32 %v936, %v989
      %v991 = vpop.f32.mrf.mxu0
      %992 = vdwg.mxu0
      %v993 = vld [vmem:[%s5] sm:$0xff]
      %vm994 = vcmask 257024
      %995 = vst.msk [vmem:[#allocation2] sm:$0xf] %vm994, 0.0
      %996 = vst.msk [vmem:[#allocation2 + $0x4] sm:$0xf] %vm994, 0.0
      %997 = vst.msk [vmem:[#allocation2 + $0x8] sm:$0xf] %vm994, 0.0
      %998 = vst.msk [vmem:[#allocation2 + $0xc] sm:$0xf] %vm994, 0.0
      %v999 = vld [vmem:[%s708] sm:$0xf]
      %v1000 = vld [vmem:[%s708 + $0x4] sm:$0xf]
      %v1001 = vld [vmem:[%s708 + $0x8] sm:$0xf]
      %v1002 = vld [vmem:[%s708 + $0xc] sm:$0xf]
      %v1003 = vld [vmem:[#allocation2] sm:$0xf]
      %v1004 = vld [vmem:[#allocation2 + $0x4] sm:$0xf]
      %v1005 = vld [vmem:[#allocation2 + $0x8] sm:$0xf]
      %v1006 = vld [vmem:[#allocation2 + $0xc] sm:$0xf]
      %v1007 = vlaneseq
      %v1008 = vshrl.u32 %v1007, 7
      %v1009 = vsub.s32 4, %v1008
      %v1010 = vrot.slane %v993, %v1009
      %v1011 = vmul.f32 %v999, %v1010
      %v1012 = vmul.f32 %v1000, %v1010
      %v1013 = vmul.f32 %v1001, %v1010
      %v1014 = vmul.f32 %v1002, %v1010
      %v1015 = vadd.f32 %v1003, %v1011
      %v1016 = vadd.f32 %v1004, %v1012
      %v1017 = vadd.f32 %v1005, %v1013
      %v1018 = vadd.f32 %v1006, %v1014
      %1019 = vst.msk [vmem:[#allocation2] sm:$0xf] %vm994, %v1015
      %1020 = vst.msk [vmem:[#allocation2 + $0x4] sm:$0xf] %vm994, %v1016
      %1021 = vst.msk [vmem:[#allocation2 + $0x8] sm:$0xf] %vm994, %v1017
      %1022 = vst.msk [vmem:[#allocation2 + $0xc] sm:$0xf] %vm994, %v1018
      %v1023 = vld [vmem:[#allocation2] sm:$0xf]
      %1024 = vst.msk [vmem:[#allocation3] sm:$0xf] %vm994, %v1023
      %s1025 = scalar_lea.vmem [#allocation2], 4
      %v1026 = vld [vmem:[%s1025] sm:$0xf]
      %1027 = vst.msk [vmem:[#allocation3 + $0x4] sm:$0xf] %vm994, %v1026
      %s1028 = scalar_lea.vmem [#allocation2], 8
      %v1029 = vld [vmem:[%s1028] sm:$0xf]
      %1030 = vst.msk [vmem:[#allocation3 + $0x8] sm:$0xf] %vm994, %v1029
      %s1031 = scalar_lea.vmem [#allocation2], 12
      %v1032 = vld [vmem:[%s1031] sm:$0xf]
      %1033 = vst.msk [vmem:[#allocation3 + $0xc] sm:$0xf] %vm994, %v1032
      %v1034 = vld [vmem:[#allocation3] sm:$0xff]
      %v1035 = vld [vmem:[#allocation3 + $0x8] sm:$0xff]
      %v1036 = vld [vmem:[%s6] sm:$0xf]
      %v1037 = vld [vmem:[%s6 + $0x4] sm:$0xf]
      %v1038 = vld [vmem:[%s6 + $0x8] sm:$0xf]
      %v1039 = vld [vmem:[%s6 + $0xc] sm:$0xf]
      %v1040 = vpack.c.bf16 %v1035, %v1034
      %v1041 = vld [vmem:[%s7 + $0x1] sm:$0x1]
      %v1042 = vlaneseq
      %v1043 = vshrl.u32 %v1042, 7
      %v1044 = vsub.s32 0, %v1043
      %v1045 = vrot.slane %v1041, %v1044
      %v1050 = vunpack.c.l.b16 %v1036
      %v1051 = vunpack.c.l.b16 %v1037
      %v1052 = vunpack.c.l.b16 %v1038
      %v1053 = vunpack.c.l.b16 %v1039
      %v1054 = vpack.c.b16 %v1051, %v1050
      %v1055 = vpack.c.b16 %v1053, %v1052
      %v1059 = vsel %vm749, %v1040, 0
      %1061 = vmatprep.subr.bf16.mxu0 0
      %1062 = vmatpush1.bf16.msra.mxu0 0
      %1063 = vmatprep.subr.bf16.mxu0 0
      %1064 = vmatpush1.bf16.msra.mxu0 0
      %1065 = vmatprep.subr.bf16.mxu0 0
      %1066 = vmatpush1.bf16.msra.mxu0 0
      %1067 = vmatprep.subr.bf16.mxu0 0
      %1068 = vmatpush1.bf16.msra.mxu0 0
      %1069 = vmatprep.subr.bf16.mxu0 0
      %1070 = vmatpush1.bf16.msra.mxu0 0
      %1071 = vmatprep.subr.bf16.mxu0 0
      %1072 = vmatpush1.bf16.msra.mxu0 0
      %1073 = vmatprep.subr.bf16.mxu0 0
      %1074 = vmatpush1.bf16.msra.mxu0 %v1055
      %1075 = vmatprep.subr.bf16.mxu0 0
      %1076 = vmatpush1.bf16.msra.mxu0 %v1054
      %1077 = vmatprep.subr.bf16.mxu0 0
      %1078 = vmatpush2.bf16.msra.mxu0 0
      %1079 = vmatprep.subr.bf16.mxu0 0
      %1080 = vmatpush2.bf16.msra.mxu0 0
      %1081 = vmatprep.subr.bf16.mxu0 0
      %1082 = vmatpush2.bf16.msra.mxu0 0
      %1083 = vmatprep.subr.bf16.mxu0 0
      %1084 = vmatpush2.bf16.msra.mxu0 0
      %1085 = vmatprep.subr.bf16.mxu0 0
      %1086 = vmatpush2.bf16.msra.mxu0 0
      %1087 = vmatprep.subr.bf16.mxu0 0
      %1088 = vmatpush2.bf16.msra.mxu0 0
      %1089 = vmatprep.subr.bf16.mxu0 0
      %1090 = vmatpush2.bf16.msra.mxu0 0
      %1091 = vmatprep.subr.bf16.mxu0 0
      %1092 = vmatpush2.bf16.msra.mxu0 0
      %1093 = vmatprep.mubr.bf16.mxu0 0
      %1094 = vmatmul.mubr.bf16.gmra.mxu0 %v1059
      %v1095 = vpop.f32.mrf.mxu0
      %v1096 = vadd.f32 %v1045, %v1095
      %v1097 = vpop.f32.mrf.mxu0
      %v1098 = vpop.f32.mrf.mxu0
      %v1099 = vadd.f32 %v1045, %v1098
      %v1100 = vpop.f32.mrf.mxu0
      %1101 = vdwg.mxu0
      %v1102 = vmax.f32 %v1096, 0.0
      %v1103 = vmax.f32 %v1099, 0.0
      %v1104 = vpack.c.bf16 %v1103, %v1102
      %v1105 = vld [vmem:[%s10 + $0x10] sm:$0xf]
      %v1106 = vld [vmem:[%s10 + $0x14] sm:$0xf]
      %v1107 = vld [vmem:[%s10 + $0x18] sm:$0xf]
      %v1108 = vld [vmem:[%s10 + $0x1c] sm:$0xf]
      %v1113 = vunpack.c.l.b16 %v1105
      %v1114 = vunpack.c.l.b16 %v1106
      %v1115 = vunpack.c.l.b16 %v1107
      %v1116 = vunpack.c.l.b16 %v1108
      %v1117 = vpack.c.b16 %v1114, %v1113
      %v1118 = vpack.c.b16 %v1116, %v1115
      %v1122 = vsel %vm749, %v1104, 0
      %1124 = vmatprep.subr.bf16.mxu0 0
      %1125 = vmatpush1.bf16.msra.mxu0 0
      %1126 = vmatprep.subr.bf16.mxu0 0
      %1127 = vmatpush1.bf16.msra.mxu0 0
      %1128 = vmatprep.subr.bf16.mxu0 0
      %1129 = vmatpush1.bf16.msra.mxu0 0
      %1130 = vmatprep.subr.bf16.mxu0 0
      %1131 = vmatpush1.bf16.msra.mxu0 0
      %1132 = vmatprep.subr.bf16.mxu0 0
      %1133 = vmatpush1.bf16.msra.mxu0 0
      %1134 = vmatprep.subr.bf16.mxu0 0
      %1135 = vmatpush1.bf16.msra.mxu0 0
      %1136 = vmatprep.subr.bf16.mxu0 0
      %1137 = vmatpush1.bf16.msra.mxu0 %v1118
      %1138 = vmatprep.subr.bf16.mxu0 0
      %1139 = vmatpush1.bf16.msra.mxu0 %v1117
      %1140 = vmatprep.subr.bf16.mxu0 0
      %1141 = vmatpush2.bf16.msra.mxu0 0
      %1142 = vmatprep.subr.bf16.mxu0 0
      %1143 = vmatpush2.bf16.msra.mxu0 0
      %1144 = vmatprep.subr.bf16.mxu0 0
      %1145 = vmatpush2.bf16.msra.mxu0 0
      %1146 = vmatprep.subr.bf16.mxu0 0
      %1147 = vmatpush2.bf16.msra.mxu0 0
      %1148 = vmatprep.subr.bf16.mxu0 0
      %1149 = vmatpush2.bf16.msra.mxu0 0
      %1150 = vmatprep.subr.bf16.mxu0 0
      %1151 = vmatpush2.bf16.msra.mxu0 0
      %1152 = vmatprep.subr.bf16.mxu0 0
      %1153 = vmatpush2.bf16.msra.mxu0 0
      %1154 = vmatprep.subr.bf16.mxu0 0
      %1155 = vmatpush2.bf16.msra.mxu0 0
      %1156 = vmatprep.mubr.bf16.mxu0 0
      %1157 = vmatmul.mubr.bf16.gmra.mxu0 %v1122
      %v1158 = vpop.f32.mrf.mxu0
      %v1159 = vadd.f32 0.0, %v1158
      %v1160 = vpop.f32.mrf.mxu0
      %v1161 = vpop.f32.mrf.mxu0
      %v1162 = vadd.f32 0.0, %v1161
      %v1163 = vpop.f32.mrf.mxu0
      %1164 = vdwg.mxu0
      %v1165 = vadd.f32 %v987, %v1159
      %v1166 = vadd.f32 %v990, %v1162
      %s1167 = scalar_lea.vmem %s5, 16
      %v1168 = vld [vmem:[%s1167] sm:$0xff]
      %1169 = vst.msk [vmem:[#allocation2] sm:$0xf] %vm994, 0.0
      %1170 = vst.msk [vmem:[#allocation2 + $0x4] sm:$0xf] %vm994, 0.0
      %1171 = vst.msk [vmem:[#allocation2 + $0x8] sm:$0xf] %vm994, 0.0
      %1172 = vst.msk [vmem:[#allocation2 + $0xc] sm:$0xf] %vm994, 0.0
      %v1173 = vld [vmem:[%s708] sm:$0xf]
      %v1174 = vld [vmem:[%s708 + $0x4] sm:$0xf]
      %v1175 = vld [vmem:[%s708 + $0x8] sm:$0xf]
      %v1176 = vld [vmem:[%s708 + $0xc] sm:$0xf]
      %v1177 = vld [vmem:[#allocation2] sm:$0xf]
      %v1178 = vld [vmem:[#allocation2 + $0x4] sm:$0xf]
      %v1179 = vld [vmem:[#allocation2 + $0x8] sm:$0xf]
      %v1180 = vld [vmem:[#allocation2 + $0xc] sm:$0xf]
      %v1181 = vlaneseq
      %v1182 = vshrl.u32 %v1181, 7
      %v1183 = vsub.s32 4, %v1182
      %v1184 = vrot.slane %v1168, %v1183
      %v1185 = vmul.f32 %v1173, %v1184
      %v1186 = vmul.f32 %v1174, %v1184
      %v1187 = vmul.f32 %v1175, %v1184
      %v1188 = vmul.f32 %v1176, %v1184
      %v1189 = vadd.f32 %v1177, %v1185
      %v1190 = vadd.f32 %v1178, %v1186
      %v1191 = vadd.f32 %v1179, %v1187
      %v1192 = vadd.f32 %v1180, %v1188
      %1193 = vst.msk [vmem:[#allocation2] sm:$0xf] %vm994, %v1189
      %1194 = vst.msk [vmem:[#allocation2 + $0x4] sm:$0xf] %vm994, %v1190
      %1195 = vst.msk [vmem:[#allocation2 + $0x8] sm:$0xf] %vm994, %v1191
      %1196 = vst.msk [vmem:[#allocation2 + $0xc] sm:$0xf] %vm994, %v1192
      %v1197 = vld [vmem:[#allocation2] sm:$0xf]
      %1198 = vst.msk [vmem:[#allocation3] sm:$0xf] %vm994, %v1197
      %v1199 = vld [vmem:[%s1025] sm:$0xf]
      %1200 = vst.msk [vmem:[#allocation3 + $0x4] sm:$0xf] %vm994, %v1199
      %v1201 = vld [vmem:[%s1028] sm:$0xf]
      %1202 = vst.msk [vmem:[#allocation3 + $0x8] sm:$0xf] %vm994, %v1201
      %v1203 = vld [vmem:[%s1031] sm:$0xf]
      %1204 = vst.msk [vmem:[#allocation3 + $0xc] sm:$0xf] %vm994, %v1203
      %v1205 = vld [vmem:[#allocation3] sm:$0xff]
      %v1206 = vld [vmem:[#allocation3 + $0x8] sm:$0xff]
      %s1207 = scalar_lea.vmem %s6, 16
      %v1208 = vld [vmem:[%s1207] sm:$0xf]
      %v1209 = vld [vmem:[%s1207 + $0x4] sm:$0xf]
      %v1210 = vld [vmem:[%s1207 + $0x8] sm:$0xf]
      %v1211 = vld [vmem:[%s1207 + $0xc] sm:$0xf]
      %v1212 = vpack.c.bf16 %v1206, %v1205
      %v1213 = vld [vmem:[%s7 + $0x2] sm:$0x1]
      %v1214 = vlaneseq
      %v1215 = vshrl.u32 %v1214, 7
      %v1216 = vsub.s32 0, %v1215
      %v1217 = vrot.slane %v1213, %v1216
      %v1222 = vunpack.c.l.b16 %v1208
      %v1223 = vunpack.c.l.b16 %v1209
      %v1224 = vunpack.c.l.b16 %v1210
      %v1225 = vunpack.c.l.b16 %v1211
      %v1226 = vpack.c.b16 %v1223, %v1222
      %v1227 = vpack.c.b16 %v1225, %v1224
      %v1231 = vsel %vm749, %v1212, 0
      %1233 = vmatprep.subr.bf16.mxu0 0
      %1234 = vmatpush1.bf16.msra.mxu0 0
      %1235 = vmatprep.subr.bf16.mxu0 0
      %1236 = vmatpush1.bf16.msra.mxu0 0
      %1237 = vmatprep.subr.bf16.mxu0 0
      %1238 = vmatpush1.bf16.msra.mxu0 0
      %1239 = vmatprep.subr.bf16.mxu0 0
      %1240 = vmatpush1.bf16.msra.mxu0 0
      %1241 = vmatprep.subr.bf16.mxu0 0
      %1242 = vmatpush1.bf16.msra.mxu0 0
      %1243 = vmatprep.subr.bf16.mxu0 0
      %1244 = vmatpush1.bf16.msra.mxu0 0
      %1245 = vmatprep.subr.bf16.mxu0 0
      %1246 = vmatpush1.bf16.msra.mxu0 %v1227
      %1247 = vmatprep.subr.bf16.mxu0 0
      %1248 = vmatpush1.bf16.msra.mxu0 %v1226
      %1249 = vmatprep.subr.bf16.mxu0 0
      %1250 = vmatpush2.bf16.msra.mxu0 0
      %1251 = vmatprep.subr.bf16.mxu0 0
      %1252 = vmatpush2.bf16.msra.mxu0 0
      %1253 = vmatprep.subr.bf16.mxu0 0
      %1254 = vmatpush2.bf16.msra.mxu0 0
      %1255 = vmatprep.subr.bf16.mxu0 0
      %1256 = vmatpush2.bf16.msra.mxu0 0
      %1257 = vmatprep.subr.bf16.mxu0 0
      %1258 = vmatpush2.bf16.msra.mxu0 0
      %1259 = vmatprep.subr.bf16.mxu0 0
      %1260 = vmatpush2.bf16.msra.mxu0 0
      %1261 = vmatprep.subr.bf16.mxu0 0
      %1262 = vmatpush2.bf16.msra.mxu0 0
      %1263 = vmatprep.subr.bf16.mxu0 0
      %1264 = vmatpush2.bf16.msra.mxu0 0
      %1265 = vmatprep.mubr.bf16.mxu0 0
      %1266 = vmatmul.mubr.bf16.gmra.mxu0 %v1231
      %v1267 = vpop.f32.mrf.mxu0
      %v1268 = vadd.f32 %v1217, %v1267
      %v1269 = vpop.f32.mrf.mxu0
      %v1270 = vpop.f32.mrf.mxu0
      %v1271 = vadd.f32 %v1217, %v1270
      %v1272 = vpop.f32.mrf.mxu0
      %1273 = vdwg.mxu0
      %v1274 = vmax.f32 %v1268, 0.0
      %v1275 = vmax.f32 %v1271, 0.0
      %v1276 = vpack.c.bf16 %v1275, %v1274
      %v1277 = vld [vmem:[%s10 + $0x20] sm:$0xf]
      %v1278 = vld [vmem:[%s10 + $0x24] sm:$0xf]
      %v1279 = vld [vmem:[%s10 + $0x28] sm:$0xf]
      %v1280 = vld [vmem:[%s10 + $0x2c] sm:$0xf]
      %v1285 = vunpack.c.l.b16 %v1277
      %v1286 = vunpack.c.l.b16 %v1278
      %v1287 = vunpack.c.l.b16 %v1279
      %v1288 = vunpack.c.l.b16 %v1280
      %v1289 = vpack.c.b16 %v1286, %v1285
      %v1290 = vpack.c.b16 %v1288, %v1287
      %v1294 = vsel %vm749, %v1276, 0
      %1296 = vmatprep.subr.bf16.mxu0 0
      %1297 = vmatpush1.bf16.msra.mxu0 0
      %1298 = vmatprep.subr.bf16.mxu0 0
      %1299 = vmatpush1.bf16.msra.mxu0 0
      %1300 = vmatprep.subr.bf16.mxu0 0
      %1301 = vmatpush1.bf16.msra.mxu0 0
      %1302 = vmatprep.subr.bf16.mxu0 0
      %1303 = vmatpush1.bf16.msra.mxu0 0
      %1304 = vmatprep.subr.bf16.mxu0 0
      %1305 = vmatpush1.bf16.msra.mxu0 0
      %1306 = vmatprep.subr.bf16.mxu0 0
      %1307 = vmatpush1.bf16.msra.mxu0 0
      %1308 = vmatprep.subr.bf16.mxu0 0
      %1309 = vmatpush1.bf16.msra.mxu0 %v1290
      %1310 = vmatprep.subr.bf16.mxu0 0
      %1311 = vmatpush1.bf16.msra.mxu0 %v1289
      %1312 = vmatprep.subr.bf16.mxu0 0
      %1313 = vmatpush2.bf16.msra.mxu0 0
      %1314 = vmatprep.subr.bf16.mxu0 0
      %1315 = vmatpush2.bf16.msra.mxu0 0
      %1316 = vmatprep.subr.bf16.mxu0 0
      %1317 = vmatpush2.bf16.msra.mxu0 0
      %1318 = vmatprep.subr.bf16.mxu0 0
      %1319 = vmatpush2.bf16.msra.mxu0 0
      %1320 = vmatprep.subr.bf16.mxu0 0
      %1321 = vmatpush2.bf16.msra.mxu0 0
      %1322 = vmatprep.subr.bf16.mxu0 0
      %1323 = vmatpush2.bf16.msra.mxu0 0
      %1324 = vmatprep.subr.bf16.mxu0 0
      %1325 = vmatpush2.bf16.msra.mxu0 0
      %1326 = vmatprep.subr.bf16.mxu0 0
      %1327 = vmatpush2.bf16.msra.mxu0 0
      %1328 = vmatprep.mubr.bf16.mxu0 0
      %1329 = vmatmul.mubr.bf16.gmra.mxu0 %v1294
      %v1330 = vpop.f32.mrf.mxu0
      %v1331 = vadd.f32 0.0, %v1330
      %v1332 = vpop.f32.mrf.mxu0
      %v1333 = vpop.f32.mrf.mxu0
      %v1334 = vadd.f32 0.0, %v1333
      %v1335 = vpop.f32.mrf.mxu0
      %1336 = vdwg.mxu0
      %v1337 = vadd.f32 %v1165, %v1331
      %v1338 = vadd.f32 %v1166, %v1334
      %s1339 = scalar_lea.vmem %s5, 32
      %v1340 = vld [vmem:[%s1339] sm:$0xff]
      %1341 = vst.msk [vmem:[#allocation2] sm:$0xf] %vm994, 0.0
      %1342 = vst.msk [vmem:[#allocation2 + $0x4] sm:$0xf] %vm994, 0.0
      %1343 = vst.msk [vmem:[#allocation2 + $0x8] sm:$0xf] %vm994, 0.0
      %1344 = vst.msk [vmem:[#allocation2 + $0xc] sm:$0xf] %vm994, 0.0
      %v1345 = vld [vmem:[%s708] sm:$0xf]
      %v1346 = vld [vmem:[%s708 + $0x4] sm:$0xf]
      %v1347 = vld [vmem:[%s708 + $0x8] sm:$0xf]
      %v1348 = vld [vmem:[%s708 + $0xc] sm:$0xf]
      %v1349 = vld [vmem:[#allocation2] sm:$0xf]
      %v1350 = vld [vmem:[#allocation2 + $0x4] sm:$0xf]
      %v1351 = vld [vmem:[#allocation2 + $0x8] sm:$0xf]
      %v1352 = vld [vmem:[#allocation2 + $0xc] sm:$0xf]
      %v1353 = vlaneseq
      %v1354 = vshrl.u32 %v1353, 7
      %v1355 = vsub.s32 4, %v1354
      %v1356 = vrot.slane %v1340, %v1355
      %v1357 = vmul.f32 %v1345, %v1356
      %v1358 = vmul.f32 %v1346, %v1356
      %v1359 = vmul.f32 %v1347, %v1356
      %v1360 = vmul.f32 %v1348, %v1356
      %v1361 = vadd.f32 %v1349, %v1357
      %v1362 = vadd.f32 %v1350, %v1358
      %v1363 = vadd.f32 %v1351, %v1359
      %v1364 = vadd.f32 %v1352, %v1360
      %1365 = vst.msk [vmem:[#allocation2] sm:$0xf] %vm994, %v1361
      %1366 = vst.msk [vmem:[#allocation2 + $0x4] sm:$0xf] %vm994, %v1362
      %1367 = vst.msk [vmem:[#allocation2 + $0x8] sm:$0xf] %vm994, %v1363
      %1368 = vst.msk [vmem:[#allocation2 + $0xc] sm:$0xf] %vm994, %v1364
      %v1369 = vld [vmem:[#allocation2] sm:$0xf]
      %1370 = vst.msk [vmem:[#allocation3] sm:$0xf] %vm994, %v1369
      %v1371 = vld [vmem:[%s1025] sm:$0xf]
      %1372 = vst.msk [vmem:[#allocation3 + $0x4] sm:$0xf] %vm994, %v1371
      %v1373 = vld [vmem:[%s1028] sm:$0xf]
      %1374 = vst.msk [vmem:[#allocation3 + $0x8] sm:$0xf] %vm994, %v1373
      %v1375 = vld [vmem:[%s1031] sm:$0xf]
      %1376 = vst.msk [vmem:[#allocation3 + $0xc] sm:$0xf] %vm994, %v1375
      %v1377 = vld [vmem:[#allocation3] sm:$0xff]
      %v1378 = vld [vmem:[#allocation3 + $0x8] sm:$0xff]
      %s1379 = scalar_lea.vmem %s6, 32
      %v1380 = vld [vmem:[%s1379] sm:$0xf]
      %v1381 = vld [vmem:[%s1379 + $0x4] sm:$0xf]
      %v1382 = vld [vmem:[%s1379 + $0x8] sm:$0xf]
      %v1383 = vld [vmem:[%s1379 + $0xc] sm:$0xf]
      %v1384 = vpack.c.bf16 %v1378, %v1377
      %v1385 = vld [vmem:[%s7 + $0x3] sm:$0x1]
      %v1386 = vlaneseq
      %v1387 = vshrl.u32 %v1386, 7
      %v1388 = vsub.s32 0, %v1387
      %v1389 = vrot.slane %v1385, %v1388
      %v1394 = vunpack.c.l.b16 %v1380
      %v1395 = vunpack.c.l.b16 %v1381
      %v1396 = vunpack.c.l.b16 %v1382
      %v1397 = vunpack.c.l.b16 %v1383
      %v1398 = vpack.c.b16 %v1395, %v1394
      %v1399 = vpack.c.b16 %v1397, %v1396
      %v1403 = vsel %vm749, %v1384, 0
      %1405 = vmatprep.subr.bf16.mxu0 0
      %1406 = vmatpush1.bf16.msra.mxu0 0
      %1407 = vmatprep.subr.bf16.mxu0 0
      %1408 = vmatpush1.bf16.msra.mxu0 0
      %1409 = vmatprep.subr.bf16.mxu0 0
      %1410 = vmatpush1.bf16.msra.mxu0 0
      %1411 = vmatprep.subr.bf16.mxu0 0
      %1412 = vmatpush1.bf16.msra.mxu0 0
      %1413 = vmatprep.subr.bf16.mxu0 0
      %1414 = vmatpush1.bf16.msra.mxu0 0
      %1415 = vmatprep.subr.bf16.mxu0 0
      %1416 = vmatpush1.bf16.msra.mxu0 0
      %1417 = vmatprep.subr.bf16.mxu0 0
      %1418 = vmatpush1.bf16.msra.mxu0 %v1399
      %1419 = vmatprep.subr.bf16.mxu0 0
      %1420 = vmatpush1.bf16.msra.mxu0 %v1398
      %1421 = vmatprep.subr.bf16.mxu0 0
      %1422 = vmatpush2.bf16.msra.mxu0 0
      %1423 = vmatprep.subr.bf16.mxu0 0
      %1424 = vmatpush2.bf16.msra.mxu0 0
      %1425 = vmatprep.subr.bf16.mxu0 0
      %1426 = vmatpush2.bf16.msra.mxu0 0
      %1427 = vmatprep.subr.bf16.mxu0 0
      %1428 = vmatpush2.bf16.msra.mxu0 0
      %1429 = vmatprep.subr.bf16.mxu0 0
      %1430 = vmatpush2.bf16.msra.mxu0 0
      %1431 = vmatprep.subr.bf16.mxu0 0
      %1432 = vmatpush2.bf16.msra.mxu0 0
      %1433 = vmatprep.subr.bf16.mxu0 0
      %1434 = vmatpush2.bf16.msra.mxu0 0
      %1435 = vmatprep.subr.bf16.mxu0 0
      %1436 = vmatpush2.bf16.msra.mxu0 0
      %1437 = vmatprep.mubr.bf16.mxu0 0
      %1438 = vmatmul.mubr.bf16.gmra.mxu0 %v1403
      %v1439 = vpop.f32.mrf.mxu0
      %v1440 = vadd.f32 %v1389, %v1439
      %v1441 = vpop.f32.mrf.mxu0
      %v1442 = vpop.f32.mrf.mxu0
      %v1443 = vadd.f32 %v1389, %v1442
      %v1444 = vpop.f32.mrf.mxu0
      %1445 = vdwg.mxu0
      %v1446 = vmax.f32 %v1440, 0.0
      %v1447 = vmax.f32 %v1443, 0.0
      %v1448 = vpack.c.bf16 %v1447, %v1446
      %v1449 = vld [vmem:[%s10 + $0x30] sm:$0xf]
      %v1450 = vld [vmem:[%s10 + $0x34] sm:$0xf]
      %v1451 = vld [vmem:[%s10 + $0x38] sm:$0xf]
      %v1452 = vld [vmem:[%s10 + $0x3c] sm:$0xf]
      %v1457 = vunpack.c.l.b16 %v1449
      %v1458 = vunpack.c.l.b16 %v1450
      %v1459 = vunpack.c.l.b16 %v1451
      %v1460 = vunpack.c.l.b16 %v1452
      %v1461 = vpack.c.b16 %v1458, %v1457
      %v1462 = vpack.c.b16 %v1460, %v1459
      %v1466 = vsel %vm749, %v1448, 0
      %1468 = vmatprep.subr.bf16.mxu0 0
      %1469 = vmatpush1.bf16.msra.mxu0 0
      %1470 = vmatprep.subr.bf16.mxu0 0
      %1471 = vmatpush1.bf16.msra.mxu0 0
      %1472 = vmatprep.subr.bf16.mxu0 0
      %1473 = vmatpush1.bf16.msra.mxu0 0
      %1474 = vmatprep.subr.bf16.mxu0 0
      %1475 = vmatpush1.bf16.msra.mxu0 0
      %1476 = vmatprep.subr.bf16.mxu0 0
      %1477 = vmatpush1.bf16.msra.mxu0 0
      %1478 = vmatprep.subr.bf16.mxu0 0
      %1479 = vmatpush1.bf16.msra.mxu0 0
      %1480 = vmatprep.subr.bf16.mxu0 0
      %1481 = vmatpush1.bf16.msra.mxu0 %v1462
      %1482 = vmatprep.subr.bf16.mxu0 0
      %1483 = vmatpush1.bf16.msra.mxu0 %v1461
      %1484 = vmatprep.subr.bf16.mxu0 0
      %1485 = vmatpush2.bf16.msra.mxu0 0
      %1486 = vmatprep.subr.bf16.mxu0 0
      %1487 = vmatpush2.bf16.msra.mxu0 0
      %1488 = vmatprep.subr.bf16.mxu0 0
      %1489 = vmatpush2.bf16.msra.mxu0 0
      %1490 = vmatprep.subr.bf16.mxu0 0
      %1491 = vmatpush2.bf16.msra.mxu0 0
      %1492 = vmatprep.subr.bf16.mxu0 0
      %1493 = vmatpush2.bf16.msra.mxu0 0
      %1494 = vmatprep.subr.bf16.mxu0 0
      %1495 = vmatpush2.bf16.msra.mxu0 0
      %1496 = vmatprep.subr.bf16.mxu0 0
      %1497 = vmatpush2.bf16.msra.mxu0 0
      %1498 = vmatprep.subr.bf16.mxu0 0
      %1499 = vmatpush2.bf16.msra.mxu0 0
      %1500 = vmatprep.mubr.bf16.mxu0 0
      %1501 = vmatmul.mubr.bf16.gmra.mxu0 %v1466
      %v1502 = vpop.f32.mrf.mxu0
      %v1503 = vadd.f32 0.0, %v1502
      %v1504 = vpop.f32.mrf.mxu0
      %v1505 = vpop.f32.mrf.mxu0
      %v1506 = vadd.f32 0.0, %v1505
      %v1507 = vpop.f32.mrf.mxu0
      %1508 = vdwg.mxu0
      %v1509 = vadd.f32 %v1337, %v1503
      %v1510 = vadd.f32 %v1338, %v1506
      %v1511 = vld [vmem:[%s11] sm:$0x1]
      %v1513 = vlaneseq
      %v1514 = vshrl.u32 %v1513, 7
      %v1515 = vsub.s32 0, %v1514
      %v1516 = vrot.slane %v1511, %v1515
      %v1518 = vadd.f32 %v1509, %v1516
      %v1519 = vadd.f32 %v1510, %v1516
      %v1520 = vmax.f32 %v1518, 0.0
      %v1521 = vmax.f32 %v1519, 0.0
      %1522 = vst.msk [vmem:[#allocation4] sm:$0xf] %vm994, %v1520
      %s1523 = scalar_lea.vmem [#allocation4], 4
      %vm1524 = vcmask 261124
      %1525 = vst.msk [vmem:[%s1523 - $0x4] sm:$0xf0] %vm1524, %v1520
      %s1526 = scalar_lea.vmem [#allocation4], 8
      %1527 = vst.msk [vmem:[%s1526] sm:$0xf] %vm994, %v1521
      %s1528 = scalar_lea.vmem [#allocation4], 12
      %1529 = vst.msk [vmem:[%s1528 - $0x4] sm:$0xf0] %vm1524, %v1521
      %v1530 = vld [vmem:[%s12] sm:$0xff]
      %v1531 = vld [vmem:[%s12 + $0x8] sm:$0x1]
      %1532 = vst.msk [vmem:[#allocation5] sm:$0xf] %vm994, 0.0
      %1533 = vst.msk [vmem:[#allocation5 + $0x4] sm:$0xf] %vm994, 0.0
      %1534 = vst.msk [vmem:[#allocation5 + $0x8] sm:$0xf] %vm994, 0.0
      %1535 = vst.msk [vmem:[#allocation5 + $0xc] sm:$0xf] %vm994, 0.0
      %v1536 = vld [vmem:[#allocation4] sm:$0x7]
      %v1537 = vld [vmem:[#allocation4 + $0x4] sm:$0x7]
      %v1538 = vld [vmem:[#allocation4 + $0x8] sm:$0x7]
      %s1539 = scalar_lea.vmem [#allocation5], 4
      %v1540 = vld [vmem:[%s1539 + $0x1] sm:$0x7]
      %v1541 = vld [vmem:[%s1539 + $0x5] sm:$0x7]
      %v1542 = vld [vmem:[%s1539 + $0x9] sm:$0x7]
      %v1543 = vlaneseq
      %v1544 = vshrl.u32 %v1543, 7
      %v1545 = vsub.s32 0, %v1544
      %v1546 = vrot.slane %v1530, %v1545
      %v1547 = vmul.f32 %v1536, %v1546
      %v1548 = vmul.f32 %v1537, %v1546
      %v1549 = vmul.f32 %v1538, %v1546
      %v1550 = vadd.f32 %v1540, %v1547
      %v1551 = vadd.f32 %v1541, %v1548
      %v1552 = vadd.f32 %v1542, %v1549
      %vm1553 = vcmask 256000
      %1554 = vst.msk [vmem:[%s1539 + $0x1] sm:$0x7] %vm1553, %v1550
      %1555 = vst.msk [vmem:[%s1539 + $0x5] sm:$0x7] %vm1553, %v1551
      %1556 = vst.msk [vmem:[%s1539 + $0x9] sm:$0x7] %vm1553, %v1552
      %v1557 = vld [vmem:[#allocation4] sm:$0xf]
      %v1558 = vld [vmem:[#allocation4 + $0x4] sm:$0xf]
      %v1559 = vld [vmem:[#allocation4 + $0x8] sm:$0xf]
      %v1560 = vld [vmem:[%s1539] sm:$0xf]
      %v1561 = vld [vmem:[%s1539 + $0x4] sm:$0xf]
      %v1562 = vld [vmem:[%s1539 + $0x8] sm:$0xf]
      %v1563 = vlaneseq
      %v1564 = vshrl.u32 %v1563, 7
      %v1565 = vsub.s32 1, %v1564
      %v1566 = vrot.slane %v1530, %v1565
      %v1567 = vmul.f32 %v1557, %v1566
      %v1568 = vmul.f32 %v1558, %v1566
      %v1569 = vmul.f32 %v1559, %v1566
      %v1570 = vadd.f32 %v1560, %v1567
      %v1571 = vadd.f32 %v1561, %v1568
      %v1572 = vadd.f32 %v1562, %v1569
      %1573 = vst.msk [vmem:[%s1539] sm:$0xf] %vm994, %v1570
      %1574 = vst.msk [vmem:[%s1539 + $0x4] sm:$0xf] %vm994, %v1571
      %1575 = vst.msk [vmem:[%s1539 + $0x8] sm:$0xf] %vm994, %v1572
      %v1576 = vld [vmem:[#allocation4 + $0x1] sm:$0x7]
      %v1577 = vld [vmem:[#allocation4 + $0x5] sm:$0x7]
      %v1578 = vld [vmem:[#allocation4 + $0x9] sm:$0x7]
      %v1579 = vld [vmem:[%s1539] sm:$0x7]
      %v1580 = vld [vmem:[%s1539 + $0x4] sm:$0x7]
      %v1581 = vld [vmem:[%s1539 + $0x8] sm:$0x7]
      %v1582 = vlaneseq
      %v1583 = vshrl.u32 %v1582, 7
      %v1584 = vsub.s32 2, %v1583
      %v1585 = vrot.slane %v1530, %v1584
      %v1586 = vmul.f32 %v1576, %v1585
      %v1587 = vmul.f32 %v1577, %v1585
      %v1588 = vmul.f32 %v1578, %v1585
      %v1589 = vadd.f32 %v1579, %v1586
      %v1590 = vadd.f32 %v1580, %v1587
      %v1591 = vadd.f32 %v1581, %v1588
      %1592 = vst.msk [vmem:[%s1539] sm:$0x7] %vm1553, %v1589
      %1593 = vst.msk [vmem:[%s1539 + $0x4] sm:$0x7] %vm1553, %v1590
      %1594 = vst.msk [vmem:[%s1539 + $0x8] sm:$0x7] %vm1553, %v1591
      %v1595 = vld [vmem:[#allocation4] sm:$0x7]
      %v1596 = vld [vmem:[#allocation4 + $0x4] sm:$0x7]
      %v1597 = vld [vmem:[#allocation4 + $0x8] sm:$0x7]
      %v1598 = vld [vmem:[#allocation4 + $0xc] sm:$0x7]
      %v1599 = vld [vmem:[#allocation5 + $0x1] sm:$0x7]
      %v1600 = vld [vmem:[#allocation5 + $0x5] sm:$0x7]
      %v1601 = vld [vmem:[#allocation5 + $0x9] sm:$0x7]
      %v1602 = vld [vmem:[#allocation5 + $0xd] sm:$0x7]
      %v1603 = vlaneseq
      %v1604 = vshrl.u32 %v1603, 7
      %v1605 = vsub.s32 3, %v1604
      %v1606 = vrot.slane %v1530, %v1605
      %v1607 = vmul.f32 %v1595, %v1606
      %v1608 = vmul.f32 %v1596, %v1606
      %v1609 = vmul.f32 %v1597, %v1606
      %v1610 = vmul.f32 %v1598, %v1606
      %v1611 = vadd.f32 %v1599, %v1607
      %v1612 = vadd.f32 %v1600, %v1608
      %v1613 = vadd.f32 %v1601, %v1609
      %v1614 = vadd.f32 %v1602, %v1610
      %1615 = vst.msk [vmem:[#allocation5 + $0x1] sm:$0x7] %vm1553, %v1611
      %1616 = vst.msk [vmem:[#allocation5 + $0x5] sm:$0x7] %vm1553, %v1612
      %1617 = vst.msk [vmem:[#allocation5 + $0x9] sm:$0x7] %vm1553, %v1613
      %1618 = vst.msk [vmem:[#allocation5 + $0xd] sm:$0x7] %vm1553, %v1614
      %v1619 = vld [vmem:[#allocation4] sm:$0xf]
      %v1620 = vld [vmem:[#allocation4 + $0x4] sm:$0xf]
      %v1621 = vld [vmem:[#allocation4 + $0x8] sm:$0xf]
      %v1622 = vld [vmem:[#allocation4 + $0xc] sm:$0xf]
      %v1623 = vld [vmem:[#allocation5] sm:$0xf]
      %v1624 = vld [vmem:[#allocation5 + $0x4] sm:$0xf]
      %v1625 = vld [vmem:[#allocation5 + $0x8] sm:$0xf]
      %v1626 = vld [vmem:[#allocation5 + $0xc] sm:$0xf]
      %v1627 = vlaneseq
      %v1628 = vshrl.u32 %v1627, 7
      %v1629 = vsub.s32 4, %v1628
      %v1630 = vrot.slane %v1530, %v1629
      %v1631 = vmul.f32 %v1619, %v1630
      %v1632 = vmul.f32 %v1620, %v1630
      %v1633 = vmul.f32 %v1621, %v1630
      %v1634 = vmul.f32 %v1622, %v1630
      %v1635 = vadd.f32 %v1623, %v1631
      %v1636 = vadd.f32 %v1624, %v1632
      %v1637 = vadd.f32 %v1625, %v1633
      %v1638 = vadd.f32 %v1626, %v1634
      %1639 = vst.msk [vmem:[#allocation5] sm:$0xf] %vm994, %v1635
      %1640 = vst.msk [vmem:[#allocation5 + $0x4] sm:$0xf] %vm994, %v1636
      %1641 = vst.msk [vmem:[#allocation5 + $0x8] sm:$0xf] %vm994, %v1637
      %1642 = vst.msk [vmem:[#allocation5 + $0xc] sm:$0xf] %vm994, %v1638
      %v1643 = vld [vmem:[#allocation4 + $0x1] sm:$0x7]
      %v1644 = vld [vmem:[#allocation4 + $0x5] sm:$0x7]
      %v1645 = vld [vmem:[#allocation4 + $0x9] sm:$0x7]
      %v1646 = vld [vmem:[#allocation4 + $0xd] sm:$0x7]
      %v1647 = vld [vmem:[#allocation5] sm:$0x7]
      %v1648 = vld [vmem:[#allocation5 + $0x4] sm:$0x7]
      %v1649 = vld [vmem:[#allocation5 + $0x8] sm:$0x7]
      %v1650 = vld [vmem:[#allocation5 + $0xc] sm:$0x7]
      %v1651 = vlaneseq
      %v1652 = vshrl.u32 %v1651, 7
      %v1653 = vsub.s32 5, %v1652
      %v1654 = vrot.slane %v1530, %v1653
      %v1655 = vmul.f32 %v1643, %v1654
      %v1656 = vmul.f32 %v1644, %v1654
      %v1657 = vmul.f32 %v1645, %v1654
      %v1658 = vmul.f32 %v1646, %v1654
      %v1659 = vadd.f32 %v1647, %v1655
      %v1660 = vadd.f32 %v1648, %v1656
      %v1661 = vadd.f32 %v1649, %v1657
      %v1662 = vadd.f32 %v1650, %v1658
      %1663 = vst.msk [vmem:[#allocation5] sm:$0x7] %vm1553, %v1659
      %1664 = vst.msk [vmem:[#allocation5 + $0x4] sm:$0x7] %vm1553, %v1660
      %1665 = vst.msk [vmem:[#allocation5 + $0x8] sm:$0x7] %vm1553, %v1661
      %1666 = vst.msk [vmem:[#allocation5 + $0xc] sm:$0x7] %vm1553, %v1662
      %v1667 = vld [vmem:[%s1523] sm:$0x7]
      %v1668 = vld [vmem:[%s1523 + $0x4] sm:$0x7]
      %v1669 = vld [vmem:[%s1523 + $0x8] sm:$0x7]
      %v1670 = vld [vmem:[#allocation5 + $0x1] sm:$0x7]
      %v1671 = vld [vmem:[#allocation5 + $0x5] sm:$0x7]
      %v1672 = vld [vmem:[#allocation5 + $0x9] sm:$0x7]
      %v1673 = vlaneseq
      %v1674 = vshrl.u32 %v1673, 7
      %v1675 = vsub.s32 6, %v1674
      %v1676 = vrot.slane %v1530, %v1675
      %v1677 = vmul.f32 %v1667, %v1676
      %v1678 = vmul.f32 %v1668, %v1676
      %v1679 = vmul.f32 %v1669, %v1676
      %v1680 = vadd.f32 %v1670, %v1677
      %v1681 = vadd.f32 %v1671, %v1678
      %v1682 = vadd.f32 %v1672, %v1679
      %1683 = vst.msk [vmem:[#allocation5 + $0x1] sm:$0x7] %vm1553, %v1680
      %1684 = vst.msk [vmem:[#allocation5 + $0x5] sm:$0x7] %vm1553, %v1681
      %1685 = vst.msk [vmem:[#allocation5 + $0x9] sm:$0x7] %vm1553, %v1682
      %v1686 = vld [vmem:[%s1523] sm:$0xf]
      %v1687 = vld [vmem:[%s1523 + $0x4] sm:$0xf]
      %v1688 = vld [vmem:[%s1523 + $0x8] sm:$0xf]
      %v1689 = vld [vmem:[#allocation5] sm:$0xf]
      %v1690 = vld [vmem:[#allocation5 + $0x4] sm:$0xf]
      %v1691 = vld [vmem:[#allocation5 + $0x8] sm:$0xf]
      %v1692 = vlaneseq
      %v1693 = vshrl.u32 %v1692, 7
      %v1694 = vsub.s32 7, %v1693
      %v1695 = vrot.slane %v1530, %v1694
      %v1696 = vmul.f32 %v1686, %v1695
      %v1697 = vmul.f32 %v1687, %v1695
      %v1698 = vmul.f32 %v1688, %v1695
      %v1699 = vadd.f32 %v1689, %v1696
      %v1700 = vadd.f32 %v1690, %v1697
      %v1701 = vadd.f32 %v1691, %v1698
      %1702 = vst.msk [vmem:[#allocation5] sm:$0xf] %vm994, %v1699
      %1703 = vst.msk [vmem:[#allocation5 + $0x4] sm:$0xf] %vm994, %v1700
      %1704 = vst.msk [vmem:[#allocation5 + $0x8] sm:$0xf] %vm994, %v1701
      %v1705 = vld [vmem:[%s1523 + $0x1] sm:$0x7]
      %v1706 = vld [vmem:[%s1523 + $0x5] sm:$0x7]
      %v1707 = vld [vmem:[%s1523 + $0x9] sm:$0x7]
      %v1708 = vld [vmem:[#allocation5] sm:$0x7]
      %v1709 = vld [vmem:[#allocation5 + $0x4] sm:$0x7]
      %v1710 = vld [vmem:[#allocation5 + $0x8] sm:$0x7]
      %v1711 = vlaneseq
      %v1712 = vshrl.u32 %v1711, 7
      %v1713 = vsub.s32 0, %v1712
      %v1714 = vrot.slane %v1531, %v1713
      %v1715 = vmul.f32 %v1705, %v1714
      %v1716 = vmul.f32 %v1706, %v1714
      %v1717 = vmul.f32 %v1707, %v1714
      %v1718 = vadd.f32 %v1708, %v1715
      %v1719 = vadd.f32 %v1709, %v1716
      %v1720 = vadd.f32 %v1710, %v1717
      %1721 = vst.msk [vmem:[#allocation5] sm:$0x7] %vm1553, %v1718
      %1722 = vst.msk [vmem:[#allocation5 + $0x4] sm:$0x7] %vm1553, %v1719
      %1723 = vst.msk [vmem:[#allocation5 + $0x8] sm:$0x7] %vm1553, %v1720
      %v1724 = vld [vmem:[#allocation5] sm:$0xf]
      %1725 = vst.msk [vmem:[#allocation6] sm:$0xf] %vm994, %v1724
      %v1726 = vld [vmem:[%s1539] sm:$0xf]
      %1727 = vst.msk [vmem:[#allocation6 + $0x4] sm:$0xf] %vm994, %v1726
      %s1728 = scalar_lea.vmem [#allocation5], 8
      %v1729 = vld [vmem:[%s1728] sm:$0xf]
      %1730 = vst.msk [vmem:[#allocation6 + $0x8] sm:$0xf] %vm994, %v1729
      %s1731 = scalar_lea.vmem [#allocation5], 12
      %v1732 = vld [vmem:[%s1731] sm:$0xf]
      %1733 = vst.msk [vmem:[#allocation6 + $0xc] sm:$0xf] %vm994, %v1732
      %v1734 = vld [vmem:[#allocation6] sm:$0xff]
      %v1735 = vld [vmem:[#allocation6 + $0x8] sm:$0xff]
      %v1736 = vld [vmem:[%s13] sm:$0xf]
      %v1737 = vld [vmem:[%s13 + $0x4] sm:$0xf]
      %v1738 = vld [vmem:[%s13 + $0x8] sm:$0xf]
      %v1739 = vld [vmem:[%s13 + $0xc] sm:$0xf]
      %v1740 = vpack.c.bf16 %v1735, %v1734
      %v1741 = vld [vmem:[%s14] sm:$0x1]
      %v1743 = vlaneseq
      %v1744 = vshrl.u32 %v1743, 7
      %v1745 = vsub.s32 0, %v1744
      %v1746 = vrot.slane %v1741, %v1745
      %v1752 = vunpack.c.l.b16 %v1736
      %v1753 = vunpack.c.l.b16 %v1737
      %v1754 = vunpack.c.l.b16 %v1738
      %v1755 = vunpack.c.l.b16 %v1739
      %v1756 = vpack.c.b16 %v1753, %v1752
      %v1757 = vpack.c.b16 %v1755, %v1754
      %v1761 = vsel %vm749, %v1740, 0
      %1763 = vmatprep.subr.bf16.mxu0 0
      %1764 = vmatpush1.bf16.msra.mxu0 0
      %1765 = vmatprep.subr.bf16.mxu0 0
      %1766 = vmatpush1.bf16.msra.mxu0 0
      %1767 = vmatprep.subr.bf16.mxu0 0
      %1768 = vmatpush1.bf16.msra.mxu0 0
      %1769 = vmatprep.subr.bf16.mxu0 0
      %1770 = vmatpush1.bf16.msra.mxu0 0
      %1771 = vmatprep.subr.bf16.mxu0 0
      %1772 = vmatpush1.bf16.msra.mxu0 0
      %1773 = vmatprep.subr.bf16.mxu0 0
      %1774 = vmatpush1.bf16.msra.mxu0 0
      %1775 = vmatprep.subr.bf16.mxu0 0
      %1776 = vmatpush1.bf16.msra.mxu0 %v1757
      %1777 = vmatprep.subr.bf16.mxu0 0
      %1778 = vmatpush1.bf16.msra.mxu0 %v1756
      %1779 = vmatprep.subr.bf16.mxu0 0
      %1780 = vmatpush2.bf16.msra.mxu0 0
      %1781 = vmatprep.subr.bf16.mxu0 0
      %1782 = vmatpush2.bf16.msra.mxu0 0
      %1783 = vmatprep.subr.bf16.mxu0 0
      %1784 = vmatpush2.bf16.msra.mxu0 0
      %1785 = vmatprep.subr.bf16.mxu0 0
      %1786 = vmatpush2.bf16.msra.mxu0 0
      %1787 = vmatprep.subr.bf16.mxu0 0
      %1788 = vmatpush2.bf16.msra.mxu0 0
      %1789 = vmatprep.subr.bf16.mxu0 0
      %1790 = vmatpush2.bf16.msra.mxu0 0
      %1791 = vmatprep.subr.bf16.mxu0 0
      %1792 = vmatpush2.bf16.msra.mxu0 0
      %1793 = vmatprep.subr.bf16.mxu0 0
      %1794 = vmatpush2.bf16.msra.mxu0 0
      %1795 = vmatprep.mubr.bf16.mxu0 0
      %1796 = vmatmul.mubr.bf16.gmra.mxu0 %v1761
      %v1797 = vpop.f32.mrf.mxu0
      %v1798 = vadd.f32 %v1746, %v1797
      %v1799 = vpop.f32.mrf.mxu0
      %v1800 = vpop.f32.mrf.mxu0
      %v1801 = vadd.f32 %v1746, %v1800
      %v1802 = vpop.f32.mrf.mxu0
      %1803 = vdwg.mxu0
      %v1804 = vmax.f32 %v1798, 0.0
      %v1805 = vmax.f32 %v1801, 0.0
      %v1806 = vld [vmem:[%s3] sm:$0xf]
      %v1807 = vld [vmem:[%s3 + $0x4] sm:$0xf]
      %v1808 = vld [vmem:[%s3 + $0x8] sm:$0xf]
      %v1809 = vld [vmem:[%s3 + $0xc] sm:$0xf]
      %v1810 = vld [vmem:[%s3 + $0x10] sm:$0xf]
      %v1811 = vld [vmem:[%s3 + $0x14] sm:$0xf]
      %v1812 = vld [vmem:[%s3 + $0x18] sm:$0xf]
      %v1813 = vld [vmem:[%s3 + $0x1c] sm:$0xf]
      %v1814 = vld [vmem:[%s3 + $0x20] sm:$0xf]
      %v1815 = vld [vmem:[%s3 + $0x24] sm:$0xf]
      %v1816 = vld [vmem:[%s3 + $0x28] sm:$0xf]
      %v1817 = vld [vmem:[%s3 + $0x2c] sm:$0xf]
      %v1818 = vld [vmem:[%s3 + $0x30] sm:$0xf]
      %v1819 = vld [vmem:[%s3 + $0x34] sm:$0xf]
      %v1820 = vld [vmem:[%s3 + $0x38] sm:$0xf]
      %v1821 = vld [vmem:[%s3 + $0x3c] sm:$0xf]
      %v1822 = vld [vmem:[%s3 + $0x40] sm:$0xf]
      %v1823 = vld [vmem:[%s3 + $0x44] sm:$0xf]
      %v1824 = vld [vmem:[%s3 + $0x48] sm:$0xf]
      %v1825 = vld [vmem:[%s3 + $0x4c] sm:$0xf]
      %v1826 = vld [vmem:[%s3 + $0x50] sm:$0xf]
      %v1827 = vld [vmem:[%s3 + $0x54] sm:$0xf]
      %v1828 = vld [vmem:[%s3 + $0x58] sm:$0xf]
      %v1829 = vld [vmem:[%s3 + $0x5c] sm:$0xf]
      %v1830 = vld [vmem:[%s3 + $0x60] sm:$0xf]
      %v1831 = vld [vmem:[%s3 + $0x64] sm:$0xf]
      %v1832 = vld [vmem:[%s3 + $0x68] sm:$0xf]
      %v1833 = vld [vmem:[%s3 + $0x6c] sm:$0xf]
      %v1834 = vld [vmem:[%s3 + $0x70] sm:$0xf]
      %v1835 = vld [vmem:[%s3 + $0x74] sm:$0xf]
      %v1836 = vld [vmem:[%s3 + $0x78] sm:$0xf]
      %v1837 = vld [vmem:[%s3 + $0x7c] sm:$0xf]
      %v1838 = vpack.c.bf16 %v1805, %v1804
      %v1871 = vunpack.c.l.b16 %v1806
      %v1872 = vunpack.c.l.b16 %v1807
      %v1873 = vunpack.c.l.b16 %v1808
      %v1874 = vunpack.c.l.b16 %v1809
      %v1875 = vunpack.c.l.b16 %v1810
      %v1876 = vunpack.c.l.b16 %v1811
      %v1877 = vunpack.c.l.b16 %v1812
      %v1878 = vunpack.c.l.b16 %v1813
      %v1879 = vunpack.c.l.b16 %v1814
      %v1880 = vunpack.c.l.b16 %v1815
      %v1881 = vunpack.c.l.b16 %v1816
      %v1882 = vunpack.c.l.b16 %v1817
      %v1883 = vunpack.c.l.b16 %v1818
      %v1884 = vunpack.c.l.b16 %v1819
      %v1885 = vunpack.c.l.b16 %v1820
      %v1886 = vunpack.c.l.b16 %v1821
      %v1887 = vunpack.c.l.b16 %v1822
      %v1888 = vunpack.c.l.b16 %v1823
      %v1889 = vunpack.c.l.b16 %v1824
      %v1890 = vunpack.c.l.b16 %v1825
      %v1891 = vunpack.c.l.b16 %v1826
      %v1892 = vunpack.c.l.b16 %v1827
      %v1893 = vunpack.c.l.b16 %v1828
      %v1894 = vunpack.c.l.b16 %v1829
      %v1895 = vunpack.c.l.b16 %v1830
      %v1896 = vunpack.c.l.b16 %v1831
      %v1897 = vunpack.c.l.b16 %v1832
      %v1898 = vunpack.c.l.b16 %v1833
      %v1899 = vunpack.c.l.b16 %v1834
      %v1900 = vunpack.c.l.b16 %v1835
      %v1901 = vunpack.c.l.b16 %v1836
      %v1902 = vunpack.c.l.b16 %v1837
      %v1903 = vpack.c.b16 %v1872, %v1871
      %v1904 = vpack.c.b16 %v1874, %v1873
      %v1905 = vpack.c.b16 %v1876, %v1875
      %v1906 = vpack.c.b16 %v1878, %v1877
      %v1907 = vpack.c.b16 %v1880, %v1879
      %v1908 = vpack.c.b16 %v1882, %v1881
      %v1909 = vpack.c.b16 %v1884, %v1883
      %v1910 = vpack.c.b16 %v1886, %v1885
      %v1911 = vpack.c.b16 %v1888, %v1887
      %v1912 = vpack.c.b16 %v1890, %v1889
      %v1913 = vpack.c.b16 %v1892, %v1891
      %v1914 = vpack.c.b16 %v1894, %v1893
      %v1915 = vpack.c.b16 %v1896, %v1895
      %v1916 = vpack.c.b16 %v1898, %v1897
      %v1917 = vpack.c.b16 %v1900, %v1899
      %v1918 = vpack.c.b16 %v1902, %v1901
      %vm1919 = vcmask 130048
      %v1921 = vsel %vm1919, %v1903, 0
      %v1924 = vsel %vm1919, %v1904, 0
      %v1927 = vsel %vm1919, %v1905, 0
      %v1930 = vsel %vm1919, %v1906, 0
      %v1933 = vsel %vm1919, %v1907, 0
      %v1936 = vsel %vm1919, %v1908, 0
      %v1939 = vsel %vm1919, %v1909, 0
      %v1942 = vsel %vm1919, %v1910, 0
      %v1945 = vsel %vm1919, %v1911, 0
      %v1948 = vsel %vm1919, %v1912, 0
      %v1951 = vsel %vm1919, %v1913, 0
      %v1954 = vsel %vm1919, %v1914, 0
      %v1957 = vsel %vm1919, %v1915, 0
      %v1960 = vsel %vm1919, %v1916, 0
      %v1963 = vsel %vm1919, %v1917, 0
      %v1966 = vsel %vm1919, %v1918, 0
      %1968 = vmatprep.subr.bf16.mxu0 0
      %1969 = vmatpush1.bf16.msra.mxu0 0
      %1970 = vmatprep.subr.bf16.mxu0 0
      %1971 = vmatpush1.bf16.msra.mxu0 0
      %1972 = vmatprep.subr.bf16.mxu0 0
      %1973 = vmatpush1.bf16.msra.mxu0 0
      %1974 = vmatprep.subr.bf16.mxu0 0
      %1975 = vmatpush1.bf16.msra.mxu0 0
      %1976 = vmatprep.subr.bf16.mxu0 0
      %1977 = vmatpush1.bf16.msra.mxu0 0
      %1978 = vmatprep.subr.bf16.mxu0 0
      %1979 = vmatpush1.bf16.msra.mxu0 0
      %1980 = vmatprep.subr.bf16.mxu0 0
      %1981 = vmatpush1.bf16.msra.mxu0 0
      %1982 = vmatprep.subr.bf16.mxu0 0
      %1983 = vmatpush1.bf16.msra.mxu0 %v1838
      %1984 = vmatprep.subr.bf16.mxu0 0
      %1985 = vmatpush2.bf16.msra.mxu0 0
      %1986 = vmatprep.subr.bf16.mxu0 0
      %1987 = vmatpush2.bf16.msra.mxu0 0
      %1988 = vmatprep.subr.bf16.mxu0 0
      %1989 = vmatpush2.bf16.msra.mxu0 0
      %1990 = vmatprep.subr.bf16.mxu0 0
      %1991 = vmatpush2.bf16.msra.mxu0 0
      %1992 = vmatprep.subr.bf16.mxu0 0
      %1993 = vmatpush2.bf16.msra.mxu0 0
      %1994 = vmatprep.subr.bf16.mxu0 0
      %1995 = vmatpush2.bf16.msra.mxu0 0
      %1996 = vmatprep.subr.bf16.mxu0 0
      %1997 = vmatpush2.bf16.msra.mxu0 0
      %1998 = vmatprep.subr.bf16.mxu0 0
      %1999 = vmatpush2.bf16.msra.mxu0 0
      %2000 = vmatprep.mubr.bf16.mxu0 0
      %2001 = vmatmul.mubr.bf16.gmra.mxu0 %v1921
      %v2002 = vpop.f32.mrf.mxu0
      %v2003 = vadd.f32 0.0, %v2002
      %v2004 = vpop.f32.mrf.mxu0
      %v2005 = vpop.f32.mrf.mxu0
      %v2006 = vadd.f32 0.0, %v2005
      %v2007 = vpop.f32.mrf.mxu0
      %2008 = vmatprep.mubr.bf16.mxu0 0
      %2009 = vmatmul.mubr.bf16.gmra.mxu0 %v1924
      %v2010 = vpop.f32.mrf.mxu0
      %v2011 = vadd.f32 0.0, %v2010
      %v2012 = vpop.f32.mrf.mxu0
      %v2013 = vpop.f32.mrf.mxu0
      %v2014 = vadd.f32 0.0, %v2013
      %v2015 = vpop.f32.mrf.mxu0
      %2016 = vmatprep.mubr.bf16.mxu0 0
      %2017 = vmatmul.mubr.bf16.gmra.mxu0 %v1927
      %v2018 = vpop.f32.mrf.mxu0
      %v2019 = vadd.f32 0.0, %v2018
      %v2020 = vpop.f32.mrf.mxu0
      %v2021 = vpop.f32.mrf.mxu0
      %v2022 = vadd.f32 0.0, %v2021
      %v2023 = vpop.f32.mrf.mxu0
      %2024 = vmatprep.mubr.bf16.mxu0 0
      %2025 = vmatmul.mubr.bf16.gmra.mxu0 %v1930
      %v2026 = vpop.f32.mrf.mxu0
      %v2027 = vadd.f32 0.0, %v2026
      %v2028 = vpop.f32.mrf.mxu0
      %v2029 = vpop.f32.mrf.mxu0
      %v2030 = vadd.f32 0.0, %v2029
      %v2031 = vpop.f32.mrf.mxu0
      %2032 = vmatprep.mubr.bf16.mxu0 0
      %2033 = vmatmul.mubr.bf16.gmra.mxu0 %v1933
      %v2034 = vpop.f32.mrf.mxu0
      %v2035 = vadd.f32 0.0, %v2034
      %v2036 = vpop.f32.mrf.mxu0
      %v2037 = vpop.f32.mrf.mxu0
      %v2038 = vadd.f32 0.0, %v2037
      %v2039 = vpop.f32.mrf.mxu0
      %2040 = vmatprep.mubr.bf16.mxu0 0
      %2041 = vmatmul.mubr.bf16.gmra.mxu0 %v1936
      %v2042 = vpop.f32.mrf.mxu0
      %v2043 = vadd.f32 0.0, %v2042
      %v2044 = vpop.f32.mrf.mxu0
      %v2045 = vpop.f32.mrf.mxu0
      %v2046 = vadd.f32 0.0, %v2045
      %v2047 = vpop.f32.mrf.mxu0
      %2048 = vmatprep.mubr.bf16.mxu0 0
      %2049 = vmatmul.mubr.bf16.gmra.mxu0 %v1939
      %v2050 = vpop.f32.mrf.mxu0
      %v2051 = vadd.f32 0.0, %v2050
      %v2052 = vpop.f32.mrf.mxu0
      %v2053 = vpop.f32.mrf.mxu0
      %v2054 = vadd.f32 0.0, %v2053
      %v2055 = vpop.f32.mrf.mxu0
      %2056 = vmatprep.mubr.bf16.mxu0 0
      %2057 = vmatmul.mubr.bf16.gmra.mxu0 %v1942
      %v2058 = vpop.f32.mrf.mxu0
      %v2059 = vadd.f32 0.0, %v2058
      %v2060 = vpop.f32.mrf.mxu0
      %v2061 = vpop.f32.mrf.mxu0
      %v2062 = vadd.f32 0.0, %v2061
      %v2063 = vpop.f32.mrf.mxu0
      %2064 = vmatprep.mubr.bf16.mxu0 0
      %2065 = vmatmul.mubr.bf16.gmra.mxu0 %v1945
      %v2066 = vpop.f32.mrf.mxu0
      %v2067 = vadd.f32 0.0, %v2066
      %v2068 = vpop.f32.mrf.mxu0
      %v2069 = vpop.f32.mrf.mxu0
      %v2070 = vadd.f32 0.0, %v2069
      %v2071 = vpop.f32.mrf.mxu0
      %2072 = vmatprep.mubr.bf16.mxu0 0
      %2073 = vmatmul.mubr.bf16.gmra.mxu0 %v1948
      %v2074 = vpop.f32.mrf.mxu0
      %v2075 = vadd.f32 0.0, %v2074
      %v2076 = vpop.f32.mrf.mxu0
      %v2077 = vpop.f32.mrf.mxu0
      %v2078 = vadd.f32 0.0, %v2077
      %v2079 = vpop.f32.mrf.mxu0
      %2080 = vmatprep.mubr.bf16.mxu0 0
      %2081 = vmatmul.mubr.bf16.gmra.mxu0 %v1951
      %v2082 = vpop.f32.mrf.mxu0
      %v2083 = vadd.f32 0.0, %v2082
      %v2084 = vpop.f32.mrf.mxu0
      %v2085 = vpop.f32.mrf.mxu0
      %v2086 = vadd.f32 0.0, %v2085
      %v2087 = vpop.f32.mrf.mxu0
      %2088 = vmatprep.mubr.bf16.mxu0 0
      %2089 = vmatmul.mubr.bf16.gmra.mxu0 %v1954
      %v2090 = vpop.f32.mrf.mxu0
      %v2091 = vadd.f32 0.0, %v2090
      %v2092 = vpop.f32.mrf.mxu0
      %v2093 = vpop.f32.mrf.mxu0
      %v2094 = vadd.f32 0.0, %v2093
      %v2095 = vpop.f32.mrf.mxu0
      %2096 = vmatprep.mubr.bf16.mxu0 0
      %2097 = vmatmul.mubr.bf16.gmra.mxu0 %v1957
      %v2098 = vpop.f32.mrf.mxu0
      %v2099 = vadd.f32 0.0, %v2098
      %v2100 = vpop.f32.mrf.mxu0
      %v2101 = vpop.f32.mrf.mxu0
      %v2102 = vadd.f32 0.0, %v2101
      %v2103 = vpop.f32.mrf.mxu0
      %2104 = vmatprep.mubr.bf16.mxu0 0
      %2105 = vmatmul.mubr.bf16.gmra.mxu0 %v1960
      %v2106 = vpop.f32.mrf.mxu0
      %v2107 = vadd.f32 0.0, %v2106
      %v2108 = vpop.f32.mrf.mxu0
      %v2109 = vpop.f32.mrf.mxu0
      %v2110 = vadd.f32 0.0, %v2109
      %v2111 = vpop.f32.mrf.mxu0
      %2112 = vmatprep.mubr.bf16.mxu0 0
      %2113 = vmatmul.mubr.bf16.gmra.mxu0 %v1963
      %v2114 = vpop.f32.mrf.mxu0
      %v2115 = vadd.f32 0.0, %v2114
      %v2116 = vpop.f32.mrf.mxu0
      %v2117 = vpop.f32.mrf.mxu0
      %v2118 = vadd.f32 0.0, %v2117
      %v2119 = vpop.f32.mrf.mxu0
      %2120 = vmatprep.mubr.bf16.mxu0 0
      %2121 = vmatmul.mubr.bf16.gmra.mxu0 %v1966
      %v2122 = vpop.f32.mrf.mxu0
      %v2123 = vadd.f32 0.0, %v2122
      %v2124 = vpop.f32.mrf.mxu0
      %v2125 = vpop.f32.mrf.mxu0
      %v2126 = vadd.f32 0.0, %v2125
      %v2127 = vpop.f32.mrf.mxu0
      %2128 = vdwg.mxu0
      %v2129 = vld [vmem:[%s718] sm:$0xff]
      %v2130 = vld [vmem:[%s718 + $0x8] sm:$0xff]
      %v2131 = vld [vmem:[%s718 + $0x10] sm:$0xff]
      %v2132 = vld [vmem:[%s718 + $0x18] sm:$0xff]
      %v2133 = vld [vmem:[%s718 + $0x20] sm:$0xff]
      %v2134 = vld [vmem:[%s718 + $0x28] sm:$0xff]
      %v2135 = vld [vmem:[%s718 + $0x30] sm:$0xff]
      %v2136 = vld [vmem:[%s718 + $0x38] sm:$0xff]
      %v2137 = vld [vmem:[%s718 + $0x40] sm:$0xff]
      %v2138 = vld [vmem:[%s718 + $0x48] sm:$0xff]
      %v2139 = vld [vmem:[%s718 + $0x50] sm:$0xff]
      %v2140 = vld [vmem:[%s718 + $0x58] sm:$0xff]
      %v2141 = vld [vmem:[%s718 + $0x60] sm:$0xff]
      %v2142 = vld [vmem:[%s718 + $0x68] sm:$0xff]
      %v2143 = vld [vmem:[%s718 + $0x70] sm:$0xff]
      %v2144 = vld [vmem:[%s718 + $0x78] sm:$0xff]
      %v2145 = vld [vmem:[%s718 + $0x80] sm:$0xff]
      %v2146 = vld [vmem:[%s718 + $0x88] sm:$0xff]
      %v2147 = vld [vmem:[%s718 + $0x90] sm:$0xff]
      %v2148 = vld [vmem:[%s718 + $0x98] sm:$0xff]
      %v2149 = vld [vmem:[%s718 + $0xa0] sm:$0xff]
      %v2150 = vld [vmem:[%s718 + $0xa8] sm:$0xff]
      %v2151 = vld [vmem:[%s718 + $0xb0] sm:$0xff]
      %v2152 = vld [vmem:[%s718 + $0xb8] sm:$0xff]
      %v2153 = vld [vmem:[%s718 + $0xc0] sm:$0xff]
      %v2154 = vld [vmem:[%s718 + $0xc8] sm:$0xff]
      %v2155 = vld [vmem:[%s718 + $0xd0] sm:$0xff]
      %v2156 = vld [vmem:[%s718 + $0xd8] sm:$0xff]
      %v2157 = vld [vmem:[%s718 + $0xe0] sm:$0xff]
      %v2158 = vld [vmem:[%s718 + $0xe8] sm:$0xff]
      %v2159 = vld [vmem:[%s718 + $0xf0] sm:$0xff]
      %v2160 = vld [vmem:[%s718 + $0xf8] sm:$0xff]
      %v2161 = vld [vmem:[%s15] sm:$0xf]
      %v2162 = vpack.c.bf16 %v2130, %v2129
      %v2163 = vpack.c.bf16 %v2132, %v2131
      %v2164 = vpack.c.bf16 %v2134, %v2133
      %v2165 = vpack.c.bf16 %v2136, %v2135
      %v2166 = vpack.c.bf16 %v2138, %v2137
      %v2167 = vpack.c.bf16 %v2140, %v2139
      %v2168 = vpack.c.bf16 %v2142, %v2141
      %v2169 = vpack.c.bf16 %v2144, %v2143
      %v2170 = vpack.c.bf16 %v2146, %v2145
      %v2171 = vpack.c.bf16 %v2148, %v2147
      %v2172 = vpack.c.bf16 %v2150, %v2149
      %v2173 = vpack.c.bf16 %v2152, %v2151
      %v2174 = vpack.c.bf16 %v2154, %v2153
      %v2175 = vpack.c.bf16 %v2156, %v2155
      %v2176 = vpack.c.bf16 %v2158, %v2157
      %v2177 = vpack.c.bf16 %v2160, %v2159
      %v2178 = vld [vmem:[%s16] sm:$0x1]
      %v2180 = vlaneseq
      %v2181 = vshrl.u32 %v2180, 7
      %v2182 = vsub.s32 0, %v2181
      %v2183 = vrot.slane %v2178, %v2182
      %vm2185 = vcmask 64512
      %v2187 = vsel %vm2185, %v2162, 0
      %v2190 = vsel %vm2185, %v2163, 0
      %v2193 = vsel %vm2185, %v2164, 0
      %v2196 = vsel %vm2185, %v2165, 0
      %v2199 = vsel %vm2185, %v2166, 0
      %v2202 = vsel %vm2185, %v2167, 0
      %v2205 = vsel %vm2185, %v2168, 0
      %v2208 = vsel %vm2185, %v2169, 0
      %v2211 = vsel %vm2185, %v2170, 0
      %v2214 = vsel %vm2185, %v2171, 0
      %v2217 = vsel %vm2185, %v2172, 0
      %v2220 = vsel %vm2185, %v2173, 0
      %v2223 = vsel %vm2185, %v2174, 0
      %v2226 = vsel %vm2185, %v2175, 0
      %v2229 = vsel %vm2185, %v2176, 0
      %v2232 = vsel %vm2185, %v2177, 0
      %vm2234 = vcmask 1043456
      %v2236 = vsel %vm2234, %v2161, 0
      %2238 = vmatprep.subr.bf16.mxu0 0
      %2239 = vmatpush1.bf16.msra.mxu0 0
      %2240 = vmatprep.subr.bf16.mxu0 0
      %2241 = vmatpush1.bf16.msra.mxu0 0
      %2242 = vmatprep.subr.bf16.mxu0 0
      %2243 = vmatpush1.bf16.msra.mxu0 0
      %2244 = vmatprep.subr.bf16.mxu0 0
      %2245 = vmatpush1.bf16.msra.mxu0 0
      %2246 = vmatprep.subr.bf16.mxu0 0
      %2247 = vmatpush1.bf16.msra.mxu0 0
      %2248 = vmatprep.subr.bf16.mxu0 0
      %2249 = vmatpush1.bf16.msra.mxu0 0
      %2250 = vmatprep.subr.bf16.mxu0 0
      %2251 = vmatpush1.bf16.msra.mxu0 0
      %2252 = vmatprep.subr.bf16.mxu0 0
      %2253 = vmatpush1.bf16.msra.mxu0 %v2236
      %2254 = vmatprep.subr.bf16.mxu0 0
      %2255 = vmatpush2.bf16.msra.mxu0 0
      %2256 = vmatprep.subr.bf16.mxu0 0
      %2257 = vmatpush2.bf16.msra.mxu0 0
      %2258 = vmatprep.subr.bf16.mxu0 0
      %2259 = vmatpush2.bf16.msra.mxu0 0
      %2260 = vmatprep.subr.bf16.mxu0 0
      %2261 = vmatpush2.bf16.msra.mxu0 0
      %2262 = vmatprep.subr.bf16.mxu0 0
      %2263 = vmatpush2.bf16.msra.mxu0 0
      %2264 = vmatprep.subr.bf16.mxu0 0
      %2265 = vmatpush2.bf16.msra.mxu0 0
      %2266 = vmatprep.subr.bf16.mxu0 0
      %2267 = vmatpush2.bf16.msra.mxu0 0
      %2268 = vmatprep.subr.bf16.mxu0 0
      %2269 = vmatpush2.bf16.msra.mxu0 0
      %2270 = vmatprep.mubr.bf16.mxu0 0
      %2271 = vmatmul.mubr.bf16.gmra.mxu0 %v2187
      %v2272 = vpop.f32.mrf.mxu0
      %v2273 = vadd.f32 %v2183, %v2272
      %v2274 = vpop.f32.mrf.mxu0
      %v2275 = vpop.f32.mrf.mxu0
      %v2276 = vadd.f32 %v2183, %v2275
      %v2277 = vpop.f32.mrf.mxu0
      %2278 = vmatprep.mubr.bf16.mxu0 0
      %2279 = vmatmul.mubr.bf16.gmra.mxu0 %v2190
      %v2280 = vpop.f32.mrf.mxu0
      %v2281 = vadd.f32 %v2183, %v2280
      %v2282 = vpop.f32.mrf.mxu0
      %v2283 = vpop.f32.mrf.mxu0
      %v2284 = vadd.f32 %v2183, %v2283
      %v2285 = vpop.f32.mrf.mxu0
      %2286 = vmatprep.mubr.bf16.mxu0 0
      %2287 = vmatmul.mubr.bf16.gmra.mxu0 %v2193
      %v2288 = vpop.f32.mrf.mxu0
      %v2289 = vadd.f32 %v2183, %v2288
      %v2290 = vpop.f32.mrf.mxu0
      %v2291 = vpop.f32.mrf.mxu0
      %v2292 = vadd.f32 %v2183, %v2291
      %v2293 = vpop.f32.mrf.mxu0
      %2294 = vmatprep.mubr.bf16.mxu0 0
      %2295 = vmatmul.mubr.bf16.gmra.mxu0 %v2196
      %v2296 = vpop.f32.mrf.mxu0
      %v2297 = vadd.f32 %v2183, %v2296
      %v2298 = vpop.f32.mrf.mxu0
      %v2299 = vpop.f32.mrf.mxu0
      %v2300 = vadd.f32 %v2183, %v2299
      %v2301 = vpop.f32.mrf.mxu0
      %2302 = vmatprep.mubr.bf16.mxu0 0
      %2303 = vmatmul.mubr.bf16.gmra.mxu0 %v2199
      %v2304 = vpop.f32.mrf.mxu0
      %v2305 = vadd.f32 %v2183, %v2304
      %v2306 = vpop.f32.mrf.mxu0
      %v2307 = vpop.f32.mrf.mxu0
      %v2308 = vadd.f32 %v2183, %v2307
      %v2309 = vpop.f32.mrf.mxu0
      %2310 = vmatprep.mubr.bf16.mxu0 0
      %2311 = vmatmul.mubr.bf16.gmra.mxu0 %v2202
      %v2312 = vpop.f32.mrf.mxu0
      %v2313 = vadd.f32 %v2183, %v2312
      %v2314 = vpop.f32.mrf.mxu0
      %v2315 = vpop.f32.mrf.mxu0
      %v2316 = vadd.f32 %v2183, %v2315
      %v2317 = vpop.f32.mrf.mxu0
      %2318 = vmatprep.mubr.bf16.mxu0 0
      %2319 = vmatmul.mubr.bf16.gmra.mxu0 %v2205
      %v2320 = vpop.f32.mrf.mxu0
      %v2321 = vadd.f32 %v2183, %v2320
      %v2322 = vpop.f32.mrf.mxu0
      %v2323 = vpop.f32.mrf.mxu0
      %v2324 = vadd.f32 %v2183, %v2323
      %v2325 = vpop.f32.mrf.mxu0
      %2326 = vmatprep.mubr.bf16.mxu0 0
      %2327 = vmatmul.mubr.bf16.gmra.mxu0 %v2208
      %v2328 = vpop.f32.mrf.mxu0
      %v2329 = vadd.f32 %v2183, %v2328
      %v2330 = vpop.f32.mrf.mxu0
      %v2331 = vpop.f32.mrf.mxu0
      %v2332 = vadd.f32 %v2183, %v2331
      %v2333 = vpop.f32.mrf.mxu0
      %2334 = vmatprep.mubr.bf16.mxu0 0
      %2335 = vmatmul.mubr.bf16.gmra.mxu0 %v2211
      %v2336 = vpop.f32.mrf.mxu0
      %v2337 = vadd.f32 %v2183, %v2336
      %v2338 = vpop.f32.mrf.mxu0
      %v2339 = vpop.f32.mrf.mxu0
      %v2340 = vadd.f32 %v2183, %v2339
      %v2341 = vpop.f32.mrf.mxu0
      %2342 = vmatprep.mubr.bf16.mxu0 0
      %2343 = vmatmul.mubr.bf16.gmra.mxu0 %v2214
      %v2344 = vpop.f32.mrf.mxu0
      %v2345 = vadd.f32 %v2183, %v2344
      %v2346 = vpop.f32.mrf.mxu0
      %v2347 = vpop.f32.mrf.mxu0
      %v2348 = vadd.f32 %v2183, %v2347
      %v2349 = vpop.f32.mrf.mxu0
      %2350 = vmatprep.mubr.bf16.mxu0 0
      %2351 = vmatmul.mubr.bf16.gmra.mxu0 %v2217
      %v2352 = vpop.f32.mrf.mxu0
      %v2353 = vadd.f32 %v2183, %v2352
      %v2354 = vpop.f32.mrf.mxu0
      %v2355 = vpop.f32.mrf.mxu0
      %v2356 = vadd.f32 %v2183, %v2355
      %v2357 = vpop.f32.mrf.mxu0
      %2358 = vmatprep.mubr.bf16.mxu0 0
      %2359 = vmatmul.mubr.bf16.gmra.mxu0 %v2220
      %v2360 = vpop.f32.mrf.mxu0
      %v2361 = vadd.f32 %v2183, %v2360
      %v2362 = vpop.f32.mrf.mxu0
      %v2363 = vpop.f32.mrf.mxu0
      %v2364 = vadd.f32 %v2183, %v2363
      %v2365 = vpop.f32.mrf.mxu0
      %2366 = vmatprep.mubr.bf16.mxu0 0
      %2367 = vmatmul.mubr.bf16.gmra.mxu0 %v2223
      %v2368 = vpop.f32.mrf.mxu0
      %v2369 = vadd.f32 %v2183, %v2368
      %v2370 = vpop.f32.mrf.mxu0
      %v2371 = vpop.f32.mrf.mxu0
      %v2372 = vadd.f32 %v2183, %v2371
      %v2373 = vpop.f32.mrf.mxu0
      %2374 = vmatprep.mubr.bf16.mxu0 0
      %2375 = vmatmul.mubr.bf16.gmra.mxu0 %v2226
      %v2376 = vpop.f32.mrf.mxu0
      %v2377 = vadd.f32 %v2183, %v2376
      %v2378 = vpop.f32.mrf.mxu0
      %v2379 = vpop.f32.mrf.mxu0
      %v2380 = vadd.f32 %v2183, %v2379
      %v2381 = vpop.f32.mrf.mxu0
      %2382 = vmatprep.mubr.bf16.mxu0 0
      %2383 = vmatmul.mubr.bf16.gmra.mxu0 %v2229
      %v2384 = vpop.f32.mrf.mxu0
      %v2385 = vadd.f32 %v2183, %v2384
      %v2386 = vpop.f32.mrf.mxu0
      %v2387 = vpop.f32.mrf.mxu0
      %v2388 = vadd.f32 %v2183, %v2387
      %v2389 = vpop.f32.mrf.mxu0
      %2390 = vmatprep.mubr.bf16.mxu0 0
      %2391 = vmatmul.mubr.bf16.gmra.mxu0 %v2232
      %v2392 = vpop.f32.mrf.mxu0
      %v2393 = vadd.f32 %v2183, %v2392
      %v2394 = vpop.f32.mrf.mxu0
      %v2395 = vpop.f32.mrf.mxu0
      %v2396 = vadd.f32 %v2183, %v2395
      %v2397 = vpop.f32.mrf.mxu0
      %2398 = vdwg.mxu0
      %v2399 = vmax.f32 %v2273, 0.0
      %v2400 = vmax.f32 %v2276, 0.0
      %v2401 = vmax.f32 %v2281, 0.0
      %v2402 = vmax.f32 %v2284, 0.0
      %v2403 = vmax.f32 %v2289, 0.0
      %v2404 = vmax.f32 %v2292, 0.0
      %v2405 = vmax.f32 %v2297, 0.0
      %v2406 = vmax.f32 %v2300, 0.0
      %v2407 = vmax.f32 %v2305, 0.0
      %v2408 = vmax.f32 %v2308, 0.0
      %v2409 = vmax.f32 %v2313, 0.0
      %v2410 = vmax.f32 %v2316, 0.0
      %v2411 = vmax.f32 %v2321, 0.0
      %v2412 = vmax.f32 %v2324, 0.0
      %v2413 = vmax.f32 %v2329, 0.0
      %v2414 = vmax.f32 %v2332, 0.0
      %v2415 = vmax.f32 %v2337, 0.0
      %v2416 = vmax.f32 %v2340, 0.0
      %v2417 = vmax.f32 %v2345, 0.0
      %v2418 = vmax.f32 %v2348, 0.0
      %v2419 = vmax.f32 %v2353, 0.0
      %v2420 = vmax.f32 %v2356, 0.0
      %v2421 = vmax.f32 %v2361, 0.0
      %v2422 = vmax.f32 %v2364, 0.0
      %v2423 = vmax.f32 %v2369, 0.0
      %v2424 = vmax.f32 %v2372, 0.0
      %v2425 = vmax.f32 %v2377, 0.0
      %v2426 = vmax.f32 %v2380, 0.0
      %v2427 = vmax.f32 %v2385, 0.0
      %v2428 = vmax.f32 %v2388, 0.0
      %v2429 = vmax.f32 %v2393, 0.0
      %v2430 = vmax.f32 %v2396, 0.0
      %2431 = vst.msk [vmem:[#allocation7] sm:$0xff] %vm749, %v2003
      %2432 = vst.msk [vmem:[#allocation7 + $0x8] sm:$0xff] %vm749, %v2006
      %s2433 = scalar_lea.vmem [#allocation7], 16
      %2434 = vst.msk [vmem:[%s2433] sm:$0xff] %vm749, %v2011
      %2435 = vst.msk [vmem:[%s2433 + $0x8] sm:$0xff] %vm749, %v2014
      %s2436 = scalar_lea.vmem [#allocation7], 32
      %2437 = vst.msk [vmem:[%s2436] sm:$0xff] %vm749, %v2019
      %2438 = vst.msk [vmem:[%s2436 + $0x8] sm:$0xff] %vm749, %v2022
      %s2439 = scalar_lea.vmem [#allocation7], 48
      %2440 = vst.msk [vmem:[%s2439] sm:$0xff] %vm749, %v2027
      %2441 = vst.msk [vmem:[%s2439 + $0x8] sm:$0xff] %vm749, %v2030
      %s2442 = scalar_lea.vmem [#allocation7], 64
      %2443 = vst.msk [vmem:[%s2442] sm:$0xff] %vm749, %v2035
      %2444 = vst.msk [vmem:[%s2442 + $0x8] sm:$0xff] %vm749, %v2038
      %s2445 = scalar_lea.vmem [#allocation7], 80
      %2446 = vst.msk [vmem:[%s2445] sm:$0xff] %vm749, %v2043
      %2447 = vst.msk [vmem:[%s2445 + $0x8] sm:$0xff] %vm749, %v2046
      %s2448 = scalar_lea.vmem [#allocation7], 96
      %2449 = vst.msk [vmem:[%s2448] sm:$0xff] %vm749, %v2051
      %2450 = vst.msk [vmem:[%s2448 + $0x8] sm:$0xff] %vm749, %v2054
      %s2451 = scalar_lea.vmem [#allocation7], 112
      %2452 = vst.msk [vmem:[%s2451] sm:$0xff] %vm749, %v2059
      %2453 = vst.msk [vmem:[%s2451 + $0x8] sm:$0xff] %vm749, %v2062
      %s2454 = scalar_lea.vmem [#allocation7], 128
      %2455 = vst.msk [vmem:[%s2454] sm:$0xff] %vm749, %v2067
      %2456 = vst.msk [vmem:[%s2454 + $0x8] sm:$0xff] %vm749, %v2070
      %s2457 = scalar_lea.vmem [#allocation7], 144
      %2458 = vst.msk [vmem:[%s2457] sm:$0xff] %vm749, %v2075
      %2459 = vst.msk [vmem:[%s2457 + $0x8] sm:$0xff] %vm749, %v2078
      %s2460 = scalar_lea.vmem [#allocation7], 160
      %2461 = vst.msk [vmem:[%s2460] sm:$0xff] %vm749, %v2083
      %2462 = vst.msk [vmem:[%s2460 + $0x8] sm:$0xff] %vm749, %v2086
      %s2463 = scalar_lea.vmem [#allocation7], 176
      %2464 = vst.msk [vmem:[%s2463] sm:$0xff] %vm749, %v2091
      %2465 = vst.msk [vmem:[%s2463 + $0x8] sm:$0xff] %vm749, %v2094
      %s2466 = scalar_lea.vmem [#allocation7], 192
      %2467 = vst.msk [vmem:[%s2466] sm:$0xff] %vm749, %v2099
      %2468 = vst.msk [vmem:[%s2466 + $0x8] sm:$0xff] %vm749, %v2102
      %s2469 = scalar_lea.vmem [#allocation7], 208
      %2470 = vst.msk [vmem:[%s2469] sm:$0xff] %vm749, %v2107
      %2471 = vst.msk [vmem:[%s2469 + $0x8] sm:$0xff] %vm749, %v2110
      %s2472 = scalar_lea.vmem [#allocation7], 224
      %2473 = vst.msk [vmem:[%s2472] sm:$0xff] %vm749, %v2115
      %2474 = vst.msk [vmem:[%s2472 + $0x8] sm:$0xff] %vm749, %v2118
      %s2475 = scalar_lea.vmem [#allocation7], 240
      %2476 = vst.msk [vmem:[%s2475] sm:$0xff] %vm749, %v2123
      %2477 = vst.msk [vmem:[%s2475 + $0x8] sm:$0xff] %vm749, %v2126
      %vm2478 = vcmask 392192
      %2479 = vst.msk [vmem:[#allocation8] sm:$0xff] %vm2478, %v2399
      %2480 = vst.msk [vmem:[#allocation8 + $0x8] sm:$0xff] %vm2478, %v2400
      %s2481 = scalar_lea.vmem [#allocation8], 16
      %2482 = vst.msk [vmem:[%s2481] sm:$0xff] %vm2478, %v2401
      %2483 = vst.msk [vmem:[%s2481 + $0x8] sm:$0xff] %vm2478, %v2402
      %s2484 = scalar_lea.vmem [#allocation8], 32
      %2485 = vst.msk [vmem:[%s2484] sm:$0xff] %vm2478, %v2403
      %2486 = vst.msk [vmem:[%s2484 + $0x8] sm:$0xff] %vm2478, %v2404
      %s2487 = scalar_lea.vmem [#allocation8], 48
      %2488 = vst.msk [vmem:[%s2487] sm:$0xff] %vm2478, %v2405
      %2489 = vst.msk [vmem:[%s2487 + $0x8] sm:$0xff] %vm2478, %v2406
      %s2490 = scalar_lea.vmem [#allocation8], 64
      %2491 = vst.msk [vmem:[%s2490] sm:$0xff] %vm2478, %v2407
      %2492 = vst.msk [vmem:[%s2490 + $0x8] sm:$0xff] %vm2478, %v2408
      %s2493 = scalar_lea.vmem [#allocation8], 80
      %2494 = vst.msk [vmem:[%s2493] sm:$0xff] %vm2478, %v2409
      %2495 = vst.msk [vmem:[%s2493 + $0x8] sm:$0xff] %vm2478, %v2410
      %s2496 = scalar_lea.vmem [#allocation8], 96
      %2497 = vst.msk [vmem:[%s2496] sm:$0xff] %vm2478, %v2411
      %2498 = vst.msk [vmem:[%s2496 + $0x8] sm:$0xff] %vm2478, %v2412
      %s2499 = scalar_lea.vmem [#allocation8], 112
      %2500 = vst.msk [vmem:[%s2499] sm:$0xff] %vm2478, %v2413
      %2501 = vst.msk [vmem:[%s2499 + $0x8] sm:$0xff] %vm2478, %v2414
      %s2502 = scalar_lea.vmem [#allocation8], 128
      %2503 = vst.msk [vmem:[%s2502] sm:$0xff] %vm2478, %v2415
      %2504 = vst.msk [vmem:[%s2502 + $0x8] sm:$0xff] %vm2478, %v2416
      %s2505 = scalar_lea.vmem [#allocation8], 144
      %2506 = vst.msk [vmem:[%s2505] sm:$0xff] %vm2478, %v2417
      %2507 = vst.msk [vmem:[%s2505 + $0x8] sm:$0xff] %vm2478, %v2418
      %s2508 = scalar_lea.vmem [#allocation8], 160
      %2509 = vst.msk [vmem:[%s2508] sm:$0xff] %vm2478, %v2419
      %2510 = vst.msk [vmem:[%s2508 + $0x8] sm:$0xff] %vm2478, %v2420
      %s2511 = scalar_lea.vmem [#allocation8], 176
      %2512 = vst.msk [vmem:[%s2511] sm:$0xff] %vm2478, %v2421
      %2513 = vst.msk [vmem:[%s2511 + $0x8] sm:$0xff] %vm2478, %v2422
      %s2514 = scalar_lea.vmem [#allocation8], 192
      %2515 = vst.msk [vmem:[%s2514] sm:$0xff] %vm2478, %v2423
      %2516 = vst.msk [vmem:[%s2514 + $0x8] sm:$0xff] %vm2478, %v2424
      %s2517 = scalar_lea.vmem [#allocation8], 208
      %2518 = vst.msk [vmem:[%s2517] sm:$0xff] %vm2478, %v2425
      %2519 = vst.msk [vmem:[%s2517 + $0x8] sm:$0xff] %vm2478, %v2426
      %s2520 = scalar_lea.vmem [#allocation8], 224
      %2521 = vst.msk [vmem:[%s2520] sm:$0xff] %vm2478, %v2427
      %2522 = vst.msk [vmem:[%s2520 + $0x8] sm:$0xff] %vm2478, %v2428
      %s2523 = scalar_lea.vmem [#allocation8], 240
      %2524 = vst.msk [vmem:[%s2523] sm:$0xff] %vm2478, %v2429
      %2525 = vst.msk [vmem:[%s2523 + $0x8] sm:$0xff] %vm2478, %v2430
      %v2526 = vld [vmem:[%s17] sm:$0xff]
      %v2527 = vld [vmem:[%s17 + $0x8] sm:$0x1]
      %2528 = vst.msk [vmem:[#allocation9] sm:$0xff] %vm749, 0.0
      %2529 = vst.msk [vmem:[#allocation9 + $0x8] sm:$0xff] %vm749, 0.0
      %2530 = vst.msk [vmem:[#allocation9 + $0x10] sm:$0xff] %vm749, 0.0
      %2531 = vst.msk [vmem:[#allocation9 + $0x18] sm:$0xff] %vm749, 0.0
      %2532 = vst.msk [vmem:[#allocation9 + $0x20] sm:$0xff] %vm749, 0.0
      %2533 = vst.msk [vmem:[#allocation9 + $0x28] sm:$0xff] %vm749, 0.0
      %2534 = vst.msk [vmem:[#allocation9 + $0x30] sm:$0xff] %vm749, 0.0
      %2535 = vst.msk [vmem:[#allocation9 + $0x38] sm:$0xff] %vm749, 0.0
      %2536 = vst.msk [vmem:[#allocation9 + $0x40] sm:$0xff] %vm749, 0.0
      %2537 = vst.msk [vmem:[#allocation9 + $0x48] sm:$0xff] %vm749, 0.0
      %2538 = vst.msk [vmem:[#allocation9 + $0x50] sm:$0xff] %vm749, 0.0
      %2539 = vst.msk [vmem:[#allocation9 + $0x58] sm:$0xff] %vm749, 0.0
      %2540 = vst.msk [vmem:[#allocation9 + $0x60] sm:$0xff] %vm749, 0.0
      %2541 = vst.msk [vmem:[#allocation9 + $0x68] sm:$0xff] %vm749, 0.0
      %2542 = vst.msk [vmem:[#allocation9 + $0x70] sm:$0xff] %vm749, 0.0
      %2543 = vst.msk [vmem:[#allocation9 + $0x78] sm:$0xff] %vm749, 0.0
      %2544 = vst.msk [vmem:[#allocation9 + $0x80] sm:$0xff] %vm749, 0.0
      %2545 = vst.msk [vmem:[#allocation9 + $0x88] sm:$0xff] %vm749, 0.0
      %2546 = vst.msk [vmem:[#allocation9 + $0x90] sm:$0xff] %vm749, 0.0
      %2547 = vst.msk [vmem:[#allocation9 + $0x98] sm:$0xff] %vm749, 0.0
      %2548 = vst.msk [vmem:[#allocation9 + $0xa0] sm:$0xff] %vm749, 0.0
      %2549 = vst.msk [vmem:[#allocation9 + $0xa8] sm:$0xff] %vm749, 0.0
      %2550 = vst.msk [vmem:[#allocation9 + $0xb0] sm:$0xff] %vm749, 0.0
      %2551 = vst.msk [vmem:[#allocation9 + $0xb8] sm:$0xff] %vm749, 0.0
      %2552 = vst.msk [vmem:[#allocation9 + $0xc0] sm:$0xff] %vm749, 0.0
      %2553 = vst.msk [vmem:[#allocation9 + $0xc8] sm:$0xff] %vm749, 0.0
      %2554 = vst.msk [vmem:[#allocation9 + $0xd0] sm:$0xff] %vm749, 0.0
      %2555 = vst.msk [vmem:[#allocation9 + $0xd8] sm:$0xff] %vm749, 0.0
      %2556 = vst.msk [vmem:[#allocation9 + $0xe0] sm:$0xff] %vm749, 0.0
      %2557 = vst.msk [vmem:[#allocation9 + $0xe8] sm:$0xff] %vm749, 0.0
      %2558 = vst.msk [vmem:[#allocation9 + $0xf0] sm:$0xff] %vm749, 0.0
      %2559 = vst.msk [vmem:[#allocation9 + $0xf8] sm:$0xff] %vm749, 0.0
      %v2560 = vld [vmem:[#allocation7] sm:$0xff]
      %v2561 = vld [vmem:[#allocation7 + $0x8] sm:$0x7f]
      %v2562 = vld [vmem:[#allocation7 + $0x10] sm:$0xff]
      %v2563 = vld [vmem:[#allocation7 + $0x18] sm:$0x7f]
      %v2564 = vld [vmem:[#allocation7 + $0x20] sm:$0xff]
      %v2565 = vld [vmem:[#allocation7 + $0x28] sm:$0x7f]
      %v2566 = vld [vmem:[#allocation7 + $0x30] sm:$0xff]
      %v2567 = vld [vmem:[#allocation7 + $0x38] sm:$0x7f]
      %v2568 = vld [vmem:[#allocation7 + $0x40] sm:$0xff]
      %v2569 = vld [vmem:[#allocation7 + $0x48] sm:$0x7f]
      %v2570 = vld [vmem:[#allocation7 + $0x50] sm:$0xff]
      %v2571 = vld [vmem:[#allocation7 + $0x58] sm:$0x7f]
      %v2572 = vld [vmem:[#allocation7 + $0x60] sm:$0xff]
      %v2573 = vld [vmem:[#allocation7 + $0x68] sm:$0x7f]
      %v2574 = vld [vmem:[#allocation7 + $0x70] sm:$0xff]
      %v2575 = vld [vmem:[#allocation7 + $0x78] sm:$0x7f]
      %v2576 = vld [vmem:[#allocation7 + $0x80] sm:$0xff]
      %v2577 = vld [vmem:[#allocation7 + $0x88] sm:$0x7f]
      %v2578 = vld [vmem:[#allocation7 + $0x90] sm:$0xff]
      %v2579 = vld [vmem:[#allocation7 + $0x98] sm:$0x7f]
      %v2580 = vld [vmem:[#allocation7 + $0xa0] sm:$0xff]
      %v2581 = vld [vmem:[#allocation7 + $0xa8] sm:$0x7f]
      %v2582 = vld [vmem:[#allocation7 + $0xb0] sm:$0xff]
      %v2583 = vld [vmem:[#allocation7 + $0xb8] sm:$0x7f]
      %v2584 = vld [vmem:[#allocation7 + $0xc0] sm:$0xff]
      %v2585 = vld [vmem:[#allocation7 + $0xc8] sm:$0x7f]
      %v2586 = vld [vmem:[#allocation7 + $0xd0] sm:$0xff]
      %v2587 = vld [vmem:[#allocation7 + $0xd8] sm:$0x7f]
      %v2588 = vld [vmem:[#allocation7 + $0xe0] sm:$0xff]
      %v2589 = vld [vmem:[#allocation7 + $0xe8] sm:$0x7f]
      %s2590 = scalar_lea.vmem [#allocation9], 16
      %v2591 = vld [vmem:[%s2590 + $0x1] sm:$0xff]
      %v2592 = vld [vmem:[%s2590 + $0x9] sm:$0x7f]
      %v2593 = vld [vmem:[%s2590 + $0x11] sm:$0xff]
      %v2594 = vld [vmem:[%s2590 + $0x19] sm:$0x7f]
      %v2595 = vld [vmem:[%s2590 + $0x21] sm:$0xff]
      %v2596 = vld [vmem:[%s2590 + $0x29] sm:$0x7f]
      %v2597 = vld [vmem:[%s2590 + $0x31] sm:$0xff]
      %v2598 = vld [vmem:[%s2590 + $0x39] sm:$0x7f]
      %v2599 = vld [vmem:[%s2590 + $0x41] sm:$0xff]
      %v2600 = vld [vmem:[%s2590 + $0x49] sm:$0x7f]
      %v2601 = vld [vmem:[%s2590 + $0x51] sm:$0xff]
      %v2602 = vld [vmem:[%s2590 + $0x59] sm:$0x7f]
      %v2603 = vld [vmem:[%s2590 + $0x61] sm:$0xff]
      %v2604 = vld [vmem:[%s2590 + $0x69] sm:$0x7f]
      %v2605 = vld [vmem:[%s2590 + $0x71] sm:$0xff]
      %v2606 = vld [vmem:[%s2590 + $0x79] sm:$0x7f]
      %v2607 = vld [vmem:[%s2590 + $0x81] sm:$0xff]
      %v2608 = vld [vmem:[%s2590 + $0x89] sm:$0x7f]
      %v2609 = vld [vmem:[%s2590 + $0x91] sm:$0xff]
      %v2610 = vld [vmem:[%s2590 + $0x99] sm:$0x7f]
      %v2611 = vld [vmem:[%s2590 + $0xa1] sm:$0xff]
      %v2612 = vld [vmem:[%s2590 + $0xa9] sm:$0x7f]
      %v2613 = vld [vmem:[%s2590 + $0xb1] sm:$0xff]
      %v2614 = vld [vmem:[%s2590 + $0xb9] sm:$0x7f]
      %v2615 = vld [vmem:[%s2590 + $0xc1] sm:$0xff]
      %v2616 = vld [vmem:[%s2590 + $0xc9] sm:$0x7f]
      %v2617 = vld [vmem:[%s2590 + $0xd1] sm:$0xff]
      %v2618 = vld [vmem:[%s2590 + $0xd9] sm:$0x7f]
      %v2619 = vld [vmem:[%s2590 + $0xe1] sm:$0xff]
      %v2620 = vld [vmem:[%s2590 + $0xe9] sm:$0x7f]
      %v2621 = vlaneseq
      %v2622 = vshrl.u32 %v2621, 7
      %v2623 = vsub.s32 0, %v2622
      %v2624 = vrot.slane %v2526, %v2623
      %v2625 = vmul.f32 %v2560, %v2624
      %v2626 = vmul.f32 %v2561, %v2624
      %v2627 = vmul.f32 %v2562, %v2624
      %v2628 = vmul.f32 %v2563, %v2624
      %v2629 = vmul.f32 %v2564, %v2624
      %v2630 = vmul.f32 %v2565, %v2624
      %v2631 = vmul.f32 %v2566, %v2624
      %v2632 = vmul.f32 %v2567, %v2624
      %v2633 = vmul.f32 %v2568, %v2624
      %v2634 = vmul.f32 %v2569, %v2624
      %v2635 = vmul.f32 %v2570, %v2624
      %v2636 = vmul.f32 %v2571, %v2624
      %v2637 = vmul.f32 %v2572, %v2624
      %v2638 = vmul.f32 %v2573, %v2624
      %v2639 = vmul.f32 %v2574, %v2624
      %v2640 = vmul.f32 %v2575, %v2624
      %v2641 = vmul.f32 %v2576, %v2624
      %v2642 = vmul.f32 %v2577, %v2624
      %v2643 = vmul.f32 %v2578, %v2624
      %v2644 = vmul.f32 %v2579, %v2624
      %v2645 = vmul.f32 %v2580, %v2624
      %v2646 = vmul.f32 %v2581, %v2624
      %v2647 = vmul.f32 %v2582, %v2624
      %v2648 = vmul.f32 %v2583, %v2624
      %v2649 = vmul.f32 %v2584, %v2624
      %v2650 = vmul.f32 %v2585, %v2624
      %v2651 = vmul.f32 %v2586, %v2624
      %v2652 = vmul.f32 %v2587, %v2624
      %v2653 = vmul.f32 %v2588, %v2624
      %v2654 = vmul.f32 %v2589, %v2624
      %v2655 = vadd.f32 %v2591, %v2625
      %v2656 = vadd.f32 %v2592, %v2626
      %v2657 = vadd.f32 %v2593, %v2627
      %v2658 = vadd.f32 %v2594, %v2628
      %v2659 = vadd.f32 %v2595, %v2629
      %v2660 = vadd.f32 %v2596, %v2630
      %v2661 = vadd.f32 %v2597, %v2631
      %v2662 = vadd.f32 %v2598, %v2632
      %v2663 = vadd.f32 %v2599, %v2633
      %v2664 = vadd.f32 %v2600, %v2634
      %v2665 = vadd.f32 %v2601, %v2635
      %v2666 = vadd.f32 %v2602, %v2636
      %v2667 = vadd.f32 %v2603, %v2637
      %v2668 = vadd.f32 %v2604, %v2638
      %v2669 = vadd.f32 %v2605, %v2639
      %v2670 = vadd.f32 %v2606, %v2640
      %v2671 = vadd.f32 %v2607, %v2641
      %v2672 = vadd.f32 %v2608, %v2642
      %v2673 = vadd.f32 %v2609, %v2643
      %v2674 = vadd.f32 %v2610, %v2644
      %v2675 = vadd.f32 %v2611, %v2645
      %v2676 = vadd.f32 %v2612, %v2646
      %v2677 = vadd.f32 %v2613, %v2647
      %v2678 = vadd.f32 %v2614, %v2648
      %v2679 = vadd.f32 %v2615, %v2649
      %v2680 = vadd.f32 %v2616, %v2650
      %v2681 = vadd.f32 %v2617, %v2651
      %v2682 = vadd.f32 %v2618, %v2652
      %v2683 = vadd.f32 %v2619, %v2653
      %v2684 = vadd.f32 %v2620, %v2654
      %2685 = vst.msk [vmem:[%s2590 + $0x1] sm:$0xff] %vm749, %v2655
      %vm2686 = vcmask 260096
      %2687 = vst.msk [vmem:[%s2590 + $0x9] sm:$0x7f] %vm2686, %v2656
      %2688 = vst.msk [vmem:[%s2590 + $0x11] sm:$0xff] %vm749, %v2657
      %2689 = vst.msk [vmem:[%s2590 + $0x19] sm:$0x7f] %vm2686, %v2658
      %2690 = vst.msk [vmem:[%s2590 + $0x21] sm:$0xff] %vm749, %v2659
      %2691 = vst.msk [vmem:[%s2590 + $0x29] sm:$0x7f] %vm2686, %v2660
      %2692 = vst.msk [vmem:[%s2590 + $0x31] sm:$0xff] %vm749, %v2661
      %2693 = vst.msk [vmem:[%s2590 + $0x39] sm:$0x7f] %vm2686, %v2662
      %2694 = vst.msk [vmem:[%s2590 + $0x41] sm:$0xff] %vm749, %v2663
      %2695 = vst.msk [vmem:[%s2590 + $0x49] sm:$0x7f] %vm2686, %v2664
      %2696 = vst.msk [vmem:[%s2590 + $0x51] sm:$0xff] %vm749, %v2665
      %2697 = vst.msk [vmem:[%s2590 + $0x59] sm:$0x7f] %vm2686, %v2666
      %2698 = vst.msk [vmem:[%s2590 + $0x61] sm:$0xff] %vm749, %v2667
      %2699 = vst.msk [vmem:[%s2590 + $0x69] sm:$0x7f] %vm2686, %v2668
      %2700 = vst.msk [vmem:[%s2590 + $0x71] sm:$0xff] %vm749, %v2669
      %2701 = vst.msk [vmem:[%s2590 + $0x79] sm:$0x7f] %vm2686, %v2670
      %2702 = vst.msk [vmem:[%s2590 + $0x81] sm:$0xff] %vm749, %v2671
      %2703 = vst.msk [vmem:[%s2590 + $0x89] sm:$0x7f] %vm2686, %v2672
      %2704 = vst.msk [vmem:[%s2590 + $0x91] sm:$0xff] %vm749, %v2673
      %2705 = vst.msk [vmem:[%s2590 + $0x99] sm:$0x7f] %vm2686, %v2674
      %2706 = vst.msk [vmem:[%s2590 + $0xa1] sm:$0xff] %vm749, %v2675
      %2707 = vst.msk [vmem:[%s2590 + $0xa9] sm:$0x7f] %vm2686, %v2676
      %2708 = vst.msk [vmem:[%s2590 + $0xb1] sm:$0xff] %vm749, %v2677
      %2709 = vst.msk [vmem:[%s2590 + $0xb9] sm:$0x7f] %vm2686, %v2678
      %2710 = vst.msk [vmem:[%s2590 + $0xc1] sm:$0xff] %vm749, %v2679
      %2711 = vst.msk [vmem:[%s2590 + $0xc9] sm:$0x7f] %vm2686, %v2680
      %2712 = vst.msk [vmem:[%s2590 + $0xd1] sm:$0xff] %vm749, %v2681
      %2713 = vst.msk [vmem:[%s2590 + $0xd9] sm:$0x7f] %vm2686, %v2682
      %2714 = vst.msk [vmem:[%s2590 + $0xe1] sm:$0xff] %vm749, %v2683
      %2715 = vst.msk [vmem:[%s2590 + $0xe9] sm:$0x7f] %vm2686, %v2684
      %v2716 = vld [vmem:[#allocation7] sm:$0xff]
      %v2717 = vld [vmem:[#allocation7 + $0x8] sm:$0xff]
      %v2718 = vld [vmem:[#allocation7 + $0x10] sm:$0xff]
      %v2719 = vld [vmem:[#allocation7 + $0x18] sm:$0xff]
      %v2720 = vld [vmem:[#allocation7 + $0x20] sm:$0xff]
      %v2721 = vld [vmem:[#allocation7 + $0x28] sm:$0xff]
      %v2722 = vld [vmem:[#allocation7 + $0x30] sm:$0xff]
      %v2723 = vld [vmem:[#allocation7 + $0x38] sm:$0xff]
      %v2724 = vld [vmem:[#allocation7 + $0x40] sm:$0xff]
      %v2725 = vld [vmem:[#allocation7 + $0x48] sm:$0xff]
      %v2726 = vld [vmem:[#allocation7 + $0x50] sm:$0xff]
      %v2727 = vld [vmem:[#allocation7 + $0x58] sm:$0xff]
      %v2728 = vld [vmem:[#allocation7 + $0x60] sm:$0xff]
      %v2729 = vld [vmem:[#allocation7 + $0x68] sm:$0xff]
      %v2730 = vld [vmem:[#allocation7 + $0x70] sm:$0xff]
      %v2731 = vld [vmem:[#allocation7 + $0x78] sm:$0xff]
      %v2732 = vld [vmem:[#allocation7 + $0x80] sm:$0xff]
      %v2733 = vld [vmem:[#allocation7 + $0x88] sm:$0xff]
      %v2734 = vld [vmem:[#allocation7 + $0x90] sm:$0xff]
      %v2735 = vld [vmem:[#allocation7 + $0x98] sm:$0xff]
      %v2736 = vld [vmem:[#allocation7 + $0xa0] sm:$0xff]
      %v2737 = vld [vmem:[#allocation7 + $0xa8] sm:$0xff]
      %v2738 = vld [vmem:[#allocation7 + $0xb0] sm:$0xff]
      %v2739 = vld [vmem:[#allocation7 + $0xb8] sm:$0xff]
      %v2740 = vld [vmem:[#allocation7 + $0xc0] sm:$0xff]
      %v2741 = vld [vmem:[#allocation7 + $0xc8] sm:$0xff]
      %v2742 = vld [vmem:[#allocation7 + $0xd0] sm:$0xff]
      %v2743 = vld [vmem:[#allocation7 + $0xd8] sm:$0xff]
      %v2744 = vld [vmem:[#allocation7 + $0xe0] sm:$0xff]
      %v2745 = vld [vmem:[#allocation7 + $0xe8] sm:$0xff]
      %v2746 = vld [vmem:[%s2590] sm:$0xff]
      %v2747 = vld [vmem:[%s2590 + $0x8] sm:$0xff]
      %v2748 = vld [vmem:[%s2590 + $0x10] sm:$0xff]
      %v2749 = vld [vmem:[%s2590 + $0x18] sm:$0xff]
      %v2750 = vld [vmem:[%s2590 + $0x20] sm:$0xff]
      %v2751 = vld [vmem:[%s2590 + $0x28] sm:$0xff]
      %v2752 = vld [vmem:[%s2590 + $0x30] sm:$0xff]
      %v2753 = vld [vmem:[%s2590 + $0x38] sm:$0xff]
      %v2754 = vld [vmem:[%s2590 + $0x40] sm:$0xff]
      %v2755 = vld [vmem:[%s2590 + $0x48] sm:$0xff]
      %v2756 = vld [vmem:[%s2590 + $0x50] sm:$0xff]
      %v2757 = vld [vmem:[%s2590 + $0x58] sm:$0xff]
      %v2758 = vld [vmem:[%s2590 + $0x60] sm:$0xff]
      %v2759 = vld [vmem:[%s2590 + $0x68] sm:$0xff]
      %v2760 = vld [vmem:[%s2590 + $0x70] sm:$0xff]
      %v2761 = vld [vmem:[%s2590 + $0x78] sm:$0xff]
      %v2762 = vld [vmem:[%s2590 + $0x80] sm:$0xff]
      %v2763 = vld [vmem:[%s2590 + $0x88] sm:$0xff]
      %v2764 = vld [vmem:[%s2590 + $0x90] sm:$0xff]
      %v2765 = vld [vmem:[%s2590 + $0x98] sm:$0xff]
      %v2766 = vld [vmem:[%s2590 + $0xa0] sm:$0xff]
      %v2767 = vld [vmem:[%s2590 + $0xa8] sm:$0xff]
      %v2768 = vld [vmem:[%s2590 + $0xb0] sm:$0xff]
      %v2769 = vld [vmem:[%s2590 + $0xb8] sm:$0xff]
      %v2770 = vld [vmem:[%s2590 + $0xc0] sm:$0xff]
      %v2771 = vld [vmem:[%s2590 + $0xc8] sm:$0xff]
      %v2772 = vld [vmem:[%s2590 + $0xd0] sm:$0xff]
      %v2773 = vld [vmem:[%s2590 + $0xd8] sm:$0xff]
      %v2774 = vld [vmem:[%s2590 + $0xe0] sm:$0xff]
      %v2775 = vld [vmem:[%s2590 + $0xe8] sm:$0xff]
      %v2776 = vlaneseq
      %v2777 = vshrl.u32 %v2776, 7
      %v2778 = vsub.s32 1, %v2777
      %v2779 = vrot.slane %v2526, %v2778
      %v2780 = vmul.f32 %v2716, %v2779
      %v2781 = vmul.f32 %v2717, %v2779
      %v2782 = vmul.f32 %v2718, %v2779
      %v2783 = vmul.f32 %v2719, %v2779
      %v2784 = vmul.f32 %v2720, %v2779
      %v2785 = vmul.f32 %v2721, %v2779
      %v2786 = vmul.f32 %v2722, %v2779
      %v2787 = vmul.f32 %v2723, %v2779
      %v2788 = vmul.f32 %v2724, %v2779
      %v2789 = vmul.f32 %v2725, %v2779
      %v2790 = vmul.f32 %v2726, %v2779
      %v2791 = vmul.f32 %v2727, %v2779
      %v2792 = vmul.f32 %v2728, %v2779
      %v2793 = vmul.f32 %v2729, %v2779
      %v2794 = vmul.f32 %v2730, %v2779
      %v2795 = vmul.f32 %v2731, %v2779
      %v2796 = vmul.f32 %v2732, %v2779
      %v2797 = vmul.f32 %v2733, %v2779
      %v2798 = vmul.f32 %v2734, %v2779
      %v2799 = vmul.f32 %v2735, %v2779
      %v2800 = vmul.f32 %v2736, %v2779
      %v2801 = vmul.f32 %v2737, %v2779
      %v2802 = vmul.f32 %v2738, %v2779
      %v2803 = vmul.f32 %v2739, %v2779
      %v2804 = vmul.f32 %v2740, %v2779
      %v2805 = vmul.f32 %v2741, %v2779
      %v2806 = vmul.f32 %v2742, %v2779
      %v2807 = vmul.f32 %v2743, %v2779
      %v2808 = vmul.f32 %v2744, %v2779
      %v2809 = vmul.f32 %v2745, %v2779
      %v2810 = vadd.f32 %v2746, %v2780
      %v2811 = vadd.f32 %v2747, %v2781
      %v2812 = vadd.f32 %v2748, %v2782
      %v2813 = vadd.f32 %v2749, %v2783
      %v2814 = vadd.f32 %v2750, %v2784
      %v2815 = vadd.f32 %v2751, %v2785
      %v2816 = vadd.f32 %v2752, %v2786
      %v2817 = vadd.f32 %v2753, %v2787
      %v2818 = vadd.f32 %v2754, %v2788
      %v2819 = vadd.f32 %v2755, %v2789
      %v2820 = vadd.f32 %v2756, %v2790
      %v2821 = vadd.f32 %v2757, %v2791
      %v2822 = vadd.f32 %v2758, %v2792
      %v2823 = vadd.f32 %v2759, %v2793
      %v2824 = vadd.f32 %v2760, %v2794
      %v2825 = vadd.f32 %v2761, %v2795
      %v2826 = vadd.f32 %v2762, %v2796
      %v2827 = vadd.f32 %v2763, %v2797
      %v2828 = vadd.f32 %v2764, %v2798
      %v2829 = vadd.f32 %v2765, %v2799
      %v2830 = vadd.f32 %v2766, %v2800
      %v2831 = vadd.f32 %v2767, %v2801
      %v2832 = vadd.f32 %v2768, %v2802
      %v2833 = vadd.f32 %v2769, %v2803
      %v2834 = vadd.f32 %v2770, %v2804
      %v2835 = vadd.f32 %v2771, %v2805
      %v2836 = vadd.f32 %v2772, %v2806
      %v2837 = vadd.f32 %v2773, %v2807
      %v2838 = vadd.f32 %v2774, %v2808
      %v2839 = vadd.f32 %v2775, %v2809
      %2840 = vst.msk [vmem:[%s2590] sm:$0xff] %vm749, %v2810
      %2841 = vst.msk [vmem:[%s2590 + $0x8] sm:$0xff] %vm749, %v2811
      %2842 = vst.msk [vmem:[%s2590 + $0x10] sm:$0xff] %vm749, %v2812
      %2843 = vst.msk [vmem:[%s2590 + $0x18] sm:$0xff] %vm749, %v2813
      %2844 = vst.msk [vmem:[%s2590 + $0x20] sm:$0xff] %vm749, %v2814
      %2845 = vst.msk [vmem:[%s2590 + $0x28] sm:$0xff] %vm749, %v2815
      %2846 = vst.msk [vmem:[%s2590 + $0x30] sm:$0xff] %vm749, %v2816
      %2847 = vst.msk [vmem:[%s2590 + $0x38] sm:$0xff] %vm749, %v2817
      %2848 = vst.msk [vmem:[%s2590 + $0x40] sm:$0xff] %vm749, %v2818
      %2849 = vst.msk [vmem:[%s2590 + $0x48] sm:$0xff] %vm749, %v2819
      %2850 = vst.msk [vmem:[%s2590 + $0x50] sm:$0xff] %vm749, %v2820
      %2851 = vst.msk [vmem:[%s2590 + $0x58] sm:$0xff] %vm749, %v2821
      %2852 = vst.msk [vmem:[%s2590 + $0x60] sm:$0xff] %vm749, %v2822
      %2853 = vst.msk [vmem:[%s2590 + $0x68] sm:$0xff] %vm749, %v2823
      %2854 = vst.msk [vmem:[%s2590 + $0x70] sm:$0xff] %vm749, %v2824
      %2855 = vst.msk [vmem:[%s2590 + $0x78] sm:$0xff] %vm749, %v2825
      %2856 = vst.msk [vmem:[%s2590 + $0x80] sm:$0xff] %vm749, %v2826
      %2857 = vst.msk [vmem:[%s2590 + $0x88] sm:$0xff] %vm749, %v2827
      %2858 = vst.msk [vmem:[%s2590 + $0x90] sm:$0xff] %vm749, %v2828
      %2859 = vst.msk [vmem:[%s2590 + $0x98] sm:$0xff] %vm749, %v2829
      %2860 = vst.msk [vmem:[%s2590 + $0xa0] sm:$0xff] %vm749, %v2830
      %2861 = vst.msk [vmem:[%s2590 + $0xa8] sm:$0xff] %vm749, %v2831
      %2862 = vst.msk [vmem:[%s2590 + $0xb0] sm:$0xff] %vm749, %v2832
      %2863 = vst.msk [vmem:[%s2590 + $0xb8] sm:$0xff] %vm749, %v2833
      %2864 = vst.msk [vmem:[%s2590 + $0xc0] sm:$0xff] %vm749, %v2834
      %2865 = vst.msk [vmem:[%s2590 + $0xc8] sm:$0xff] %vm749, %v2835
      %2866 = vst.msk [vmem:[%s2590 + $0xd0] sm:$0xff] %vm749, %v2836
      %2867 = vst.msk [vmem:[%s2590 + $0xd8] sm:$0xff] %vm749, %v2837
      %2868 = vst.msk [vmem:[%s2590 + $0xe0] sm:$0xff] %vm749, %v2838
      %2869 = vst.msk [vmem:[%s2590 + $0xe8] sm:$0xff] %vm749, %v2839
      %v2870 = vld [vmem:[#allocation7 + $0x1] sm:$0xff]
      %v2871 = vld [vmem:[#allocation7 + $0x9] sm:$0x7f]
      %v2872 = vld [vmem:[#allocation7 + $0x11] sm:$0xff]
      %v2873 = vld [vmem:[#allocation7 + $0x19] sm:$0x7f]
      %v2874 = vld [vmem:[#allocation7 + $0x21] sm:$0xff]
      %v2875 = vld [vmem:[#allocation7 + $0x29] sm:$0x7f]
      %v2876 = vld [vmem:[#allocation7 + $0x31] sm:$0xff]
      %v2877 = vld [vmem:[#allocation7 + $0x39] sm:$0x7f]
      %v2878 = vld [vmem:[#allocation7 + $0x41] sm:$0xff]
      %v2879 = vld [vmem:[#allocation7 + $0x49] sm:$0x7f]
      %v2880 = vld [vmem:[#allocation7 + $0x51] sm:$0xff]
      %v2881 = vld [vmem:[#allocation7 + $0x59] sm:$0x7f]
      %v2882 = vld [vmem:[#allocation7 + $0x61] sm:$0xff]
      %v2883 = vld [vmem:[#allocation7 + $0x69] sm:$0x7f]
      %v2884 = vld [vmem:[#allocation7 + $0x71] sm:$0xff]
      %v2885 = vld [vmem:[#allocation7 + $0x79] sm:$0x7f]
      %v2886 = vld [vmem:[#allocation7 + $0x81] sm:$0xff]
      %v2887 = vld [vmem:[#allocation7 + $0x89] sm:$0x7f]
      %v2888 = vld [vmem:[#allocation7 + $0x91] sm:$0xff]
      %v2889 = vld [vmem:[#allocation7 + $0x99] sm:$0x7f]
      %v2890 = vld [vmem:[#allocation7 + $0xa1] sm:$0xff]
      %v2891 = vld [vmem:[#allocation7 + $0xa9] sm:$0x7f]
      %v2892 = vld [vmem:[#allocation7 + $0xb1] sm:$0xff]
      %v2893 = vld [vmem:[#allocation7 + $0xb9] sm:$0x7f]
      %v2894 = vld [vmem:[#allocation7 + $0xc1] sm:$0xff]
      %v2895 = vld [vmem:[#allocation7 + $0xc9] sm:$0x7f]
      %v2896 = vld [vmem:[#allocation7 + $0xd1] sm:$0xff]
      %v2897 = vld [vmem:[#allocation7 + $0xd9] sm:$0x7f]
      %v2898 = vld [vmem:[#allocation7 + $0xe1] sm:$0xff]
      %v2899 = vld [vmem:[#allocation7 + $0xe9] sm:$0x7f]
      %v2900 = vld [vmem:[%s2590] sm:$0xff]
      %v2901 = vld [vmem:[%s2590 + $0x8] sm:$0x7f]
      %v2902 = vld [vmem:[%s2590 + $0x10] sm:$0xff]
      %v2903 = vld [vmem:[%s2590 + $0x18] sm:$0x7f]
      %v2904 = vld [vmem:[%s2590 + $0x20] sm:$0xff]
      %v2905 = vld [vmem:[%s2590 + $0x28] sm:$0x7f]
      %v2906 = vld [vmem:[%s2590 + $0x30] sm:$0xff]
      %v2907 = vld [vmem:[%s2590 + $0x38] sm:$0x7f]
      %v2908 = vld [vmem:[%s2590 + $0x40] sm:$0xff]
      %v2909 = vld [vmem:[%s2590 + $0x48] sm:$0x7f]
      %v2910 = vld [vmem:[%s2590 + $0x50] sm:$0xff]
      %v2911 = vld [vmem:[%s2590 + $0x58] sm:$0x7f]
      %v2912 = vld [vmem:[%s2590 + $0x60] sm:$0xff]
      %v2913 = vld [vmem:[%s2590 + $0x68] sm:$0x7f]
      %v2914 = vld [vmem:[%s2590 + $0x70] sm:$0xff]
      %v2915 = vld [vmem:[%s2590 + $0x78] sm:$0x7f]
      %v2916 = vld [vmem:[%s2590 + $0x80] sm:$0xff]
      %v2917 = vld [vmem:[%s2590 + $0x88] sm:$0x7f]
      %v2918 = vld [vmem:[%s2590 + $0x90] sm:$0xff]
      %v2919 = vld [vmem:[%s2590 + $0x98] sm:$0x7f]
      %v2920 = vld [vmem:[%s2590 + $0xa0] sm:$0xff]
      %v2921 = vld [vmem:[%s2590 + $0xa8] sm:$0x7f]
      %v2922 = vld [vmem:[%s2590 + $0xb0] sm:$0xff]
      %v2923 = vld [vmem:[%s2590 + $0xb8] sm:$0x7f]
      %v2924 = vld [vmem:[%s2590 + $0xc0] sm:$0xff]
      %v2925 = vld [vmem:[%s2590 + $0xc8] sm:$0x7f]
      %v2926 = vld [vmem:[%s2590 + $0xd0] sm:$0xff]
      %v2927 = vld [vmem:[%s2590 + $0xd8] sm:$0x7f]
      %v2928 = vld [vmem:[%s2590 + $0xe0] sm:$0xff]
      %v2929 = vld [vmem:[%s2590 + $0xe8] sm:$0x7f]
      %v2930 = vlaneseq
      %v2931 = vshrl.u32 %v2930, 7
      %v2932 = vsub.s32 2, %v2931
      %v2933 = vrot.slane %v2526, %v2932
      %v2934 = vmul.f32 %v2870, %v2933
      %v2935 = vmul.f32 %v2871, %v2933
      %v2936 = vmul.f32 %v2872, %v2933
      %v2937 = vmul.f32 %v2873, %v2933
      %v2938 = vmul.f32 %v2874, %v2933
      %v2939 = vmul.f32 %v2875, %v2933
      %v2940 = vmul.f32 %v2876, %v2933
      %v2941 = vmul.f32 %v2877, %v2933
      %v2942 = vmul.f32 %v2878, %v2933
      %v2943 = vmul.f32 %v2879, %v2933
      %v2944 = vmul.f32 %v2880, %v2933
      %v2945 = vmul.f32 %v2881, %v2933
      %v2946 = vmul.f32 %v2882, %v2933
      %v2947 = vmul.f32 %v2883, %v2933
      %v2948 = vmul.f32 %v2884, %v2933
      %v2949 = vmul.f32 %v2885, %v2933
      %v2950 = vmul.f32 %v2886, %v2933
      %v2951 = vmul.f32 %v2887, %v2933
      %v2952 = vmul.f32 %v2888, %v2933
      %v2953 = vmul.f32 %v2889, %v2933
      %v2954 = vmul.f32 %v2890, %v2933
      %v2955 = vmul.f32 %v2891, %v2933
      %v2956 = vmul.f32 %v2892, %v2933
      %v2957 = vmul.f32 %v2893, %v2933
      %v2958 = vmul.f32 %v2894, %v2933
      %v2959 = vmul.f32 %v2895, %v2933
      %v2960 = vmul.f32 %v2896, %v2933
      %v2961 = vmul.f32 %v2897, %v2933
      %v2962 = vmul.f32 %v2898, %v2933
      %v2963 = vmul.f32 %v2899, %v2933
      %v2964 = vadd.f32 %v2900, %v2934
      %v2965 = vadd.f32 %v2901, %v2935
      %v2966 = vadd.f32 %v2902, %v2936
      %v2967 = vadd.f32 %v2903, %v2937
      %v2968 = vadd.f32 %v2904, %v2938
      %v2969 = vadd.f32 %v2905, %v2939
      %v2970 = vadd.f32 %v2906, %v2940
      %v2971 = vadd.f32 %v2907, %v2941
      %v2972 = vadd.f32 %v2908, %v2942
      %v2973 = vadd.f32 %v2909, %v2943
      %v2974 = vadd.f32 %v2910, %v2944
      %v2975 = vadd.f32 %v2911, %v2945
      %v2976 = vadd.f32 %v2912, %v2946
      %v2977 = vadd.f32 %v2913, %v2947
      %v2978 = vadd.f32 %v2914, %v2948
      %v2979 = vadd.f32 %v2915, %v2949
      %v2980 = vadd.f32 %v2916, %v2950
      %v2981 = vadd.f32 %v2917, %v2951
      %v2982 = vadd.f32 %v2918, %v2952
      %v2983 = vadd.f32 %v2919, %v2953
      %v2984 = vadd.f32 %v2920, %v2954
      %v2985 = vadd.f32 %v2921, %v2955
      %v2986 = vadd.f32 %v2922, %v2956
      %v2987 = vadd.f32 %v2923, %v2957
      %v2988 = vadd.f32 %v2924, %v2958
      %v2989 = vadd.f32 %v2925, %v2959
      %v2990 = vadd.f32 %v2926, %v2960
      %v2991 = vadd.f32 %v2927, %v2961
      %v2992 = vadd.f32 %v2928, %v2962
      %v2993 = vadd.f32 %v2929, %v2963
      %2994 = vst.msk [vmem:[%s2590] sm:$0xff] %vm749, %v2964
      %2995 = vst.msk [vmem:[%s2590 + $0x8] sm:$0x7f] %vm2686, %v2965
      %2996 = vst.msk [vmem:[%s2590 + $0x10] sm:$0xff] %vm749, %v2966
      %2997 = vst.msk [vmem:[%s2590 + $0x18] sm:$0x7f] %vm2686, %v2967
      %2998 = vst.msk [vmem:[%s2590 + $0x20] sm:$0xff] %vm749, %v2968
      %2999 = vst.msk [vmem:[%s2590 + $0x28] sm:$0x7f] %vm2686, %v2969
      %3000 = vst.msk [vmem:[%s2590 + $0x30] sm:$0xff] %vm749, %v2970
      %3001 = vst.msk [vmem:[%s2590 + $0x38] sm:$0x7f] %vm2686, %v2971
      %3002 = vst.msk [vmem:[%s2590 + $0x40] sm:$0xff] %vm749, %v2972
      %3003 = vst.msk [vmem:[%s2590 + $0x48] sm:$0x7f] %vm2686, %v2973
      %3004 = vst.msk [vmem:[%s2590 + $0x50] sm:$0xff] %vm749, %v2974
      %3005 = vst.msk [vmem:[%s2590 + $0x58] sm:$0x7f] %vm2686, %v2975
      %3006 = vst.msk [vmem:[%s2590 + $0x60] sm:$0xff] %vm749, %v2976
      %3007 = vst.msk [vmem:[%s2590 + $0x68] sm:$0x7f] %vm2686, %v2977
      %3008 = vst.msk [vmem:[%s2590 + $0x70] sm:$0xff] %vm749, %v2978
      %3009 = vst.msk [vmem:[%s2590 + $0x78] sm:$0x7f] %vm2686, %v2979
      %3010 = vst.msk [vmem:[%s2590 + $0x80] sm:$0xff] %vm749, %v2980
      %3011 = vst.msk [vmem:[%s2590 + $0x88] sm:$0x7f] %vm2686, %v2981
      %3012 = vst.msk [vmem:[%s2590 + $0x90] sm:$0xff] %vm749, %v2982
      %3013 = vst.msk [vmem:[%s2590 + $0x98] sm:$0x7f] %vm2686, %v2983
      %3014 = vst.msk [vmem:[%s2590 + $0xa0] sm:$0xff] %vm749, %v2984
      %3015 = vst.msk [vmem:[%s2590 + $0xa8] sm:$0x7f] %vm2686, %v2985
      %3016 = vst.msk [vmem:[%s2590 + $0xb0] sm:$0xff] %vm749, %v2986
      %3017 = vst.msk [vmem:[%s2590 + $0xb8] sm:$0x7f] %vm2686, %v2987
      %3018 = vst.msk [vmem:[%s2590 + $0xc0] sm:$0xff] %vm749, %v2988
      %3019 = vst.msk [vmem:[%s2590 + $0xc8] sm:$0x7f] %vm2686, %v2989
      %3020 = vst.msk [vmem:[%s2590 + $0xd0] sm:$0xff] %vm749, %v2990
      %3021 = vst.msk [vmem:[%s2590 + $0xd8] sm:$0x7f] %vm2686, %v2991
      %3022 = vst.msk [vmem:[%s2590 + $0xe0] sm:$0xff] %vm749, %v2992
      %3023 = vst.msk [vmem:[%s2590 + $0xe8] sm:$0x7f] %vm2686, %v2993
      %v3024 = vld [vmem:[#allocation7] sm:$0xff]
      %v3025 = vld [vmem:[#allocation7 + $0x8] sm:$0x7f]
      %v3026 = vld [vmem:[#allocation7 + $0x10] sm:$0xff]
      %v3027 = vld [vmem:[#allocation7 + $0x18] sm:$0x7f]
      %v3028 = vld [vmem:[#allocation7 + $0x20] sm:$0xff]
      %v3029 = vld [vmem:[#allocation7 + $0x28] sm:$0x7f]
      %v3030 = vld [vmem:[#allocation7 + $0x30] sm:$0xff]
      %v3031 = vld [vmem:[#allocation7 + $0x38] sm:$0x7f]
      %v3032 = vld [vmem:[#allocation7 + $0x40] sm:$0xff]
      %v3033 = vld [vmem:[#allocation7 + $0x48] sm:$0x7f]
      %v3034 = vld [vmem:[#allocation7 + $0x50] sm:$0xff]
      %v3035 = vld [vmem:[#allocation7 + $0x58] sm:$0x7f]
      %v3036 = vld [vmem:[#allocation7 + $0x60] sm:$0xff]
      %v3037 = vld [vmem:[#allocation7 + $0x68] sm:$0x7f]
      %v3038 = vld [vmem:[#allocation7 + $0x70] sm:$0xff]
      %v3039 = vld [vmem:[#allocation7 + $0x78] sm:$0x7f]
      %v3040 = vld [vmem:[#allocation7 + $0x80] sm:$0xff]
      %v3041 = vld [vmem:[#allocation7 + $0x88] sm:$0x7f]
      %v3042 = vld [vmem:[#allocation7 + $0x90] sm:$0xff]
      %v3043 = vld [vmem:[#allocation7 + $0x98] sm:$0x7f]
      %v3044 = vld [vmem:[#allocation7 + $0xa0] sm:$0xff]
      %v3045 = vld [vmem:[#allocation7 + $0xa8] sm:$0x7f]
      %v3046 = vld [vmem:[#allocation7 + $0xb0] sm:$0xff]
      %v3047 = vld [vmem:[#allocation7 + $0xb8] sm:$0x7f]
      %v3048 = vld [vmem:[#allocation7 + $0xc0] sm:$0xff]
      %v3049 = vld [vmem:[#allocation7 + $0xc8] sm:$0x7f]
      %v3050 = vld [vmem:[#allocation7 + $0xd0] sm:$0xff]
      %v3051 = vld [vmem:[#allocation7 + $0xd8] sm:$0x7f]
      %v3052 = vld [vmem:[#allocation7 + $0xe0] sm:$0xff]
      %v3053 = vld [vmem:[#allocation7 + $0xe8] sm:$0x7f]
      %v3054 = vld [vmem:[#allocation7 + $0xf0] sm:$0xff]
      %v3055 = vld [vmem:[#allocation7 + $0xf8] sm:$0x7f]
      %v3056 = vld [vmem:[#allocation9 + $0x1] sm:$0xff]
      %v3057 = vld [vmem:[#allocation9 + $0x9] sm:$0x7f]
      %v3058 = vld [vmem:[#allocation9 + $0x11] sm:$0xff]
      %v3059 = vld [vmem:[#allocation9 + $0x19] sm:$0x7f]
      %v3060 = vld [vmem:[#allocation9 + $0x21] sm:$0xff]
      %v3061 = vld [vmem:[#allocation9 + $0x29] sm:$0x7f]
      %v3062 = vld [vmem:[#allocation9 + $0x31] sm:$0xff]
      %v3063 = vld [vmem:[#allocation9 + $0x39] sm:$0x7f]
      %v3064 = vld [vmem:[#allocation9 + $0x41] sm:$0xff]
      %v3065 = vld [vmem:[#allocation9 + $0x49] sm:$0x7f]
      %v3066 = vld [vmem:[#allocation9 + $0x51] sm:$0xff]
      %v3067 = vld [vmem:[#allocation9 + $0x59] sm:$0x7f]
      %v3068 = vld [vmem:[#allocation9 + $0x61] sm:$0xff]
      %v3069 = vld [vmem:[#allocation9 + $0x69] sm:$0x7f]
      %v3070 = vld [vmem:[#allocation9 + $0x71] sm:$0xff]
      %v3071 = vld [vmem:[#allocation9 + $0x79] sm:$0x7f]
      %v3072 = vld [vmem:[#allocation9 + $0x81] sm:$0xff]
      %v3073 = vld [vmem:[#allocation9 + $0x89] sm:$0x7f]
      %v3074 = vld [vmem:[#allocation9 + $0x91] sm:$0xff]
      %v3075 = vld [vmem:[#allocation9 + $0x99] sm:$0x7f]
      %v3076 = vld [vmem:[#allocation9 + $0xa1] sm:$0xff]
      %v3077 = vld [vmem:[#allocation9 + $0xa9] sm:$0x7f]
      %v3078 = vld [vmem:[#allocation9 + $0xb1] sm:$0xff]
      %v3079 = vld [vmem:[#allocation9 + $0xb9] sm:$0x7f]
      %v3080 = vld [vmem:[#allocation9 + $0xc1] sm:$0xff]
      %v3081 = vld [vmem:[#allocation9 + $0xc9] sm:$0x7f]
      %v3082 = vld [vmem:[#allocation9 + $0xd1] sm:$0xff]
      %v3083 = vld [vmem:[#allocation9 + $0xd9] sm:$0x7f]
      %v3084 = vld [vmem:[#allocation9 + $0xe1] sm:$0xff]
      %v3085 = vld [vmem:[#allocation9 + $0xe9] sm:$0x7f]
      %v3086 = vld [vmem:[#allocation9 + $0xf1] sm:$0xff]
      %v3087 = vld [vmem:[#allocation9 + $0xf9] sm:$0x7f]
      %v3088 = vlaneseq
      %v3089 = vshrl.u32 %v3088, 7
      %v3090 = vsub.s32 3, %v3089
      %v3091 = vrot.slane %v2526, %v3090
      %v3092 = vmul.f32 %v3024, %v3091
      %v3093 = vmul.f32 %v3025, %v3091
      %v3094 = vmul.f32 %v3026, %v3091
      %v3095 = vmul.f32 %v3027, %v3091
      %v3096 = vmul.f32 %v3028, %v3091
      %v3097 = vmul.f32 %v3029, %v3091
      %v3098 = vmul.f32 %v3030, %v3091
      %v3099 = vmul.f32 %v3031, %v3091
      %v3100 = vmul.f32 %v3032, %v3091
      %v3101 = vmul.f32 %v3033, %v3091
      %v3102 = vmul.f32 %v3034, %v3091
      %v3103 = vmul.f32 %v3035, %v3091
      %v3104 = vmul.f32 %v3036, %v3091
      %v3105 = vmul.f32 %v3037, %v3091
      %v3106 = vmul.f32 %v3038, %v3091
      %v3107 = vmul.f32 %v3039, %v3091
      %v3108 = vmul.f32 %v3040, %v3091
      %v3109 = vmul.f32 %v3041, %v3091
      %v3110 = vmul.f32 %v3042, %v3091
      %v3111 = vmul.f32 %v3043, %v3091
      %v3112 = vmul.f32 %v3044, %v3091
      %v3113 = vmul.f32 %v3045, %v3091
      %v3114 = vmul.f32 %v3046, %v3091
      %v3115 = vmul.f32 %v3047, %v3091
      %v3116 = vmul.f32 %v3048, %v3091
      %v3117 = vmul.f32 %v3049, %v3091
      %v3118 = vmul.f32 %v3050, %v3091
      %v3119 = vmul.f32 %v3051, %v3091
      %v3120 = vmul.f32 %v3052, %v3091
      %v3121 = vmul.f32 %v3053, %v3091
      %v3122 = vmul.f32 %v3054, %v3091
      %v3123 = vmul.f32 %v3055, %v3091
      %v3124 = vadd.f32 %v3056, %v3092
      %v3125 = vadd.f32 %v3057, %v3093
      %v3126 = vadd.f32 %v3058, %v3094
      %v3127 = vadd.f32 %v3059, %v3095
      %v3128 = vadd.f32 %v3060, %v3096
      %v3129 = vadd.f32 %v3061, %v3097
      %v3130 = vadd.f32 %v3062, %v3098
      %v3131 = vadd.f32 %v3063, %v3099
      %v3132 = vadd.f32 %v3064, %v3100
      %v3133 = vadd.f32 %v3065, %v3101
      %v3134 = vadd.f32 %v3066, %v3102
      %v3135 = vadd.f32 %v3067, %v3103
      %v3136 = vadd.f32 %v3068, %v3104
      %v3137 = vadd.f32 %v3069, %v3105
      %v3138 = vadd.f32 %v3070, %v3106
      %v3139 = vadd.f32 %v3071, %v3107
      %v3140 = vadd.f32 %v3072, %v3108
      %v3141 = vadd.f32 %v3073, %v3109
      %v3142 = vadd.f32 %v3074, %v3110
      %v3143 = vadd.f32 %v3075, %v3111
      %v3144 = vadd.f32 %v3076, %v3112
      %v3145 = vadd.f32 %v3077, %v3113
      %v3146 = vadd.f32 %v3078, %v3114
      %v3147 = vadd.f32 %v3079, %v3115
      %v3148 = vadd.f32 %v3080, %v3116
      %v3149 = vadd.f32 %v3081, %v3117
      %v3150 = vadd.f32 %v3082, %v3118
      %v3151 = vadd.f32 %v3083, %v3119
      %v3152 = vadd.f32 %v3084, %v3120
      %v3153 = vadd.f32 %v3085, %v3121
      %v3154 = vadd.f32 %v3086, %v3122
      %v3155 = vadd.f32 %v3087, %v3123
      %3156 = vst.msk [vmem:[#allocation9 + $0x1] sm:$0xff] %vm749, %v3124
      %3157 = vst.msk [vmem:[#allocation9 + $0x9] sm:$0x7f] %vm2686, %v3125
      %3158 = vst.msk [vmem:[#allocation9 + $0x11] sm:$0xff] %vm749, %v3126
      %3159 = vst.msk [vmem:[#allocation9 + $0x19] sm:$0x7f] %vm2686, %v3127
      %3160 = vst.msk [vmem:[#allocation9 + $0x21] sm:$0xff] %vm749, %v3128
      %3161 = vst.msk [vmem:[#allocation9 + $0x29] sm:$0x7f] %vm2686, %v3129
      %3162 = vst.msk [vmem:[#allocation9 + $0x31] sm:$0xff] %vm749, %v3130
      %3163 = vst.msk [vmem:[#allocation9 + $0x39] sm:$0x7f] %vm2686, %v3131
      %3164 = vst.msk [vmem:[#allocation9 + $0x41] sm:$0xff] %vm749, %v3132
      %3165 = vst.msk [vmem:[#allocation9 + $0x49] sm:$0x7f] %vm2686, %v3133
      %3166 = vst.msk [vmem:[#allocation9 + $0x51] sm:$0xff] %vm749, %v3134
      %3167 = vst.msk [vmem:[#allocation9 + $0x59] sm:$0x7f] %vm2686, %v3135
      %3168 = vst.msk [vmem:[#allocation9 + $0x61] sm:$0xff] %vm749, %v3136
      %3169 = vst.msk [vmem:[#allocation9 + $0x69] sm:$0x7f] %vm2686, %v3137
      %3170 = vst.msk [vmem:[#allocation9 + $0x71] sm:$0xff] %vm749, %v3138
      %3171 = vst.msk [vmem:[#allocation9 + $0x79] sm:$0x7f] %vm2686, %v3139
      %3172 = vst.msk [vmem:[#allocation9 + $0x81] sm:$0xff] %vm749, %v3140
      %3173 = vst.msk [vmem:[#allocation9 + $0x89] sm:$0x7f] %vm2686, %v3141
      %3174 = vst.msk [vmem:[#allocation9 + $0x91] sm:$0xff] %vm749, %v3142
      %3175 = vst.msk [vmem:[#allocation9 + $0x99] sm:$0x7f] %vm2686, %v3143
      %3176 = vst.msk [vmem:[#allocation9 + $0xa1] sm:$0xff] %vm749, %v3144
      %3177 = vst.msk [vmem:[#allocation9 + $0xa9] sm:$0x7f] %vm2686, %v3145
      %3178 = vst.msk [vmem:[#allocation9 + $0xb1] sm:$0xff] %vm749, %v3146
      %3179 = vst.msk [vmem:[#allocation9 + $0xb9] sm:$0x7f] %vm2686, %v3147
      %3180 = vst.msk [vmem:[#allocation9 + $0xc1] sm:$0xff] %vm749, %v3148
      %3181 = vst.msk [vmem:[#allocation9 + $0xc9] sm:$0x7f] %vm2686, %v3149
      %3182 = vst.msk [vmem:[#allocation9 + $0xd1] sm:$0xff] %vm749, %v3150
      %3183 = vst.msk [vmem:[#allocation9 + $0xd9] sm:$0x7f] %vm2686, %v3151
      %3184 = vst.msk [vmem:[#allocation9 + $0xe1] sm:$0xff] %vm749, %v3152
      %3185 = vst.msk [vmem:[#allocation9 + $0xe9] sm:$0x7f] %vm2686, %v3153
      %3186 = vst.msk [vmem:[#allocation9 + $0xf1] sm:$0xff] %vm749, %v3154
      %3187 = vst.msk [vmem:[#allocation9 + $0xf9] sm:$0x7f] %vm2686, %v3155
      %v3188 = vld [vmem:[#allocation7] sm:$0xff]
      %v3189 = vld [vmem:[#allocation7 + $0x8] sm:$0xff]
      %v3190 = vld [vmem:[#allocation7 + $0x10] sm:$0xff]
      %v3191 = vld [vmem:[#allocation7 + $0x18] sm:$0xff]
      %v3192 = vld [vmem:[#allocation7 + $0x20] sm:$0xff]
      %v3193 = vld [vmem:[#allocation7 + $0x28] sm:$0xff]
      %v3194 = vld [vmem:[#allocation7 + $0x30] sm:$0xff]
      %v3195 = vld [vmem:[#allocation7 + $0x38] sm:$0xff]
      %v3196 = vld [vmem:[#allocation7 + $0x40] sm:$0xff]
      %v3197 = vld [vmem:[#allocation7 + $0x48] sm:$0xff]
      %v3198 = vld [vmem:[#allocation7 + $0x50] sm:$0xff]
      %v3199 = vld [vmem:[#allocation7 + $0x58] sm:$0xff]
      %v3200 = vld [vmem:[#allocation7 + $0x60] sm:$0xff]
      %v3201 = vld [vmem:[#allocation7 + $0x68] sm:$0xff]
      %v3202 = vld [vmem:[#allocation7 + $0x70] sm:$0xff]
      %v3203 = vld [vmem:[#allocation7 + $0x78] sm:$0xff]
      %v3204 = vld [vmem:[#allocation7 + $0x80] sm:$0xff]
      %v3205 = vld [vmem:[#allocation7 + $0x88] sm:$0xff]
      %v3206 = vld [vmem:[#allocation7 + $0x90] sm:$0xff]
      %v3207 = vld [vmem:[#allocation7 + $0x98] sm:$0xff]
      %v3208 = vld [vmem:[#allocation7 + $0xa0] sm:$0xff]
      %v3209 = vld [vmem:[#allocation7 + $0xa8] sm:$0xff]
      %v3210 = vld [vmem:[#allocation7 + $0xb0] sm:$0xff]
      %v3211 = vld [vmem:[#allocation7 + $0xb8] sm:$0xff]
      %v3212 = vld [vmem:[#allocation7 + $0xc0] sm:$0xff]
      %v3213 = vld [vmem:[#allocation7 + $0xc8] sm:$0xff]
      %v3214 = vld [vmem:[#allocation7 + $0xd0] sm:$0xff]
      %v3215 = vld [vmem:[#allocation7 + $0xd8] sm:$0xff]
      %v3216 = vld [vmem:[#allocation7 + $0xe0] sm:$0xff]
      %v3217 = vld [vmem:[#allocation7 + $0xe8] sm:$0xff]
      %v3218 = vld [vmem:[#allocation7 + $0xf0] sm:$0xff]
      %v3219 = vld [vmem:[#allocation7 + $0xf8] sm:$0xff]
      %v3220 = vld [vmem:[#allocation9] sm:$0xff]
      %v3221 = vld [vmem:[#allocation9 + $0x8] sm:$0xff]
      %v3222 = vld [vmem:[#allocation9 + $0x10] sm:$0xff]
      %v3223 = vld [vmem:[#allocation9 + $0x18] sm:$0xff]
      %v3224 = vld [vmem:[#allocation9 + $0x20] sm:$0xff]
      %v3225 = vld [vmem:[#allocation9 + $0x28] sm:$0xff]
      %v3226 = vld [vmem:[#allocation9 + $0x30] sm:$0xff]
      %v3227 = vld [vmem:[#allocation9 + $0x38] sm:$0xff]
      %v3228 = vld [vmem:[#allocation9 + $0x40] sm:$0xff]
      %v3229 = vld [vmem:[#allocation9 + $0x48] sm:$0xff]
      %v3230 = vld [vmem:[#allocation9 + $0x50] sm:$0xff]
      %v3231 = vld [vmem:[#allocation9 + $0x58] sm:$0xff]
      %v3232 = vld [vmem:[#allocation9 + $0x60] sm:$0xff]
      %v3233 = vld [vmem:[#allocation9 + $0x68] sm:$0xff]
      %v3234 = vld [vmem:[#allocation9 + $0x70] sm:$0xff]
      %v3235 = vld [vmem:[#allocation9 + $0x78] sm:$0xff]
      %v3236 = vld [vmem:[#allocation9 + $0x80] sm:$0xff]
      %v3237 = vld [vmem:[#allocation9 + $0x88] sm:$0xff]
      %v3238 = vld [vmem:[#allocation9 + $0x90] sm:$0xff]
      %v3239 = vld [vmem:[#allocation9 + $0x98] sm:$0xff]
      %v3240 = vld [vmem:[#allocation9 + $0xa0] sm:$0xff]
      %v3241 = vld [vmem:[#allocation9 + $0xa8] sm:$0xff]
      %v3242 = vld [vmem:[#allocation9 + $0xb0] sm:$0xff]
      %v3243 = vld [vmem:[#allocation9 + $0xb8] sm:$0xff]
      %v3244 = vld [vmem:[#allocation9 + $0xc0] sm:$0xff]
      %v3245 = vld [vmem:[#allocation9 + $0xc8] sm:$0xff]
      %v3246 = vld [vmem:[#allocation9 + $0xd0] sm:$0xff]
      %v3247 = vld [vmem:[#allocation9 + $0xd8] sm:$0xff]
      %v3248 = vld [vmem:[#allocation9 + $0xe0] sm:$0xff]
      %v3249 = vld [vmem:[#allocation9 + $0xe8] sm:$0xff]
      %v3250 = vld [vmem:[#allocation9 + $0xf0] sm:$0xff]
      %v3251 = vld [vmem:[#allocation9 + $0xf8] sm:$0xff]
      %v3252 = vlaneseq
      %v3253 = vshrl.u32 %v3252, 7
      %v3254 = vsub.s32 4, %v3253
      %v3255 = vrot.slane %v2526, %v3254
      %v3256 = vmul.f32 %v3188, %v3255
      %v3257 = vmul.f32 %v3189, %v3255
      %v3258 = vmul.f32 %v3190, %v3255
      %v3259 = vmul.f32 %v3191, %v3255
      %v3260 = vmul.f32 %v3192, %v3255
      %v3261 = vmul.f32 %v3193, %v3255
      %v3262 = vmul.f32 %v3194, %v3255
      %v3263 = vmul.f32 %v3195, %v3255
      %v3264 = vmul.f32 %v3196, %v3255
      %v3265 = vmul.f32 %v3197, %v3255
      %v3266 = vmul.f32 %v3198, %v3255
      %v3267 = vmul.f32 %v3199, %v3255
      %v3268 = vmul.f32 %v3200, %v3255
      %v3269 = vmul.f32 %v3201, %v3255
      %v3270 = vmul.f32 %v3202, %v3255
      %v3271 = vmul.f32 %v3203, %v3255
      %v3272 = vmul.f32 %v3204, %v3255
      %v3273 = vmul.f32 %v3205, %v3255
      %v3274 = vmul.f32 %v3206, %v3255
      %v3275 = vmul.f32 %v3207, %v3255
      %v3276 = vmul.f32 %v3208, %v3255
      %v3277 = vmul.f32 %v3209, %v3255
      %v3278 = vmul.f32 %v3210, %v3255
      %v3279 = vmul.f32 %v3211, %v3255
      %v3280 = vmul.f32 %v3212, %v3255
      %v3281 = vmul.f32 %v3213, %v3255
      %v3282 = vmul.f32 %v3214, %v3255
      %v3283 = vmul.f32 %v3215, %v3255
      %v3284 = vmul.f32 %v3216, %v3255
      %v3285 = vmul.f32 %v3217, %v3255
      %v3286 = vmul.f32 %v3218, %v3255
      %v3287 = vmul.f32 %v3219, %v3255
      %v3288 = vadd.f32 %v3220, %v3256
      %v3289 = vadd.f32 %v3221, %v3257
      %v3290 = vadd.f32 %v3222, %v3258
      %v3291 = vadd.f32 %v3223, %v3259
      %v3292 = vadd.f32 %v3224, %v3260
      %v3293 = vadd.f32 %v3225, %v3261
      %v3294 = vadd.f32 %v3226, %v3262
      %v3295 = vadd.f32 %v3227, %v3263
      %v3296 = vadd.f32 %v3228, %v3264
      %v3297 = vadd.f32 %v3229, %v3265
      %v3298 = vadd.f32 %v3230, %v3266
      %v3299 = vadd.f32 %v3231, %v3267
      %v3300 = vadd.f32 %v3232, %v3268
      %v3301 = vadd.f32 %v3233, %v3269
      %v3302 = vadd.f32 %v3234, %v3270
      %v3303 = vadd.f32 %v3235, %v3271
      %v3304 = vadd.f32 %v3236, %v3272
      %v3305 = vadd.f32 %v3237, %v3273
      %v3306 = vadd.f32 %v3238, %v3274
      %v3307 = vadd.f32 %v3239, %v3275
      %v3308 = vadd.f32 %v3240, %v3276
      %v3309 = vadd.f32 %v3241, %v3277
      %v3310 = vadd.f32 %v3242, %v3278
      %v3311 = vadd.f32 %v3243, %v3279
      %v3312 = vadd.f32 %v3244, %v3280
      %v3313 = vadd.f32 %v3245, %v3281
      %v3314 = vadd.f32 %v3246, %v3282
      %v3315 = vadd.f32 %v3247, %v3283
      %v3316 = vadd.f32 %v3248, %v3284
      %v3317 = vadd.f32 %v3249, %v3285
      %v3318 = vadd.f32 %v3250, %v3286
      %v3319 = vadd.f32 %v3251, %v3287
      %3320 = vst.msk [vmem:[#allocation9] sm:$0xff] %vm749, %v3288
      %3321 = vst.msk [vmem:[#allocation9 + $0x8] sm:$0xff] %vm749, %v3289
      %3322 = vst.msk [vmem:[#allocation9 + $0x10] sm:$0xff] %vm749, %v3290
      %3323 = vst.msk [vmem:[#allocation9 + $0x18] sm:$0xff] %vm749, %v3291
      %3324 = vst.msk [vmem:[#allocation9 + $0x20] sm:$0xff] %vm749, %v3292
      %3325 = vst.msk [vmem:[#allocation9 + $0x28] sm:$0xff] %vm749, %v3293
      %3326 = vst.msk [vmem:[#allocation9 + $0x30] sm:$0xff] %vm749, %v3294
      %3327 = vst.msk [vmem:[#allocation9 + $0x38] sm:$0xff] %vm749, %v3295
      %3328 = vst.msk [vmem:[#allocation9 + $0x40] sm:$0xff] %vm749, %v3296
      %3329 = vst.msk [vmem:[#allocation9 + $0x48] sm:$0xff] %vm749, %v3297
      %3330 = vst.msk [vmem:[#allocation9 + $0x50] sm:$0xff] %vm749, %v3298
      %3331 = vst.msk [vmem:[#allocation9 + $0x58] sm:$0xff] %vm749, %v3299
      %3332 = vst.msk [vmem:[#allocation9 + $0x60] sm:$0xff] %vm749, %v3300
      %3333 = vst.msk [vmem:[#allocation9 + $0x68] sm:$0xff] %vm749, %v3301
      %3334 = vst.msk [vmem:[#allocation9 + $0x70] sm:$0xff] %vm749, %v3302
      %3335 = vst.msk [vmem:[#allocation9 + $0x78] sm:$0xff] %vm749, %v3303
      %3336 = vst.msk [vmem:[#allocation9 + $0x80] sm:$0xff] %vm749, %v3304
      %3337 = vst.msk [vmem:[#allocation9 + $0x88] sm:$0xff] %vm749, %v3305
      %3338 = vst.msk [vmem:[#allocation9 + $0x90] sm:$0xff] %vm749, %v3306
      %3339 = vst.msk [vmem:[#allocation9 + $0x98] sm:$0xff] %vm749, %v3307
      %3340 = vst.msk [vmem:[#allocation9 + $0xa0] sm:$0xff] %vm749, %v3308
      %3341 = vst.msk [vmem:[#allocation9 + $0xa8] sm:$0xff] %vm749, %v3309
      %3342 = vst.msk [vmem:[#allocation9 + $0xb0] sm:$0xff] %vm749, %v3310
      %3343 = vst.msk [vmem:[#allocation9 + $0xb8] sm:$0xff] %vm749, %v3311
      %3344 = vst.msk [vmem:[#allocation9 + $0xc0] sm:$0xff] %vm749, %v3312
      %3345 = vst.msk [vmem:[#allocation9 + $0xc8] sm:$0xff] %vm749, %v3313
      %3346 = vst.msk [vmem:[#allocation9 + $0xd0] sm:$0xff] %vm749, %v3314
      %3347 = vst.msk [vmem:[#allocation9 + $0xd8] sm:$0xff] %vm749, %v3315
      %3348 = vst.msk [vmem:[#allocation9 + $0xe0] sm:$0xff] %vm749, %v3316
      %3349 = vst.msk [vmem:[#allocation9 + $0xe8] sm:$0xff] %vm749, %v3317
      %3350 = vst.msk [vmem:[#allocation9 + $0xf0] sm:$0xff] %vm749, %v3318
      %3351 = vst.msk [vmem:[#allocation9 + $0xf8] sm:$0xff] %vm749, %v3319
      %v3352 = vld [vmem:[#allocation7 + $0x1] sm:$0xff]
      %v3353 = vld [vmem:[#allocation7 + $0x9] sm:$0x7f]
      %v3354 = vld [vmem:[#allocation7 + $0x11] sm:$0xff]
      %v3355 = vld [vmem:[#allocation7 + $0x19] sm:$0x7f]
      %v3356 = vld [vmem:[#allocation7 + $0x21] sm:$0xff]
      %v3357 = vld [vmem:[#allocation7 + $0x29] sm:$0x7f]
      %v3358 = vld [vmem:[#allocation7 + $0x31] sm:$0xff]
      %v3359 = vld [vmem:[#allocation7 + $0x39] sm:$0x7f]
      %v3360 = vld [vmem:[#allocation7 + $0x41] sm:$0xff]
      %v3361 = vld [vmem:[#allocation7 + $0x49] sm:$0x7f]
      %v3362 = vld [vmem:[#allocation7 + $0x51] sm:$0xff]
      %v3363 = vld [vmem:[#allocation7 + $0x59] sm:$0x7f]
      %v3364 = vld [vmem:[#allocation7 + $0x61] sm:$0xff]
      %v3365 = vld [vmem:[#allocation7 + $0x69] sm:$0x7f]
      %v3366 = vld [vmem:[#allocation7 + $0x71] sm:$0xff]
      %v3367 = vld [vmem:[#allocation7 + $0x79] sm:$0x7f]
      %v3368 = vld [vmem:[#allocation7 + $0x81] sm:$0xff]
      %v3369 = vld [vmem:[#allocation7 + $0x89] sm:$0x7f]
      %v3370 = vld [vmem:[#allocation7 + $0x91] sm:$0xff]
      %v3371 = vld [vmem:[#allocation7 + $0x99] sm:$0x7f]
      %v3372 = vld [vmem:[#allocation7 + $0xa1] sm:$0xff]
      %v3373 = vld [vmem:[#allocation7 + $0xa9] sm:$0x7f]
      %v3374 = vld [vmem:[#allocation7 + $0xb1] sm:$0xff]
      %v3375 = vld [vmem:[#allocation7 + $0xb9] sm:$0x7f]
      %v3376 = vld [vmem:[#allocation7 + $0xc1] sm:$0xff]
      %v3377 = vld [vmem:[#allocation7 + $0xc9] sm:$0x7f]
      %v3378 = vld [vmem:[#allocation7 + $0xd1] sm:$0xff]
      %v3379 = vld [vmem:[#allocation7 + $0xd9] sm:$0x7f]
      %v3380 = vld [vmem:[#allocation7 + $0xe1] sm:$0xff]
      %v3381 = vld [vmem:[#allocation7 + $0xe9] sm:$0x7f]
      %v3382 = vld [vmem:[#allocation7 + $0xf1] sm:$0xff]
      %v3383 = vld [vmem:[#allocation7 + $0xf9] sm:$0x7f]
      %v3384 = vld [vmem:[#allocation9] sm:$0xff]
      %v3385 = vld [vmem:[#allocation9 + $0x8] sm:$0x7f]
      %v3386 = vld [vmem:[#allocation9 + $0x10] sm:$0xff]
      %v3387 = vld [vmem:[#allocation9 + $0x18] sm:$0x7f]
      %v3388 = vld [vmem:[#allocation9 + $0x20] sm:$0xff]
      %v3389 = vld [vmem:[#allocation9 + $0x28] sm:$0x7f]
      %v3390 = vld [vmem:[#allocation9 + $0x30] sm:$0xff]
      %v3391 = vld [vmem:[#allocation9 + $0x38] sm:$0x7f]
      %v3392 = vld [vmem:[#allocation9 + $0x40] sm:$0xff]
      %v3393 = vld [vmem:[#allocation9 + $0x48] sm:$0x7f]
      %v3394 = vld [vmem:[#allocation9 + $0x50] sm:$0xff]
      %v3395 = vld [vmem:[#allocation9 + $0x58] sm:$0x7f]
      %v3396 = vld [vmem:[#allocation9 + $0x60] sm:$0xff]
      %v3397 = vld [vmem:[#allocation9 + $0x68] sm:$0x7f]
      %v3398 = vld [vmem:[#allocation9 + $0x70] sm:$0xff]
      %v3399 = vld [vmem:[#allocation9 + $0x78] sm:$0x7f]
      %v3400 = vld [vmem:[#allocation9 + $0x80] sm:$0xff]
      %v3401 = vld [vmem:[#allocation9 + $0x88] sm:$0x7f]
      %v3402 = vld [vmem:[#allocation9 + $0x90] sm:$0xff]
      %v3403 = vld [vmem:[#allocation9 + $0x98] sm:$0x7f]
      %v3404 = vld [vmem:[#allocation9 + $0xa0] sm:$0xff]
      %v3405 = vld [vmem:[#allocation9 + $0xa8] sm:$0x7f]
      %v3406 = vld [vmem:[#allocation9 + $0xb0] sm:$0xff]
      %v3407 = vld [vmem:[#allocation9 + $0xb8] sm:$0x7f]
      %v3408 = vld [vmem:[#allocation9 + $0xc0] sm:$0xff]
      %v3409 = vld [vmem:[#allocation9 + $0xc8] sm:$0x7f]
      %v3410 = vld [vmem:[#allocation9 + $0xd0] sm:$0xff]
      %v3411 = vld [vmem:[#allocation9 + $0xd8] sm:$0x7f]
      %v3412 = vld [vmem:[#allocation9 + $0xe0] sm:$0xff]
      %v3413 = vld [vmem:[#allocation9 + $0xe8] sm:$0x7f]
      %v3414 = vld [vmem:[#allocation9 + $0xf0] sm:$0xff]
      %v3415 = vld [vmem:[#allocation9 + $0xf8] sm:$0x7f]
      %v3416 = vlaneseq
      %v3417 = vshrl.u32 %v3416, 7
      %v3418 = vsub.s32 5, %v3417
      %v3419 = vrot.slane %v2526, %v3418
      %v3420 = vmul.f32 %v3352, %v3419
      %v3421 = vmul.f32 %v3353, %v3419
      %v3422 = vmul.f32 %v3354, %v3419
      %v3423 = vmul.f32 %v3355, %v3419
      %v3424 = vmul.f32 %v3356, %v3419
      %v3425 = vmul.f32 %v3357, %v3419
      %v3426 = vmul.f32 %v3358, %v3419
      %v3427 = vmul.f32 %v3359, %v3419
      %v3428 = vmul.f32 %v3360, %v3419
      %v3429 = vmul.f32 %v3361, %v3419
      %v3430 = vmul.f32 %v3362, %v3419
      %v3431 = vmul.f32 %v3363, %v3419
      %v3432 = vmul.f32 %v3364, %v3419
      %v3433 = vmul.f32 %v3365, %v3419
      %v3434 = vmul.f32 %v3366, %v3419
      %v3435 = vmul.f32 %v3367, %v3419
      %v3436 = vmul.f32 %v3368, %v3419
      %v3437 = vmul.f32 %v3369, %v3419
      %v3438 = vmul.f32 %v3370, %v3419
      %v3439 = vmul.f32 %v3371, %v3419
      %v3440 = vmul.f32 %v3372, %v3419
      %v3441 = vmul.f32 %v3373, %v3419
      %v3442 = vmul.f32 %v3374, %v3419
      %v3443 = vmul.f32 %v3375, %v3419
      %v3444 = vmul.f32 %v3376, %v3419
      %v3445 = vmul.f32 %v3377, %v3419
      %v3446 = vmul.f32 %v3378, %v3419
      %v3447 = vmul.f32 %v3379, %v3419
      %v3448 = vmul.f32 %v3380, %v3419
      %v3449 = vmul.f32 %v3381, %v3419
      %v3450 = vmul.f32 %v3382, %v3419
      %v3451 = vmul.f32 %v3383, %v3419
      %v3452 = vadd.f32 %v3384, %v3420
      %v3453 = vadd.f32 %v3385, %v3421
      %v3454 = vadd.f32 %v3386, %v3422
      %v3455 = vadd.f32 %v3387, %v3423
      %v3456 = vadd.f32 %v3388, %v3424
      %v3457 = vadd.f32 %v3389, %v3425
      %v3458 = vadd.f32 %v3390, %v3426
      %v3459 = vadd.f32 %v3391, %v3427
      %v3460 = vadd.f32 %v3392, %v3428
      %v3461 = vadd.f32 %v3393, %v3429
      %v3462 = vadd.f32 %v3394, %v3430
      %v3463 = vadd.f32 %v3395, %v3431
      %v3464 = vadd.f32 %v3396, %v3432
      %v3465 = vadd.f32 %v3397, %v3433
      %v3466 = vadd.f32 %v3398, %v3434
      %v3467 = vadd.f32 %v3399, %v3435
      %v3468 = vadd.f32 %v3400, %v3436
      %v3469 = vadd.f32 %v3401, %v3437
      %v3470 = vadd.f32 %v3402, %v3438
      %v3471 = vadd.f32 %v3403, %v3439
      %v3472 = vadd.f32 %v3404, %v3440
      %v3473 = vadd.f32 %v3405, %v3441
      %v3474 = vadd.f32 %v3406, %v3442
      %v3475 = vadd.f32 %v3407, %v3443
      %v3476 = vadd.f32 %v3408, %v3444
      %v3477 = vadd.f32 %v3409, %v3445
      %v3478 = vadd.f32 %v3410, %v3446
      %v3479 = vadd.f32 %v3411, %v3447
      %v3480 = vadd.f32 %v3412, %v3448
      %v3481 = vadd.f32 %v3413, %v3449
      %v3482 = vadd.f32 %v3414, %v3450
      %v3483 = vadd.f32 %v3415, %v3451
      %3484 = vst.msk [vmem:[#allocation9] sm:$0xff] %vm749, %v3452
      %3485 = vst.msk [vmem:[#allocation9 + $0x8] sm:$0x7f] %vm2686, %v3453
      %3486 = vst.msk [vmem:[#allocation9 + $0x10] sm:$0xff] %vm749, %v3454
      %3487 = vst.msk [vmem:[#allocation9 + $0x18] sm:$0x7f] %vm2686, %v3455
      %3488 = vst.msk [vmem:[#allocation9 + $0x20] sm:$0xff] %vm749, %v3456
      %3489 = vst.msk [vmem:[#allocation9 + $0x28] sm:$0x7f] %vm2686, %v3457
      %3490 = vst.msk [vmem:[#allocation9 + $0x30] sm:$0xff] %vm749, %v3458
      %3491 = vst.msk [vmem:[#allocation9 + $0x38] sm:$0x7f] %vm2686, %v3459
      %3492 = vst.msk [vmem:[#allocation9 + $0x40] sm:$0xff] %vm749, %v3460
      %3493 = vst.msk [vmem:[#allocation9 + $0x48] sm:$0x7f] %vm2686, %v3461
      %3494 = vst.msk [vmem:[#allocation9 + $0x50] sm:$0xff] %vm749, %v3462
      %3495 = vst.msk [vmem:[#allocation9 + $0x58] sm:$0x7f] %vm2686, %v3463
      %3496 = vst.msk [vmem:[#allocation9 + $0x60] sm:$0xff] %vm749, %v3464
      %3497 = vst.msk [vmem:[#allocation9 + $0x68] sm:$0x7f] %vm2686, %v3465
      %3498 = vst.msk [vmem:[#allocation9 + $0x70] sm:$0xff] %vm749, %v3466
      %3499 = vst.msk [vmem:[#allocation9 + $0x78] sm:$0x7f] %vm2686, %v3467
      %3500 = vst.msk [vmem:[#allocation9 + $0x80] sm:$0xff] %vm749, %v3468
      %3501 = vst.msk [vmem:[#allocation9 + $0x88] sm:$0x7f] %vm2686, %v3469
      %3502 = vst.msk [vmem:[#allocation9 + $0x90] sm:$0xff] %vm749, %v3470
      %3503 = vst.msk [vmem:[#allocation9 + $0x98] sm:$0x7f] %vm2686, %v3471
      %3504 = vst.msk [vmem:[#allocation9 + $0xa0] sm:$0xff] %vm749, %v3472
      %3505 = vst.msk [vmem:[#allocation9 + $0xa8] sm:$0x7f] %vm2686, %v3473
      %3506 = vst.msk [vmem:[#allocation9 + $0xb0] sm:$0xff] %vm749, %v3474
      %3507 = vst.msk [vmem:[#allocation9 + $0xb8] sm:$0x7f] %vm2686, %v3475
      %3508 = vst.msk [vmem:[#allocation9 + $0xc0] sm:$0xff] %vm749, %v3476
      %3509 = vst.msk [vmem:[#allocation9 + $0xc8] sm:$0x7f] %vm2686, %v3477
      %3510 = vst.msk [vmem:[#allocation9 + $0xd0] sm:$0xff] %vm749, %v3478
      %3511 = vst.msk [vmem:[#allocation9 + $0xd8] sm:$0x7f] %vm2686, %v3479
      %3512 = vst.msk [vmem:[#allocation9 + $0xe0] sm:$0xff] %vm749, %v3480
      %3513 = vst.msk [vmem:[#allocation9 + $0xe8] sm:$0x7f] %vm2686, %v3481
      %3514 = vst.msk [vmem:[#allocation9 + $0xf0] sm:$0xff] %vm749, %v3482
      %3515 = vst.msk [vmem:[#allocation9 + $0xf8] sm:$0x7f] %vm2686, %v3483
      %v3516 = vld [vmem:[%s2433] sm:$0xff]
      %v3517 = vld [vmem:[%s2433 + $0x8] sm:$0x7f]
      %v3518 = vld [vmem:[%s2433 + $0x10] sm:$0xff]
      %v3519 = vld [vmem:[%s2433 + $0x18] sm:$0x7f]
      %v3520 = vld [vmem:[%s2433 + $0x20] sm:$0xff]
      %v3521 = vld [vmem:[%s2433 + $0x28] sm:$0x7f]
      %v3522 = vld [vmem:[%s2433 + $0x30] sm:$0xff]
      %v3523 = vld [vmem:[%s2433 + $0x38] sm:$0x7f]
      %v3524 = vld [vmem:[%s2433 + $0x40] sm:$0xff]
      %v3525 = vld [vmem:[%s2433 + $0x48] sm:$0x7f]
      %v3526 = vld [vmem:[%s2433 + $0x50] sm:$0xff]
      %v3527 = vld [vmem:[%s2433 + $0x58] sm:$0x7f]
      %v3528 = vld [vmem:[%s2433 + $0x60] sm:$0xff]
      %v3529 = vld [vmem:[%s2433 + $0x68] sm:$0x7f]
      %v3530 = vld [vmem:[%s2433 + $0x70] sm:$0xff]
      %v3531 = vld [vmem:[%s2433 + $0x78] sm:$0x7f]
      %v3532 = vld [vmem:[%s2433 + $0x80] sm:$0xff]
      %v3533 = vld [vmem:[%s2433 + $0x88] sm:$0x7f]
      %v3534 = vld [vmem:[%s2433 + $0x90] sm:$0xff]
      %v3535 = vld [vmem:[%s2433 + $0x98] sm:$0x7f]
      %v3536 = vld [vmem:[%s2433 + $0xa0] sm:$0xff]
      %v3537 = vld [vmem:[%s2433 + $0xa8] sm:$0x7f]
      %v3538 = vld [vmem:[%s2433 + $0xb0] sm:$0xff]
      %v3539 = vld [vmem:[%s2433 + $0xb8] sm:$0x7f]
      %v3540 = vld [vmem:[%s2433 + $0xc0] sm:$0xff]
      %v3541 = vld [vmem:[%s2433 + $0xc8] sm:$0x7f]
      %v3542 = vld [vmem:[%s2433 + $0xd0] sm:$0xff]
      %v3543 = vld [vmem:[%s2433 + $0xd8] sm:$0x7f]
      %v3544 = vld [vmem:[%s2433 + $0xe0] sm:$0xff]
      %v3545 = vld [vmem:[%s2433 + $0xe8] sm:$0x7f]
      %v3546 = vld [vmem:[#allocation9 + $0x1] sm:$0xff]
      %v3547 = vld [vmem:[#allocation9 + $0x9] sm:$0x7f]
      %v3548 = vld [vmem:[#allocation9 + $0x11] sm:$0xff]
      %v3549 = vld [vmem:[#allocation9 + $0x19] sm:$0x7f]
      %v3550 = vld [vmem:[#allocation9 + $0x21] sm:$0xff]
      %v3551 = vld [vmem:[#allocation9 + $0x29] sm:$0x7f]
      %v3552 = vld [vmem:[#allocation9 + $0x31] sm:$0xff]
      %v3553 = vld [vmem:[#allocation9 + $0x39] sm:$0x7f]
      %v3554 = vld [vmem:[#allocation9 + $0x41] sm:$0xff]
      %v3555 = vld [vmem:[#allocation9 + $0x49] sm:$0x7f]
      %v3556 = vld [vmem:[#allocation9 + $0x51] sm:$0xff]
      %v3557 = vld [vmem:[#allocation9 + $0x59] sm:$0x7f]
      %v3558 = vld [vmem:[#allocation9 + $0x61] sm:$0xff]
      %v3559 = vld [vmem:[#allocation9 + $0x69] sm:$0x7f]
      %v3560 = vld [vmem:[#allocation9 + $0x71] sm:$0xff]
      %v3561 = vld [vmem:[#allocation9 + $0x79] sm:$0x7f]
      %v3562 = vld [vmem:[#allocation9 + $0x81] sm:$0xff]
      %v3563 = vld [vmem:[#allocation9 + $0x89] sm:$0x7f]
      %v3564 = vld [vmem:[#allocation9 + $0x91] sm:$0xff]
      %v3565 = vld [vmem:[#allocation9 + $0x99] sm:$0x7f]
      %v3566 = vld [vmem:[#allocation9 + $0xa1] sm:$0xff]
      %v3567 = vld [vmem:[#allocation9 + $0xa9] sm:$0x7f]
      %v3568 = vld [vmem:[#allocation9 + $0xb1] sm:$0xff]
      %v3569 = vld [vmem:[#allocation9 + $0xb9] sm:$0x7f]
      %v3570 = vld [vmem:[#allocation9 + $0xc1] sm:$0xff]
      %v3571 = vld [vmem:[#allocation9 + $0xc9] sm:$0x7f]
      %v3572 = vld [vmem:[#allocation9 + $0xd1] sm:$0xff]
      %v3573 = vld [vmem:[#allocation9 + $0xd9] sm:$0x7f]
      %v3574 = vld [vmem:[#allocation9 + $0xe1] sm:$0xff]
      %v3575 = vld [vmem:[#allocation9 + $0xe9] sm:$0x7f]
      %v3576 = vlaneseq
      %v3577 = vshrl.u32 %v3576, 7
      %v3578 = vsub.s32 6, %v3577
      %v3579 = vrot.slane %v2526, %v3578
      %v3580 = vmul.f32 %v3516, %v3579
      %v3581 = vmul.f32 %v3517, %v3579
      %v3582 = vmul.f32 %v3518, %v3579
      %v3583 = vmul.f32 %v3519, %v3579
      %v3584 = vmul.f32 %v3520, %v3579
      %v3585 = vmul.f32 %v3521, %v3579
      %v3586 = vmul.f32 %v3522, %v3579
      %v3587 = vmul.f32 %v3523, %v3579
      %v3588 = vmul.f32 %v3524, %v3579
      %v3589 = vmul.f32 %v3525, %v3579
      %v3590 = vmul.f32 %v3526, %v3579
      %v3591 = vmul.f32 %v3527, %v3579
      %v3592 = vmul.f32 %v3528, %v3579
      %v3593 = vmul.f32 %v3529, %v3579
      %v3594 = vmul.f32 %v3530, %v3579
      %v3595 = vmul.f32 %v3531, %v3579
      %v3596 = vmul.f32 %v3532, %v3579
      %v3597 = vmul.f32 %v3533, %v3579
      %v3598 = vmul.f32 %v3534, %v3579
      %v3599 = vmul.f32 %v3535, %v3579
      %v3600 = vmul.f32 %v3536, %v3579
      %v3601 = vmul.f32 %v3537, %v3579
      %v3602 = vmul.f32 %v3538, %v3579
      %v3603 = vmul.f32 %v3539, %v3579
      %v3604 = vmul.f32 %v3540, %v3579
      %v3605 = vmul.f32 %v3541, %v3579
      %v3606 = vmul.f32 %v3542, %v3579
      %v3607 = vmul.f32 %v3543, %v3579
      %v3608 = vmul.f32 %v3544, %v3579
      %v3609 = vmul.f32 %v3545, %v3579
      %v3610 = vadd.f32 %v3546, %v3580
      %v3611 = vadd.f32 %v3547, %v3581
      %v3612 = vadd.f32 %v3548, %v3582
      %v3613 = vadd.f32 %v3549, %v3583
      %v3614 = vadd.f32 %v3550, %v3584
      %v3615 = vadd.f32 %v3551, %v3585
      %v3616 = vadd.f32 %v3552, %v3586
      %v3617 = vadd.f32 %v3553, %v3587
      %v3618 = vadd.f32 %v3554, %v3588
      %v3619 = vadd.f32 %v3555, %v3589
      %v3620 = vadd.f32 %v3556, %v3590
      %v3621 = vadd.f32 %v3557, %v3591
      %v3622 = vadd.f32 %v3558, %v3592
      %v3623 = vadd.f32 %v3559, %v3593
      %v3624 = vadd.f32 %v3560, %v3594
      %v3625 = vadd.f32 %v3561, %v3595
      %v3626 = vadd.f32 %v3562, %v3596
      %v3627 = vadd.f32 %v3563, %v3597
      %v3628 = vadd.f32 %v3564, %v3598
      %v3629 = vadd.f32 %v3565, %v3599
      %v3630 = vadd.f32 %v3566, %v3600
      %v3631 = vadd.f32 %v3567, %v3601
      %v3632 = vadd.f32 %v3568, %v3602
      %v3633 = vadd.f32 %v3569, %v3603
      %v3634 = vadd.f32 %v3570, %v3604
      %v3635 = vadd.f32 %v3571, %v3605
      %v3636 = vadd.f32 %v3572, %v3606
      %v3637 = vadd.f32 %v3573, %v3607
      %v3638 = vadd.f32 %v3574, %v3608
      %v3639 = vadd.f32 %v3575, %v3609
      %3640 = vst.msk [vmem:[#allocation9 + $0x1] sm:$0xff] %vm749, %v3610
      %3641 = vst.msk [vmem:[#allocation9 + $0x9] sm:$0x7f] %vm2686, %v3611
      %3642 = vst.msk [vmem:[#allocation9 + $0x11] sm:$0xff] %vm749, %v3612
      %3643 = vst.msk [vmem:[#allocation9 + $0x19] sm:$0x7f] %vm2686, %v3613
      %3644 = vst.msk [vmem:[#allocation9 + $0x21] sm:$0xff] %vm749, %v3614
      %3645 = vst.msk [vmem:[#allocation9 + $0x29] sm:$0x7f] %vm2686, %v3615
      %3646 = vst.msk [vmem:[#allocation9 + $0x31] sm:$0xff] %vm749, %v3616
      %3647 = vst.msk [vmem:[#allocation9 + $0x39] sm:$0x7f] %vm2686, %v3617
      %3648 = vst.msk [vmem:[#allocation9 + $0x41] sm:$0xff] %vm749, %v3618
      %3649 = vst.msk [vmem:[#allocation9 + $0x49] sm:$0x7f] %vm2686, %v3619
      %3650 = vst.msk [vmem:[#allocation9 + $0x51] sm:$0xff] %vm749, %v3620
      %3651 = vst.msk [vmem:[#allocation9 + $0x59] sm:$0x7f] %vm2686, %v3621
      %3652 = vst.msk [vmem:[#allocation9 + $0x61] sm:$0xff] %vm749, %v3622
      %3653 = vst.msk [vmem:[#allocation9 + $0x69] sm:$0x7f] %vm2686, %v3623
      %3654 = vst.msk [vmem:[#allocation9 + $0x71] sm:$0xff] %vm749, %v3624
      %3655 = vst.msk [vmem:[#allocation9 + $0x79] sm:$0x7f] %vm2686, %v3625
      %3656 = vst.msk [vmem:[#allocation9 + $0x81] sm:$0xff] %vm749, %v3626
      %3657 = vst.msk [vmem:[#allocation9 + $0x89] sm:$0x7f] %vm2686, %v3627
      %3658 = vst.msk [vmem:[#allocation9 + $0x91] sm:$0xff] %vm749, %v3628
      %3659 = vst.msk [vmem:[#allocation9 + $0x99] sm:$0x7f] %vm2686, %v3629
      %3660 = vst.msk [vmem:[#allocation9 + $0xa1] sm:$0xff] %vm749, %v3630
      %3661 = vst.msk [vmem:[#allocation9 + $0xa9] sm:$0x7f] %vm2686, %v3631
      %3662 = vst.msk [vmem:[#allocation9 + $0xb1] sm:$0xff] %vm749, %v3632
      %3663 = vst.msk [vmem:[#allocation9 + $0xb9] sm:$0x7f] %vm2686, %v3633
      %3664 = vst.msk [vmem:[#allocation9 + $0xc1] sm:$0xff] %vm749, %v3634
      %3665 = vst.msk [vmem:[#allocation9 + $0xc9] sm:$0x7f] %vm2686, %v3635
      %3666 = vst.msk [vmem:[#allocation9 + $0xd1] sm:$0xff] %vm749, %v3636
      %3667 = vst.msk [vmem:[#allocation9 + $0xd9] sm:$0x7f] %vm2686, %v3637
      %3668 = vst.msk [vmem:[#allocation9 + $0xe1] sm:$0xff] %vm749, %v3638
      %3669 = vst.msk [vmem:[#allocation9 + $0xe9] sm:$0x7f] %vm2686, %v3639
      %v3670 = vld [vmem:[%s2433] sm:$0xff]
      %v3671 = vld [vmem:[%s2433 + $0x8] sm:$0xff]
      %v3672 = vld [vmem:[%s2433 + $0x10] sm:$0xff]
      %v3673 = vld [vmem:[%s2433 + $0x18] sm:$0xff]
      %v3674 = vld [vmem:[%s2433 + $0x20] sm:$0xff]
      %v3675 = vld [vmem:[%s2433 + $0x28] sm:$0xff]
      %v3676 = vld [vmem:[%s2433 + $0x30] sm:$0xff]
      %v3677 = vld [vmem:[%s2433 + $0x38] sm:$0xff]
      %v3678 = vld [vmem:[%s2433 + $0x40] sm:$0xff]
      %v3679 = vld [vmem:[%s2433 + $0x48] sm:$0xff]
      %v3680 = vld [vmem:[%s2433 + $0x50] sm:$0xff]
      %v3681 = vld [vmem:[%s2433 + $0x58] sm:$0xff]
      %v3682 = vld [vmem:[%s2433 + $0x60] sm:$0xff]
      %v3683 = vld [vmem:[%s2433 + $0x68] sm:$0xff]
      %v3684 = vld [vmem:[%s2433 + $0x70] sm:$0xff]
      %v3685 = vld [vmem:[%s2433 + $0x78] sm:$0xff]
      %v3686 = vld [vmem:[%s2433 + $0x80] sm:$0xff]
      %v3687 = vld [vmem:[%s2433 + $0x88] sm:$0xff]
      %v3688 = vld [vmem:[%s2433 + $0x90] sm:$0xff]
      %v3689 = vld [vmem:[%s2433 + $0x98] sm:$0xff]
      %v3690 = vld [vmem:[%s2433 + $0xa0] sm:$0xff]
      %v3691 = vld [vmem:[%s2433 + $0xa8] sm:$0xff]
      %v3692 = vld [vmem:[%s2433 + $0xb0] sm:$0xff]
      %v3693 = vld [vmem:[%s2433 + $0xb8] sm:$0xff]
      %v3694 = vld [vmem:[%s2433 + $0xc0] sm:$0xff]
      %v3695 = vld [vmem:[%s2433 + $0xc8] sm:$0xff]
      %v3696 = vld [vmem:[%s2433 + $0xd0] sm:$0xff]
      %v3697 = vld [vmem:[%s2433 + $0xd8] sm:$0xff]
      %v3698 = vld [vmem:[%s2433 + $0xe0] sm:$0xff]
      %v3699 = vld [vmem:[%s2433 + $0xe8] sm:$0xff]
      %v3700 = vld [vmem:[#allocation9] sm:$0xff]
      %v3701 = vld [vmem:[#allocation9 + $0x8] sm:$0xff]
      %v3702 = vld [vmem:[#allocation9 + $0x10] sm:$0xff]
      %v3703 = vld [vmem:[#allocation9 + $0x18] sm:$0xff]
      %v3704 = vld [vmem:[#allocation9 + $0x20] sm:$0xff]
      %v3705 = vld [vmem:[#allocation9 + $0x28] sm:$0xff]
      %v3706 = vld [vmem:[#allocation9 + $0x30] sm:$0xff]
      %v3707 = vld [vmem:[#allocation9 + $0x38] sm:$0xff]
      %v3708 = vld [vmem:[#allocation9 + $0x40] sm:$0xff]
      %v3709 = vld [vmem:[#allocation9 + $0x48] sm:$0xff]
      %v3710 = vld [vmem:[#allocation9 + $0x50] sm:$0xff]
      %v3711 = vld [vmem:[#allocation9 + $0x58] sm:$0xff]
      %v3712 = vld [vmem:[#allocation9 + $0x60] sm:$0xff]
      %v3713 = vld [vmem:[#allocation9 + $0x68] sm:$0xff]
      %v3714 = vld [vmem:[#allocation9 + $0x70] sm:$0xff]
      %v3715 = vld [vmem:[#allocation9 + $0x78] sm:$0xff]
      %v3716 = vld [vmem:[#allocation9 + $0x80] sm:$0xff]
      %v3717 = vld [vmem:[#allocation9 + $0x88] sm:$0xff]
      %v3718 = vld [vmem:[#allocation9 + $0x90] sm:$0xff]
      %v3719 = vld [vmem:[#allocation9 + $0x98] sm:$0xff]
      %v3720 = vld [vmem:[#allocation9 + $0xa0] sm:$0xff]
      %v3721 = vld [vmem:[#allocation9 + $0xa8] sm:$0xff]
      %v3722 = vld [vmem:[#allocation9 + $0xb0] sm:$0xff]
      %v3723 = vld [vmem:[#allocation9 + $0xb8] sm:$0xff]
      %v3724 = vld [vmem:[#allocation9 + $0xc0] sm:$0xff]
      %v3725 = vld [vmem:[#allocation9 + $0xc8] sm:$0xff]
      %v3726 = vld [vmem:[#allocation9 + $0xd0] sm:$0xff]
      %v3727 = vld [vmem:[#allocation9 + $0xd8] sm:$0xff]
      %v3728 = vld [vmem:[#allocation9 + $0xe0] sm:$0xff]
      %v3729 = vld [vmem:[#allocation9 + $0xe8] sm:$0xff]
      %v3730 = vlaneseq
      %v3731 = vshrl.u32 %v3730, 7
      %v3732 = vsub.s32 7, %v3731
      %v3733 = vrot.slane %v2526, %v3732
      %v3734 = vmul.f32 %v3670, %v3733
      %v3735 = vmul.f32 %v3671, %v3733
      %v3736 = vmul.f32 %v3672, %v3733
      %v3737 = vmul.f32 %v3673, %v3733
      %v3738 = vmul.f32 %v3674, %v3733
      %v3739 = vmul.f32 %v3675, %v3733
      %v3740 = vmul.f32 %v3676, %v3733
      %v3741 = vmul.f32 %v3677, %v3733
      %v3742 = vmul.f32 %v3678, %v3733
      %v3743 = vmul.f32 %v3679, %v3733
      %v3744 = vmul.f32 %v3680, %v3733
      %v3745 = vmul.f32 %v3681, %v3733
      %v3746 = vmul.f32 %v3682, %v3733
      %v3747 = vmul.f32 %v3683, %v3733
      %v3748 = vmul.f32 %v3684, %v3733
      %v3749 = vmul.f32 %v3685, %v3733
      %v3750 = vmul.f32 %v3686, %v3733
      %v3751 = vmul.f32 %v3687, %v3733
      %v3752 = vmul.f32 %v3688, %v3733
      %v3753 = vmul.f32 %v3689, %v3733
      %v3754 = vmul.f32 %v3690, %v3733
      %v3755 = vmul.f32 %v3691, %v3733
      %v3756 = vmul.f32 %v3692, %v3733
      %v3757 = vmul.f32 %v3693, %v3733
      %v3758 = vmul.f32 %v3694, %v3733
      %v3759 = vmul.f32 %v3695, %v3733
      %v3760 = vmul.f32 %v3696, %v3733
      %v3761 = vmul.f32 %v3697, %v3733
      %v3762 = vmul.f32 %v3698, %v3733
      %v3763 = vmul.f32 %v3699, %v3733
      %v3764 = vadd.f32 %v3700, %v3734
      %v3765 = vadd.f32 %v3701, %v3735
      %v3766 = vadd.f32 %v3702, %v3736
      %v3767 = vadd.f32 %v3703, %v3737
      %v3768 = vadd.f32 %v3704, %v3738
      %v3769 = vadd.f32 %v3705, %v3739
      %v3770 = vadd.f32 %v3706, %v3740
      %v3771 = vadd.f32 %v3707, %v3741
      %v3772 = vadd.f32 %v3708, %v3742
      %v3773 = vadd.f32 %v3709, %v3743
      %v3774 = vadd.f32 %v3710, %v3744
      %v3775 = vadd.f32 %v3711, %v3745
      %v3776 = vadd.f32 %v3712, %v3746
      %v3777 = vadd.f32 %v3713, %v3747
      %v3778 = vadd.f32 %v3714, %v3748
      %v3779 = vadd.f32 %v3715, %v3749
      %v3780 = vadd.f32 %v3716, %v3750
      %v3781 = vadd.f32 %v3717, %v3751
      %v3782 = vadd.f32 %v3718, %v3752
      %v3783 = vadd.f32 %v3719, %v3753
      %v3784 = vadd.f32 %v3720, %v3754
      %v3785 = vadd.f32 %v3721, %v3755
      %v3786 = vadd.f32 %v3722, %v3756
      %v3787 = vadd.f32 %v3723, %v3757
      %v3788 = vadd.f32 %v3724, %v3758
      %v3789 = vadd.f32 %v3725, %v3759
      %v3790 = vadd.f32 %v3726, %v3760
      %v3791 = vadd.f32 %v3727, %v3761
      %v3792 = vadd.f32 %v3728, %v3762
      %v3793 = vadd.f32 %v3729, %v3763
      %3794 = vst.msk [vmem:[#allocation9] sm:$0xff] %vm749, %v3764
      %3795 = vst.msk [vmem:[#allocation9 + $0x8] sm:$0xff] %vm749, %v3765
      %3796 = vst.msk [vmem:[#allocation9 + $0x10] sm:$0xff] %vm749, %v3766
      %3797 = vst.msk [vmem:[#allocation9 + $0x18] sm:$0xff] %vm749, %v3767
      %3798 = vst.msk [vmem:[#allocation9 + $0x20] sm:$0xff] %vm749, %v3768
      %3799 = vst.msk [vmem:[#allocation9 + $0x28] sm:$0xff] %vm749, %v3769
      %3800 = vst.msk [vmem:[#allocation9 + $0x30] sm:$0xff] %vm749, %v3770
      %3801 = vst.msk [vmem:[#allocation9 + $0x38] sm:$0xff] %vm749, %v3771
      %3802 = vst.msk [vmem:[#allocation9 + $0x40] sm:$0xff] %vm749, %v3772
      %3803 = vst.msk [vmem:[#allocation9 + $0x48] sm:$0xff] %vm749, %v3773
      %3804 = vst.msk [vmem:[#allocation9 + $0x50] sm:$0xff] %vm749, %v3774
      %3805 = vst.msk [vmem:[#allocation9 + $0x58] sm:$0xff] %vm749, %v3775
      %3806 = vst.msk [vmem:[#allocation9 + $0x60] sm:$0xff] %vm749, %v3776
      %3807 = vst.msk [vmem:[#allocation9 + $0x68] sm:$0xff] %vm749, %v3777
      %3808 = vst.msk [vmem:[#allocation9 + $0x70] sm:$0xff] %vm749, %v3778
      %3809 = vst.msk [vmem:[#allocation9 + $0x78] sm:$0xff] %vm749, %v3779
      %3810 = vst.msk [vmem:[#allocation9 + $0x80] sm:$0xff] %vm749, %v3780
      %3811 = vst.msk [vmem:[#allocation9 + $0x88] sm:$0xff] %vm749, %v3781
      %3812 = vst.msk [vmem:[#allocation9 + $0x90] sm:$0xff] %vm749, %v3782
      %3813 = vst.msk [vmem:[#allocation9 + $0x98] sm:$0xff] %vm749, %v3783
      %3814 = vst.msk [vmem:[#allocation9 + $0xa0] sm:$0xff] %vm749, %v3784
      %3815 = vst.msk [vmem:[#allocation9 + $0xa8] sm:$0xff] %vm749, %v3785
      %3816 = vst.msk [vmem:[#allocation9 + $0xb0] sm:$0xff] %vm749, %v3786
      %3817 = vst.msk [vmem:[#allocation9 + $0xb8] sm:$0xff] %vm749, %v3787
      %3818 = vst.msk [vmem:[#allocation9 + $0xc0] sm:$0xff] %vm749, %v3788
      %3819 = vst.msk [vmem:[#allocation9 + $0xc8] sm:$0xff] %vm749, %v3789
      %3820 = vst.msk [vmem:[#allocation9 + $0xd0] sm:$0xff] %vm749, %v3790
      %3821 = vst.msk [vmem:[#allocation9 + $0xd8] sm:$0xff] %vm749, %v3791
      %3822 = vst.msk [vmem:[#allocation9 + $0xe0] sm:$0xff] %vm749, %v3792
      %3823 = vst.msk [vmem:[#allocation9 + $0xe8] sm:$0xff] %vm749, %v3793
      %v3824 = vld [vmem:[%s2433 + $0x1] sm:$0xff]
      %v3825 = vld [vmem:[%s2433 + $0x9] sm:$0x7f]
      %v3826 = vld [vmem:[%s2433 + $0x11] sm:$0xff]
      %v3827 = vld [vmem:[%s2433 + $0x19] sm:$0x7f]
      %v3828 = vld [vmem:[%s2433 + $0x21] sm:$0xff]
      %v3829 = vld [vmem:[%s2433 + $0x29] sm:$0x7f]
      %v3830 = vld [vmem:[%s2433 + $0x31] sm:$0xff]
      %v3831 = vld [vmem:[%s2433 + $0x39] sm:$0x7f]
      %v3832 = vld [vmem:[%s2433 + $0x41] sm:$0xff]
      %v3833 = vld [vmem:[%s2433 + $0x49] sm:$0x7f]
      %v3834 = vld [vmem:[%s2433 + $0x51] sm:$0xff]
      %v3835 = vld [vmem:[%s2433 + $0x59] sm:$0x7f]
      %v3836 = vld [vmem:[%s2433 + $0x61] sm:$0xff]
      %v3837 = vld [vmem:[%s2433 + $0x69] sm:$0x7f]
      %v3838 = vld [vmem:[%s2433 + $0x71] sm:$0xff]
      %v3839 = vld [vmem:[%s2433 + $0x79] sm:$0x7f]
      %v3840 = vld [vmem:[%s2433 + $0x81] sm:$0xff]
      %v3841 = vld [vmem:[%s2433 + $0x89] sm:$0x7f]
      %v3842 = vld [vmem:[%s2433 + $0x91] sm:$0xff]
      %v3843 = vld [vmem:[%s2433 + $0x99] sm:$0x7f]
      %v3844 = vld [vmem:[%s2433 + $0xa1] sm:$0xff]
      %v3845 = vld [vmem:[%s2433 + $0xa9] sm:$0x7f]
      %v3846 = vld [vmem:[%s2433 + $0xb1] sm:$0xff]
      %v3847 = vld [vmem:[%s2433 + $0xb9] sm:$0x7f]
      %v3848 = vld [vmem:[%s2433 + $0xc1] sm:$0xff]
      %v3849 = vld [vmem:[%s2433 + $0xc9] sm:$0x7f]
      %v3850 = vld [vmem:[%s2433 + $0xd1] sm:$0xff]
      %v3851 = vld [vmem:[%s2433 + $0xd9] sm:$0x7f]
      %v3852 = vld [vmem:[%s2433 + $0xe1] sm:$0xff]
      %v3853 = vld [vmem:[%s2433 + $0xe9] sm:$0x7f]
      %v3854 = vld [vmem:[#allocation9] sm:$0xff]
      %v3855 = vld [vmem:[#allocation9 + $0x8] sm:$0x7f]
      %v3856 = vld [vmem:[#allocation9 + $0x10] sm:$0xff]
      %v3857 = vld [vmem:[#allocation9 + $0x18] sm:$0x7f]
      %v3858 = vld [vmem:[#allocation9 + $0x20] sm:$0xff]
      %v3859 = vld [vmem:[#allocation9 + $0x28] sm:$0x7f]
      %v3860 = vld [vmem:[#allocation9 + $0x30] sm:$0xff]
      %v3861 = vld [vmem:[#allocation9 + $0x38] sm:$0x7f]
      %v3862 = vld [vmem:[#allocation9 + $0x40] sm:$0xff]
      %v3863 = vld [vmem:[#allocation9 + $0x48] sm:$0x7f]
      %v3864 = vld [vmem:[#allocation9 + $0x50] sm:$0xff]
      %v3865 = vld [vmem:[#allocation9 + $0x58] sm:$0x7f]
      %v3866 = vld [vmem:[#allocation9 + $0x60] sm:$0xff]
      %v3867 = vld [vmem:[#allocation9 + $0x68] sm:$0x7f]
      %v3868 = vld [vmem:[#allocation9 + $0x70] sm:$0xff]
      %v3869 = vld [vmem:[#allocation9 + $0x78] sm:$0x7f]
      %v3870 = vld [vmem:[#allocation9 + $0x80] sm:$0xff]
      %v3871 = vld [vmem:[#allocation9 + $0x88] sm:$0x7f]
      %v3872 = vld [vmem:[#allocation9 + $0x90] sm:$0xff]
      %v3873 = vld [vmem:[#allocation9 + $0x98] sm:$0x7f]
      %v3874 = vld [vmem:[#allocation9 + $0xa0] sm:$0xff]
      %v3875 = vld [vmem:[#allocation9 + $0xa8] sm:$0x7f]
      %v3876 = vld [vmem:[#allocation9 + $0xb0] sm:$0xff]
      %v3877 = vld [vmem:[#allocation9 + $0xb8] sm:$0x7f]
      %v3878 = vld [vmem:[#allocation9 + $0xc0] sm:$0xff]
      %v3879 = vld [vmem:[#allocation9 + $0xc8] sm:$0x7f]
      %v3880 = vld [vmem:[#allocation9 + $0xd0] sm:$0xff]
      %v3881 = vld [vmem:[#allocation9 + $0xd8] sm:$0x7f]
      %v3882 = vld [vmem:[#allocation9 + $0xe0] sm:$0xff]
      %v3883 = vld [vmem:[#allocation9 + $0xe8] sm:$0x7f]
      %v3884 = vlaneseq
      %v3885 = vshrl.u32 %v3884, 7
      %v3886 = vsub.s32 0, %v3885
      %v3887 = vrot.slane %v2527, %v3886
      %v3888 = vmul.f32 %v3824, %v3887
      %v3889 = vmul.f32 %v3825, %v3887
      %v3890 = vmul.f32 %v3826, %v3887
      %v3891 = vmul.f32 %v3827, %v3887
      %v3892 = vmul.f32 %v3828, %v3887
      %v3893 = vmul.f32 %v3829, %v3887
      %v3894 = vmul.f32 %v3830, %v3887
      %v3895 = vmul.f32 %v3831, %v3887
      %v3896 = vmul.f32 %v3832, %v3887
      %v3897 = vmul.f32 %v3833, %v3887
      %v3898 = vmul.f32 %v3834, %v3887
      %v3899 = vmul.f32 %v3835, %v3887
      %v3900 = vmul.f32 %v3836, %v3887
      %v3901 = vmul.f32 %v3837, %v3887
      %v3902 = vmul.f32 %v3838, %v3887
      %v3903 = vmul.f32 %v3839, %v3887
      %v3904 = vmul.f32 %v3840, %v3887
      %v3905 = vmul.f32 %v3841, %v3887
      %v3906 = vmul.f32 %v3842, %v3887
      %v3907 = vmul.f32 %v3843, %v3887
      %v3908 = vmul.f32 %v3844, %v3887
      %v3909 = vmul.f32 %v3845, %v3887
      %v3910 = vmul.f32 %v3846, %v3887
      %v3911 = vmul.f32 %v3847, %v3887
      %v3912 = vmul.f32 %v3848, %v3887
      %v3913 = vmul.f32 %v3849, %v3887
      %v3914 = vmul.f32 %v3850, %v3887
      %v3915 = vmul.f32 %v3851, %v3887
      %v3916 = vmul.f32 %v3852, %v3887
      %v3917 = vmul.f32 %v3853, %v3887
      %v3918 = vadd.f32 %v3854, %v3888
      %v3919 = vadd.f32 %v3855, %v3889
      %v3920 = vadd.f32 %v3856, %v3890
      %v3921 = vadd.f32 %v3857, %v3891
      %v3922 = vadd.f32 %v3858, %v3892
      %v3923 = vadd.f32 %v3859, %v3893
      %v3924 = vadd.f32 %v3860, %v3894
      %v3925 = vadd.f32 %v3861, %v3895
      %v3926 = vadd.f32 %v3862, %v3896
      %v3927 = vadd.f32 %v3863, %v3897
      %v3928 = vadd.f32 %v3864, %v3898
      %v3929 = vadd.f32 %v3865, %v3899
      %v3930 = vadd.f32 %v3866, %v3900
      %v3931 = vadd.f32 %v3867, %v3901
      %v3932 = vadd.f32 %v3868, %v3902
      %v3933 = vadd.f32 %v3869, %v3903
      %v3934 = vadd.f32 %v3870, %v3904
      %v3935 = vadd.f32 %v3871, %v3905
      %v3936 = vadd.f32 %v3872, %v3906
      %v3937 = vadd.f32 %v3873, %v3907
      %v3938 = vadd.f32 %v3874, %v3908
      %v3939 = vadd.f32 %v3875, %v3909
      %v3940 = vadd.f32 %v3876, %v3910
      %v3941 = vadd.f32 %v3877, %v3911
      %v3942 = vadd.f32 %v3878, %v3912
      %v3943 = vadd.f32 %v3879, %v3913
      %v3944 = vadd.f32 %v3880, %v3914
      %v3945 = vadd.f32 %v3881, %v3915
      %v3946 = vadd.f32 %v3882, %v3916
      %v3947 = vadd.f32 %v3883, %v3917
      %3948 = vst.msk [vmem:[#allocation9] sm:$0xff] %vm749, %v3918
      %3949 = vst.msk [vmem:[#allocation9 + $0x8] sm:$0x7f] %vm2686, %v3919
      %3950 = vst.msk [vmem:[#allocation9 + $0x10] sm:$0xff] %vm749, %v3920
      %3951 = vst.msk [vmem:[#allocation9 + $0x18] sm:$0x7f] %vm2686, %v3921
      %3952 = vst.msk [vmem:[#allocation9 + $0x20] sm:$0xff] %vm749, %v3922
      %3953 = vst.msk [vmem:[#allocation9 + $0x28] sm:$0x7f] %vm2686, %v3923
      %3954 = vst.msk [vmem:[#allocation9 + $0x30] sm:$0xff] %vm749, %v3924
      %3955 = vst.msk [vmem:[#allocation9 + $0x38] sm:$0x7f] %vm2686, %v3925
      %3956 = vst.msk [vmem:[#allocation9 + $0x40] sm:$0xff] %vm749, %v3926
      %3957 = vst.msk [vmem:[#allocation9 + $0x48] sm:$0x7f] %vm2686, %v3927
      %3958 = vst.msk [vmem:[#allocation9 + $0x50] sm:$0xff] %vm749, %v3928
      %3959 = vst.msk [vmem:[#allocation9 + $0x58] sm:$0x7f] %vm2686, %v3929
      %3960 = vst.msk [vmem:[#allocation9 + $0x60] sm:$0xff] %vm749, %v3930
      %3961 = vst.msk [vmem:[#allocation9 + $0x68] sm:$0x7f] %vm2686, %v3931
      %3962 = vst.msk [vmem:[#allocation9 + $0x70] sm:$0xff] %vm749, %v3932
      %3963 = vst.msk [vmem:[#allocation9 + $0x78] sm:$0x7f] %vm2686, %v3933
      %3964 = vst.msk [vmem:[#allocation9 + $0x80] sm:$0xff] %vm749, %v3934
      %3965 = vst.msk [vmem:[#allocation9 + $0x88] sm:$0x7f] %vm2686, %v3935
      %3966 = vst.msk [vmem:[#allocation9 + $0x90] sm:$0xff] %vm749, %v3936
      %3967 = vst.msk [vmem:[#allocation9 + $0x98] sm:$0x7f] %vm2686, %v3937
      %3968 = vst.msk [vmem:[#allocation9 + $0xa0] sm:$0xff] %vm749, %v3938
      %3969 = vst.msk [vmem:[#allocation9 + $0xa8] sm:$0x7f] %vm2686, %v3939
      %3970 = vst.msk [vmem:[#allocation9 + $0xb0] sm:$0xff] %vm749, %v3940
      %3971 = vst.msk [vmem:[#allocation9 + $0xb8] sm:$0x7f] %vm2686, %v3941
      %3972 = vst.msk [vmem:[#allocation9 + $0xc0] sm:$0xff] %vm749, %v3942
      %3973 = vst.msk [vmem:[#allocation9 + $0xc8] sm:$0x7f] %vm2686, %v3943
      %3974 = vst.msk [vmem:[#allocation9 + $0xd0] sm:$0xff] %vm749, %v3944
      %3975 = vst.msk [vmem:[#allocation9 + $0xd8] sm:$0x7f] %vm2686, %v3945
      %3976 = vst.msk [vmem:[#allocation9 + $0xe0] sm:$0xff] %vm749, %v3946
      %3977 = vst.msk [vmem:[#allocation9 + $0xe8] sm:$0x7f] %vm2686, %v3947
      %v3978 = vld [vmem:[%s18] sm:$0xff]
      %v3979 = vld [vmem:[%s18 + $0x8] sm:$0x1]
      %3980 = vst.msk [vmem:[#allocation10] sm:$0xff] %vm2478, 0.0
      %3981 = vst.msk [vmem:[#allocation10 + $0x8] sm:$0xff] %vm2478, 0.0
      %3982 = vst.msk [vmem:[#allocation10 + $0x10] sm:$0xff] %vm2478, 0.0
      %3983 = vst.msk [vmem:[#allocation10 + $0x18] sm:$0xff] %vm2478, 0.0
      %3984 = vst.msk [vmem:[#allocation10 + $0x20] sm:$0xff] %vm2478, 0.0
      %3985 = vst.msk [vmem:[#allocation10 + $0x28] sm:$0xff] %vm2478, 0.0
      %3986 = vst.msk [vmem:[#allocation10 + $0x30] sm:$0xff] %vm2478, 0.0
      %3987 = vst.msk [vmem:[#allocation10 + $0x38] sm:$0xff] %vm2478, 0.0
      %3988 = vst.msk [vmem:[#allocation10 + $0x40] sm:$0xff] %vm2478, 0.0
      %3989 = vst.msk [vmem:[#allocation10 + $0x48] sm:$0xff] %vm2478, 0.0
      %3990 = vst.msk [vmem:[#allocation10 + $0x50] sm:$0xff] %vm2478, 0.0
      %3991 = vst.msk [vmem:[#allocation10 + $0x58] sm:$0xff] %vm2478, 0.0
      %3992 = vst.msk [vmem:[#allocation10 + $0x60] sm:$0xff] %vm2478, 0.0
      %3993 = vst.msk [vmem:[#allocation10 + $0x68] sm:$0xff] %vm2478, 0.0
      %3994 = vst.msk [vmem:[#allocation10 + $0x70] sm:$0xff] %vm2478, 0.0
      %3995 = vst.msk [vmem:[#allocation10 + $0x78] sm:$0xff] %vm2478, 0.0
      %3996 = vst.msk [vmem:[#allocation10 + $0x80] sm:$0xff] %vm2478, 0.0
      %3997 = vst.msk [vmem:[#allocation10 + $0x88] sm:$0xff] %vm2478, 0.0
      %3998 = vst.msk [vmem:[#allocation10 + $0x90] sm:$0xff] %vm2478, 0.0
      %3999 = vst.msk [vmem:[#allocation10 + $0x98] sm:$0xff] %vm2478, 0.0
      %4000 = vst.msk [vmem:[#allocation10 + $0xa0] sm:$0xff] %vm2478, 0.0
      %4001 = vst.msk [vmem:[#allocation10 + $0xa8] sm:$0xff] %vm2478, 0.0
      %4002 = vst.msk [vmem:[#allocation10 + $0xb0] sm:$0xff] %vm2478, 0.0
      %4003 = vst.msk [vmem:[#allocation10 + $0xb8] sm:$0xff] %vm2478, 0.0
      %4004 = vst.msk [vmem:[#allocation10 + $0xc0] sm:$0xff] %vm2478, 0.0
      %4005 = vst.msk [vmem:[#allocation10 + $0xc8] sm:$0xff] %vm2478, 0.0
      %4006 = vst.msk [vmem:[#allocation10 + $0xd0] sm:$0xff] %vm2478, 0.0
      %4007 = vst.msk [vmem:[#allocation10 + $0xd8] sm:$0xff] %vm2478, 0.0
      %4008 = vst.msk [vmem:[#allocation10 + $0xe0] sm:$0xff] %vm2478, 0.0
      %4009 = vst.msk [vmem:[#allocation10 + $0xe8] sm:$0xff] %vm2478, 0.0
      %4010 = vst.msk [vmem:[#allocation10 + $0xf0] sm:$0xff] %vm2478, 0.0
      %4011 = vst.msk [vmem:[#allocation10 + $0xf8] sm:$0xff] %vm2478, 0.0
      %v4012 = vld [vmem:[#allocation8] sm:$0xff]
      %v4013 = vld [vmem:[#allocation8 + $0x8] sm:$0x7f]
      %v4014 = vld [vmem:[#allocation8 + $0x10] sm:$0xff]
      %v4015 = vld [vmem:[#allocation8 + $0x18] sm:$0x7f]
      %v4016 = vld [vmem:[#allocation8 + $0x20] sm:$0xff]
      %v4017 = vld [vmem:[#allocation8 + $0x28] sm:$0x7f]
      %v4018 = vld [vmem:[#allocation8 + $0x30] sm:$0xff]
      %v4019 = vld [vmem:[#allocation8 + $0x38] sm:$0x7f]
      %v4020 = vld [vmem:[#allocation8 + $0x40] sm:$0xff]
      %v4021 = vld [vmem:[#allocation8 + $0x48] sm:$0x7f]
      %v4022 = vld [vmem:[#allocation8 + $0x50] sm:$0xff]
      %v4023 = vld [vmem:[#allocation8 + $0x58] sm:$0x7f]
      %v4024 = vld [vmem:[#allocation8 + $0x60] sm:$0xff]
      %v4025 = vld [vmem:[#allocation8 + $0x68] sm:$0x7f]
      %v4026 = vld [vmem:[#allocation8 + $0x70] sm:$0xff]
      %v4027 = vld [vmem:[#allocation8 + $0x78] sm:$0x7f]
      %v4028 = vld [vmem:[#allocation8 + $0x80] sm:$0xff]
      %v4029 = vld [vmem:[#allocation8 + $0x88] sm:$0x7f]
      %v4030 = vld [vmem:[#allocation8 + $0x90] sm:$0xff]
      %v4031 = vld [vmem:[#allocation8 + $0x98] sm:$0x7f]
      %v4032 = vld [vmem:[#allocation8 + $0xa0] sm:$0xff]
      %v4033 = vld [vmem:[#allocation8 + $0xa8] sm:$0x7f]
      %v4034 = vld [vmem:[#allocation8 + $0xb0] sm:$0xff]
      %v4035 = vld [vmem:[#allocation8 + $0xb8] sm:$0x7f]
      %v4036 = vld [vmem:[#allocation8 + $0xc0] sm:$0xff]
      %v4037 = vld [vmem:[#allocation8 + $0xc8] sm:$0x7f]
      %v4038 = vld [vmem:[#allocation8 + $0xd0] sm:$0xff]
      %v4039 = vld [vmem:[#allocation8 + $0xd8] sm:$0x7f]
      %v4040 = vld [vmem:[#allocation8 + $0xe0] sm:$0xff]
      %v4041 = vld [vmem:[#allocation8 + $0xe8] sm:$0x7f]
      %s4042 = scalar_lea.vmem [#allocation10], 16
      %v4043 = vld [vmem:[%s4042 + $0x1] sm:$0xff]
      %v4044 = vld [vmem:[%s4042 + $0x9] sm:$0x7f]
      %v4045 = vld [vmem:[%s4042 + $0x11] sm:$0xff]
      %v4046 = vld [vmem:[%s4042 + $0x19] sm:$0x7f]
      %v4047 = vld [vmem:[%s4042 + $0x21] sm:$0xff]
      %v4048 = vld [vmem:[%s4042 + $0x29] sm:$0x7f]
      %v4049 = vld [vmem:[%s4042 + $0x31] sm:$0xff]
      %v4050 = vld [vmem:[%s4042 + $0x39] sm:$0x7f]
      %v4051 = vld [vmem:[%s4042 + $0x41] sm:$0xff]
      %v4052 = vld [vmem:[%s4042 + $0x49] sm:$0x7f]
      %v4053 = vld [vmem:[%s4042 + $0x51] sm:$0xff]
      %v4054 = vld [vmem:[%s4042 + $0x59] sm:$0x7f]
      %v4055 = vld [vmem:[%s4042 + $0x61] sm:$0xff]
      %v4056 = vld [vmem:[%s4042 + $0x69] sm:$0x7f]
      %v4057 = vld [vmem:[%s4042 + $0x71] sm:$0xff]
      %v4058 = vld [vmem:[%s4042 + $0x79] sm:$0x7f]
      %v4059 = vld [vmem:[%s4042 + $0x81] sm:$0xff]
      %v4060 = vld [vmem:[%s4042 + $0x89] sm:$0x7f]
      %v4061 = vld [vmem:[%s4042 + $0x91] sm:$0xff]
      %v4062 = vld [vmem:[%s4042 + $0x99] sm:$0x7f]
      %v4063 = vld [vmem:[%s4042 + $0xa1] sm:$0xff]
      %v4064 = vld [vmem:[%s4042 + $0xa9] sm:$0x7f]
      %v4065 = vld [vmem:[%s4042 + $0xb1] sm:$0xff]
      %v4066 = vld [vmem:[%s4042 + $0xb9] sm:$0x7f]
      %v4067 = vld [vmem:[%s4042 + $0xc1] sm:$0xff]
      %v4068 = vld [vmem:[%s4042 + $0xc9] sm:$0x7f]
      %v4069 = vld [vmem:[%s4042 + $0xd1] sm:$0xff]
      %v4070 = vld [vmem:[%s4042 + $0xd9] sm:$0x7f]
      %v4071 = vld [vmem:[%s4042 + $0xe1] sm:$0xff]
      %v4072 = vld [vmem:[%s4042 + $0xe9] sm:$0x7f]
      %v4073 = vlaneseq
      %v4074 = vshrl.u32 %v4073, 7
      %v4075 = vsub.s32 0, %v4074
      %v4076 = vrot.slane %v3978, %v4075
      %v4077 = vmul.f32 %v4012, %v4076
      %v4078 = vmul.f32 %v4013, %v4076
      %v4079 = vmul.f32 %v4014, %v4076
      %v4080 = vmul.f32 %v4015, %v4076
      %v4081 = vmul.f32 %v4016, %v4076
      %v4082 = vmul.f32 %v4017, %v4076
      %v4083 = vmul.f32 %v4018, %v4076
      %v4084 = vmul.f32 %v4019, %v4076
      %v4085 = vmul.f32 %v4020, %v4076
      %v4086 = vmul.f32 %v4021, %v4076
      %v4087 = vmul.f32 %v4022, %v4076
      %v4088 = vmul.f32 %v4023, %v4076
      %v4089 = vmul.f32 %v4024, %v4076
      %v4090 = vmul.f32 %v4025, %v4076
      %v4091 = vmul.f32 %v4026, %v4076
      %v4092 = vmul.f32 %v4027, %v4076
      %v4093 = vmul.f32 %v4028, %v4076
      %v4094 = vmul.f32 %v4029, %v4076
      %v4095 = vmul.f32 %v4030, %v4076
      %v4096 = vmul.f32 %v4031, %v4076
      %v4097 = vmul.f32 %v4032, %v4076
      %v4098 = vmul.f32 %v4033, %v4076
      %v4099 = vmul.f32 %v4034, %v4076
      %v4100 = vmul.f32 %v4035, %v4076
      %v4101 = vmul.f32 %v4036, %v4076
      %v4102 = vmul.f32 %v4037, %v4076
      %v4103 = vmul.f32 %v4038, %v4076
      %v4104 = vmul.f32 %v4039, %v4076
      %v4105 = vmul.f32 %v4040, %v4076
      %v4106 = vmul.f32 %v4041, %v4076
      %v4107 = vadd.f32 %v4043, %v4077
      %v4108 = vadd.f32 %v4044, %v4078
      %v4109 = vadd.f32 %v4045, %v4079
      %v4110 = vadd.f32 %v4046, %v4080
      %v4111 = vadd.f32 %v4047, %v4081
      %v4112 = vadd.f32 %v4048, %v4082
      %v4113 = vadd.f32 %v4049, %v4083
      %v4114 = vadd.f32 %v4050, %v4084
      %v4115 = vadd.f32 %v4051, %v4085
      %v4116 = vadd.f32 %v4052, %v4086
      %v4117 = vadd.f32 %v4053, %v4087
      %v4118 = vadd.f32 %v4054, %v4088
      %v4119 = vadd.f32 %v4055, %v4089
      %v4120 = vadd.f32 %v4056, %v4090
      %v4121 = vadd.f32 %v4057, %v4091
      %v4122 = vadd.f32 %v4058, %v4092
      %v4123 = vadd.f32 %v4059, %v4093
      %v4124 = vadd.f32 %v4060, %v4094
      %v4125 = vadd.f32 %v4061, %v4095
      %v4126 = vadd.f32 %v4062, %v4096
      %v4127 = vadd.f32 %v4063, %v4097
      %v4128 = vadd.f32 %v4064, %v4098
      %v4129 = vadd.f32 %v4065, %v4099
      %v4130 = vadd.f32 %v4066, %v4100
      %v4131 = vadd.f32 %v4067, %v4101
      %v4132 = vadd.f32 %v4068, %v4102
      %v4133 = vadd.f32 %v4069, %v4103
      %v4134 = vadd.f32 %v4070, %v4104
      %v4135 = vadd.f32 %v4071, %v4105
      %v4136 = vadd.f32 %v4072, %v4106
      %4137 = vst.msk [vmem:[%s4042 + $0x1] sm:$0xff] %vm2478, %v4107
      %vm4138 = vcmask 391168
      %4139 = vst.msk [vmem:[%s4042 + $0x9] sm:$0x7f] %vm4138, %v4108
      %4140 = vst.msk [vmem:[%s4042 + $0x11] sm:$0xff] %vm2478, %v4109
      %4141 = vst.msk [vmem:[%s4042 + $0x19] sm:$0x7f] %vm4138, %v4110
      %4142 = vst.msk [vmem:[%s4042 + $0x21] sm:$0xff] %vm2478, %v4111
      %4143 = vst.msk [vmem:[%s4042 + $0x29] sm:$0x7f] %vm4138, %v4112
      %4144 = vst.msk [vmem:[%s4042 + $0x31] sm:$0xff] %vm2478, %v4113
      %4145 = vst.msk [vmem:[%s4042 + $0x39] sm:$0x7f] %vm4138, %v4114
      %4146 = vst.msk [vmem:[%s4042 + $0x41] sm:$0xff] %vm2478, %v4115
      %4147 = vst.msk [vmem:[%s4042 + $0x49] sm:$0x7f] %vm4138, %v4116
      %4148 = vst.msk [vmem:[%s4042 + $0x51] sm:$0xff] %vm2478, %v4117
      %4149 = vst.msk [vmem:[%s4042 + $0x59] sm:$0x7f] %vm4138, %v4118
      %4150 = vst.msk [vmem:[%s4042 + $0x61] sm:$0xff] %vm2478, %v4119
      %4151 = vst.msk [vmem:[%s4042 + $0x69] sm:$0x7f] %vm4138, %v4120
      %4152 = vst.msk [vmem:[%s4042 + $0x71] sm:$0xff] %vm2478, %v4121
      %4153 = vst.msk [vmem:[%s4042 + $0x79] sm:$0x7f] %vm4138, %v4122
      %4154 = vst.msk [vmem:[%s4042 + $0x81] sm:$0xff] %vm2478, %v4123
      %4155 = vst.msk [vmem:[%s4042 + $0x89] sm:$0x7f] %vm4138, %v4124
      %4156 = vst.msk [vmem:[%s4042 + $0x91] sm:$0xff] %vm2478, %v4125
      %4157 = vst.msk [vmem:[%s4042 + $0x99] sm:$0x7f] %vm4138, %v4126
      %4158 = vst.msk [vmem:[%s4042 + $0xa1] sm:$0xff] %vm2478, %v4127
      %4159 = vst.msk [vmem:[%s4042 + $0xa9] sm:$0x7f] %vm4138, %v4128
      %4160 = vst.msk [vmem:[%s4042 + $0xb1] sm:$0xff] %vm2478, %v4129
      %4161 = vst.msk [vmem:[%s4042 + $0xb9] sm:$0x7f] %vm4138, %v4130
      %4162 = vst.msk [vmem:[%s4042 + $0xc1] sm:$0xff] %vm2478, %v4131
      %4163 = vst.msk [vmem:[%s4042 + $0xc9] sm:$0x7f] %vm4138, %v4132
      %4164 = vst.msk [vmem:[%s4042 + $0xd1] sm:$0xff] %vm2478, %v4133
      %4165 = vst.msk [vmem:[%s4042 + $0xd9] sm:$0x7f] %vm4138, %v4134
      %4166 = vst.msk [vmem:[%s4042 + $0xe1] sm:$0xff] %vm2478, %v4135
      %4167 = vst.msk [vmem:[%s4042 + $0xe9] sm:$0x7f] %vm4138, %v4136
      %v4168 = vld [vmem:[#allocation8] sm:$0xff]
      %v4169 = vld [vmem:[#allocation8 + $0x8] sm:$0xff]
      %v4170 = vld [vmem:[#allocation8 + $0x10] sm:$0xff]
      %v4171 = vld [vmem:[#allocation8 + $0x18] sm:$0xff]
      %v4172 = vld [vmem:[#allocation8 + $0x20] sm:$0xff]
      %v4173 = vld [vmem:[#allocation8 + $0x28] sm:$0xff]
      %v4174 = vld [vmem:[#allocation8 + $0x30] sm:$0xff]
      %v4175 = vld [vmem:[#allocation8 + $0x38] sm:$0xff]
      %v4176 = vld [vmem:[#allocation8 + $0x40] sm:$0xff]
      %v4177 = vld [vmem:[#allocation8 + $0x48] sm:$0xff]
      %v4178 = vld [vmem:[#allocation8 + $0x50] sm:$0xff]
      %v4179 = vld [vmem:[#allocation8 + $0x58] sm:$0xff]
      %v4180 = vld [vmem:[#allocation8 + $0x60] sm:$0xff]
      %v4181 = vld [vmem:[#allocation8 + $0x68] sm:$0xff]
      %v4182 = vld [vmem:[#allocation8 + $0x70] sm:$0xff]
      %v4183 = vld [vmem:[#allocation8 + $0x78] sm:$0xff]
      %v4184 = vld [vmem:[#allocation8 + $0x80] sm:$0xff]
      %v4185 = vld [vmem:[#allocation8 + $0x88] sm:$0xff]
      %v4186 = vld [vmem:[#allocation8 + $0x90] sm:$0xff]
      %v4187 = vld [vmem:[#allocation8 + $0x98] sm:$0xff]
      %v4188 = vld [vmem:[#allocation8 + $0xa0] sm:$0xff]
      %v4189 = vld [vmem:[#allocation8 + $0xa8] sm:$0xff]
      %v4190 = vld [vmem:[#allocation8 + $0xb0] sm:$0xff]
      %v4191 = vld [vmem:[#allocation8 + $0xb8] sm:$0xff]
      %v4192 = vld [vmem:[#allocation8 + $0xc0] sm:$0xff]
      %v4193 = vld [vmem:[#allocation8 + $0xc8] sm:$0xff]
      %v4194 = vld [vmem:[#allocation8 + $0xd0] sm:$0xff]
      %v4195 = vld [vmem:[#allocation8 + $0xd8] sm:$0xff]
      %v4196 = vld [vmem:[#allocation8 + $0xe0] sm:$0xff]
      %v4197 = vld [vmem:[#allocation8 + $0xe8] sm:$0xff]
      %v4198 = vld [vmem:[%s4042] sm:$0xff]
      %v4199 = vld [vmem:[%s4042 + $0x8] sm:$0xff]
      %v4200 = vld [vmem:[%s4042 + $0x10] sm:$0xff]
      %v4201 = vld [vmem:[%s4042 + $0x18] sm:$0xff]
      %v4202 = vld [vmem:[%s4042 + $0x20] sm:$0xff]
      %v4203 = vld [vmem:[%s4042 + $0x28] sm:$0xff]
      %v4204 = vld [vmem:[%s4042 + $0x30] sm:$0xff]
      %v4205 = vld [vmem:[%s4042 + $0x38] sm:$0xff]
      %v4206 = vld [vmem:[%s4042 + $0x40] sm:$0xff]
      %v4207 = vld [vmem:[%s4042 + $0x48] sm:$0xff]
      %v4208 = vld [vmem:[%s4042 + $0x50] sm:$0xff]
      %v4209 = vld [vmem:[%s4042 + $0x58] sm:$0xff]
      %v4210 = vld [vmem:[%s4042 + $0x60] sm:$0xff]
      %v4211 = vld [vmem:[%s4042 + $0x68] sm:$0xff]
      %v4212 = vld [vmem:[%s4042 + $0x70] sm:$0xff]
      %v4213 = vld [vmem:[%s4042 + $0x78] sm:$0xff]
      %v4214 = vld [vmem:[%s4042 + $0x80] sm:$0xff]
      %v4215 = vld [vmem:[%s4042 + $0x88] sm:$0xff]
      %v4216 = vld [vmem:[%s4042 + $0x90] sm:$0xff]
      %v4217 = vld [vmem:[%s4042 + $0x98] sm:$0xff]
      %v4218 = vld [vmem:[%s4042 + $0xa0] sm:$0xff]
      %v4219 = vld [vmem:[%s4042 + $0xa8] sm:$0xff]
      %v4220 = vld [vmem:[%s4042 + $0xb0] sm:$0xff]
      %v4221 = vld [vmem:[%s4042 + $0xb8] sm:$0xff]
      %v4222 = vld [vmem:[%s4042 + $0xc0] sm:$0xff]
      %v4223 = vld [vmem:[%s4042 + $0xc8] sm:$0xff]
      %v4224 = vld [vmem:[%s4042 + $0xd0] sm:$0xff]
      %v4225 = vld [vmem:[%s4042 + $0xd8] sm:$0xff]
      %v4226 = vld [vmem:[%s4042 + $0xe0] sm:$0xff]
      %v4227 = vld [vmem:[%s4042 + $0xe8] sm:$0xff]
      %v4228 = vlaneseq
      %v4229 = vshrl.u32 %v4228, 7
      %v4230 = vsub.s32 1, %v4229
      %v4231 = vrot.slane %v3978, %v4230
      %v4232 = vmul.f32 %v4168, %v4231
      %v4233 = vmul.f32 %v4169, %v4231
      %v4234 = vmul.f32 %v4170, %v4231
      %v4235 = vmul.f32 %v4171, %v4231
      %v4236 = vmul.f32 %v4172, %v4231
      %v4237 = vmul.f32 %v4173, %v4231
      %v4238 = vmul.f32 %v4174, %v4231
      %v4239 = vmul.f32 %v4175, %v4231
      %v4240 = vmul.f32 %v4176, %v4231
      %v4241 = vmul.f32 %v4177, %v4231
      %v4242 = vmul.f32 %v4178, %v4231
      %v4243 = vmul.f32 %v4179, %v4231
      %v4244 = vmul.f32 %v4180, %v4231
      %v4245 = vmul.f32 %v4181, %v4231
      %v4246 = vmul.f32 %v4182, %v4231
      %v4247 = vmul.f32 %v4183, %v4231
      %v4248 = vmul.f32 %v4184, %v4231
      %v4249 = vmul.f32 %v4185, %v4231
      %v4250 = vmul.f32 %v4186, %v4231
      %v4251 = vmul.f32 %v4187, %v4231
      %v4252 = vmul.f32 %v4188, %v4231
      %v4253 = vmul.f32 %v4189, %v4231
      %v4254 = vmul.f32 %v4190, %v4231
      %v4255 = vmul.f32 %v4191, %v4231
      %v4256 = vmul.f32 %v4192, %v4231
      %v4257 = vmul.f32 %v4193, %v4231
      %v4258 = vmul.f32 %v4194, %v4231
      %v4259 = vmul.f32 %v4195, %v4231
      %v4260 = vmul.f32 %v4196, %v4231
      %v4261 = vmul.f32 %v4197, %v4231
      %v4262 = vadd.f32 %v4198, %v4232
      %v4263 = vadd.f32 %v4199, %v4233
      %v4264 = vadd.f32 %v4200, %v4234
      %v4265 = vadd.f32 %v4201, %v4235
      %v4266 = vadd.f32 %v4202, %v4236
      %v4267 = vadd.f32 %v4203, %v4237
      %v4268 = vadd.f32 %v4204, %v4238
      %v4269 = vadd.f32 %v4205, %v4239
      %v4270 = vadd.f32 %v4206, %v4240
      %v4271 = vadd.f32 %v4207, %v4241
      %v4272 = vadd.f32 %v4208, %v4242
      %v4273 = vadd.f32 %v4209, %v4243
      %v4274 = vadd.f32 %v4210, %v4244
      %v4275 = vadd.f32 %v4211, %v4245
      %v4276 = vadd.f32 %v4212, %v4246
      %v4277 = vadd.f32 %v4213, %v4247
      %v4278 = vadd.f32 %v4214, %v4248
      %v4279 = vadd.f32 %v4215, %v4249
      %v4280 = vadd.f32 %v4216, %v4250
      %v4281 = vadd.f32 %v4217, %v4251
      %v4282 = vadd.f32 %v4218, %v4252
      %v4283 = vadd.f32 %v4219, %v4253
      %v4284 = vadd.f32 %v4220, %v4254
      %v4285 = vadd.f32 %v4221, %v4255
      %v4286 = vadd.f32 %v4222, %v4256
      %v4287 = vadd.f32 %v4223, %v4257
      %v4288 = vadd.f32 %v4224, %v4258
      %v4289 = vadd.f32 %v4225, %v4259
      %v4290 = vadd.f32 %v4226, %v4260
      %v4291 = vadd.f32 %v4227, %v4261
      %4292 = vst.msk [vmem:[%s4042] sm:$0xff] %vm2478, %v4262
      %4293 = vst.msk [vmem:[%s4042 + $0x8] sm:$0xff] %vm2478, %v4263
      %4294 = vst.msk [vmem:[%s4042 + $0x10] sm:$0xff] %vm2478, %v4264
      %4295 = vst.msk [vmem:[%s4042 + $0x18] sm:$0xff] %vm2478, %v4265
      %4296 = vst.msk [vmem:[%s4042 + $0x20] sm:$0xff] %vm2478, %v4266
      %4297 = vst.msk [vmem:[%s4042 + $0x28] sm:$0xff] %vm2478, %v4267
      %4298 = vst.msk [vmem:[%s4042 + $0x30] sm:$0xff] %vm2478, %v4268
      %4299 = vst.msk [vmem:[%s4042 + $0x38] sm:$0xff] %vm2478, %v4269
      %4300 = vst.msk [vmem:[%s4042 + $0x40] sm:$0xff] %vm2478, %v4270
      %4301 = vst.msk [vmem:[%s4042 + $0x48] sm:$0xff] %vm2478, %v4271
      %4302 = vst.msk [vmem:[%s4042 + $0x50] sm:$0xff] %vm2478, %v4272
      %4303 = vst.msk [vmem:[%s4042 + $0x58] sm:$0xff] %vm2478, %v4273
      %4304 = vst.msk [vmem:[%s4042 + $0x60] sm:$0xff] %vm2478, %v4274
      %4305 = vst.msk [vmem:[%s4042 + $0x68] sm:$0xff] %vm2478, %v4275
      %4306 = vst.msk [vmem:[%s4042 + $0x70] sm:$0xff] %vm2478, %v4276
      %4307 = vst.msk [vmem:[%s4042 + $0x78] sm:$0xff] %vm2478, %v4277
      %4308 = vst.msk [vmem:[%s4042 + $0x80] sm:$0xff] %vm2478, %v4278
      %4309 = vst.msk [vmem:[%s4042 + $0x88] sm:$0xff] %vm2478, %v4279
      %4310 = vst.msk [vmem:[%s4042 + $0x90] sm:$0xff] %vm2478, %v4280
      %4311 = vst.msk [vmem:[%s4042 + $0x98] sm:$0xff] %vm2478, %v4281
      %4312 = vst.msk [vmem:[%s4042 + $0xa0] sm:$0xff] %vm2478, %v4282
      %4313 = vst.msk [vmem:[%s4042 + $0xa8] sm:$0xff] %vm2478, %v4283
      %4314 = vst.msk [vmem:[%s4042 + $0xb0] sm:$0xff] %vm2478, %v4284
      %4315 = vst.msk [vmem:[%s4042 + $0xb8] sm:$0xff] %vm2478, %v4285
      %4316 = vst.msk [vmem:[%s4042 + $0xc0] sm:$0xff] %vm2478, %v4286
      %4317 = vst.msk [vmem:[%s4042 + $0xc8] sm:$0xff] %vm2478, %v4287
      %4318 = vst.msk [vmem:[%s4042 + $0xd0] sm:$0xff] %vm2478, %v4288
      %4319 = vst.msk [vmem:[%s4042 + $0xd8] sm:$0xff] %vm2478, %v4289
      %4320 = vst.msk [vmem:[%s4042 + $0xe0] sm:$0xff] %vm2478, %v4290
      %4321 = vst.msk [vmem:[%s4042 + $0xe8] sm:$0xff] %vm2478, %v4291
      %v4322 = vld [vmem:[#allocation8 + $0x1] sm:$0xff]
      %v4323 = vld [vmem:[#allocation8 + $0x9] sm:$0x7f]
      %v4324 = vld [vmem:[#allocation8 + $0x11] sm:$0xff]
      %v4325 = vld [vmem:[#allocation8 + $0x19] sm:$0x7f]
      %v4326 = vld [vmem:[#allocation8 + $0x21] sm:$0xff]
      %v4327 = vld [vmem:[#allocation8 + $0x29] sm:$0x7f]
      %v4328 = vld [vmem:[#allocation8 + $0x31] sm:$0xff]
      %v4329 = vld [vmem:[#allocation8 + $0x39] sm:$0x7f]
      %v4330 = vld [vmem:[#allocation8 + $0x41] sm:$0xff]
      %v4331 = vld [vmem:[#allocation8 + $0x49] sm:$0x7f]
      %v4332 = vld [vmem:[#allocation8 + $0x51] sm:$0xff]
      %v4333 = vld [vmem:[#allocation8 + $0x59] sm:$0x7f]
      %v4334 = vld [vmem:[#allocation8 + $0x61] sm:$0xff]
      %v4335 = vld [vmem:[#allocation8 + $0x69] sm:$0x7f]
      %v4336 = vld [vmem:[#allocation8 + $0x71] sm:$0xff]
      %v4337 = vld [vmem:[#allocation8 + $0x79] sm:$0x7f]
      %v4338 = vld [vmem:[#allocation8 + $0x81] sm:$0xff]
      %v4339 = vld [vmem:[#allocation8 + $0x89] sm:$0x7f]
      %v4340 = vld [vmem:[#allocation8 + $0x91] sm:$0xff]
      %v4341 = vld [vmem:[#allocation8 + $0x99] sm:$0x7f]
      %v4342 = vld [vmem:[#allocation8 + $0xa1] sm:$0xff]
      %v4343 = vld [vmem:[#allocation8 + $0xa9] sm:$0x7f]
      %v4344 = vld [vmem:[#allocation8 + $0xb1] sm:$0xff]
      %v4345 = vld [vmem:[#allocation8 + $0xb9] sm:$0x7f]
      %v4346 = vld [vmem:[#allocation8 + $0xc1] sm:$0xff]
      %v4347 = vld [vmem:[#allocation8 + $0xc9] sm:$0x7f]
      %v4348 = vld [vmem:[#allocation8 + $0xd1] sm:$0xff]
      %v4349 = vld [vmem:[#allocation8 + $0xd9] sm:$0x7f]
      %v4350 = vld [vmem:[#allocation8 + $0xe1] sm:$0xff]
      %v4351 = vld [vmem:[#allocation8 + $0xe9] sm:$0x7f]
      %v4352 = vld [vmem:[%s4042] sm:$0xff]
      %v4353 = vld [vmem:[%s4042 + $0x8] sm:$0x7f]
      %v4354 = vld [vmem:[%s4042 + $0x10] sm:$0xff]
      %v4355 = vld [vmem:[%s4042 + $0x18] sm:$0x7f]
      %v4356 = vld [vmem:[%s4042 + $0x20] sm:$0xff]
      %v4357 = vld [vmem:[%s4042 + $0x28] sm:$0x7f]
      %v4358 = vld [vmem:[%s4042 + $0x30] sm:$0xff]
      %v4359 = vld [vmem:[%s4042 + $0x38] sm:$0x7f]
      %v4360 = vld [vmem:[%s4042 + $0x40] sm:$0xff]
      %v4361 = vld [vmem:[%s4042 + $0x48] sm:$0x7f]
      %v4362 = vld [vmem:[%s4042 + $0x50] sm:$0xff]
      %v4363 = vld [vmem:[%s4042 + $0x58] sm:$0x7f]
      %v4364 = vld [vmem:[%s4042 + $0x60] sm:$0xff]
      %v4365 = vld [vmem:[%s4042 + $0x68] sm:$0x7f]
      %v4366 = vld [vmem:[%s4042 + $0x70] sm:$0xff]
      %v4367 = vld [vmem:[%s4042 + $0x78] sm:$0x7f]
      %v4368 = vld [vmem:[%s4042 + $0x80] sm:$0xff]
      %v4369 = vld [vmem:[%s4042 + $0x88] sm:$0x7f]
      %v4370 = vld [vmem:[%s4042 + $0x90] sm:$0xff]
      %v4371 = vld [vmem:[%s4042 + $0x98] sm:$0x7f]
      %v4372 = vld [vmem:[%s4042 + $0xa0] sm:$0xff]
      %v4373 = vld [vmem:[%s4042 + $0xa8] sm:$0x7f]
      %v4374 = vld [vmem:[%s4042 + $0xb0] sm:$0xff]
      %v4375 = vld [vmem:[%s4042 + $0xb8] sm:$0x7f]
      %v4376 = vld [vmem:[%s4042 + $0xc0] sm:$0xff]
      %v4377 = vld [vmem:[%s4042 + $0xc8] sm:$0x7f]
      %v4378 = vld [vmem:[%s4042 + $0xd0] sm:$0xff]
      %v4379 = vld [vmem:[%s4042 + $0xd8] sm:$0x7f]
      %v4380 = vld [vmem:[%s4042 + $0xe0] sm:$0xff]
      %v4381 = vld [vmem:[%s4042 + $0xe8] sm:$0x7f]
      %v4382 = vlaneseq
      %v4383 = vshrl.u32 %v4382, 7
      %v4384 = vsub.s32 2, %v4383
      %v4385 = vrot.slane %v3978, %v4384
      %v4386 = vmul.f32 %v4322, %v4385
      %v4387 = vmul.f32 %v4323, %v4385
      %v4388 = vmul.f32 %v4324, %v4385
      %v4389 = vmul.f32 %v4325, %v4385
      %v4390 = vmul.f32 %v4326, %v4385
      %v4391 = vmul.f32 %v4327, %v4385
      %v4392 = vmul.f32 %v4328, %v4385
      %v4393 = vmul.f32 %v4329, %v4385
      %v4394 = vmul.f32 %v4330, %v4385
      %v4395 = vmul.f32 %v4331, %v4385
      %v4396 = vmul.f32 %v4332, %v4385
      %v4397 = vmul.f32 %v4333, %v4385
      %v4398 = vmul.f32 %v4334, %v4385
      %v4399 = vmul.f32 %v4335, %v4385
      %v4400 = vmul.f32 %v4336, %v4385
      %v4401 = vmul.f32 %v4337, %v4385
      %v4402 = vmul.f32 %v4338, %v4385
      %v4403 = vmul.f32 %v4339, %v4385
      %v4404 = vmul.f32 %v4340, %v4385
      %v4405 = vmul.f32 %v4341, %v4385
      %v4406 = vmul.f32 %v4342, %v4385
      %v4407 = vmul.f32 %v4343, %v4385
      %v4408 = vmul.f32 %v4344, %v4385
      %v4409 = vmul.f32 %v4345, %v4385
      %v4410 = vmul.f32 %v4346, %v4385
      %v4411 = vmul.f32 %v4347, %v4385
      %v4412 = vmul.f32 %v4348, %v4385
      %v4413 = vmul.f32 %v4349, %v4385
      %v4414 = vmul.f32 %v4350, %v4385
      %v4415 = vmul.f32 %v4351, %v4385
      %v4416 = vadd.f32 %v4352, %v4386
      %v4417 = vadd.f32 %v4353, %v4387
      %v4418 = vadd.f32 %v4354, %v4388
      %v4419 = vadd.f32 %v4355, %v4389
      %v4420 = vadd.f32 %v4356, %v4390
      %v4421 = vadd.f32 %v4357, %v4391
      %v4422 = vadd.f32 %v4358, %v4392
      %v4423 = vadd.f32 %v4359, %v4393
      %v4424 = vadd.f32 %v4360, %v4394
      %v4425 = vadd.f32 %v4361, %v4395
      %v4426 = vadd.f32 %v4362, %v4396
      %v4427 = vadd.f32 %v4363, %v4397
      %v4428 = vadd.f32 %v4364, %v4398
      %v4429 = vadd.f32 %v4365, %v4399
      %v4430 = vadd.f32 %v4366, %v4400
      %v4431 = vadd.f32 %v4367, %v4401
      %v4432 = vadd.f32 %v4368, %v4402
      %v4433 = vadd.f32 %v4369, %v4403
      %v4434 = vadd.f32 %v4370, %v4404
      %v4435 = vadd.f32 %v4371, %v4405
      %v4436 = vadd.f32 %v4372, %v4406
      %v4437 = vadd.f32 %v4373, %v4407
      %v4438 = vadd.f32 %v4374, %v4408
      %v4439 = vadd.f32 %v4375, %v4409
      %v4440 = vadd.f32 %v4376, %v4410
      %v4441 = vadd.f32 %v4377, %v4411
      %v4442 = vadd.f32 %v4378, %v4412
      %v4443 = vadd.f32 %v4379, %v4413
      %v4444 = vadd.f32 %v4380, %v4414
      %v4445 = vadd.f32 %v4381, %v4415
      %4446 = vst.msk [vmem:[%s4042] sm:$0xff] %vm2478, %v4416
      %4447 = vst.msk [vmem:[%s4042 + $0x8] sm:$0x7f] %vm4138, %v4417
      %4448 = vst.msk [vmem:[%s4042 + $0x10] sm:$0xff] %vm2478, %v4418
      %4449 = vst.msk [vmem:[%s4042 + $0x18] sm:$0x7f] %vm4138, %v4419
      %4450 = vst.msk [vmem:[%s4042 + $0x20] sm:$0xff] %vm2478, %v4420
      %4451 = vst.msk [vmem:[%s4042 + $0x28] sm:$0x7f] %vm4138, %v4421
      %4452 = vst.msk [vmem:[%s4042 + $0x30] sm:$0xff] %vm2478, %v4422
      %4453 = vst.msk [vmem:[%s4042 + $0x38] sm:$0x7f] %vm4138, %v4423
      %4454 = vst.msk [vmem:[%s4042 + $0x40] sm:$0xff] %vm2478, %v4424
      %4455 = vst.msk [vmem:[%s4042 + $0x48] sm:$0x7f] %vm4138, %v4425
      %4456 = vst.msk [vmem:[%s4042 + $0x50] sm:$0xff] %vm2478, %v4426
      %4457 = vst.msk [vmem:[%s4042 + $0x58] sm:$0x7f] %vm4138, %v4427
      %4458 = vst.msk [vmem:[%s4042 + $0x60] sm:$0xff] %vm2478, %v4428
      %4459 = vst.msk [vmem:[%s4042 + $0x68] sm:$0x7f] %vm4138, %v4429
      %4460 = vst.msk [vmem:[%s4042 + $0x70] sm:$0xff] %vm2478, %v4430
      %4461 = vst.msk [vmem:[%s4042 + $0x78] sm:$0x7f] %vm4138, %v4431
      %4462 = vst.msk [vmem:[%s4042 + $0x80] sm:$0xff] %vm2478, %v4432
      %4463 = vst.msk [vmem:[%s4042 + $0x88] sm:$0x7f] %vm4138, %v4433
      %4464 = vst.msk [vmem:[%s4042 + $0x90] sm:$0xff] %vm2478, %v4434
      %4465 = vst.msk [vmem:[%s4042 + $0x98] sm:$0x7f] %vm4138, %v4435
      %4466 = vst.msk [vmem:[%s4042 + $0xa0] sm:$0xff] %vm2478, %v4436
      %4467 = vst.msk [vmem:[%s4042 + $0xa8] sm:$0x7f] %vm4138, %v4437
      %4468 = vst.msk [vmem:[%s4042 + $0xb0] sm:$0xff] %vm2478, %v4438
      %4469 = vst.msk [vmem:[%s4042 + $0xb8] sm:$0x7f] %vm4138, %v4439
      %4470 = vst.msk [vmem:[%s4042 + $0xc0] sm:$0xff] %vm2478, %v4440
      %4471 = vst.msk [vmem:[%s4042 + $0xc8] sm:$0x7f] %vm4138, %v4441
      %4472 = vst.msk [vmem:[%s4042 + $0xd0] sm:$0xff] %vm2478, %v4442
      %4473 = vst.msk [vmem:[%s4042 + $0xd8] sm:$0x7f] %vm4138, %v4443
      %4474 = vst.msk [vmem:[%s4042 + $0xe0] sm:$0xff] %vm2478, %v4444
      %4475 = vst.msk [vmem:[%s4042 + $0xe8] sm:$0x7f] %vm4138, %v4445
      %v4476 = vld [vmem:[#allocation8] sm:$0xff]
      %v4477 = vld [vmem:[#allocation8 + $0x8] sm:$0x7f]
      %v4478 = vld [vmem:[#allocation8 + $0x10] sm:$0xff]
      %v4479 = vld [vmem:[#allocation8 + $0x18] sm:$0x7f]
      %v4480 = vld [vmem:[#allocation8 + $0x20] sm:$0xff]
      %v4481 = vld [vmem:[#allocation8 + $0x28] sm:$0x7f]
      %v4482 = vld [vmem:[#allocation8 + $0x30] sm:$0xff]
      %v4483 = vld [vmem:[#allocation8 + $0x38] sm:$0x7f]
      %v4484 = vld [vmem:[#allocation8 + $0x40] sm:$0xff]
      %v4485 = vld [vmem:[#allocation8 + $0x48] sm:$0x7f]
      %v4486 = vld [vmem:[#allocation8 + $0x50] sm:$0xff]
      %v4487 = vld [vmem:[#allocation8 + $0x58] sm:$0x7f]
      %v4488 = vld [vmem:[#allocation8 + $0x60] sm:$0xff]
      %v4489 = vld [vmem:[#allocation8 + $0x68] sm:$0x7f]
      %v4490 = vld [vmem:[#allocation8 + $0x70] sm:$0xff]
      %v4491 = vld [vmem:[#allocation8 + $0x78] sm:$0x7f]
      %v4492 = vld [vmem:[#allocation8 + $0x80] sm:$0xff]
      %v4493 = vld [vmem:[#allocation8 + $0x88] sm:$0x7f]
      %v4494 = vld [vmem:[#allocation8 + $0x90] sm:$0xff]
      %v4495 = vld [vmem:[#allocation8 + $0x98] sm:$0x7f]
      %v4496 = vld [vmem:[#allocation8 + $0xa0] sm:$0xff]
      %v4497 = vld [vmem:[#allocation8 + $0xa8] sm:$0x7f]
      %v4498 = vld [vmem:[#allocation8 + $0xb0] sm:$0xff]
      %v4499 = vld [vmem:[#allocation8 + $0xb8] sm:$0x7f]
      %v4500 = vld [vmem:[#allocation8 + $0xc0] sm:$0xff]
      %v4501 = vld [vmem:[#allocation8 + $0xc8] sm:$0x7f]
      %v4502 = vld [vmem:[#allocation8 + $0xd0] sm:$0xff]
      %v4503 = vld [vmem:[#allocation8 + $0xd8] sm:$0x7f]
      %v4504 = vld [vmem:[#allocation8 + $0xe0] sm:$0xff]
      %v4505 = vld [vmem:[#allocation8 + $0xe8] sm:$0x7f]
      %v4506 = vld [vmem:[#allocation8 + $0xf0] sm:$0xff]
      %v4507 = vld [vmem:[#allocation8 + $0xf8] sm:$0x7f]
      %v4508 = vld [vmem:[#allocation10 + $0x1] sm:$0xff]
      %v4509 = vld [vmem:[#allocation10 + $0x9] sm:$0x7f]
      %v4510 = vld [vmem:[#allocation10 + $0x11] sm:$0xff]
      %v4511 = vld [vmem:[#allocation10 + $0x19] sm:$0x7f]
      %v4512 = vld [vmem:[#allocation10 + $0x21] sm:$0xff]
      %v4513 = vld [vmem:[#allocation10 + $0x29] sm:$0x7f]
      %v4514 = vld [vmem:[#allocation10 + $0x31] sm:$0xff]
      %v4515 = vld [vmem:[#allocation10 + $0x39] sm:$0x7f]
      %v4516 = vld [vmem:[#allocation10 + $0x41] sm:$0xff]
      %v4517 = vld [vmem:[#allocation10 + $0x49] sm:$0x7f]
      %v4518 = vld [vmem:[#allocation10 + $0x51] sm:$0xff]
      %v4519 = vld [vmem:[#allocation10 + $0x59] sm:$0x7f]
      %v4520 = vld [vmem:[#allocation10 + $0x61] sm:$0xff]
      %v4521 = vld [vmem:[#allocation10 + $0x69] sm:$0x7f]
      %v4522 = vld [vmem:[#allocation10 + $0x71] sm:$0xff]
      %v4523 = vld [vmem:[#allocation10 + $0x79] sm:$0x7f]
      %v4524 = vld [vmem:[#allocation10 + $0x81] sm:$0xff]
      %v4525 = vld [vmem:[#allocation10 + $0x89] sm:$0x7f]
      %v4526 = vld [vmem:[#allocation10 + $0x91] sm:$0xff]
      %v4527 = vld [vmem:[#allocation10 + $0x99] sm:$0x7f]
      %v4528 = vld [vmem:[#allocation10 + $0xa1] sm:$0xff]
      %v4529 = vld [vmem:[#allocation10 + $0xa9] sm:$0x7f]
      %v4530 = vld [vmem:[#allocation10 + $0xb1] sm:$0xff]
      %v4531 = vld [vmem:[#allocation10 + $0xb9] sm:$0x7f]
      %v4532 = vld [vmem:[#allocation10 + $0xc1] sm:$0xff]
      %v4533 = vld [vmem:[#allocation10 + $0xc9] sm:$0x7f]
      %v4534 = vld [vmem:[#allocation10 + $0xd1] sm:$0xff]
      %v4535 = vld [vmem:[#allocation10 + $0xd9] sm:$0x7f]
      %v4536 = vld [vmem:[#allocation10 + $0xe1] sm:$0xff]
      %v4537 = vld [vmem:[#allocation10 + $0xe9] sm:$0x7f]
      %v4538 = vld [vmem:[#allocation10 + $0xf1] sm:$0xff]
      %v4539 = vld [vmem:[#allocation10 + $0xf9] sm:$0x7f]
      %v4540 = vlaneseq
      %v4541 = vshrl.u32 %v4540, 7
      %v4542 = vsub.s32 3, %v4541
      %v4543 = vrot.slane %v3978, %v4542
      %v4544 = vmul.f32 %v4476, %v4543
      %v4545 = vmul.f32 %v4477, %v4543
      %v4546 = vmul.f32 %v4478, %v4543
      %v4547 = vmul.f32 %v4479, %v4543
      %v4548 = vmul.f32 %v4480, %v4543
      %v4549 = vmul.f32 %v4481, %v4543
      %v4550 = vmul.f32 %v4482, %v4543
      %v4551 = vmul.f32 %v4483, %v4543
      %v4552 = vmul.f32 %v4484, %v4543
      %v4553 = vmul.f32 %v4485, %v4543
      %v4554 = vmul.f32 %v4486, %v4543
      %v4555 = vmul.f32 %v4487, %v4543
      %v4556 = vmul.f32 %v4488, %v4543
      %v4557 = vmul.f32 %v4489, %v4543
      %v4558 = vmul.f32 %v4490, %v4543
      %v4559 = vmul.f32 %v4491, %v4543
      %v4560 = vmul.f32 %v4492, %v4543
      %v4561 = vmul.f32 %v4493, %v4543
      %v4562 = vmul.f32 %v4494, %v4543
      %v4563 = vmul.f32 %v4495, %v4543
      %v4564 = vmul.f32 %v4496, %v4543
      %v4565 = vmul.f32 %v4497, %v4543
      %v4566 = vmul.f32 %v4498, %v4543
      %v4567 = vmul.f32 %v4499, %v4543
      %v4568 = vmul.f32 %v4500, %v4543
      %v4569 = vmul.f32 %v4501, %v4543
      %v4570 = vmul.f32 %v4502, %v4543
      %v4571 = vmul.f32 %v4503, %v4543
      %v4572 = vmul.f32 %v4504, %v4543
      %v4573 = vmul.f32 %v4505, %v4543
      %v4574 = vmul.f32 %v4506, %v4543
      %v4575 = vmul.f32 %v4507, %v4543
      %v4576 = vadd.f32 %v4508, %v4544
      %v4577 = vadd.f32 %v4509, %v4545
      %v4578 = vadd.f32 %v4510, %v4546
      %v4579 = vadd.f32 %v4511, %v4547
      %v4580 = vadd.f32 %v4512, %v4548
      %v4581 = vadd.f32 %v4513, %v4549
      %v4582 = vadd.f32 %v4514, %v4550
      %v4583 = vadd.f32 %v4515, %v4551
      %v4584 = vadd.f32 %v4516, %v4552
      %v4585 = vadd.f32 %v4517, %v4553
      %v4586 = vadd.f32 %v4518, %v4554
      %v4587 = vadd.f32 %v4519, %v4555
      %v4588 = vadd.f32 %v4520, %v4556
      %v4589 = vadd.f32 %v4521, %v4557
      %v4590 = vadd.f32 %v4522, %v4558
      %v4591 = vadd.f32 %v4523, %v4559
      %v4592 = vadd.f32 %v4524, %v4560
      %v4593 = vadd.f32 %v4525, %v4561
      %v4594 = vadd.f32 %v4526, %v4562
      %v4595 = vadd.f32 %v4527, %v4563
      %v4596 = vadd.f32 %v4528, %v4564
      %v4597 = vadd.f32 %v4529, %v4565
      %v4598 = vadd.f32 %v4530, %v4566
      %v4599 = vadd.f32 %v4531, %v4567
      %v4600 = vadd.f32 %v4532, %v4568
      %v4601 = vadd.f32 %v4533, %v4569
      %v4602 = vadd.f32 %v4534, %v4570
      %v4603 = vadd.f32 %v4535, %v4571
      %v4604 = vadd.f32 %v4536, %v4572
      %v4605 = vadd.f32 %v4537, %v4573
      %v4606 = vadd.f32 %v4538, %v4574
      %v4607 = vadd.f32 %v4539, %v4575
      %4608 = vst.msk [vmem:[#allocation10 + $0x1] sm:$0xff] %vm2478, %v4576
      %4609 = vst.msk [vmem:[#allocation10 + $0x9] sm:$0x7f] %vm4138, %v4577
      %4610 = vst.msk [vmem:[#allocation10 + $0x11] sm:$0xff] %vm2478, %v4578
      %4611 = vst.msk [vmem:[#allocation10 + $0x19] sm:$0x7f] %vm4138, %v4579
      %4612 = vst.msk [vmem:[#allocation10 + $0x21] sm:$0xff] %vm2478, %v4580
      %4613 = vst.msk [vmem:[#allocation10 + $0x29] sm:$0x7f] %vm4138, %v4581
      %4614 = vst.msk [vmem:[#allocation10 + $0x31] sm:$0xff] %vm2478, %v4582
      %4615 = vst.msk [vmem:[#allocation10 + $0x39] sm:$0x7f] %vm4138, %v4583
      %4616 = vst.msk [vmem:[#allocation10 + $0x41] sm:$0xff] %vm2478, %v4584
      %4617 = vst.msk [vmem:[#allocation10 + $0x49] sm:$0x7f] %vm4138, %v4585
      %4618 = vst.msk [vmem:[#allocation10 + $0x51] sm:$0xff] %vm2478, %v4586
      %4619 = vst.msk [vmem:[#allocation10 + $0x59] sm:$0x7f] %vm4138, %v4587
      %4620 = vst.msk [vmem:[#allocation10 + $0x61] sm:$0xff] %vm2478, %v4588
      %4621 = vst.msk [vmem:[#allocation10 + $0x69] sm:$0x7f] %vm4138, %v4589
      %4622 = vst.msk [vmem:[#allocation10 + $0x71] sm:$0xff] %vm2478, %v4590
      %4623 = vst.msk [vmem:[#allocation10 + $0x79] sm:$0x7f] %vm4138, %v4591
      %4624 = vst.msk [vmem:[#allocation10 + $0x81] sm:$0xff] %vm2478, %v4592
      %4625 = vst.msk [vmem:[#allocation10 + $0x89] sm:$0x7f] %vm4138, %v4593
      %4626 = vst.msk [vmem:[#allocation10 + $0x91] sm:$0xff] %vm2478, %v4594
      %4627 = vst.msk [vmem:[#allocation10 + $0x99] sm:$0x7f] %vm4138, %v4595
      %4628 = vst.msk [vmem:[#allocation10 + $0xa1] sm:$0xff] %vm2478, %v4596
      %4629 = vst.msk [vmem:[#allocation10 + $0xa9] sm:$0x7f] %vm4138, %v4597
      %4630 = vst.msk [vmem:[#allocation10 + $0xb1] sm:$0xff] %vm2478, %v4598
      %4631 = vst.msk [vmem:[#allocation10 + $0xb9] sm:$0x7f] %vm4138, %v4599
      %4632 = vst.msk [vmem:[#allocation10 + $0xc1] sm:$0xff] %vm2478, %v4600
      %4633 = vst.msk [vmem:[#allocation10 + $0xc9] sm:$0x7f] %vm4138, %v4601
      %4634 = vst.msk [vmem:[#allocation10 + $0xd1] sm:$0xff] %vm2478, %v4602
      %4635 = vst.msk [vmem:[#allocation10 + $0xd9] sm:$0x7f] %vm4138, %v4603
      %4636 = vst.msk [vmem:[#allocation10 + $0xe1] sm:$0xff] %vm2478, %v4604
      %4637 = vst.msk [vmem:[#allocation10 + $0xe9] sm:$0x7f] %vm4138, %v4605
      %4638 = vst.msk [vmem:[#allocation10 + $0xf1] sm:$0xff] %vm2478, %v4606
      %4639 = vst.msk [vmem:[#allocation10 + $0xf9] sm:$0x7f] %vm4138, %v4607
      %v4640 = vld [vmem:[#allocation8] sm:$0xff]
      %v4641 = vld [vmem:[#allocation8 + $0x8] sm:$0xff]
      %v4642 = vld [vmem:[#allocation8 + $0x10] sm:$0xff]
      %v4643 = vld [vmem:[#allocation8 + $0x18] sm:$0xff]
      %v4644 = vld [vmem:[#allocation8 + $0x20] sm:$0xff]
      %v4645 = vld [vmem:[#allocation8 + $0x28] sm:$0xff]
      %v4646 = vld [vmem:[#allocation8 + $0x30] sm:$0xff]
      %v4647 = vld [vmem:[#allocation8 + $0x38] sm:$0xff]
      %v4648 = vld [vmem:[#allocation8 + $0x40] sm:$0xff]
      %v4649 = vld [vmem:[#allocation8 + $0x48] sm:$0xff]
      %v4650 = vld [vmem:[#allocation8 + $0x50] sm:$0xff]
      %v4651 = vld [vmem:[#allocation8 + $0x58] sm:$0xff]
      %v4652 = vld [vmem:[#allocation8 + $0x60] sm:$0xff]
      %v4653 = vld [vmem:[#allocation8 + $0x68] sm:$0xff]
      %v4654 = vld [vmem:[#allocation8 + $0x70] sm:$0xff]
      %v4655 = vld [vmem:[#allocation8 + $0x78] sm:$0xff]
      %v4656 = vld [vmem:[#allocation8 + $0x80] sm:$0xff]
      %v4657 = vld [vmem:[#allocation8 + $0x88] sm:$0xff]
      %v4658 = vld [vmem:[#allocation8 + $0x90] sm:$0xff]
      %v4659 = vld [vmem:[#allocation8 + $0x98] sm:$0xff]
      %v4660 = vld [vmem:[#allocation8 + $0xa0] sm:$0xff]
      %v4661 = vld [vmem:[#allocation8 + $0xa8] sm:$0xff]
      %v4662 = vld [vmem:[#allocation8 + $0xb0] sm:$0xff]
      %v4663 = vld [vmem:[#allocation8 + $0xb8] sm:$0xff]
      %v4664 = vld [vmem:[#allocation8 + $0xc0] sm:$0xff]
      %v4665 = vld [vmem:[#allocation8 + $0xc8] sm:$0xff]
      %v4666 = vld [vmem:[#allocation8 + $0xd0] sm:$0xff]
      %v4667 = vld [vmem:[#allocation8 + $0xd8] sm:$0xff]
      %v4668 = vld [vmem:[#allocation8 + $0xe0] sm:$0xff]
      %v4669 = vld [vmem:[#allocation8 + $0xe8] sm:$0xff]
      %v4670 = vld [vmem:[#allocation8 + $0xf0] sm:$0xff]
      %v4671 = vld [vmem:[#allocation8 + $0xf8] sm:$0xff]
      %v4672 = vld [vmem:[#allocation10] sm:$0xff]
      %v4673 = vld [vmem:[#allocation10 + $0x8] sm:$0xff]
      %v4674 = vld [vmem:[#allocation10 + $0x10] sm:$0xff]
      %v4675 = vld [vmem:[#allocation10 + $0x18] sm:$0xff]
      %v4676 = vld [vmem:[#allocation10 + $0x20] sm:$0xff]
      %v4677 = vld [vmem:[#allocation10 + $0x28] sm:$0xff]
      %v4678 = vld [vmem:[#allocation10 + $0x30] sm:$0xff]
      %v4679 = vld [vmem:[#allocation10 + $0x38] sm:$0xff]
      %v4680 = vld [vmem:[#allocation10 + $0x40] sm:$0xff]
      %v4681 = vld [vmem:[#allocation10 + $0x48] sm:$0xff]
      %v4682 = vld [vmem:[#allocation10 + $0x50] sm:$0xff]
      %v4683 = vld [vmem:[#allocation10 + $0x58] sm:$0xff]
      %v4684 = vld [vmem:[#allocation10 + $0x60] sm:$0xff]
      %v4685 = vld [vmem:[#allocation10 + $0x68] sm:$0xff]
      %v4686 = vld [vmem:[#allocation10 + $0x70] sm:$0xff]
      %v4687 = vld [vmem:[#allocation10 + $0x78] sm:$0xff]
      %v4688 = vld [vmem:[#allocation10 + $0x80] sm:$0xff]
      %v4689 = vld [vmem:[#allocation10 + $0x88] sm:$0xff]
      %v4690 = vld [vmem:[#allocation10 + $0x90] sm:$0xff]
      %v4691 = vld [vmem:[#allocation10 + $0x98] sm:$0xff]
      %v4692 = vld [vmem:[#allocation10 + $0xa0] sm:$0xff]
      %v4693 = vld [vmem:[#allocation10 + $0xa8] sm:$0xff]
      %v4694 = vld [vmem:[#allocation10 + $0xb0] sm:$0xff]
      %v4695 = vld [vmem:[#allocation10 + $0xb8] sm:$0xff]
      %v4696 = vld [vmem:[#allocation10 + $0xc0] sm:$0xff]
      %v4697 = vld [vmem:[#allocation10 + $0xc8] sm:$0xff]
      %v4698 = vld [vmem:[#allocation10 + $0xd0] sm:$0xff]
      %v4699 = vld [vmem:[#allocation10 + $0xd8] sm:$0xff]
      %v4700 = vld [vmem:[#allocation10 + $0xe0] sm:$0xff]
      %v4701 = vld [vmem:[#allocation10 + $0xe8] sm:$0xff]
      %v4702 = vld [vmem:[#allocation10 + $0xf0] sm:$0xff]
      %v4703 = vld [vmem:[#allocation10 + $0xf8] sm:$0xff]
      %v4704 = vlaneseq
      %v4705 = vshrl.u32 %v4704, 7
      %v4706 = vsub.s32 4, %v4705
      %v4707 = vrot.slane %v3978, %v4706
      %v4708 = vmul.f32 %v4640, %v4707
      %v4709 = vmul.f32 %v4641, %v4707
      %v4710 = vmul.f32 %v4642, %v4707
      %v4711 = vmul.f32 %v4643, %v4707
      %v4712 = vmul.f32 %v4644, %v4707
      %v4713 = vmul.f32 %v4645, %v4707
      %v4714 = vmul.f32 %v4646, %v4707
      %v4715 = vmul.f32 %v4647, %v4707
      %v4716 = vmul.f32 %v4648, %v4707
      %v4717 = vmul.f32 %v4649, %v4707
      %v4718 = vmul.f32 %v4650, %v4707
      %v4719 = vmul.f32 %v4651, %v4707
      %v4720 = vmul.f32 %v4652, %v4707
      %v4721 = vmul.f32 %v4653, %v4707
      %v4722 = vmul.f32 %v4654, %v4707
      %v4723 = vmul.f32 %v4655, %v4707
      %v4724 = vmul.f32 %v4656, %v4707
      %v4725 = vmul.f32 %v4657, %v4707
      %v4726 = vmul.f32 %v4658, %v4707
      %v4727 = vmul.f32 %v4659, %v4707
      %v4728 = vmul.f32 %v4660, %v4707
      %v4729 = vmul.f32 %v4661, %v4707
      %v4730 = vmul.f32 %v4662, %v4707
      %v4731 = vmul.f32 %v4663, %v4707
      %v4732 = vmul.f32 %v4664, %v4707
      %v4733 = vmul.f32 %v4665, %v4707
      %v4734 = vmul.f32 %v4666, %v4707
      %v4735 = vmul.f32 %v4667, %v4707
      %v4736 = vmul.f32 %v4668, %v4707
      %v4737 = vmul.f32 %v4669, %v4707
      %v4738 = vmul.f32 %v4670, %v4707
      %v4739 = vmul.f32 %v4671, %v4707
      %v4740 = vadd.f32 %v4672, %v4708
      %v4741 = vadd.f32 %v4673, %v4709
      %v4742 = vadd.f32 %v4674, %v4710
      %v4743 = vadd.f32 %v4675, %v4711
      %v4744 = vadd.f32 %v4676, %v4712
      %v4745 = vadd.f32 %v4677, %v4713
      %v4746 = vadd.f32 %v4678, %v4714
      %v4747 = vadd.f32 %v4679, %v4715
      %v4748 = vadd.f32 %v4680, %v4716
      %v4749 = vadd.f32 %v4681, %v4717
      %v4750 = vadd.f32 %v4682, %v4718
      %v4751 = vadd.f32 %v4683, %v4719
      %v4752 = vadd.f32 %v4684, %v4720
      %v4753 = vadd.f32 %v4685, %v4721
      %v4754 = vadd.f32 %v4686, %v4722
      %v4755 = vadd.f32 %v4687, %v4723
      %v4756 = vadd.f32 %v4688, %v4724
      %v4757 = vadd.f32 %v4689, %v4725
      %v4758 = vadd.f32 %v4690, %v4726
      %v4759 = vadd.f32 %v4691, %v4727
      %v4760 = vadd.f32 %v4692, %v4728
      %v4761 = vadd.f32 %v4693, %v4729
      %v4762 = vadd.f32 %v4694, %v4730
      %v4763 = vadd.f32 %v4695, %v4731
      %v4764 = vadd.f32 %v4696, %v4732
      %v4765 = vadd.f32 %v4697, %v4733
      %v4766 = vadd.f32 %v4698, %v4734
      %v4767 = vadd.f32 %v4699, %v4735
      %v4768 = vadd.f32 %v4700, %v4736
      %v4769 = vadd.f32 %v4701, %v4737
      %v4770 = vadd.f32 %v4702, %v4738
      %v4771 = vadd.f32 %v4703, %v4739
      %4772 = vst.msk [vmem:[#allocation10] sm:$0xff] %vm2478, %v4740
      %4773 = vst.msk [vmem:[#allocation10 + $0x8] sm:$0xff] %vm2478, %v4741
      %4774 = vst.msk [vmem:[#allocation10 + $0x10] sm:$0xff] %vm2478, %v4742
      %4775 = vst.msk [vmem:[#allocation10 + $0x18] sm:$0xff] %vm2478, %v4743
      %4776 = vst.msk [vmem:[#allocation10 + $0x20] sm:$0xff] %vm2478, %v4744
      %4777 = vst.msk [vmem:[#allocation10 + $0x28] sm:$0xff] %vm2478, %v4745
      %4778 = vst.msk [vmem:[#allocation10 + $0x30] sm:$0xff] %vm2478, %v4746
      %4779 = vst.msk [vmem:[#allocation10 + $0x38] sm:$0xff] %vm2478, %v4747
      %4780 = vst.msk [vmem:[#allocation10 + $0x40] sm:$0xff] %vm2478, %v4748
      %4781 = vst.msk [vmem:[#allocation10 + $0x48] sm:$0xff] %vm2478, %v4749
      %4782 = vst.msk [vmem:[#allocation10 + $0x50] sm:$0xff] %vm2478, %v4750
      %4783 = vst.msk [vmem:[#allocation10 + $0x58] sm:$0xff] %vm2478, %v4751
      %4784 = vst.msk [vmem:[#allocation10 + $0x60] sm:$0xff] %vm2478, %v4752
      %4785 = vst.msk [vmem:[#allocation10 + $0x68] sm:$0xff] %vm2478, %v4753
      %4786 = vst.msk [vmem:[#allocation10 + $0x70] sm:$0xff] %vm2478, %v4754
      %4787 = vst.msk [vmem:[#allocation10 + $0x78] sm:$0xff] %vm2478, %v4755
      %4788 = vst.msk [vmem:[#allocation10 + $0x80] sm:$0xff] %vm2478, %v4756
      %4789 = vst.msk [vmem:[#allocation10 + $0x88] sm:$0xff] %vm2478, %v4757
      %4790 = vst.msk [vmem:[#allocation10 + $0x90] sm:$0xff] %vm2478, %v4758
      %4791 = vst.msk [vmem:[#allocation10 + $0x98] sm:$0xff] %vm2478, %v4759
      %4792 = vst.msk [vmem:[#allocation10 + $0xa0] sm:$0xff] %vm2478, %v4760
      %4793 = vst.msk [vmem:[#allocation10 + $0xa8] sm:$0xff] %vm2478, %v4761
      %4794 = vst.msk [vmem:[#allocation10 + $0xb0] sm:$0xff] %vm2478, %v4762
      %4795 = vst.msk [vmem:[#allocation10 + $0xb8] sm:$0xff] %vm2478, %v4763
      %4796 = vst.msk [vmem:[#allocation10 + $0xc0] sm:$0xff] %vm2478, %v4764
      %4797 = vst.msk [vmem:[#allocation10 + $0xc8] sm:$0xff] %vm2478, %v4765
      %4798 = vst.msk [vmem:[#allocation10 + $0xd0] sm:$0xff] %vm2478, %v4766
      %4799 = vst.msk [vmem:[#allocation10 + $0xd8] sm:$0xff] %vm2478, %v4767
      %4800 = vst.msk [vmem:[#allocation10 + $0xe0] sm:$0xff] %vm2478, %v4768
      %4801 = vst.msk [vmem:[#allocation10 + $0xe8] sm:$0xff] %vm2478, %v4769
      %4802 = vst.msk [vmem:[#allocation10 + $0xf0] sm:$0xff] %vm2478, %v4770
      %4803 = vst.msk [vmem:[#allocation10 + $0xf8] sm:$0xff] %vm2478, %v4771
      %v4804 = vld [vmem:[#allocation8 + $0x1] sm:$0xff]
      %v4805 = vld [vmem:[#allocation8 + $0x9] sm:$0x7f]
      %v4806 = vld [vmem:[#allocation8 + $0x11] sm:$0xff]
      %v4807 = vld [vmem:[#allocation8 + $0x19] sm:$0x7f]
      %v4808 = vld [vmem:[#allocation8 + $0x21] sm:$0xff]
      %v4809 = vld [vmem:[#allocation8 + $0x29] sm:$0x7f]
      %v4810 = vld [vmem:[#allocation8 + $0x31] sm:$0xff]
      %v4811 = vld [vmem:[#allocation8 + $0x39] sm:$0x7f]
      %v4812 = vld [vmem:[#allocation8 + $0x41] sm:$0xff]
      %v4813 = vld [vmem:[#allocation8 + $0x49] sm:$0x7f]
      %v4814 = vld [vmem:[#allocation8 + $0x51] sm:$0xff]
      %v4815 = vld [vmem:[#allocation8 + $0x59] sm:$0x7f]
      %v4816 = vld [vmem:[#allocation8 + $0x61] sm:$0xff]
      %v4817 = vld [vmem:[#allocation8 + $0x69] sm:$0x7f]
      %v4818 = vld [vmem:[#allocation8 + $0x71] sm:$0xff]
      %v4819 = vld [vmem:[#allocation8 + $0x79] sm:$0x7f]
      %v4820 = vld [vmem:[#allocation8 + $0x81] sm:$0xff]
      %v4821 = vld [vmem:[#allocation8 + $0x89] sm:$0x7f]
      %v4822 = vld [vmem:[#allocation8 + $0x91] sm:$0xff]
      %v4823 = vld [vmem:[#allocation8 + $0x99] sm:$0x7f]
      %v4824 = vld [vmem:[#allocation8 + $0xa1] sm:$0xff]
      %v4825 = vld [vmem:[#allocation8 + $0xa9] sm:$0x7f]
      %v4826 = vld [vmem:[#allocation8 + $0xb1] sm:$0xff]
      %v4827 = vld [vmem:[#allocation8 + $0xb9] sm:$0x7f]
      %v4828 = vld [vmem:[#allocation8 + $0xc1] sm:$0xff]
      %v4829 = vld [vmem:[#allocation8 + $0xc9] sm:$0x7f]
      %v4830 = vld [vmem:[#allocation8 + $0xd1] sm:$0xff]
      %v4831 = vld [vmem:[#allocation8 + $0xd9] sm:$0x7f]
      %v4832 = vld [vmem:[#allocation8 + $0xe1] sm:$0xff]
      %v4833 = vld [vmem:[#allocation8 + $0xe9] sm:$0x7f]
      %v4834 = vld [vmem:[#allocation8 + $0xf1] sm:$0xff]
      %v4835 = vld [vmem:[#allocation8 + $0xf9] sm:$0x7f]
      %v4836 = vld [vmem:[#allocation10] sm:$0xff]
      %v4837 = vld [vmem:[#allocation10 + $0x8] sm:$0x7f]
      %v4838 = vld [vmem:[#allocation10 + $0x10] sm:$0xff]
      %v4839 = vld [vmem:[#allocation10 + $0x18] sm:$0x7f]
      %v4840 = vld [vmem:[#allocation10 + $0x20] sm:$0xff]
      %v4841 = vld [vmem:[#allocation10 + $0x28] sm:$0x7f]
      %v4842 = vld [vmem:[#allocation10 + $0x30] sm:$0xff]
      %v4843 = vld [vmem:[#allocation10 + $0x38] sm:$0x7f]
      %v4844 = vld [vmem:[#allocation10 + $0x40] sm:$0xff]
      %v4845 = vld [vmem:[#allocation10 + $0x48] sm:$0x7f]
      %v4846 = vld [vmem:[#allocation10 + $0x50] sm:$0xff]
      %v4847 = vld [vmem:[#allocation10 + $0x58] sm:$0x7f]
      %v4848 = vld [vmem:[#allocation10 + $0x60] sm:$0xff]
      %v4849 = vld [vmem:[#allocation10 + $0x68] sm:$0x7f]
      %v4850 = vld [vmem:[#allocation10 + $0x70] sm:$0xff]
      %v4851 = vld [vmem:[#allocation10 + $0x78] sm:$0x7f]
      %v4852 = vld [vmem:[#allocation10 + $0x80] sm:$0xff]
      %v4853 = vld [vmem:[#allocation10 + $0x88] sm:$0x7f]
      %v4854 = vld [vmem:[#allocation10 + $0x90] sm:$0xff]
      %v4855 = vld [vmem:[#allocation10 + $0x98] sm:$0x7f]
      %v4856 = vld [vmem:[#allocation10 + $0xa0] sm:$0xff]
      %v4857 = vld [vmem:[#allocation10 + $0xa8] sm:$0x7f]
      %v4858 = vld [vmem:[#allocation10 + $0xb0] sm:$0xff]
      %v4859 = vld [vmem:[#allocation10 + $0xb8] sm:$0x7f]
      %v4860 = vld [vmem:[#allocation10 + $0xc0] sm:$0xff]
      %v4861 = vld [vmem:[#allocation10 + $0xc8] sm:$0x7f]
      %v4862 = vld [vmem:[#allocation10 + $0xd0] sm:$0xff]
      %v4863 = vld [vmem:[#allocation10 + $0xd8] sm:$0x7f]
      %v4864 = vld [vmem:[#allocation10 + $0xe0] sm:$0xff]
      %v4865 = vld [vmem:[#allocation10 + $0xe8] sm:$0x7f]
      %v4866 = vld [vmem:[#allocation10 + $0xf0] sm:$0xff]
      %v4867 = vld [vmem:[#allocation10 + $0xf8] sm:$0x7f]
      %v4868 = vlaneseq
      %v4869 = vshrl.u32 %v4868, 7
      %v4870 = vsub.s32 5, %v4869
      %v4871 = vrot.slane %v3978, %v4870
      %v4872 = vmul.f32 %v4804, %v4871
      %v4873 = vmul.f32 %v4805, %v4871
      %v4874 = vmul.f32 %v4806, %v4871
      %v4875 = vmul.f32 %v4807, %v4871
      %v4876 = vmul.f32 %v4808, %v4871
      %v4877 = vmul.f32 %v4809, %v4871
      %v4878 = vmul.f32 %v4810, %v4871
      %v4879 = vmul.f32 %v4811, %v4871
      %v4880 = vmul.f32 %v4812, %v4871
      %v4881 = vmul.f32 %v4813, %v4871
      %v4882 = vmul.f32 %v4814, %v4871
      %v4883 = vmul.f32 %v4815, %v4871
      %v4884 = vmul.f32 %v4816, %v4871
      %v4885 = vmul.f32 %v4817, %v4871
      %v4886 = vmul.f32 %v4818, %v4871
      %v4887 = vmul.f32 %v4819, %v4871
      %v4888 = vmul.f32 %v4820, %v4871
      %v4889 = vmul.f32 %v4821, %v4871
      %v4890 = vmul.f32 %v4822, %v4871
      %v4891 = vmul.f32 %v4823, %v4871
      %v4892 = vmul.f32 %v4824, %v4871
      %v4893 = vmul.f32 %v4825, %v4871
      %v4894 = vmul.f32 %v4826, %v4871
      %v4895 = vmul.f32 %v4827, %v4871
      %v4896 = vmul.f32 %v4828, %v4871
      %v4897 = vmul.f32 %v4829, %v4871
      %v4898 = vmul.f32 %v4830, %v4871
      %v4899 = vmul.f32 %v4831, %v4871
      %v4900 = vmul.f32 %v4832, %v4871
      %v4901 = vmul.f32 %v4833, %v4871
      %v4902 = vmul.f32 %v4834, %v4871
      %v4903 = vmul.f32 %v4835, %v4871
      %v4904 = vadd.f32 %v4836, %v4872
      %v4905 = vadd.f32 %v4837, %v4873
      %v4906 = vadd.f32 %v4838, %v4874
      %v4907 = vadd.f32 %v4839, %v4875
      %v4908 = vadd.f32 %v4840, %v4876
      %v4909 = vadd.f32 %v4841, %v4877
      %v4910 = vadd.f32 %v4842, %v4878
      %v4911 = vadd.f32 %v4843, %v4879
      %v4912 = vadd.f32 %v4844, %v4880
      %v4913 = vadd.f32 %v4845, %v4881
      %v4914 = vadd.f32 %v4846, %v4882
      %v4915 = vadd.f32 %v4847, %v4883
      %v4916 = vadd.f32 %v4848, %v4884
      %v4917 = vadd.f32 %v4849, %v4885
      %v4918 = vadd.f32 %v4850, %v4886
      %v4919 = vadd.f32 %v4851, %v4887
      %v4920 = vadd.f32 %v4852, %v4888
      %v4921 = vadd.f32 %v4853, %v4889
      %v4922 = vadd.f32 %v4854, %v4890
      %v4923 = vadd.f32 %v4855, %v4891
      %v4924 = vadd.f32 %v4856, %v4892
      %v4925 = vadd.f32 %v4857, %v4893
      %v4926 = vadd.f32 %v4858, %v4894
      %v4927 = vadd.f32 %v4859, %v4895
      %v4928 = vadd.f32 %v4860, %v4896
      %v4929 = vadd.f32 %v4861, %v4897
      %v4930 = vadd.f32 %v4862, %v4898
      %v4931 = vadd.f32 %v4863, %v4899
      %v4932 = vadd.f32 %v4864, %v4900
      %v4933 = vadd.f32 %v4865, %v4901
      %v4934 = vadd.f32 %v4866, %v4902
      %v4935 = vadd.f32 %v4867, %v4903
      %4936 = vst.msk [vmem:[#allocation10] sm:$0xff] %vm2478, %v4904
      %4937 = vst.msk [vmem:[#allocation10 + $0x8] sm:$0x7f] %vm4138, %v4905
      %4938 = vst.msk [vmem:[#allocation10 + $0x10] sm:$0xff] %vm2478, %v4906
      %4939 = vst.msk [vmem:[#allocation10 + $0x18] sm:$0x7f] %vm4138, %v4907
      %4940 = vst.msk [vmem:[#allocation10 + $0x20] sm:$0xff] %vm2478, %v4908
      %4941 = vst.msk [vmem:[#allocation10 + $0x28] sm:$0x7f] %vm4138, %v4909
      %4942 = vst.msk [vmem:[#allocation10 + $0x30] sm:$0xff] %vm2478, %v4910
      %4943 = vst.msk [vmem:[#allocation10 + $0x38] sm:$0x7f] %vm4138, %v4911
      %4944 = vst.msk [vmem:[#allocation10 + $0x40] sm:$0xff] %vm2478, %v4912
      %4945 = vst.msk [vmem:[#allocation10 + $0x48] sm:$0x7f] %vm4138, %v4913
      %4946 = vst.msk [vmem:[#allocation10 + $0x50] sm:$0xff] %vm2478, %v4914
      %4947 = vst.msk [vmem:[#allocation10 + $0x58] sm:$0x7f] %vm4138, %v4915
      %4948 = vst.msk [vmem:[#allocation10 + $0x60] sm:$0xff] %vm2478, %v4916
      %4949 = vst.msk [vmem:[#allocation10 + $0x68] sm:$0x7f] %vm4138, %v4917
      %4950 = vst.msk [vmem:[#allocation10 + $0x70] sm:$0xff] %vm2478, %v4918
      %4951 = vst.msk [vmem:[#allocation10 + $0x78] sm:$0x7f] %vm4138, %v4919
      %4952 = vst.msk [vmem:[#allocation10 + $0x80] sm:$0xff] %vm2478, %v4920
      %4953 = vst.msk [vmem:[#allocation10 + $0x88] sm:$0x7f] %vm4138, %v4921
      %4954 = vst.msk [vmem:[#allocation10 + $0x90] sm:$0xff] %vm2478, %v4922
      %4955 = vst.msk [vmem:[#allocation10 + $0x98] sm:$0x7f] %vm4138, %v4923
      %4956 = vst.msk [vmem:[#allocation10 + $0xa0] sm:$0xff] %vm2478, %v4924
      %4957 = vst.msk [vmem:[#allocation10 + $0xa8] sm:$0x7f] %vm4138, %v4925
      %4958 = vst.msk [vmem:[#allocation10 + $0xb0] sm:$0xff] %vm2478, %v4926
      %4959 = vst.msk [vmem:[#allocation10 + $0xb8] sm:$0x7f] %vm4138, %v4927
      %4960 = vst.msk [vmem:[#allocation10 + $0xc0] sm:$0xff] %vm2478, %v4928
      %4961 = vst.msk [vmem:[#allocation10 + $0xc8] sm:$0x7f] %vm4138, %v4929
      %4962 = vst.msk [vmem:[#allocation10 + $0xd0] sm:$0xff] %vm2478, %v4930
      %4963 = vst.msk [vmem:[#allocation10 + $0xd8] sm:$0x7f] %vm4138, %v4931
      %4964 = vst.msk [vmem:[#allocation10 + $0xe0] sm:$0xff] %vm2478, %v4932
      %4965 = vst.msk [vmem:[#allocation10 + $0xe8] sm:$0x7f] %vm4138, %v4933
      %4966 = vst.msk [vmem:[#allocation10 + $0xf0] sm:$0xff] %vm2478, %v4934
      %4967 = vst.msk [vmem:[#allocation10 + $0xf8] sm:$0x7f] %vm4138, %v4935
      %v4968 = vld [vmem:[%s2481] sm:$0xff]
      %v4969 = vld [vmem:[%s2481 + $0x8] sm:$0x7f]
      %v4970 = vld [vmem:[%s2481 + $0x10] sm:$0xff]
      %v4971 = vld [vmem:[%s2481 + $0x18] sm:$0x7f]
      %v4972 = vld [vmem:[%s2481 + $0x20] sm:$0xff]
      %v4973 = vld [vmem:[%s2481 + $0x28] sm:$0x7f]
      %v4974 = vld [vmem:[%s2481 + $0x30] sm:$0xff]
      %v4975 = vld [vmem:[%s2481 + $0x38] sm:$0x7f]
      %v4976 = vld [vmem:[%s2481 + $0x40] sm:$0xff]
      %v4977 = vld [vmem:[%s2481 + $0x48] sm:$0x7f]
      %v4978 = vld [vmem:[%s2481 + $0x50] sm:$0xff]
      %v4979 = vld [vmem:[%s2481 + $0x58] sm:$0x7f]
      %v4980 = vld [vmem:[%s2481 + $0x60] sm:$0xff]
      %v4981 = vld [vmem:[%s2481 + $0x68] sm:$0x7f]
      %v4982 = vld [vmem:[%s2481 + $0x70] sm:$0xff]
      %v4983 = vld [vmem:[%s2481 + $0x78] sm:$0x7f]
      %v4984 = vld [vmem:[%s2481 + $0x80] sm:$0xff]
      %v4985 = vld [vmem:[%s2481 + $0x88] sm:$0x7f]
      %v4986 = vld [vmem:[%s2481 + $0x90] sm:$0xff]
      %v4987 = vld [vmem:[%s2481 + $0x98] sm:$0x7f]
      %v4988 = vld [vmem:[%s2481 + $0xa0] sm:$0xff]
      %v4989 = vld [vmem:[%s2481 + $0xa8] sm:$0x7f]
      %v4990 = vld [vmem:[%s2481 + $0xb0] sm:$0xff]
      %v4991 = vld [vmem:[%s2481 + $0xb8] sm:$0x7f]
      %v4992 = vld [vmem:[%s2481 + $0xc0] sm:$0xff]
      %v4993 = vld [vmem:[%s2481 + $0xc8] sm:$0x7f]
      %v4994 = vld [vmem:[%s2481 + $0xd0] sm:$0xff]
      %v4995 = vld [vmem:[%s2481 + $0xd8] sm:$0x7f]
      %v4996 = vld [vmem:[%s2481 + $0xe0] sm:$0xff]
      %v4997 = vld [vmem:[%s2481 + $0xe8] sm:$0x7f]
      %v4998 = vld [vmem:[#allocation10 + $0x1] sm:$0xff]
      %v4999 = vld [vmem:[#allocation10 + $0x9] sm:$0x7f]
      %v5000 = vld [vmem:[#allocation10 + $0x11] sm:$0xff]
      %v5001 = vld [vmem:[#allocation10 + $0x19] sm:$0x7f]
      %v5002 = vld [vmem:[#allocation10 + $0x21] sm:$0xff]
      %v5003 = vld [vmem:[#allocation10 + $0x29] sm:$0x7f]
      %v5004 = vld [vmem:[#allocation10 + $0x31] sm:$0xff]
      %v5005 = vld [vmem:[#allocation10 + $0x39] sm:$0x7f]
      %v5006 = vld [vmem:[#allocation10 + $0x41] sm:$0xff]
      %v5007 = vld [vmem:[#allocation10 + $0x49] sm:$0x7f]
      %v5008 = vld [vmem:[#allocation10 + $0x51] sm:$0xff]
      %v5009 = vld [vmem:[#allocation10 + $0x59] sm:$0x7f]
      %v5010 = vld [vmem:[#allocation10 + $0x61] sm:$0xff]
      %v5011 = vld [vmem:[#allocation10 + $0x69] sm:$0x7f]
      %v5012 = vld [vmem:[#allocation10 + $0x71] sm:$0xff]
      %v5013 = vld [vmem:[#allocation10 + $0x79] sm:$0x7f]
      %v5014 = vld [vmem:[#allocation10 + $0x81] sm:$0xff]
      %v5015 = vld [vmem:[#allocation10 + $0x89] sm:$0x7f]
      %v5016 = vld [vmem:[#allocation10 + $0x91] sm:$0xff]
      %v5017 = vld [vmem:[#allocation10 + $0x99] sm:$0x7f]
      %v5018 = vld [vmem:[#allocation10 + $0xa1] sm:$0xff]
      %v5019 = vld [vmem:[#allocation10 + $0xa9] sm:$0x7f]
      %v5020 = vld [vmem:[#allocation10 + $0xb1] sm:$0xff]
      %v5021 = vld [vmem:[#allocation10 + $0xb9] sm:$0x7f]
      %v5022 = vld [vmem:[#allocation10 + $0xc1] sm:$0xff]
      %v5023 = vld [vmem:[#allocation10 + $0xc9] sm:$0x7f]
      %v5024 = vld [vmem:[#allocation10 + $0xd1] sm:$0xff]
      %v5025 = vld [vmem:[#allocation10 + $0xd9] sm:$0x7f]
      %v5026 = vld [vmem:[#allocation10 + $0xe1] sm:$0xff]
      %v5027 = vld [vmem:[#allocation10 + $0xe9] sm:$0x7f]
      %v5028 = vlaneseq
      %v5029 = vshrl.u32 %v5028, 7
      %v5030 = vsub.s32 6, %v5029
      %v5031 = vrot.slane %v3978, %v5030
      %v5032 = vmul.f32 %v4968, %v5031
      %v5033 = vmul.f32 %v4969, %v5031
      %v5034 = vmul.f32 %v4970, %v5031
      %v5035 = vmul.f32 %v4971, %v5031
      %v5036 = vmul.f32 %v4972, %v5031
      %v5037 = vmul.f32 %v4973, %v5031
      %v5038 = vmul.f32 %v4974, %v5031
      %v5039 = vmul.f32 %v4975, %v5031
      %v5040 = vmul.f32 %v4976, %v5031
      %v5041 = vmul.f32 %v4977, %v5031
      %v5042 = vmul.f32 %v4978, %v5031
      %v5043 = vmul.f32 %v4979, %v5031
      %v5044 = vmul.f32 %v4980, %v5031
      %v5045 = vmul.f32 %v4981, %v5031
      %v5046 = vmul.f32 %v4982, %v5031
      %v5047 = vmul.f32 %v4983, %v5031
      %v5048 = vmul.f32 %v4984, %v5031
      %v5049 = vmul.f32 %v4985, %v5031
      %v5050 = vmul.f32 %v4986, %v5031
      %v5051 = vmul.f32 %v4987, %v5031
      %v5052 = vmul.f32 %v4988, %v5031
      %v5053 = vmul.f32 %v4989, %v5031
      %v5054 = vmul.f32 %v4990, %v5031
      %v5055 = vmul.f32 %v4991, %v5031
      %v5056 = vmul.f32 %v4992, %v5031
      %v5057 = vmul.f32 %v4993, %v5031
      %v5058 = vmul.f32 %v4994, %v5031
      %v5059 = vmul.f32 %v4995, %v5031
      %v5060 = vmul.f32 %v4996, %v5031
      %v5061 = vmul.f32 %v4997, %v5031
      %v5062 = vadd.f32 %v4998, %v5032
      %v5063 = vadd.f32 %v4999, %v5033
      %v5064 = vadd.f32 %v5000, %v5034
      %v5065 = vadd.f32 %v5001, %v5035
      %v5066 = vadd.f32 %v5002, %v5036
      %v5067 = vadd.f32 %v5003, %v5037
      %v5068 = vadd.f32 %v5004, %v5038
      %v5069 = vadd.f32 %v5005, %v5039
      %v5070 = vadd.f32 %v5006, %v5040
      %v5071 = vadd.f32 %v5007, %v5041
      %v5072 = vadd.f32 %v5008, %v5042
      %v5073 = vadd.f32 %v5009, %v5043
      %v5074 = vadd.f32 %v5010, %v5044
      %v5075 = vadd.f32 %v5011, %v5045
      %v5076 = vadd.f32 %v5012, %v5046
      %v5077 = vadd.f32 %v5013, %v5047
      %v5078 = vadd.f32 %v5014, %v5048
      %v5079 = vadd.f32 %v5015, %v5049
      %v5080 = vadd.f32 %v5016, %v5050
      %v5081 = vadd.f32 %v5017, %v5051
      %v5082 = vadd.f32 %v5018, %v5052
      %v5083 = vadd.f32 %v5019, %v5053
      %v5084 = vadd.f32 %v5020, %v5054
      %v5085 = vadd.f32 %v5021, %v5055
      %v5086 = vadd.f32 %v5022, %v5056
      %v5087 = vadd.f32 %v5023, %v5057
      %v5088 = vadd.f32 %v5024, %v5058
      %v5089 = vadd.f32 %v5025, %v5059
      %v5090 = vadd.f32 %v5026, %v5060
      %v5091 = vadd.f32 %v5027, %v5061
      %5092 = vst.msk [vmem:[#allocation10 + $0x1] sm:$0xff] %vm2478, %v5062
      %5093 = vst.msk [vmem:[#allocation10 + $0x9] sm:$0x7f] %vm4138, %v5063
      %5094 = vst.msk [vmem:[#allocation10 + $0x11] sm:$0xff] %vm2478, %v5064
      %5095 = vst.msk [vmem:[#allocation10 + $0x19] sm:$0x7f] %vm4138, %v5065
      %5096 = vst.msk [vmem:[#allocation10 + $0x21] sm:$0xff] %vm2478, %v5066
      %5097 = vst.msk [vmem:[#allocation10 + $0x29] sm:$0x7f] %vm4138, %v5067
      %5098 = vst.msk [vmem:[#allocation10 + $0x31] sm:$0xff] %vm2478, %v5068
      %5099 = vst.msk [vmem:[#allocation10 + $0x39] sm:$0x7f] %vm4138, %v5069
      %5100 = vst.msk [vmem:[#allocation10 + $0x41] sm:$0xff] %vm2478, %v5070
      %5101 = vst.msk [vmem:[#allocation10 + $0x49] sm:$0x7f] %vm4138, %v5071
      %5102 = vst.msk [vmem:[#allocation10 + $0x51] sm:$0xff] %vm2478, %v5072
      %5103 = vst.msk [vmem:[#allocation10 + $0x59] sm:$0x7f] %vm4138, %v5073
      %5104 = vst.msk [vmem:[#allocation10 + $0x61] sm:$0xff] %vm2478, %v5074
      %5105 = vst.msk [vmem:[#allocation10 + $0x69] sm:$0x7f] %vm4138, %v5075
      %5106 = vst.msk [vmem:[#allocation10 + $0x71] sm:$0xff] %vm2478, %v5076
      %5107 = vst.msk [vmem:[#allocation10 + $0x79] sm:$0x7f] %vm4138, %v5077
      %5108 = vst.msk [vmem:[#allocation10 + $0x81] sm:$0xff] %vm2478, %v5078
      %5109 = vst.msk [vmem:[#allocation10 + $0x89] sm:$0x7f] %vm4138, %v5079
      %5110 = vst.msk [vmem:[#allocation10 + $0x91] sm:$0xff] %vm2478, %v5080
      %5111 = vst.msk [vmem:[#allocation10 + $0x99] sm:$0x7f] %vm4138, %v5081
      %5112 = vst.msk [vmem:[#allocation10 + $0xa1] sm:$0xff] %vm2478, %v5082
      %5113 = vst.msk [vmem:[#allocation10 + $0xa9] sm:$0x7f] %vm4138, %v5083
      %5114 = vst.msk [vmem:[#allocation10 + $0xb1] sm:$0xff] %vm2478, %v5084
      %5115 = vst.msk [vmem:[#allocation10 + $0xb9] sm:$0x7f] %vm4138, %v5085
      %5116 = vst.msk [vmem:[#allocation10 + $0xc1] sm:$0xff] %vm2478, %v5086
      %5117 = vst.msk [vmem:[#allocation10 + $0xc9] sm:$0x7f] %vm4138, %v5087
      %5118 = vst.msk [vmem:[#allocation10 + $0xd1] sm:$0xff] %vm2478, %v5088
      %5119 = vst.msk [vmem:[#allocation10 + $0xd9] sm:$0x7f] %vm4138, %v5089
      %5120 = vst.msk [vmem:[#allocation10 + $0xe1] sm:$0xff] %vm2478, %v5090
      %5121 = vst.msk [vmem:[#allocation10 + $0xe9] sm:$0x7f] %vm4138, %v5091
      %v5122 = vld [vmem:[%s2481] sm:$0xff]
      %v5123 = vld [vmem:[%s2481 + $0x8] sm:$0xff]
      %v5124 = vld [vmem:[%s2481 + $0x10] sm:$0xff]
      %v5125 = vld [vmem:[%s2481 + $0x18] sm:$0xff]
      %v5126 = vld [vmem:[%s2481 + $0x20] sm:$0xff]
      %v5127 = vld [vmem:[%s2481 + $0x28] sm:$0xff]
      %v5128 = vld [vmem:[%s2481 + $0x30] sm:$0xff]
      %v5129 = vld [vmem:[%s2481 + $0x38] sm:$0xff]
      %v5130 = vld [vmem:[%s2481 + $0x40] sm:$0xff]
      %v5131 = vld [vmem:[%s2481 + $0x48] sm:$0xff]
      %v5132 = vld [vmem:[%s2481 + $0x50] sm:$0xff]
      %v5133 = vld [vmem:[%s2481 + $0x58] sm:$0xff]
      %v5134 = vld [vmem:[%s2481 + $0x60] sm:$0xff]
      %v5135 = vld [vmem:[%s2481 + $0x68] sm:$0xff]
      %v5136 = vld [vmem:[%s2481 + $0x70] sm:$0xff]
      %v5137 = vld [vmem:[%s2481 + $0x78] sm:$0xff]
      %v5138 = vld [vmem:[%s2481 + $0x80] sm:$0xff]
      %v5139 = vld [vmem:[%s2481 + $0x88] sm:$0xff]
      %v5140 = vld [vmem:[%s2481 + $0x90] sm:$0xff]
      %v5141 = vld [vmem:[%s2481 + $0x98] sm:$0xff]
      %v5142 = vld [vmem:[%s2481 + $0xa0] sm:$0xff]
      %v5143 = vld [vmem:[%s2481 + $0xa8] sm:$0xff]
      %v5144 = vld [vmem:[%s2481 + $0xb0] sm:$0xff]
      %v5145 = vld [vmem:[%s2481 + $0xb8] sm:$0xff]
      %v5146 = vld [vmem:[%s2481 + $0xc0] sm:$0xff]
      %v5147 = vld [vmem:[%s2481 + $0xc8] sm:$0xff]
      %v5148 = vld [vmem:[%s2481 + $0xd0] sm:$0xff]
      %v5149 = vld [vmem:[%s2481 + $0xd8] sm:$0xff]
      %v5150 = vld [vmem:[%s2481 + $0xe0] sm:$0xff]
      %v5151 = vld [vmem:[%s2481 + $0xe8] sm:$0xff]
      %v5152 = vld [vmem:[#allocation10] sm:$0xff]
      %v5153 = vld [vmem:[#allocation10 + $0x8] sm:$0xff]
      %v5154 = vld [vmem:[#allocation10 + $0x10] sm:$0xff]
      %v5155 = vld [vmem:[#allocation10 + $0x18] sm:$0xff]
      %v5156 = vld [vmem:[#allocation10 + $0x20] sm:$0xff]
      %v5157 = vld [vmem:[#allocation10 + $0x28] sm:$0xff]
      %v5158 = vld [vmem:[#allocation10 + $0x30] sm:$0xff]
      %v5159 = vld [vmem:[#allocation10 + $0x38] sm:$0xff]
      %v5160 = vld [vmem:[#allocation10 + $0x40] sm:$0xff]
      %v5161 = vld [vmem:[#allocation10 + $0x48] sm:$0xff]
      %v5162 = vld [vmem:[#allocation10 + $0x50] sm:$0xff]
      %v5163 = vld [vmem:[#allocation10 + $0x58] sm:$0xff]
      %v5164 = vld [vmem:[#allocation10 + $0x60] sm:$0xff]
      %v5165 = vld [vmem:[#allocation10 + $0x68] sm:$0xff]
      %v5166 = vld [vmem:[#allocation10 + $0x70] sm:$0xff]
      %v5167 = vld [vmem:[#allocation10 + $0x78] sm:$0xff]
      %v5168 = vld [vmem:[#allocation10 + $0x80] sm:$0xff]
      %v5169 = vld [vmem:[#allocation10 + $0x88] sm:$0xff]
      %v5170 = vld [vmem:[#allocation10 + $0x90] sm:$0xff]
      %v5171 = vld [vmem:[#allocation10 + $0x98] sm:$0xff]
      %v5172 = vld [vmem:[#allocation10 + $0xa0] sm:$0xff]
      %v5173 = vld [vmem:[#allocation10 + $0xa8] sm:$0xff]
      %v5174 = vld [vmem:[#allocation10 + $0xb0] sm:$0xff]
      %v5175 = vld [vmem:[#allocation10 + $0xb8] sm:$0xff]
      %v5176 = vld [vmem:[#allocation10 + $0xc0] sm:$0xff]
      %v5177 = vld [vmem:[#allocation10 + $0xc8] sm:$0xff]
      %v5178 = vld [vmem:[#allocation10 + $0xd0] sm:$0xff]
      %v5179 = vld [vmem:[#allocation10 + $0xd8] sm:$0xff]
      %v5180 = vld [vmem:[#allocation10 + $0xe0] sm:$0xff]
      %v5181 = vld [vmem:[#allocation10 + $0xe8] sm:$0xff]
      %v5182 = vlaneseq
      %v5183 = vshrl.u32 %v5182, 7
      %v5184 = vsub.s32 7, %v5183
      %v5185 = vrot.slane %v3978, %v5184
      %v5186 = vmul.f32 %v5122, %v5185
      %v5187 = vmul.f32 %v5123, %v5185
      %v5188 = vmul.f32 %v5124, %v5185
      %v5189 = vmul.f32 %v5125, %v5185
      %v5190 = vmul.f32 %v5126, %v5185
      %v5191 = vmul.f32 %v5127, %v5185
      %v5192 = vmul.f32 %v5128, %v5185
      %v5193 = vmul.f32 %v5129, %v5185
      %v5194 = vmul.f32 %v5130, %v5185
      %v5195 = vmul.f32 %v5131, %v5185
      %v5196 = vmul.f32 %v5132, %v5185
      %v5197 = vmul.f32 %v5133, %v5185
      %v5198 = vmul.f32 %v5134, %v5185
      %v5199 = vmul.f32 %v5135, %v5185
      %v5200 = vmul.f32 %v5136, %v5185
      %v5201 = vmul.f32 %v5137, %v5185
      %v5202 = vmul.f32 %v5138, %v5185
      %v5203 = vmul.f32 %v5139, %v5185
      %v5204 = vmul.f32 %v5140, %v5185
      %v5205 = vmul.f32 %v5141, %v5185
      %v5206 = vmul.f32 %v5142, %v5185
      %v5207 = vmul.f32 %v5143, %v5185
      %v5208 = vmul.f32 %v5144, %v5185
      %v5209 = vmul.f32 %v5145, %v5185
      %v5210 = vmul.f32 %v5146, %v5185
      %v5211 = vmul.f32 %v5147, %v5185
      %v5212 = vmul.f32 %v5148, %v5185
      %v5213 = vmul.f32 %v5149, %v5185
      %v5214 = vmul.f32 %v5150, %v5185
      %v5215 = vmul.f32 %v5151, %v5185
      %v5216 = vadd.f32 %v5152, %v5186
      %v5217 = vadd.f32 %v5153, %v5187
      %v5218 = vadd.f32 %v5154, %v5188
      %v5219 = vadd.f32 %v5155, %v5189
      %v5220 = vadd.f32 %v5156, %v5190
      %v5221 = vadd.f32 %v5157, %v5191
      %v5222 = vadd.f32 %v5158, %v5192
      %v5223 = vadd.f32 %v5159, %v5193
      %v5224 = vadd.f32 %v5160, %v5194
      %v5225 = vadd.f32 %v5161, %v5195
      %v5226 = vadd.f32 %v5162, %v5196
      %v5227 = vadd.f32 %v5163, %v5197
      %v5228 = vadd.f32 %v5164, %v5198
      %v5229 = vadd.f32 %v5165, %v5199
      %v5230 = vadd.f32 %v5166, %v5200
      %v5231 = vadd.f32 %v5167, %v5201
      %v5232 = vadd.f32 %v5168, %v5202
      %v5233 = vadd.f32 %v5169, %v5203
      %v5234 = vadd.f32 %v5170, %v5204
      %v5235 = vadd.f32 %v5171, %v5205
      %v5236 = vadd.f32 %v5172, %v5206
      %v5237 = vadd.f32 %v5173, %v5207
      %v5238 = vadd.f32 %v5174, %v5208
      %v5239 = vadd.f32 %v5175, %v5209
      %v5240 = vadd.f32 %v5176, %v5210
      %v5241 = vadd.f32 %v5177, %v5211
      %v5242 = vadd.f32 %v5178, %v5212
      %v5243 = vadd.f32 %v5179, %v5213
      %v5244 = vadd.f32 %v5180, %v5214
      %v5245 = vadd.f32 %v5181, %v5215
      %5246 = vst.msk [vmem:[#allocation10] sm:$0xff] %vm2478, %v5216
      %5247 = vst.msk [vmem:[#allocation10 + $0x8] sm:$0xff] %vm2478, %v5217
      %5248 = vst.msk [vmem:[#allocation10 + $0x10] sm:$0xff] %vm2478, %v5218
      %5249 = vst.msk [vmem:[#allocation10 + $0x18] sm:$0xff] %vm2478, %v5219
      %5250 = vst.msk [vmem:[#allocation10 + $0x20] sm:$0xff] %vm2478, %v5220
      %5251 = vst.msk [vmem:[#allocation10 + $0x28] sm:$0xff] %vm2478, %v5221
      %5252 = vst.msk [vmem:[#allocation10 + $0x30] sm:$0xff] %vm2478, %v5222
      %5253 = vst.msk [vmem:[#allocation10 + $0x38] sm:$0xff] %vm2478, %v5223
      %5254 = vst.msk [vmem:[#allocation10 + $0x40] sm:$0xff] %vm2478, %v5224
      %5255 = vst.msk [vmem:[#allocation10 + $0x48] sm:$0xff] %vm2478, %v5225
      %5256 = vst.msk [vmem:[#allocation10 + $0x50] sm:$0xff] %vm2478, %v5226
      %5257 = vst.msk [vmem:[#allocation10 + $0x58] sm:$0xff] %vm2478, %v5227
      %5258 = vst.msk [vmem:[#allocation10 + $0x60] sm:$0xff] %vm2478, %v5228
      %5259 = vst.msk [vmem:[#allocation10 + $0x68] sm:$0xff] %vm2478, %v5229
      %5260 = vst.msk [vmem:[#allocation10 + $0x70] sm:$0xff] %vm2478, %v5230
      %5261 = vst.msk [vmem:[#allocation10 + $0x78] sm:$0xff] %vm2478, %v5231
      %5262 = vst.msk [vmem:[#allocation10 + $0x80] sm:$0xff] %vm2478, %v5232
      %5263 = vst.msk [vmem:[#allocation10 + $0x88] sm:$0xff] %vm2478, %v5233
      %5264 = vst.msk [vmem:[#allocation10 + $0x90] sm:$0xff] %vm2478, %v5234
      %5265 = vst.msk [vmem:[#allocation10 + $0x98] sm:$0xff] %vm2478, %v5235
      %5266 = vst.msk [vmem:[#allocation10 + $0xa0] sm:$0xff] %vm2478, %v5236
      %5267 = vst.msk [vmem:[#allocation10 + $0xa8] sm:$0xff] %vm2478, %v5237
      %5268 = vst.msk [vmem:[#allocation10 + $0xb0] sm:$0xff] %vm2478, %v5238
      %5269 = vst.msk [vmem:[#allocation10 + $0xb8] sm:$0xff] %vm2478, %v5239
      %5270 = vst.msk [vmem:[#allocation10 + $0xc0] sm:$0xff] %vm2478, %v5240
      %5271 = vst.msk [vmem:[#allocation10 + $0xc8] sm:$0xff] %vm2478, %v5241
      %5272 = vst.msk [vmem:[#allocation10 + $0xd0] sm:$0xff] %vm2478, %v5242
      %5273 = vst.msk [vmem:[#allocation10 + $0xd8] sm:$0xff] %vm2478, %v5243
      %5274 = vst.msk [vmem:[#allocation10 + $0xe0] sm:$0xff] %vm2478, %v5244
      %5275 = vst.msk [vmem:[#allocation10 + $0xe8] sm:$0xff] %vm2478, %v5245
      %v5276 = vld [vmem:[%s2481 + $0x1] sm:$0xff]
      %v5277 = vld [vmem:[%s2481 + $0x9] sm:$0x7f]
      %v5278 = vld [vmem:[%s2481 + $0x11] sm:$0xff]
      %v5279 = vld [vmem:[%s2481 + $0x19] sm:$0x7f]
      %v5280 = vld [vmem:[%s2481 + $0x21] sm:$0xff]
      %v5281 = vld [vmem:[%s2481 + $0x29] sm:$0x7f]
      %v5282 = vld [vmem:[%s2481 + $0x31] sm:$0xff]
      %v5283 = vld [vmem:[%s2481 + $0x39] sm:$0x7f]
      %v5284 = vld [vmem:[%s2481 + $0x41] sm:$0xff]
      %v5285 = vld [vmem:[%s2481 + $0x49] sm:$0x7f]
      %v5286 = vld [vmem:[%s2481 + $0x51] sm:$0xff]
      %v5287 = vld [vmem:[%s2481 + $0x59] sm:$0x7f]
      %v5288 = vld [vmem:[%s2481 + $0x61] sm:$0xff]
      %v5289 = vld [vmem:[%s2481 + $0x69] sm:$0x7f]
      %v5290 = vld [vmem:[%s2481 + $0x71] sm:$0xff]
      %v5291 = vld [vmem:[%s2481 + $0x79] sm:$0x7f]
      %v5292 = vld [vmem:[%s2481 + $0x81] sm:$0xff]
      %v5293 = vld [vmem:[%s2481 + $0x89] sm:$0x7f]
      %v5294 = vld [vmem:[%s2481 + $0x91] sm:$0xff]
      %v5295 = vld [vmem:[%s2481 + $0x99] sm:$0x7f]
      %v5296 = vld [vmem:[%s2481 + $0xa1] sm:$0xff]
      %v5297 = vld [vmem:[%s2481 + $0xa9] sm:$0x7f]
      %v5298 = vld [vmem:[%s2481 + $0xb1] sm:$0xff]
      %v5299 = vld [vmem:[%s2481 + $0xb9] sm:$0x7f]
      %v5300 = vld [vmem:[%s2481 + $0xc1] sm:$0xff]
      %v5301 = vld [vmem:[%s2481 + $0xc9] sm:$0x7f]
      %v5302 = vld [vmem:[%s2481 + $0xd1] sm:$0xff]
      %v5303 = vld [vmem:[%s2481 + $0xd9] sm:$0x7f]
      %v5304 = vld [vmem:[%s2481 + $0xe1] sm:$0xff]
      %v5305 = vld [vmem:[%s2481 + $0xe9] sm:$0x7f]
      %v5306 = vld [vmem:[#allocation10] sm:$0xff]
      %v5307 = vld [vmem:[#allocation10 + $0x8] sm:$0x7f]
      %v5308 = vld [vmem:[#allocation10 + $0x10] sm:$0xff]
      %v5309 = vld [vmem:[#allocation10 + $0x18] sm:$0x7f]
      %v5310 = vld [vmem:[#allocation10 + $0x20] sm:$0xff]
      %v5311 = vld [vmem:[#allocation10 + $0x28] sm:$0x7f]
      %v5312 = vld [vmem:[#allocation10 + $0x30] sm:$0xff]
      %v5313 = vld [vmem:[#allocation10 + $0x38] sm:$0x7f]
      %v5314 = vld [vmem:[#allocation10 + $0x40] sm:$0xff]
      %v5315 = vld [vmem:[#allocation10 + $0x48] sm:$0x7f]
      %v5316 = vld [vmem:[#allocation10 + $0x50] sm:$0xff]
      %v5317 = vld [vmem:[#allocation10 + $0x58] sm:$0x7f]
      %v5318 = vld [vmem:[#allocation10 + $0x60] sm:$0xff]
      %v5319 = vld [vmem:[#allocation10 + $0x68] sm:$0x7f]
      %v5320 = vld [vmem:[#allocation10 + $0x70] sm:$0xff]
      %v5321 = vld [vmem:[#allocation10 + $0x78] sm:$0x7f]
      %v5322 = vld [vmem:[#allocation10 + $0x80] sm:$0xff]
      %v5323 = vld [vmem:[#allocation10 + $0x88] sm:$0x7f]
      %v5324 = vld [vmem:[#allocation10 + $0x90] sm:$0xff]
      %v5325 = vld [vmem:[#allocation10 + $0x98] sm:$0x7f]
      %v5326 = vld [vmem:[#allocation10 + $0xa0] sm:$0xff]
      %v5327 = vld [vmem:[#allocation10 + $0xa8] sm:$0x7f]
      %v5328 = vld [vmem:[#allocation10 + $0xb0] sm:$0xff]
      %v5329 = vld [vmem:[#allocation10 + $0xb8] sm:$0x7f]
      %v5330 = vld [vmem:[#allocation10 + $0xc0] sm:$0xff]
      %v5331 = vld [vmem:[#allocation10 + $0xc8] sm:$0x7f]
      %v5332 = vld [vmem:[#allocation10 + $0xd0] sm:$0xff]
      %v5333 = vld [vmem:[#allocation10 + $0xd8] sm:$0x7f]
      %v5334 = vld [vmem:[#allocation10 + $0xe0] sm:$0xff]
      %v5335 = vld [vmem:[#allocation10 + $0xe8] sm:$0x7f]
      %v5336 = vlaneseq
      %v5337 = vshrl.u32 %v5336, 7
      %v5338 = vsub.s32 0, %v5337
      %v5339 = vrot.slane %v3979, %v5338
      %v5340 = vmul.f32 %v5276, %v5339
      %v5341 = vmul.f32 %v5277, %v5339
      %v5342 = vmul.f32 %v5278, %v5339
      %v5343 = vmul.f32 %v5279, %v5339
      %v5344 = vmul.f32 %v5280, %v5339
      %v5345 = vmul.f32 %v5281, %v5339
      %v5346 = vmul.f32 %v5282, %v5339
      %v5347 = vmul.f32 %v5283, %v5339
      %v5348 = vmul.f32 %v5284, %v5339
      %v5349 = vmul.f32 %v5285, %v5339
      %v5350 = vmul.f32 %v5286, %v5339
      %v5351 = vmul.f32 %v5287, %v5339
      %v5352 = vmul.f32 %v5288, %v5339
      %v5353 = vmul.f32 %v5289, %v5339
      %v5354 = vmul.f32 %v5290, %v5339
      %v5355 = vmul.f32 %v5291, %v5339
      %v5356 = vmul.f32 %v5292, %v5339
      %v5357 = vmul.f32 %v5293, %v5339
      %v5358 = vmul.f32 %v5294, %v5339
      %v5359 = vmul.f32 %v5295, %v5339
      %v5360 = vmul.f32 %v5296, %v5339
      %v5361 = vmul.f32 %v5297, %v5339
      %v5362 = vmul.f32 %v5298, %v5339
      %v5363 = vmul.f32 %v5299, %v5339
      %v5364 = vmul.f32 %v5300, %v5339
      %v5365 = vmul.f32 %v5301, %v5339
      %v5366 = vmul.f32 %v5302, %v5339
      %v5367 = vmul.f32 %v5303, %v5339
      %v5368 = vmul.f32 %v5304, %v5339
      %v5369 = vmul.f32 %v5305, %v5339
      %v5370 = vadd.f32 %v5306, %v5340
      %v5371 = vadd.f32 %v5307, %v5341
      %v5372 = vadd.f32 %v5308, %v5342
      %v5373 = vadd.f32 %v5309, %v5343
      %v5374 = vadd.f32 %v5310, %v5344
      %v5375 = vadd.f32 %v5311, %v5345
      %v5376 = vadd.f32 %v5312, %v5346
      %v5377 = vadd.f32 %v5313, %v5347
      %v5378 = vadd.f32 %v5314, %v5348
      %v5379 = vadd.f32 %v5315, %v5349
      %v5380 = vadd.f32 %v5316, %v5350
      %v5381 = vadd.f32 %v5317, %v5351
      %v5382 = vadd.f32 %v5318, %v5352
      %v5383 = vadd.f32 %v5319, %v5353
      %v5384 = vadd.f32 %v5320, %v5354
      %v5385 = vadd.f32 %v5321, %v5355
      %v5386 = vadd.f32 %v5322, %v5356
      %v5387 = vadd.f32 %v5323, %v5357
      %v5388 = vadd.f32 %v5324, %v5358
      %v5389 = vadd.f32 %v5325, %v5359
      %v5390 = vadd.f32 %v5326, %v5360
      %v5391 = vadd.f32 %v5327, %v5361
      %v5392 = vadd.f32 %v5328, %v5362
      %v5393 = vadd.f32 %v5329, %v5363
      %v5394 = vadd.f32 %v5330, %v5364
      %v5395 = vadd.f32 %v5331, %v5365
      %v5396 = vadd.f32 %v5332, %v5366
      %v5397 = vadd.f32 %v5333, %v5367
      %v5398 = vadd.f32 %v5334, %v5368
      %v5399 = vadd.f32 %v5335, %v5369
      %5400 = vst.msk [vmem:[#allocation10] sm:$0xff] %vm2478, %v5370
      %5401 = vst.msk [vmem:[#allocation10 + $0x8] sm:$0x7f] %vm4138, %v5371
      %5402 = vst.msk [vmem:[#allocation10 + $0x10] sm:$0xff] %vm2478, %v5372
      %5403 = vst.msk [vmem:[#allocation10 + $0x18] sm:$0x7f] %vm4138, %v5373
      %5404 = vst.msk [vmem:[#allocation10 + $0x20] sm:$0xff] %vm2478, %v5374
      %5405 = vst.msk [vmem:[#allocation10 + $0x28] sm:$0x7f] %vm4138, %v5375
      %5406 = vst.msk [vmem:[#allocation10 + $0x30] sm:$0xff] %vm2478, %v5376
      %5407 = vst.msk [vmem:[#allocation10 + $0x38] sm:$0x7f] %vm4138, %v5377
      %5408 = vst.msk [vmem:[#allocation10 + $0x40] sm:$0xff] %vm2478, %v5378
      %5409 = vst.msk [vmem:[#allocation10 + $0x48] sm:$0x7f] %vm4138, %v5379
      %5410 = vst.msk [vmem:[#allocation10 + $0x50] sm:$0xff] %vm2478, %v5380
      %5411 = vst.msk [vmem:[#allocation10 + $0x58] sm:$0x7f] %vm4138, %v5381
      %5412 = vst.msk [vmem:[#allocation10 + $0x60] sm:$0xff] %vm2478, %v5382
      %5413 = vst.msk [vmem:[#allocation10 + $0x68] sm:$0x7f] %vm4138, %v5383
      %5414 = vst.msk [vmem:[#allocation10 + $0x70] sm:$0xff] %vm2478, %v5384
      %5415 = vst.msk [vmem:[#allocation10 + $0x78] sm:$0x7f] %vm4138, %v5385
      %5416 = vst.msk [vmem:[#allocation10 + $0x80] sm:$0xff] %vm2478, %v5386
      %5417 = vst.msk [vmem:[#allocation10 + $0x88] sm:$0x7f] %vm4138, %v5387
      %5418 = vst.msk [vmem:[#allocation10 + $0x90] sm:$0xff] %vm2478, %v5388
      %5419 = vst.msk [vmem:[#allocation10 + $0x98] sm:$0x7f] %vm4138, %v5389
      %5420 = vst.msk [vmem:[#allocation10 + $0xa0] sm:$0xff] %vm2478, %v5390
      %5421 = vst.msk [vmem:[#allocation10 + $0xa8] sm:$0x7f] %vm4138, %v5391
      %5422 = vst.msk [vmem:[#allocation10 + $0xb0] sm:$0xff] %vm2478, %v5392
      %5423 = vst.msk [vmem:[#allocation10 + $0xb8] sm:$0x7f] %vm4138, %v5393
      %5424 = vst.msk [vmem:[#allocation10 + $0xc0] sm:$0xff] %vm2478, %v5394
      %5425 = vst.msk [vmem:[#allocation10 + $0xc8] sm:$0x7f] %vm4138, %v5395
      %5426 = vst.msk [vmem:[#allocation10 + $0xd0] sm:$0xff] %vm2478, %v5396
      %5427 = vst.msk [vmem:[#allocation10 + $0xd8] sm:$0x7f] %vm4138, %v5397
      %5428 = vst.msk [vmem:[#allocation10 + $0xe0] sm:$0xff] %vm2478, %v5398
      %5429 = vst.msk [vmem:[#allocation10 + $0xe8] sm:$0x7f] %vm4138, %v5399
      %v5430 = vld [vmem:[#allocation9] sm:$0xff]
      %v5431 = vld [vmem:[#allocation9 + $0x8] sm:$0xff]
      %5432 = vst.msk [vmem:[#allocation11] sm:$0xff] %vm749, %v5430
      %5433 = vst.msk [vmem:[#allocation11 + $0x8] sm:$0xff] %vm749, %v5431
      %v5434 = vld [vmem:[%s2590] sm:$0xff]
      %v5435 = vld [vmem:[%s2590 + $0x8] sm:$0xff]
      %5436 = vst.msk [vmem:[#allocation11 + $0x10] sm:$0xff] %vm749, %v5434
      %5437 = vst.msk [vmem:[#allocation11 + $0x18] sm:$0xff] %vm749, %v5435
      %s5438 = scalar_lea.vmem [#allocation9], 32
      %v5439 = vld [vmem:[%s5438] sm:$0xff]
      %v5440 = vld [vmem:[%s5438 + $0x8] sm:$0xff]
      %5441 = vst.msk [vmem:[#allocation11 + $0x20] sm:$0xff] %vm749, %v5439
      %5442 = vst.msk [vmem:[#allocation11 + $0x28] sm:$0xff] %vm749, %v5440
      %s5443 = scalar_lea.vmem [#allocation9], 48
      %v5444 = vld [vmem:[%s5443] sm:$0xff]
      %v5445 = vld [vmem:[%s5443 + $0x8] sm:$0xff]
      %5446 = vst.msk [vmem:[#allocation11 + $0x30] sm:$0xff] %vm749, %v5444
      %5447 = vst.msk [vmem:[#allocation11 + $0x38] sm:$0xff] %vm749, %v5445
      %s5448 = scalar_lea.vmem [#allocation9], 64
      %v5449 = vld [vmem:[%s5448] sm:$0xff]
      %v5450 = vld [vmem:[%s5448 + $0x8] sm:$0xff]
      %5451 = vst.msk [vmem:[#allocation11 + $0x40] sm:$0xff] %vm749, %v5449
      %5452 = vst.msk [vmem:[#allocation11 + $0x48] sm:$0xff] %vm749, %v5450
      %s5453 = scalar_lea.vmem [#allocation9], 80
      %v5454 = vld [vmem:[%s5453] sm:$0xff]
      %v5455 = vld [vmem:[%s5453 + $0x8] sm:$0xff]
      %5456 = vst.msk [vmem:[#allocation11 + $0x50] sm:$0xff] %vm749, %v5454
      %5457 = vst.msk [vmem:[#allocation11 + $0x58] sm:$0xff] %vm749, %v5455
      %s5458 = scalar_lea.vmem [#allocation9], 96
      %v5459 = vld [vmem:[%s5458] sm:$0xff]
      %v5460 = vld [vmem:[%s5458 + $0x8] sm:$0xff]
      %5461 = vst.msk [vmem:[#allocation11 + $0x60] sm:$0xff] %vm749, %v5459
      %5462 = vst.msk [vmem:[#allocation11 + $0x68] sm:$0xff] %vm749, %v5460
      %s5463 = scalar_lea.vmem [#allocation9], 112
      %v5464 = vld [vmem:[%s5463] sm:$0xff]
      %v5465 = vld [vmem:[%s5463 + $0x8] sm:$0xff]
      %5466 = vst.msk [vmem:[#allocation11 + $0x70] sm:$0xff] %vm749, %v5464
      %5467 = vst.msk [vmem:[#allocation11 + $0x78] sm:$0xff] %vm749, %v5465
      %s5468 = scalar_lea.vmem [#allocation9], 128
      %v5469 = vld [vmem:[%s5468] sm:$0xff]
      %v5470 = vld [vmem:[%s5468 + $0x8] sm:$0xff]
      %5471 = vst.msk [vmem:[#allocation11 + $0x80] sm:$0xff] %vm749, %v5469
      %5472 = vst.msk [vmem:[#allocation11 + $0x88] sm:$0xff] %vm749, %v5470
      %s5473 = scalar_lea.vmem [#allocation9], 144
      %v5474 = vld [vmem:[%s5473] sm:$0xff]
      %v5475 = vld [vmem:[%s5473 + $0x8] sm:$0xff]
      %5476 = vst.msk [vmem:[#allocation11 + $0x90] sm:$0xff] %vm749, %v5474
      %5477 = vst.msk [vmem:[#allocation11 + $0x98] sm:$0xff] %vm749, %v5475
      %s5478 = scalar_lea.vmem [#allocation9], 160
      %v5479 = vld [vmem:[%s5478] sm:$0xff]
      %v5480 = vld [vmem:[%s5478 + $0x8] sm:$0xff]
      %5481 = vst.msk [vmem:[#allocation11 + $0xa0] sm:$0xff] %vm749, %v5479
      %5482 = vst.msk [vmem:[#allocation11 + $0xa8] sm:$0xff] %vm749, %v5480
      %s5483 = scalar_lea.vmem [#allocation9], 176
      %v5484 = vld [vmem:[%s5483] sm:$0xff]
      %v5485 = vld [vmem:[%s5483 + $0x8] sm:$0xff]
      %5486 = vst.msk [vmem:[#allocation11 + $0xb0] sm:$0xff] %vm749, %v5484
      %5487 = vst.msk [vmem:[#allocation11 + $0xb8] sm:$0xff] %vm749, %v5485
      %s5488 = scalar_lea.vmem [#allocation9], 192
      %v5489 = vld [vmem:[%s5488] sm:$0xff]
      %v5490 = vld [vmem:[%s5488 + $0x8] sm:$0xff]
      %5491 = vst.msk [vmem:[#allocation11 + $0xc0] sm:$0xff] %vm749, %v5489
      %5492 = vst.msk [vmem:[#allocation11 + $0xc8] sm:$0xff] %vm749, %v5490
      %s5493 = scalar_lea.vmem [#allocation9], 208
      %v5494 = vld [vmem:[%s5493] sm:$0xff]
      %v5495 = vld [vmem:[%s5493 + $0x8] sm:$0xff]
      %5496 = vst.msk [vmem:[#allocation11 + $0xd0] sm:$0xff] %vm749, %v5494
      %5497 = vst.msk [vmem:[#allocation11 + $0xd8] sm:$0xff] %vm749, %v5495
      %s5498 = scalar_lea.vmem [#allocation9], 224
      %v5499 = vld [vmem:[%s5498] sm:$0xff]
      %v5500 = vld [vmem:[%s5498 + $0x8] sm:$0xff]
      %5501 = vst.msk [vmem:[#allocation11 + $0xe0] sm:$0xff] %vm749, %v5499
      %5502 = vst.msk [vmem:[#allocation11 + $0xe8] sm:$0xff] %vm749, %v5500
      %s5503 = scalar_lea.vmem [#allocation9], 240
      %v5504 = vld [vmem:[%s5503] sm:$0xff]
      %v5505 = vld [vmem:[%s5503 + $0x8] sm:$0xff]
      %5506 = vst.msk [vmem:[#allocation11 + $0xf0] sm:$0xff] %vm749, %v5504
      %5507 = vst.msk [vmem:[#allocation11 + $0xf8] sm:$0xff] %vm749, %v5505
      %v5508 = vld [vmem:[#allocation10] sm:$0xff]
      %v5509 = vld [vmem:[#allocation10 + $0x8] sm:$0xff]
      %5510 = vst.msk [vmem:[#allocation12] sm:$0xff] %vm2478, %v5508
      %5511 = vst.msk [vmem:[#allocation12 + $0x8] sm:$0xff] %vm2478, %v5509
      %v5512 = vld [vmem:[%s4042] sm:$0xff]
      %v5513 = vld [vmem:[%s4042 + $0x8] sm:$0xff]
      %5514 = vst.msk [vmem:[#allocation12 + $0x10] sm:$0xff] %vm2478, %v5512
      %5515 = vst.msk [vmem:[#allocation12 + $0x18] sm:$0xff] %vm2478, %v5513
      %s5516 = scalar_lea.vmem [#allocation10], 32
      %v5517 = vld [vmem:[%s5516] sm:$0xff]
      %v5518 = vld [vmem:[%s5516 + $0x8] sm:$0xff]
      %5519 = vst.msk [vmem:[#allocation12 + $0x20] sm:$0xff] %vm2478, %v5517
      %5520 = vst.msk [vmem:[#allocation12 + $0x28] sm:$0xff] %vm2478, %v5518
      %s5521 = scalar_lea.vmem [#allocation10], 48
      %v5522 = vld [vmem:[%s5521] sm:$0xff]
      %v5523 = vld [vmem:[%s5521 + $0x8] sm:$0xff]
      %5524 = vst.msk [vmem:[#allocation12 + $0x30] sm:$0xff] %vm2478, %v5522
      %5525 = vst.msk [vmem:[#allocation12 + $0x38] sm:$0xff] %vm2478, %v5523
      %s5526 = scalar_lea.vmem [#allocation10], 64
      %v5527 = vld [vmem:[%s5526] sm:$0xff]
      %v5528 = vld [vmem:[%s5526 + $0x8] sm:$0xff]
      %5529 = vst.msk [vmem:[#allocation12 + $0x40] sm:$0xff] %vm2478, %v5527
      %5530 = vst.msk [vmem:[#allocation12 + $0x48] sm:$0xff] %vm2478, %v5528
      %s5531 = scalar_lea.vmem [#allocation10], 80
      %v5532 = vld [vmem:[%s5531] sm:$0xff]
      %v5533 = vld [vmem:[%s5531 + $0x8] sm:$0xff]
      %5534 = vst.msk [vmem:[#allocation12 + $0x50] sm:$0xff] %vm2478, %v5532
      %5535 = vst.msk [vmem:[#allocation12 + $0x58] sm:$0xff] %vm2478, %v5533
      %s5536 = scalar_lea.vmem [#allocation10], 96
      %v5537 = vld [vmem:[%s5536] sm:$0xff]
      %v5538 = vld [vmem:[%s5536 + $0x8] sm:$0xff]
      %5539 = vst.msk [vmem:[#allocation12 + $0x60] sm:$0xff] %vm2478, %v5537
      %5540 = vst.msk [vmem:[#allocation12 + $0x68] sm:$0xff] %vm2478, %v5538
      %s5541 = scalar_lea.vmem [#allocation10], 112
      %v5542 = vld [vmem:[%s5541] sm:$0xff]
      %v5543 = vld [vmem:[%s5541 + $0x8] sm:$0xff]
      %5544 = vst.msk [vmem:[#allocation12 + $0x70] sm:$0xff] %vm2478, %v5542
      %5545 = vst.msk [vmem:[#allocation12 + $0x78] sm:$0xff] %vm2478, %v5543
      %s5546 = scalar_lea.vmem [#allocation10], 128
      %v5547 = vld [vmem:[%s5546] sm:$0xff]
      %v5548 = vld [vmem:[%s5546 + $0x8] sm:$0xff]
      %5549 = vst.msk [vmem:[#allocation12 + $0x80] sm:$0xff] %vm2478, %v5547
      %5550 = vst.msk [vmem:[#allocation12 + $0x88] sm:$0xff] %vm2478, %v5548
      %s5551 = scalar_lea.vmem [#allocation10], 144
      %v5552 = vld [vmem:[%s5551] sm:$0xff]
      %v5553 = vld [vmem:[%s5551 + $0x8] sm:$0xff]
      %5554 = vst.msk [vmem:[#allocation12 + $0x90] sm:$0xff] %vm2478, %v5552
      %5555 = vst.msk [vmem:[#allocation12 + $0x98] sm:$0xff] %vm2478, %v5553
      %s5556 = scalar_lea.vmem [#allocation10], 160
      %v5557 = vld [vmem:[%s5556] sm:$0xff]
      %v5558 = vld [vmem:[%s5556 + $0x8] sm:$0xff]
      %5559 = vst.msk [vmem:[#allocation12 + $0xa0] sm:$0xff] %vm2478, %v5557
      %5560 = vst.msk [vmem:[#allocation12 + $0xa8] sm:$0xff] %vm2478, %v5558
      %s5561 = scalar_lea.vmem [#allocation10], 176
      %v5562 = vld [vmem:[%s5561] sm:$0xff]
      %v5563 = vld [vmem:[%s5561 + $0x8] sm:$0xff]
      %5564 = vst.msk [vmem:[#allocation12 + $0xb0] sm:$0xff] %vm2478, %v5562
      %5565 = vst.msk [vmem:[#allocation12 + $0xb8] sm:$0xff] %vm2478, %v5563
      %s5566 = scalar_lea.vmem [#allocation10], 192
      %v5567 = vld [vmem:[%s5566] sm:$0xff]
      %v5568 = vld [vmem:[%s5566 + $0x8] sm:$0xff]
      %5569 = vst.msk [vmem:[#allocation12 + $0xc0] sm:$0xff] %vm2478, %v5567
      %5570 = vst.msk [vmem:[#allocation12 + $0xc8] sm:$0xff] %vm2478, %v5568
      %s5571 = scalar_lea.vmem [#allocation10], 208
      %v5572 = vld [vmem:[%s5571] sm:$0xff]
      %v5573 = vld [vmem:[%s5571 + $0x8] sm:$0xff]
      %5574 = vst.msk [vmem:[#allocation12 + $0xd0] sm:$0xff] %vm2478, %v5572
      %5575 = vst.msk [vmem:[#allocation12 + $0xd8] sm:$0xff] %vm2478, %v5573
      %s5576 = scalar_lea.vmem [#allocation10], 224
      %v5577 = vld [vmem:[%s5576] sm:$0xff]
      %v5578 = vld [vmem:[%s5576 + $0x8] sm:$0xff]
      %5579 = vst.msk [vmem:[#allocation12 + $0xe0] sm:$0xff] %vm2478, %v5577
      %5580 = vst.msk [vmem:[#allocation12 + $0xe8] sm:$0xff] %vm2478, %v5578
      %s5581 = scalar_lea.vmem [#allocation10], 240
      %v5582 = vld [vmem:[%s5581] sm:$0xff]
      %v5583 = vld [vmem:[%s5581 + $0x8] sm:$0xff]
      %5584 = vst.msk [vmem:[#allocation12 + $0xf0] sm:$0xff] %vm2478, %v5582
      %5585 = vst.msk [vmem:[#allocation12 + $0xf8] sm:$0xff] %vm2478, %v5583
      %v5586 = vld [vmem:[#allocation11] sm:$0xff]
      %v5587 = vld [vmem:[#allocation11 + $0x8] sm:$0xff]
      %v5588 = vld [vmem:[#allocation11 + $0x10] sm:$0xff]
      %v5589 = vld [vmem:[#allocation11 + $0x18] sm:$0xff]
      %v5590 = vld [vmem:[#allocation11 + $0x20] sm:$0xff]
      %v5591 = vld [vmem:[#allocation11 + $0x28] sm:$0xff]
      %v5592 = vld [vmem:[#allocation11 + $0x30] sm:$0xff]
      %v5593 = vld [vmem:[#allocation11 + $0x38] sm:$0xff]
      %v5594 = vld [vmem:[#allocation11 + $0x40] sm:$0xff]
      %v5595 = vld [vmem:[#allocation11 + $0x48] sm:$0xff]
      %v5596 = vld [vmem:[#allocation11 + $0x50] sm:$0xff]
      %v5597 = vld [vmem:[#allocation11 + $0x58] sm:$0xff]
      %v5598 = vld [vmem:[#allocation11 + $0x60] sm:$0xff]
      %v5599 = vld [vmem:[#allocation11 + $0x68] sm:$0xff]
      %v5600 = vld [vmem:[#allocation11 + $0x70] sm:$0xff]
      %v5601 = vld [vmem:[#allocation11 + $0x78] sm:$0xff]
      %v5602 = vld [vmem:[#allocation11 + $0x80] sm:$0xff]
      %v5603 = vld [vmem:[#allocation11 + $0x88] sm:$0xff]
      %v5604 = vld [vmem:[#allocation11 + $0x90] sm:$0xff]
      %v5605 = vld [vmem:[#allocation11 + $0x98] sm:$0xff]
      %v5606 = vld [vmem:[#allocation11 + $0xa0] sm:$0xff]
      %v5607 = vld [vmem:[#allocation11 + $0xa8] sm:$0xff]
      %v5608 = vld [vmem:[#allocation11 + $0xb0] sm:$0xff]
      %v5609 = vld [vmem:[#allocation11 + $0xb8] sm:$0xff]
      %v5610 = vld [vmem:[#allocation11 + $0xc0] sm:$0xff]
      %v5611 = vld [vmem:[#allocation11 + $0xc8] sm:$0xff]
      %v5612 = vld [vmem:[#allocation11 + $0xd0] sm:$0xff]
      %v5613 = vld [vmem:[#allocation11 + $0xd8] sm:$0xff]
      %v5614 = vld [vmem:[#allocation11 + $0xe0] sm:$0xff]
      %v5615 = vld [vmem:[#allocation11 + $0xe8] sm:$0xff]
      %v5616 = vld [vmem:[#allocation11 + $0xf0] sm:$0xff]
      %v5617 = vld [vmem:[#allocation11 + $0xf8] sm:$0xff]
      %v5618 = vld [vmem:[%s19] sm:$0xf]
      %v5619 = vld [vmem:[%s19 + $0x4] sm:$0xf]
      %v5620 = vld [vmem:[%s19 + $0x8] sm:$0xf]
      %v5621 = vld [vmem:[%s19 + $0xc] sm:$0xf]
      %v5622 = vpack.c.bf16 %v5587, %v5586
      %v5623 = vpack.c.bf16 %v5589, %v5588
      %v5624 = vpack.c.bf16 %v5591, %v5590
      %v5625 = vpack.c.bf16 %v5593, %v5592
      %v5626 = vpack.c.bf16 %v5595, %v5594
      %v5627 = vpack.c.bf16 %v5597, %v5596
      %v5628 = vpack.c.bf16 %v5599, %v5598
      %v5629 = vpack.c.bf16 %v5601, %v5600
      %v5630 = vpack.c.bf16 %v5603, %v5602
      %v5631 = vpack.c.bf16 %v5605, %v5604
      %v5632 = vpack.c.bf16 %v5607, %v5606
      %v5633 = vpack.c.bf16 %v5609, %v5608
      %v5634 = vpack.c.bf16 %v5611, %v5610
      %v5635 = vpack.c.bf16 %v5613, %v5612
      %v5636 = vpack.c.bf16 %v5615, %v5614
      %v5637 = vpack.c.bf16 %v5617, %v5616
      %v5638 = vld [vmem:[#allocation12] sm:$0xff]
      %v5639 = vld [vmem:[#allocation12 + $0x8] sm:$0xff]
      %v5640 = vld [vmem:[#allocation12 + $0x10] sm:$0xff]
      %v5641 = vld [vmem:[#allocation12 + $0x18] sm:$0xff]
      %v5642 = vld [vmem:[#allocation12 + $0x20] sm:$0xff]
      %v5643 = vld [vmem:[#allocation12 + $0x28] sm:$0xff]
      %v5644 = vld [vmem:[#allocation12 + $0x30] sm:$0xff]
      %v5645 = vld [vmem:[#allocation12 + $0x38] sm:$0xff]
      %v5646 = vld [vmem:[#allocation12 + $0x40] sm:$0xff]
      %v5647 = vld [vmem:[#allocation12 + $0x48] sm:$0xff]
      %v5648 = vld [vmem:[#allocation12 + $0x50] sm:$0xff]
      %v5649 = vld [vmem:[#allocation12 + $0x58] sm:$0xff]
      %v5650 = vld [vmem:[#allocation12 + $0x60] sm:$0xff]
      %v5651 = vld [vmem:[#allocation12 + $0x68] sm:$0xff]
      %v5652 = vld [vmem:[#allocation12 + $0x70] sm:$0xff]
      %v5653 = vld [vmem:[#allocation12 + $0x78] sm:$0xff]
      %v5654 = vld [vmem:[#allocation12 + $0x80] sm:$0xff]
      %v5655 = vld [vmem:[#allocation12 + $0x88] sm:$0xff]
      %v5656 = vld [vmem:[#allocation12 + $0x90] sm:$0xff]
      %v5657 = vld [vmem:[#allocation12 + $0x98] sm:$0xff]
      %v5658 = vld [vmem:[#allocation12 + $0xa0] sm:$0xff]
      %v5659 = vld [vmem:[#allocation12 + $0xa8] sm:$0xff]
      %v5660 = vld [vmem:[#allocation12 + $0xb0] sm:$0xff]
      %v5661 = vld [vmem:[#allocation12 + $0xb8] sm:$0xff]
      %v5662 = vld [vmem:[#allocation12 + $0xc0] sm:$0xff]
      %v5663 = vld [vmem:[#allocation12 + $0xc8] sm:$0xff]
      %v5664 = vld [vmem:[#allocation12 + $0xd0] sm:$0xff]
      %v5665 = vld [vmem:[#allocation12 + $0xd8] sm:$0xff]
      %v5666 = vld [vmem:[#allocation12 + $0xe0] sm:$0xff]
      %v5667 = vld [vmem:[#allocation12 + $0xe8] sm:$0xff]
      %v5668 = vld [vmem:[#allocation12 + $0xf0] sm:$0xff]
      %v5669 = vld [vmem:[#allocation12 + $0xf8] sm:$0xff]
      %v5670 = vld [vmem:[%s20] sm:$0xf]
      %v5671 = vld [vmem:[%s20 + $0x4] sm:$0xf]
      %v5672 = vld [vmem:[%s20 + $0x8] sm:$0xf]
      %v5673 = vld [vmem:[%s20 + $0xc] sm:$0xf]
      %v5674 = vld [vmem:[%s20 + $0x10] sm:$0xf]
      %v5675 = vld [vmem:[%s20 + $0x14] sm:$0xf]
      %v5676 = vpack.c.bf16 %v5639, %v5638
      %v5677 = vpack.c.bf16 %v5641, %v5640
      %v5678 = vpack.c.bf16 %v5643, %v5642
      %v5679 = vpack.c.bf16 %v5645, %v5644
      %v5680 = vpack.c.bf16 %v5647, %v5646
      %v5681 = vpack.c.bf16 %v5649, %v5648
      %v5682 = vpack.c.bf16 %v5651, %v5650
      %v5683 = vpack.c.bf16 %v5653, %v5652
      %v5684 = vpack.c.bf16 %v5655, %v5654
      %v5685 = vpack.c.bf16 %v5657, %v5656
      %v5686 = vpack.c.bf16 %v5659, %v5658
      %v5687 = vpack.c.bf16 %v5661, %v5660
      %v5688 = vpack.c.bf16 %v5663, %v5662
      %v5689 = vpack.c.bf16 %v5665, %v5664
      %v5690 = vpack.c.bf16 %v5667, %v5666
      %v5691 = vpack.c.bf16 %v5669, %v5668
      %v5698 = vunpack.c.l.b16 %v5670
      %v5699 = vunpack.c.l.b16 %v5671
      %v5700 = vunpack.c.l.b16 %v5672
      %v5701 = vunpack.c.l.b16 %v5673
      %v5702 = vunpack.c.l.b16 %v5674
      %v5703 = vunpack.c.l.b16 %v5675
      %v5704 = vpack.c.b16 %v5699, %v5698
      %v5705 = vpack.c.b16 %v5701, %v5700
      %v5706 = vpack.c.b16 %v5703, %v5702
      %v5711 = vsel %vm2478, %v5676, 0
      %v5714 = vsel %vm2478, %v5677, 0
      %v5717 = vsel %vm2478, %v5678, 0
      %v5720 = vsel %vm2478, %v5679, 0
      %v5723 = vsel %vm2478, %v5680, 0
      %v5726 = vsel %vm2478, %v5681, 0
      %v5729 = vsel %vm2478, %v5682, 0
      %v5732 = vsel %vm2478, %v5683, 0
      %v5735 = vsel %vm2478, %v5684, 0
      %v5738 = vsel %vm2478, %v5685, 0
      %v5741 = vsel %vm2478, %v5686, 0
      %v5744 = vsel %vm2478, %v5687, 0
      %v5747 = vsel %vm2478, %v5688, 0
      %v5750 = vsel %vm2478, %v5689, 0
      %v5753 = vsel %vm2478, %v5690, 0
      %v5756 = vsel %vm2478, %v5691, 0
      %5758 = vmatprep.subr.bf16.mxu0 0
      %5759 = vmatpush1.bf16.msra.mxu0 0
      %5760 = vmatprep.subr.bf16.mxu0 0
      %5761 = vmatpush1.bf16.msra.mxu0 0
      %5762 = vmatprep.subr.bf16.mxu0 0
      %5763 = vmatpush1.bf16.msra.mxu0 0
      %5764 = vmatprep.subr.bf16.mxu0 0
      %5765 = vmatpush1.bf16.msra.mxu0 0
      %5766 = vmatprep.subr.bf16.mxu0 0
      %5767 = vmatpush1.bf16.msra.mxu0 0
      %5768 = vmatprep.subr.bf16.mxu0 0
      %5769 = vmatpush1.bf16.msra.mxu0 %v5706
      %5770 = vmatprep.subr.bf16.mxu0 0
      %5771 = vmatpush1.bf16.msra.mxu0 %v5705
      %5772 = vmatprep.subr.bf16.mxu0 0
      %5773 = vmatpush1.bf16.msra.mxu0 %v5704
      %5774 = vmatprep.subr.bf16.mxu0 0
      %5775 = vmatpush2.bf16.msra.mxu0 0
      %5776 = vmatprep.subr.bf16.mxu0 0
      %5777 = vmatpush2.bf16.msra.mxu0 0
      %5778 = vmatprep.subr.bf16.mxu0 0
      %5779 = vmatpush2.bf16.msra.mxu0 0
      %5780 = vmatprep.subr.bf16.mxu0 0
      %5781 = vmatpush2.bf16.msra.mxu0 0
      %5782 = vmatprep.subr.bf16.mxu0 0
      %5783 = vmatpush2.bf16.msra.mxu0 0
      %5784 = vmatprep.subr.bf16.mxu0 0
      %5785 = vmatpush2.bf16.msra.mxu0 0
      %5786 = vmatprep.subr.bf16.mxu0 0
      %5787 = vmatpush2.bf16.msra.mxu0 0
      %5788 = vmatprep.subr.bf16.mxu0 0
      %5789 = vmatpush2.bf16.msra.mxu0 0
      %5790 = vmatprep.mubr.bf16.mxu0 0
      %5791 = vmatmul.mubr.bf16.gmra.mxu0 %v5711
      %v5792 = vpop.f32.mrf.mxu0
      %v5793 = vadd.f32 0.0, %v5792
      %v5794 = vpop.f32.mrf.mxu0
      %v5795 = vpop.f32.mrf.mxu0
      %v5796 = vadd.f32 0.0, %v5795
      %v5797 = vpop.f32.mrf.mxu0
      %5798 = vmatprep.mubr.bf16.mxu0 0
      %5799 = vmatmul.mubr.bf16.gmra.mxu0 %v5714
      %v5800 = vpop.f32.mrf.mxu0
      %v5801 = vadd.f32 0.0, %v5800
      %v5802 = vpop.f32.mrf.mxu0
      %v5803 = vpop.f32.mrf.mxu0
      %v5804 = vadd.f32 0.0, %v5803
      %v5805 = vpop.f32.mrf.mxu0
      %5806 = vmatprep.mubr.bf16.mxu0 0
      %5807 = vmatmul.mubr.bf16.gmra.mxu0 %v5717
      %v5808 = vpop.f32.mrf.mxu0
      %v5809 = vadd.f32 0.0, %v5808
      %v5810 = vpop.f32.mrf.mxu0
      %v5811 = vpop.f32.mrf.mxu0
      %v5812 = vadd.f32 0.0, %v5811
      %v5813 = vpop.f32.mrf.mxu0
      %5814 = vmatprep.mubr.bf16.mxu0 0
      %5815 = vmatmul.mubr.bf16.gmra.mxu0 %v5720
      %v5816 = vpop.f32.mrf.mxu0
      %v5817 = vadd.f32 0.0, %v5816
      %v5818 = vpop.f32.mrf.mxu0
      %v5819 = vpop.f32.mrf.mxu0
      %v5820 = vadd.f32 0.0, %v5819
      %v5821 = vpop.f32.mrf.mxu0
      %5822 = vmatprep.mubr.bf16.mxu0 0
      %5823 = vmatmul.mubr.bf16.gmra.mxu0 %v5723
      %v5824 = vpop.f32.mrf.mxu0
      %v5825 = vadd.f32 0.0, %v5824
      %v5826 = vpop.f32.mrf.mxu0
      %v5827 = vpop.f32.mrf.mxu0
      %v5828 = vadd.f32 0.0, %v5827
      %v5829 = vpop.f32.mrf.mxu0
      %5830 = vmatprep.mubr.bf16.mxu0 0
      %5831 = vmatmul.mubr.bf16.gmra.mxu0 %v5726
      %v5832 = vpop.f32.mrf.mxu0
      %v5833 = vadd.f32 0.0, %v5832
      %v5834 = vpop.f32.mrf.mxu0
      %v5835 = vpop.f32.mrf.mxu0
      %v5836 = vadd.f32 0.0, %v5835
      %v5837 = vpop.f32.mrf.mxu0
      %5838 = vmatprep.mubr.bf16.mxu0 0
      %5839 = vmatmul.mubr.bf16.gmra.mxu0 %v5729
      %v5840 = vpop.f32.mrf.mxu0
      %v5841 = vadd.f32 0.0, %v5840
      %v5842 = vpop.f32.mrf.mxu0
      %v5843 = vpop.f32.mrf.mxu0
      %v5844 = vadd.f32 0.0, %v5843
      %v5845 = vpop.f32.mrf.mxu0
      %5846 = vmatprep.mubr.bf16.mxu0 0
      %5847 = vmatmul.mubr.bf16.gmra.mxu0 %v5732
      %v5848 = vpop.f32.mrf.mxu0
      %v5849 = vadd.f32 0.0, %v5848
      %v5850 = vpop.f32.mrf.mxu0
      %v5851 = vpop.f32.mrf.mxu0
      %v5852 = vadd.f32 0.0, %v5851
      %v5853 = vpop.f32.mrf.mxu0
      %5854 = vmatprep.mubr.bf16.mxu0 0
      %5855 = vmatmul.mubr.bf16.gmra.mxu0 %v5735
      %v5856 = vpop.f32.mrf.mxu0
      %v5857 = vadd.f32 0.0, %v5856
      %v5858 = vpop.f32.mrf.mxu0
      %v5859 = vpop.f32.mrf.mxu0
      %v5860 = vadd.f32 0.0, %v5859
      %v5861 = vpop.f32.mrf.mxu0
      %5862 = vmatprep.mubr.bf16.mxu0 0
      %5863 = vmatmul.mubr.bf16.gmra.mxu0 %v5738
      %v5864 = vpop.f32.mrf.mxu0
      %v5865 = vadd.f32 0.0, %v5864
      %v5866 = vpop.f32.mrf.mxu0
      %v5867 = vpop.f32.mrf.mxu0
      %v5868 = vadd.f32 0.0, %v5867
      %v5869 = vpop.f32.mrf.mxu0
      %5870 = vmatprep.mubr.bf16.mxu0 0
      %5871 = vmatmul.mubr.bf16.gmra.mxu0 %v5741
      %v5872 = vpop.f32.mrf.mxu0
      %v5873 = vadd.f32 0.0, %v5872
      %v5874 = vpop.f32.mrf.mxu0
      %v5875 = vpop.f32.mrf.mxu0
      %v5876 = vadd.f32 0.0, %v5875
      %v5877 = vpop.f32.mrf.mxu0
      %5878 = vmatprep.mubr.bf16.mxu0 0
      %5879 = vmatmul.mubr.bf16.gmra.mxu0 %v5744
      %v5880 = vpop.f32.mrf.mxu0
      %v5881 = vadd.f32 0.0, %v5880
      %v5882 = vpop.f32.mrf.mxu0
      %v5883 = vpop.f32.mrf.mxu0
      %v5884 = vadd.f32 0.0, %v5883
      %v5885 = vpop.f32.mrf.mxu0
      %5886 = vmatprep.mubr.bf16.mxu0 0
      %5887 = vmatmul.mubr.bf16.gmra.mxu0 %v5747
      %v5888 = vpop.f32.mrf.mxu0
      %v5889 = vadd.f32 0.0, %v5888
      %v5890 = vpop.f32.mrf.mxu0
      %v5891 = vpop.f32.mrf.mxu0
      %v5892 = vadd.f32 0.0, %v5891
      %v5893 = vpop.f32.mrf.mxu0
      %5894 = vmatprep.mubr.bf16.mxu0 0
      %5895 = vmatmul.mubr.bf16.gmra.mxu0 %v5750
      %v5896 = vpop.f32.mrf.mxu0
      %v5897 = vadd.f32 0.0, %v5896
      %v5898 = vpop.f32.mrf.mxu0
      %v5899 = vpop.f32.mrf.mxu0
      %v5900 = vadd.f32 0.0, %v5899
      %v5901 = vpop.f32.mrf.mxu0
      %5902 = vmatprep.mubr.bf16.mxu0 0
      %5903 = vmatmul.mubr.bf16.gmra.mxu0 %v5753
      %v5904 = vpop.f32.mrf.mxu0
      %v5905 = vadd.f32 0.0, %v5904
      %v5906 = vpop.f32.mrf.mxu0
      %v5907 = vpop.f32.mrf.mxu0
      %v5908 = vadd.f32 0.0, %v5907
      %v5909 = vpop.f32.mrf.mxu0
      %5910 = vmatprep.mubr.bf16.mxu0 0
      %5911 = vmatmul.mubr.bf16.gmra.mxu0 %v5756
      %v5912 = vpop.f32.mrf.mxu0
      %v5913 = vadd.f32 0.0, %v5912
      %v5914 = vpop.f32.mrf.mxu0
      %v5915 = vpop.f32.mrf.mxu0
      %v5916 = vadd.f32 0.0, %v5915
      %v5917 = vpop.f32.mrf.mxu0
      %5918 = vdwg.mxu0
      %v5923 = vunpack.c.l.b16 %v5618
      %v5924 = vunpack.c.l.b16 %v5619
      %v5925 = vunpack.c.l.b16 %v5620
      %v5926 = vunpack.c.l.b16 %v5621
      %v5927 = vpack.c.b16 %v5924, %v5923
      %v5928 = vpack.c.b16 %v5926, %v5925
      %v5932 = vsel %vm749, %v5622, 0
      %v5935 = vsel %vm749, %v5623, 0
      %v5938 = vsel %vm749, %v5624, 0
      %v5941 = vsel %vm749, %v5625, 0
      %v5944 = vsel %vm749, %v5626, 0
      %v5947 = vsel %vm749, %v5627, 0
      %v5950 = vsel %vm749, %v5628, 0
      %v5953 = vsel %vm749, %v5629, 0
      %v5956 = vsel %vm749, %v5630, 0
      %v5959 = vsel %vm749, %v5631, 0
      %v5962 = vsel %vm749, %v5632, 0
      %v5965 = vsel %vm749, %v5633, 0
      %v5968 = vsel %vm749, %v5634, 0
      %v5971 = vsel %vm749, %v5635, 0
      %v5974 = vsel %vm749, %v5636, 0
      %v5977 = vsel %vm749, %v5637, 0
      %5979 = vmatprep.subr.bf16.mxu0 0
      %5980 = vmatpush1.bf16.msra.mxu0 0
      %5981 = vmatprep.subr.bf16.mxu0 0
      %5982 = vmatpush1.bf16.msra.mxu0 0
      %5983 = vmatprep.subr.bf16.mxu0 0
      %5984 = vmatpush1.bf16.msra.mxu0 0
      %5985 = vmatprep.subr.bf16.mxu0 0
      %5986 = vmatpush1.bf16.msra.mxu0 0
      %5987 = vmatprep.subr.bf16.mxu0 0
      %5988 = vmatpush1.bf16.msra.mxu0 0
      %5989 = vmatprep.subr.bf16.mxu0 0
      %5990 = vmatpush1.bf16.msra.mxu0 0
      %5991 = vmatprep.subr.bf16.mxu0 0
      %5992 = vmatpush1.bf16.msra.mxu0 %v5928
      %5993 = vmatprep.subr.bf16.mxu0 0
      %5994 = vmatpush1.bf16.msra.mxu0 %v5927
      %5995 = vmatprep.subr.bf16.mxu0 0
      %5996 = vmatpush2.bf16.msra.mxu0 0
      %5997 = vmatprep.subr.bf16.mxu0 0
      %5998 = vmatpush2.bf16.msra.mxu0 0
      %5999 = vmatprep.subr.bf16.mxu0 0
      %6000 = vmatpush2.bf16.msra.mxu0 0
      %6001 = vmatprep.subr.bf16.mxu0 0
      %6002 = vmatpush2.bf16.msra.mxu0 0
      %6003 = vmatprep.subr.bf16.mxu0 0
      %6004 = vmatpush2.bf16.msra.mxu0 0
      %6005 = vmatprep.subr.bf16.mxu0 0
      %6006 = vmatpush2.bf16.msra.mxu0 0
      %6007 = vmatprep.subr.bf16.mxu0 0
      %6008 = vmatpush2.bf16.msra.mxu0 0
      %6009 = vmatprep.subr.bf16.mxu0 0
      %6010 = vmatpush2.bf16.msra.mxu0 0
      %6011 = vmatprep.mubr.bf16.mxu0 0
      %6012 = vmatmul.mubr.bf16.gmra.mxu0 %v5932
      %v6013 = vpop.f32.mrf.mxu0
      %v6014 = vadd.f32 %v5793, %v6013
      %v6015 = vpop.f32.mrf.mxu0
      %v6016 = vpop.f32.mrf.mxu0
      %v6017 = vadd.f32 %v5796, %v6016
      %v6018 = vpop.f32.mrf.mxu0
      %6019 = vmatprep.mubr.bf16.mxu0 0
      %6020 = vmatmul.mubr.bf16.gmra.mxu0 %v5935
      %v6021 = vpop.f32.mrf.mxu0
      %v6022 = vadd.f32 %v5801, %v6021
      %v6023 = vpop.f32.mrf.mxu0
      %v6024 = vpop.f32.mrf.mxu0
      %v6025 = vadd.f32 %v5804, %v6024
      %v6026 = vpop.f32.mrf.mxu0
      %6027 = vmatprep.mubr.bf16.mxu0 0
      %6028 = vmatmul.mubr.bf16.gmra.mxu0 %v5938
      %v6029 = vpop.f32.mrf.mxu0
      %v6030 = vadd.f32 %v5809, %v6029
      %v6031 = vpop.f32.mrf.mxu0
      %v6032 = vpop.f32.mrf.mxu0
      %v6033 = vadd.f32 %v5812, %v6032
      %v6034 = vpop.f32.mrf.mxu0
      %6035 = vmatprep.mubr.bf16.mxu0 0
      %6036 = vmatmul.mubr.bf16.gmra.mxu0 %v5941
      %v6037 = vpop.f32.mrf.mxu0
      %v6038 = vadd.f32 %v5817, %v6037
      %v6039 = vpop.f32.mrf.mxu0
      %v6040 = vpop.f32.mrf.mxu0
      %v6041 = vadd.f32 %v5820, %v6040
      %v6042 = vpop.f32.mrf.mxu0
      %6043 = vmatprep.mubr.bf16.mxu0 0
      %6044 = vmatmul.mubr.bf16.gmra.mxu0 %v5944
      %v6045 = vpop.f32.mrf.mxu0
      %v6046 = vadd.f32 %v5825, %v6045
      %v6047 = vpop.f32.mrf.mxu0
      %v6048 = vpop.f32.mrf.mxu0
      %v6049 = vadd.f32 %v5828, %v6048
      %v6050 = vpop.f32.mrf.mxu0
      %6051 = vmatprep.mubr.bf16.mxu0 0
      %6052 = vmatmul.mubr.bf16.gmra.mxu0 %v5947
      %v6053 = vpop.f32.mrf.mxu0
      %v6054 = vadd.f32 %v5833, %v6053
      %v6055 = vpop.f32.mrf.mxu0
      %v6056 = vpop.f32.mrf.mxu0
      %v6057 = vadd.f32 %v5836, %v6056
      %v6058 = vpop.f32.mrf.mxu0
      %6059 = vmatprep.mubr.bf16.mxu0 0
      %6060 = vmatmul.mubr.bf16.gmra.mxu0 %v5950
      %v6061 = vpop.f32.mrf.mxu0
      %v6062 = vadd.f32 %v5841, %v6061
      %v6063 = vpop.f32.mrf.mxu0
      %v6064 = vpop.f32.mrf.mxu0
      %v6065 = vadd.f32 %v5844, %v6064
      %v6066 = vpop.f32.mrf.mxu0
      %6067 = vmatprep.mubr.bf16.mxu0 0
      %6068 = vmatmul.mubr.bf16.gmra.mxu0 %v5953
      %v6069 = vpop.f32.mrf.mxu0
      %v6070 = vadd.f32 %v5849, %v6069
      %v6071 = vpop.f32.mrf.mxu0
      %v6072 = vpop.f32.mrf.mxu0
      %v6073 = vadd.f32 %v5852, %v6072
      %v6074 = vpop.f32.mrf.mxu0
      %6075 = vmatprep.mubr.bf16.mxu0 0
      %6076 = vmatmul.mubr.bf16.gmra.mxu0 %v5956
      %v6077 = vpop.f32.mrf.mxu0
      %v6078 = vadd.f32 %v5857, %v6077
      %v6079 = vpop.f32.mrf.mxu0
      %v6080 = vpop.f32.mrf.mxu0
      %v6081 = vadd.f32 %v5860, %v6080
      %v6082 = vpop.f32.mrf.mxu0
      %6083 = vmatprep.mubr.bf16.mxu0 0
      %6084 = vmatmul.mubr.bf16.gmra.mxu0 %v5959
      %v6085 = vpop.f32.mrf.mxu0
      %v6086 = vadd.f32 %v5865, %v6085
      %v6087 = vpop.f32.mrf.mxu0
      %v6088 = vpop.f32.mrf.mxu0
      %v6089 = vadd.f32 %v5868, %v6088
      %v6090 = vpop.f32.mrf.mxu0
      %6091 = vmatprep.mubr.bf16.mxu0 0
      %6092 = vmatmul.mubr.bf16.gmra.mxu0 %v5962
      %v6093 = vpop.f32.mrf.mxu0
      %v6094 = vadd.f32 %v5873, %v6093
      %v6095 = vpop.f32.mrf.mxu0
      %v6096 = vpop.f32.mrf.mxu0
      %v6097 = vadd.f32 %v5876, %v6096
      %v6098 = vpop.f32.mrf.mxu0
      %6099 = vmatprep.mubr.bf16.mxu0 0
      %6100 = vmatmul.mubr.bf16.gmra.mxu0 %v5965
      %v6101 = vpop.f32.mrf.mxu0
      %v6102 = vadd.f32 %v5881, %v6101
      %v6103 = vpop.f32.mrf.mxu0
      %v6104 = vpop.f32.mrf.mxu0
      %v6105 = vadd.f32 %v5884, %v6104
      %v6106 = vpop.f32.mrf.mxu0
      %6107 = vmatprep.mubr.bf16.mxu0 0
      %6108 = vmatmul.mubr.bf16.gmra.mxu0 %v5968
      %v6109 = vpop.f32.mrf.mxu0
      %v6110 = vadd.f32 %v5889, %v6109
      %v6111 = vpop.f32.mrf.mxu0
      %v6112 = vpop.f32.mrf.mxu0
      %v6113 = vadd.f32 %v5892, %v6112
      %v6114 = vpop.f32.mrf.mxu0
      %6115 = vmatprep.mubr.bf16.mxu0 0
      %6116 = vmatmul.mubr.bf16.gmra.mxu0 %v5971
      %v6117 = vpop.f32.mrf.mxu0
      %v6118 = vadd.f32 %v5897, %v6117
      %v6119 = vpop.f32.mrf.mxu0
      %v6120 = vpop.f32.mrf.mxu0
      %v6121 = vadd.f32 %v5900, %v6120
      %v6122 = vpop.f32.mrf.mxu0
      %6123 = vmatprep.mubr.bf16.mxu0 0
      %6124 = vmatmul.mubr.bf16.gmra.mxu0 %v5974
      %v6125 = vpop.f32.mrf.mxu0
      %v6126 = vadd.f32 %v5905, %v6125
      %v6127 = vpop.f32.mrf.mxu0
      %v6128 = vpop.f32.mrf.mxu0
      %v6129 = vadd.f32 %v5908, %v6128
      %v6130 = vpop.f32.mrf.mxu0
      %6131 = vmatprep.mubr.bf16.mxu0 0
      %6132 = vmatmul.mubr.bf16.gmra.mxu0 %v5977
      %v6133 = vpop.f32.mrf.mxu0
      %v6134 = vadd.f32 %v5913, %v6133
      %v6135 = vpop.f32.mrf.mxu0
      %v6136 = vpop.f32.mrf.mxu0
      %v6137 = vadd.f32 %v5916, %v6136
      %v6138 = vpop.f32.mrf.mxu0
      %6139 = vdwg.mxu0
      %v6140 = vld [vmem:[%s21] sm:$0x1]
      %v6142 = vlaneseq
      %v6143 = vshrl.u32 %v6142, 7
      %v6144 = vsub.s32 0, %v6143
      %v6145 = vrot.slane %v6140, %v6144
      %v6147 = vadd.f32 %v6014, %v6145
      %v6148 = vadd.f32 %v6017, %v6145
      %v6149 = vadd.f32 %v6022, %v6145
      %v6150 = vadd.f32 %v6025, %v6145
      %v6151 = vadd.f32 %v6030, %v6145
      %v6152 = vadd.f32 %v6033, %v6145
      %v6153 = vadd.f32 %v6038, %v6145
      %v6154 = vadd.f32 %v6041, %v6145
      %v6155 = vadd.f32 %v6046, %v6145
      %v6156 = vadd.f32 %v6049, %v6145
      %v6157 = vadd.f32 %v6054, %v6145
      %v6158 = vadd.f32 %v6057, %v6145
      %v6159 = vadd.f32 %v6062, %v6145
      %v6160 = vadd.f32 %v6065, %v6145
      %v6161 = vadd.f32 %v6070, %v6145
      %v6162 = vadd.f32 %v6073, %v6145
      %v6163 = vadd.f32 %v6078, %v6145
      %v6164 = vadd.f32 %v6081, %v6145
      %v6165 = vadd.f32 %v6086, %v6145
      %v6166 = vadd.f32 %v6089, %v6145
      %v6167 = vadd.f32 %v6094, %v6145
      %v6168 = vadd.f32 %v6097, %v6145
      %v6169 = vadd.f32 %v6102, %v6145
      %v6170 = vadd.f32 %v6105, %v6145
      %v6171 = vadd.f32 %v6110, %v6145
      %v6172 = vadd.f32 %v6113, %v6145
      %v6173 = vadd.f32 %v6118, %v6145
      %v6174 = vadd.f32 %v6121, %v6145
      %v6175 = vadd.f32 %v6126, %v6145
      %v6176 = vadd.f32 %v6129, %v6145
      %v6177 = vadd.f32 %v6134, %v6145
      %v6178 = vadd.f32 %v6137, %v6145
      %v6179 = vmax.f32 %v6147, 0.0
      %v6180 = vmax.f32 %v6148, 0.0
      %v6181 = vmax.f32 %v6149, 0.0
      %v6182 = vmax.f32 %v6150, 0.0
      %v6183 = vmax.f32 %v6151, 0.0
      %v6184 = vmax.f32 %v6152, 0.0
      %v6185 = vmax.f32 %v6153, 0.0
      %v6186 = vmax.f32 %v6154, 0.0
      %v6187 = vmax.f32 %v6155, 0.0
      %v6188 = vmax.f32 %v6156, 0.0
      %v6189 = vmax.f32 %v6157, 0.0
      %v6190 = vmax.f32 %v6158, 0.0
      %v6191 = vmax.f32 %v6159, 0.0
      %v6192 = vmax.f32 %v6160, 0.0
      %v6193 = vmax.f32 %v6161, 0.0
      %v6194 = vmax.f32 %v6162, 0.0
      %v6195 = vmax.f32 %v6163, 0.0
      %v6196 = vmax.f32 %v6164, 0.0
      %v6197 = vmax.f32 %v6165, 0.0
      %v6198 = vmax.f32 %v6166, 0.0
      %v6199 = vmax.f32 %v6167, 0.0
      %v6200 = vmax.f32 %v6168, 0.0
      %v6201 = vmax.f32 %v6169, 0.0
      %v6202 = vmax.f32 %v6170, 0.0
      %v6203 = vmax.f32 %v6171, 0.0
      %v6204 = vmax.f32 %v6172, 0.0
      %v6205 = vmax.f32 %v6173, 0.0
      %v6206 = vmax.f32 %v6174, 0.0
      %v6207 = vmax.f32 %v6175, 0.0
      %v6208 = vmax.f32 %v6176, 0.0
      %v6209 = vmax.f32 %v6177, 0.0
      %v6210 = vmax.f32 %v6178, 0.0
      %6211 = vst.msk [vmem:[%s723] sm:$0xff] %vm749, %v6179
      %6212 = vst.msk [vmem:[%s723 + $0x8] sm:$0xff] %vm749, %v6180
      %6213 = vst.msk [vmem:[%s723 + $0x10] sm:$0xff] %vm749, %v6181
      %6214 = vst.msk [vmem:[%s723 + $0x18] sm:$0xff] %vm749, %v6182
      %6215 = vst.msk [vmem:[%s723 + $0x20] sm:$0xff] %vm749, %v6183
      %6216 = vst.msk [vmem:[%s723 + $0x28] sm:$0xff] %vm749, %v6184
      %6217 = vst.msk [vmem:[%s723 + $0x30] sm:$0xff] %vm749, %v6185
      %6218 = vst.msk [vmem:[%s723 + $0x38] sm:$0xff] %vm749, %v6186
      %6219 = vst.msk [vmem:[%s723 + $0x40] sm:$0xff] %vm749, %v6187
      %6220 = vst.msk [vmem:[%s723 + $0x48] sm:$0xff] %vm749, %v6188
      %6221 = vst.msk [vmem:[%s723 + $0x50] sm:$0xff] %vm749, %v6189
      %6222 = vst.msk [vmem:[%s723 + $0x58] sm:$0xff] %vm749, %v6190
      %6223 = vst.msk [vmem:[%s723 + $0x60] sm:$0xff] %vm749, %v6191
      %6224 = vst.msk [vmem:[%s723 + $0x68] sm:$0xff] %vm749, %v6192
      %6225 = vst.msk [vmem:[%s723 + $0x70] sm:$0xff] %vm749, %v6193
      %6226 = vst.msk [vmem:[%s723 + $0x78] sm:$0xff] %vm749, %v6194
      %6227 = vst.msk [vmem:[%s723 + $0x80] sm:$0xff] %vm749, %v6195
      %6228 = vst.msk [vmem:[%s723 + $0x88] sm:$0xff] %vm749, %v6196
      %6229 = vst.msk [vmem:[%s723 + $0x90] sm:$0xff] %vm749, %v6197
      %6230 = vst.msk [vmem:[%s723 + $0x98] sm:$0xff] %vm749, %v6198
      %6231 = vst.msk [vmem:[%s723 + $0xa0] sm:$0xff] %vm749, %v6199
      %6232 = vst.msk [vmem:[%s723 + $0xa8] sm:$0xff] %vm749, %v6200
      %6233 = vst.msk [vmem:[%s723 + $0xb0] sm:$0xff] %vm749, %v6201
      %6234 = vst.msk [vmem:[%s723 + $0xb8] sm:$0xff] %vm749, %v6202
      %6235 = vst.msk [vmem:[%s723 + $0xc0] sm:$0xff] %vm749, %v6203
      %6236 = vst.msk [vmem:[%s723 + $0xc8] sm:$0xff] %vm749, %v6204
      %6237 = vst.msk [vmem:[%s723 + $0xd0] sm:$0xff] %vm749, %v6205
      %6238 = vst.msk [vmem:[%s723 + $0xd8] sm:$0xff] %vm749, %v6206
      %6239 = vst.msk [vmem:[%s723 + $0xe0] sm:$0xff] %vm749, %v6207
      %6240 = vst.msk [vmem:[%s723 + $0xe8] sm:$0xff] %vm749, %v6208
      %6241 = vst.msk [vmem:[%s723 + $0xf0] sm:$0xff] %vm749, %v6209
      %6242 = vst.msk [vmem:[%s723 + $0xf8] sm:$0xff] %vm749, %v6210
      %p6243 = scmp.lt.s32.totalorder %s33, 1
      %s6244 = scalar_select %p6243, %s33, 1
      %s6245 = smul.addr %s6244, 32
      %s6246 = smul.addr %s6245, 8
      %s6247 = scalar_lea.vmem %s22, %s6246
      // Predicated region
      $region109: #{tpu_custom_call.1} parent=107 // pred_check
        %p6248 = pneg %p528
      $region110: #{tpu_custom_call.1} parent=107 // pred_check_branch
        %6250 = sbr.rel (%p6248) target = $region112
      $region111: #{tpu_custom_call.1} parent=107 // pred_region
        _
      $region112: #{tpu_custom_call.1} parent=107 // pred_fallthru
        _
    $region108: #{tpu_custom_call.1} parent=5 // pred_fallthru
      _
    %p6251 = scmp.le.s32.totalorder 2, %s28
    // Predicated region
    $region113: #{tpu_custom_call.1} parent=5 // pred_check
      %p6252 = pneg %p6251
    $region114: #{tpu_custom_call.1} parent=5 // pred_check_branch
      %6254 = sbr.rel (%p6252) target = $region116
    $region115: #{tpu_custom_call.1} parent=5 // pred_region
      %s6255 = ssub.s32 %s28, 2
      // Predicated region
      $region117: #{tpu_custom_call.1} parent=115 // pred_check
        %p6256 = pneg %p534
      $region118: #{tpu_custom_call.1} parent=115 // pred_check_branch
        %6258 = sbr.rel (%p6256) target = $region120
      $region119: #{tpu_custom_call.1} parent=115 // pred_region
        %p6259 = scmp.lt.s32.totalorder %s34, 1
        %s6260 = scalar_select %p6259, %s34, 1
        %s6261 = smul.addr %s6260, 32
        %s6262 = smul.addr %s6261, 8
        %s6263 = scalar_lea.vmem %s22, %s6262
      $region120: #{tpu_custom_call.1} parent=115 // pred_fallthru
        _
    $region116: #{tpu_custom_call.1} parent=5 // pred_fallthru
      _
  $region6: #{tpu_custom_call.1} parent=0 // loop_footer
    %s32 = sadd.s32 1, %s28
  $region7: #{tpu_custom_call.1} parent=0 // loop_footer_branch
    %27 = sbr.rel target = $region3
  $region8: #{tpu_custom_call.1} parent=0 // loop_exit
    _

</llo_original>
